<compile_context>
chip_gen: v7x
topology: tpu7x:2x2x1
jax: 0.10.0
libtpu: 0.0.40
codegen_flags: <defaults>
</compile_context>

<pallas_src>
import functools
import math

import jax
import jax.numpy as jnp
import numpy as np
from jax.experimental import pallas as pl
from jax.experimental.pallas import tpu as pltpu


D_PAD = 128      # lane-padded d_model / input feature / fc output width
HEAD_PAD = 128   # lane-padded per-head dim (dh=8 -> 128)


# ------------------------------ fused kernel --------------------------------

def _transformer_kernel(x_ref,
                        emb_w_ref, emb_b_ref,
                        in_w_ref, in_b_ref,
                        out_w_ref, out_b_ref,
                        ff1_w_ref, ff1_b_ref,
                        ff2_w_ref, ff2_b_ref,
                        ln1_g_ref, ln1_b_ref,
                        ln2_g_ref, ln2_b_ref,
                        fc_w_ref, fc_b_ref,
                        o_ref,
                        *, batch, seq, num_heads, d_real, eps):
    f32, bf16 = jnp.float32, jnp.bfloat16
    num_layers = in_w_ref.shape[0]
    hp = out_w_ref.shape[1] // num_heads          # padded per-head width (128)
    inv_d = 1.0 / d_real                          # true feature count (32)

    def layernorm(y, g, b):
        # Padded lanes of y are exactly zero, so sums over 128 lanes equal
        # sums over the real d_real features; divide by d_real and use
        # E[x^2]-mean^2 so padded lanes don't corrupt the variance.
        mean = jnp.sum(y, axis=-1, keepdims=True) * inv_d
        var = jnp.sum(y * y, axis=-1, keepdims=True) * inv_d - mean * mean
        return (y - mean) * jax.lax.rsqrt(var + eps) * g + b

    # ---- embedding: (B*T, 128) @ (128, 128) + b ----------------------------
    h = jnp.dot(x_ref[...], emb_w_ref[...],
                preferred_element_type=f32) + emb_b_ref[...]          # f32

    # ---- encoder layers (static unroll) -------------------------------------
    for l in range(num_layers):
        # fused qkv projection; 1/sqrt(dh) already folded into q columns;
        # columns are head-major, each head padded to a 128-lane block.
        qkv = jnp.dot(h.astype(bf16), in_w_ref[l],
                      preferred_element_type=f32) + in_b_ref[l]       # (B*T, 3*H*128)
        qkv = qkv.astype(bf16)

        head_outs = []
        for hd in range(num_heads):              # static unroll, whole-vreg slices
            q = qkv[:, hd * hp:(hd + 1) * hp].reshape(batch, seq, hp)
            k = qkv[:, (num_heads + hd) * hp:
                       (num_heads + hd + 1) * hp].reshape(batch, seq, hp)
            v = qkv[:, (2 * num_heads + hd) * hp:
                       (2 * num_heads + hd + 1) * hp].reshape(batch, seq, hp)
            # scores for all batch rows at once: (B, T, T), f32 accumulation
            s = jnp.einsum('bqd,bkd->bqk', q, k, preferred_element_type=f32)
            m = jnp.max(s, axis=-1, keepdims=True)
            p = jnp.exp(s - m)
            p = p * pl.reciprocal(jnp.sum(p, axis=-1, keepdims=True), approx=True)
            o = jnp.einsum('bqk,bkd->bqd', p.astype(bf16), v,
                           preferred_element_type=f32)                # (B, T, 128)
            head_outs.append(o.reshape(batch * seq, hp))
        attn = jnp.concatenate(head_outs, axis=-1).astype(bf16)       # (B*T, H*128)
        attn = jnp.dot(attn, out_w_ref[l],
                       preferred_element_type=f32) + out_b_ref[l]     # (B*T, 128)

        # post-norm residual 1
        h1 = layernorm(h + attn, ln1_g_ref[l], ln1_b_ref[l])

        # feed-forward (relu), dff = 2048 is already lane-dense
        ff = jnp.dot(h1.astype(bf16), ff1_w_ref[l],
                     preferred_element_type=f32) + ff1_b_ref[l]
        ff = jnp.maximum(ff, 0.0)
        ff = jnp.dot(ff.astype(bf16), ff2_w_ref[l],
                     preferred_element_type=f32) + ff2_b_ref[l]

        # post-norm residual 2
        h = layernorm(h1 + ff, ln2_g_ref[l], ln2_b_ref[l])

    # ---- fc + sigmoid on ALL rows (lane-dense store); last-step / real
    # column selection happens outside the kernel -----------------------------
    logits = jnp.dot(h.astype(bf16), fc_w_ref[...],
                     preferred_element_type=f32) + fc_b_ref[...]      # (B*T, 128)
    o_ref[...] = jax.nn.sigmoid(logits)


# ------------------------------- parameters ---------------------------------

def init_params(key, input_size, hidden_size, num_layers, dim_feedforward=2048):
    """PyTorch-style random init (nn.Linear default uniform), JAX (in,out) layout."""
    def linear_init(k, fan_in, fan_out):
        k1, k2 = jax.random.split(k)
        lim = 1.0 / np.sqrt(fan_in)
        w = jax.random.uniform(k1, (fan_in, fan_out), jnp.float32, -lim, lim)
        b = jax.random.uniform(k2, (fan_out,), jnp.float32, -lim, lim)
        return w, b

    keys = jax.random.split(key, 2 + num_layers)
    params = {}
    params["emb_w"], params["emb_b"] = linear_init(keys[0], input_size, hidden_size)
    params["fc_w"], params["fc_b"] = linear_init(keys[1], hidden_size, input_size)
    layers = []
    for l in range(num_layers):
        lk = jax.random.split(keys[2 + l], 4)
        in_w, in_b = linear_init(lk[0], hidden_size, 3 * hidden_size)
        out_w, out_b = linear_init(lk[1], hidden_size, hidden_size)
        ff1_w, ff1_b = linear_init(lk[2], hidden_size, dim_feedforward)
        ff2_w, ff2_b = linear_init(lk[3], dim_feedforward, hidden_size)
        layers.append(dict(
            in_proj_w=in_w, in_proj_b=in_b,
            out_proj_w=out_w, out_proj_b=out_b,
            ff1_w=ff1_w, ff1_b=ff1_b, ff2_w=ff2_w, ff2_b=ff2_b,
            ln1_g=jnp.ones((hidden_size,), jnp.float32),
            ln1_b=jnp.zeros((hidden_size,), jnp.float32),
            ln2_g=jnp.ones((hidden_size,), jnp.float32),
            ln2_b=jnp.zeros((hidden_size,), jnp.float32)))
    params["layers"] = layers
    return params


def prepare_params(params, input_size, hidden_size, num_heads,
                   d_pad=D_PAD, hp=HEAD_PAD):
    """One-time host-side prep:
       * zero-pad every feature dim to 128 lanes,
       * reorder qkv columns / out_proj rows to head-major padded layout,
       * fold 1/sqrt(dh) into the q columns of in_proj (weights and bias),
       * stack per-layer params on a leading layer axis,
       * pre-cast matmul weights to bf16 (biases / LN params stay f32)."""
    f32, bf16 = jnp.float32, jnp.bfloat16
    H = num_heads
    dh = hidden_size // H
    scale = 1.0 / math.sqrt(dh)

    def pad2(w, rows, cols):
        return jnp.zeros((rows, cols), f32).at[:w.shape[0], :w.shape[1]].set(w)

    def pad1(b, n):
        return jnp.zeros((n,), f32).at[:b.shape[0]].set(b)

    # head-major padded column scatter for the fused qkv projection:
    #   orig col  s*D + h*dh + d  (s in {q,k,v})  ->  s*H*hp + h*hp + d
    qkv_cols = np.array([s * H * hp + h * hp + d
                         for s in range(3) for h in range(H) for d in range(dh)],
                        dtype=np.int32)
    # attention-output (concat of heads) row scatter: h*dh + d -> h*hp + d
    out_rows = np.array([h * hp + d for h in range(H) for d in range(dh)],
                        dtype=np.int32)
    q_scale = jnp.concatenate([jnp.full((hidden_size,), scale, f32),
                               jnp.ones((2 * hidden_size,), f32)])

    def prep_layer(p):
        in_w = p["in_proj_w"] * q_scale[None, :]
        in_b = p["in_proj_b"] * q_scale
        in_w = jnp.zeros((hidden_size, 3 * H * hp), f32).at[:, qkv_cols].set(in_w)
        in_w = pad2(in_w, d_pad, 3 * H * hp)                    # (128, 3*H*128)
        in_b = jnp.zeros((3 * H * hp,), f32).at[qkv_cols].set(in_b)

        out_w = jnp.zeros((H * hp, hidden_size), f32).at[out_rows, :].set(
            p["out_proj_w"])
        out_w = pad2(out_w, H * hp, d_pad)                      # (H*128, 128)

        return dict(
            in_w=in_w.astype(bf16), in_b=in_b[None, :],
            out_w=out_w.astype(bf16), out_b=pad1(p["out_proj_b"], d_pad)[None, :],
            ff1_w=pad2(p["ff1_w"], d_pad, p["ff1_w"].shape[1]).astype(bf16),
            ff1_b=p["ff1_b"][None, :],
            ff2_w=pad2(p["ff2_w"], p["ff2_w"].shape[0], d_pad).astype(bf16),
            ff2_b=pad1(p["ff2_b"], d_pad)[None, :],
            ln1_g=pad1(p["ln1_g"], d_pad)[None, :],   # zero-padded gamma keeps
            ln1_b=pad1(p["ln1_b"], d_pad)[None, :],   # padded lanes exactly zero
            ln2_g=pad1(p["ln2_g"], d_pad)[None, :],
            ln2_b=pad1(p["ln2_b"], d_pad)[None, :],
        )

    per_layer = [prep_layer(p) for p in params["layers"]]
    stacked = {k: jnp.stack([lyr[k] for lyr in per_layer]) for k in per_layer[0]}

    return dict(
        emb_w=pad2(params["emb_w"], d_pad, d_pad).astype(bf16),
        emb_b=pad1(params["emb_b"], d_pad)[None, :],
        fc_w=pad2(params["fc_w"], d_pad, d_pad).astype(bf16),
        fc_b=pad1(params["fc_b"], d_pad)[None, :],
        **stacked,
    )


# ------------------------------ forward (glue) -------------------------------

def transformer_forward(x, p, *, input_size, hidden_size, num_heads, d_pad=D_PAD):
    x = x.astype(jnp.float32)
    B = x.shape[0]
    x3 = x.reshape(B, -1, input_size)            # (B, T, input_size)
    T = x3.shape[1]
    xf = x3.reshape(B * T, input_size)
    # lane-pad the input to 128 features and pre-cast to bf16 (host side)
    x_pad = jnp.zeros((B * T, d_pad), jnp.float32).at[:, :input_size].set(xf)
    x_pad = x_pad.astype(jnp.bfloat16)

    vmem = pl.BlockSpec(memory_space=pltpu.MemorySpace.VMEM)
    kernel = functools.partial(_transformer_kernel, batch=B, seq=T,
                               num_heads=num_heads, d_real=float(hidden_size),
                               eps=1e-5)
    # TODO(synk): at realistic dims add a layer grid axis ("arbitrary",
    # Buffered(2) weight specs) and a batch-parallel axis for v7x's 2 TCs;
    # at B*T=16 / 1-2 MB of weights both are pure per-step overhead.
    out_pad = pl.pallas_call(
        kernel,
        out_shape=jax.ShapeDtypeStruct((B * T, d_pad), jnp.float32),
        in_specs=[vmem] * 17,
        out_specs=vmem,
    )(x_pad,
      p["emb_w"], p["emb_b"],
      p["in_w"], p["in_b"], p["out_w"], p["out_b"],
      p["ff1_w"], p["ff1_b"], p["ff2_w"], p["ff2_b"],
      p["ln1_g"], p["ln1_b"], p["ln2_g"], p["ln2_b"],
      p["fc_w"], p["fc_b"])

    # last time step + real output columns, selected outside the kernel
    return out_pad.reshape(B, T, d_pad)[:, -1, :input_size]


# --------------------------------- main --------------------------------------

if __name__ == "__main__":
    input_size, hidden_size, num_layers, num_heads = 16, 32, 2, 4
    # dropout = 0.0 -> identity (eval-mode semantics)
    B, T = 2, 8

    key = jax.random.PRNGKey(0)
    k_x, k_p = jax.random.split(key)
    x = jax.random.normal(k_x, (B, T, input_size), jnp.float32)

    params = init_params(k_p, input_size, hidden_size, num_layers)
    prepped = prepare_params(params, input_size, hidden_size, num_heads)

    fwd = jax.jit(functools.partial(transformer_forward,
                                    input_size=input_size,
                                    hidden_size=hidden_size,
                                    num_heads=num_heads))
    out = jax.block_until_ready(fwd(x, prepped))
    assert out.shape == (B, input_size)
    assert bool(jnp.all(jnp.isfinite(out)))
    assert bool(jnp.all((out >= 0.0) & (out <= 1.0)))
    print("KERNEL_OK")
</pallas_src>

<mosaic_0001>
module attributes {stable_mosaic.version = 11 : i64} {
  func.func @_transformer_kernel(%arg0: memref<16x128xbf16, #tpu.memory_space<vmem>>, %arg1: memref<128x128xbf16, #tpu.memory_space<vmem>>, %arg2: memref<1x128xf32, #tpu.memory_space<vmem>>, %arg3: memref<2x128x1536xbf16, #tpu.memory_space<vmem>>, %arg4: memref<2x1x1536xf32, #tpu.memory_space<vmem>>, %arg5: memref<2x512x128xbf16, #tpu.memory_space<vmem>>, %arg6: memref<2x1x128xf32, #tpu.memory_space<vmem>>, %arg7: memref<2x128x2048xbf16, #tpu.memory_space<vmem>>, %arg8: memref<2x1x2048xf32, #tpu.memory_space<vmem>>, %arg9: memref<2x2048x128xbf16, #tpu.memory_space<vmem>>, %arg10: memref<2x1x128xf32, #tpu.memory_space<vmem>>, %arg11: memref<2x1x128xf32, #tpu.memory_space<vmem>>, %arg12: memref<2x1x128xf32, #tpu.memory_space<vmem>>, %arg13: memref<2x1x128xf32, #tpu.memory_space<vmem>>, %arg14: memref<2x1x128xf32, #tpu.memory_space<vmem>>, %arg15: memref<128x128xbf16, #tpu.memory_space<vmem>>, %arg16: memref<1x128xf32, #tpu.memory_space<vmem>>, %arg17: memref<16x128xf32, #tpu.memory_space<vmem>>) attributes {dimension_semantics = [], scalar_prefetch = 0 : i64, scratch_operands = 0 : i64, tpu.core_type = #tpu.core_type<tc>} {
    %c0 = arith.constant 0 : index
    %c0_0 = arith.constant 0 : index
    %0 = vector.load %arg0[%c0, %c0_0] : memref<16x128xbf16, #tpu.memory_space<vmem>>, vector<16x128xbf16>
    %c0_1 = arith.constant 0 : index
    %c0_2 = arith.constant 0 : index
    %1 = vector.load %arg1[%c0_1, %c0_2] : memref<128x128xbf16, #tpu.memory_space<vmem>>, vector<128x128xbf16>
    %cst = arith.constant dense<0.000000e+00> : vector<16x128xf32>
    %2 = tpu.matmul %0, %1, %cst {dimension_numbers = #tpu.dot_dimension_numbers<[1], [0], [0], [1], [0, 0, 1, 1], [], []>} : vector<16x128xbf16>, vector<128x128xbf16>, vector<16x128xf32> -> vector<16x128xf32>
    %c0_3 = arith.constant 0 : index
    %c0_4 = arith.constant 0 : index
    %3 = vector.load %arg2[%c0_3, %c0_4] : memref<1x128xf32, #tpu.memory_space<vmem>>, vector<1x128xf32>
    %4 = vector.broadcast %3 : vector<1x128xf32> to vector<16x128xf32>
    %5 = arith.addf %2, %4 : vector<16x128xf32>
    %6 = arith.truncf %5 : vector<16x128xf32> to vector<16x128xbf16>
    %c0_5 = arith.constant 0 : index
    %c0_6 = arith.constant 0 : index
    %c0_7 = arith.constant 0 : index
    %7 = vector.load %arg3[%c0_5, %c0_6, %c0_7] : memref<2x128x1536xbf16, #tpu.memory_space<vmem>>, vector<1x128x1536xbf16>
    %8 = vector.shape_cast %7 : vector<1x128x1536xbf16> to vector<128x1536xbf16>
    %cst_8 = arith.constant dense<0.000000e+00> : vector<16x1536xf32>
    %9 = tpu.matmul %6, %8, %cst_8 {dimension_numbers = #tpu.dot_dimension_numbers<[1], [0], [0], [1], [0, 0, 1, 1], [], []>} : vector<16x128xbf16>, vector<128x1536xbf16>, vector<16x1536xf32> -> vector<16x1536xf32>
    %c0_9 = arith.constant 0 : index
    %c0_10 = arith.constant 0 : index
    %c0_11 = arith.constant 0 : index
    %10 = vector.load %arg4[%c0_9, %c0_10, %c0_11] : memref<2x1x1536xf32, #tpu.memory_space<vmem>>, vector<1x1x1536xf32>
    %11 = vector.shape_cast %10 : vector<1x1x1536xf32> to vector<1x1536xf32>
    %12 = vector.broadcast %11 : vector<1x1536xf32> to vector<16x1536xf32>
    %13 = arith.addf %9, %12 : vector<16x1536xf32>
    %14 = arith.truncf %13 : vector<16x1536xf32> to vector<16x1536xbf16>
    %15 = vector.extract_strided_slice %14 {offsets = [0, 0], sizes = [16, 128], strides = [1, 1]} : vector<16x1536xbf16> to vector<16x128xbf16>
    %16 = vector.shape_cast %15 : vector<16x128xbf16> to vector<2x8x128xbf16>
    %17 = vector.extract_strided_slice %14 {offsets = [0, 512], sizes = [16, 128], strides = [1, 1]} : vector<16x1536xbf16> to vector<16x128xbf16>
    %18 = vector.shape_cast %17 : vector<16x128xbf16> to vector<2x8x128xbf16>
    %19 = vector.extract_strided_slice %14 {offsets = [0, 1024], sizes = [16, 128], strides = [1, 1]} : vector<16x1536xbf16> to vector<16x128xbf16>
    %20 = vector.shape_cast %19 : vector<16x128xbf16> to vector<2x8x128xbf16>
    "tpu.trace_start"() <{level = 10 : i32, message = "bqd,bkd->bqk"}> : () -> ()
    %cst_12 = arith.constant dense<0.000000e+00> : vector<2x8x8xf32>
    %21 = tpu.matmul %16, %18, %cst_12 {dimension_numbers = #tpu.dot_dimension_numbers<[2], [2], [1], [1], [0, 0, 0, 1, 1, 1], [0], [0]>} : vector<2x8x128xbf16>, vector<2x8x128xbf16>, vector<2x8x8xf32> -> vector<2x8x8xf32>
    "tpu.trace_stop"() : () -> ()
    %cst_13 = arith.constant dense<0xFF800000> : vector<2x8xf32>
    %22 = vector.multi_reduction <maximumf>, %21, %cst_13 [2] : vector<2x8x8xf32> to vector<2x8xf32>
    %23 = vector.shape_cast %22 : vector<2x8xf32> to vector<2x8x1xf32>
    %24 = vector.broadcast %23 : vector<2x8x1xf32> to vector<2x8x8xf32>
    %25 = arith.subf %21, %24 : vector<2x8x8xf32>
    %26 = math.exp %25 : vector<2x8x8xf32>
    %cst_14 = arith.constant dense<0.000000e+00> : vector<2x8xf32>
    %27 = vector.multi_reduction <add>, %26, %cst_14 [2] : vector<2x8x8xf32> to vector<2x8xf32>
    %28 = vector.shape_cast %27 : vector<2x8xf32> to vector<2x8x1xf32>
    %29 = tpu.reciprocal %28 {approx = true} : vector<2x8x1xf32> -> vector<2x8x1xf32>
    %30 = vector.broadcast %29 : vector<2x8x1xf32> to vector<2x8x8xf32>
    %31 = arith.mulf %26, %30 : vector<2x8x8xf32>
    %32 = arith.truncf %31 : vector<2x8x8xf32> to vector<2x8x8xbf16>
    "tpu.trace_start"() <{level = 10 : i32, message = "bqk,bkd->bqd"}> : () -> ()
    %cst_15 = arith.constant dense<0.000000e+00> : vector<2x8x128xf32>
    %33 = tpu.matmul %32, %20, %cst_15 {dimension_numbers = #tpu.dot_dimension_numbers<[2], [1], [1], [2], [0, 0, 0, 1, 1, 2], [0], [0]>} : vector<2x8x8xbf16>, vector<2x8x128xbf16>, vector<2x8x128xf32> -> vector<2x8x128xf32>
    "tpu.trace_stop"() : () -> ()
    %34 = vector.shape_cast %33 : vector<2x8x128xf32> to vector<16x128xf32>
    %35 = vector.extract_strided_slice %14 {offsets = [0, 128], sizes = [16, 128], strides = [1, 1]} : vector<16x1536xbf16> to vector<16x128xbf16>
    %36 = vector.shape_cast %35 : vector<16x128xbf16> to vector<2x8x128xbf16>
    %37 = vector.extract_strided_slice %14 {offsets = [0, 640], sizes = [16, 128], strides = [1, 1]} : vector<16x1536xbf16> to vector<16x128xbf16>
    %38 = vector.shape_cast %37 : vector<16x128xbf16> to vector<2x8x128xbf16>
    %39 = vector.extract_strided_slice %14 {offsets = [0, 1152], sizes = [16, 128], strides = [1, 1]} : vector<16x1536xbf16> to vector<16x128xbf16>
    %40 = vector.shape_cast %39 : vector<16x128xbf16> to vector<2x8x128xbf16>
    "tpu.trace_start"() <{level = 10 : i32, message = "bqd,bkd->bqk"}> : () -> ()
    %cst_16 = arith.constant dense<0.000000e+00> : vector<2x8x8xf32>
    %41 = tpu.matmul %36, %38, %cst_16 {dimension_numbers = #tpu.dot_dimension_numbers<[2], [2], [1], [1], [0, 0, 0, 1, 1, 1], [0], [0]>} : vector<2x8x128xbf16>, vector<2x8x128xbf16>, vector<2x8x8xf32> -> vector<2x8x8xf32>
    "tpu.trace_stop"() : () -> ()
    %cst_17 = arith.constant dense<0xFF800000> : vector<2x8xf32>
    %42 = vector.multi_reduction <maximumf>, %41, %cst_17 [2] : vector<2x8x8xf32> to vector<2x8xf32>
    %43 = vector.shape_cast %42 : vector<2x8xf32> to vector<2x8x1xf32>
    %44 = vector.broadcast %43 : vector<2x8x1xf32> to vector<2x8x8xf32>
    %45 = arith.subf %41, %44 : vector<2x8x8xf32>
    %46 = math.exp %45 : vector<2x8x8xf32>
    %cst_18 = arith.constant dense<0.000000e+00> : vector<2x8xf32>
    %47 = vector.multi_reduction <add>, %46, %cst_18 [2] : vector<2x8x8xf32> to vector<2x8xf32>
    %48 = vector.shape_cast %47 : vector<2x8xf32> to vector<2x8x1xf32>
    %49 = tpu.reciprocal %48 {approx = true} : vector<2x8x1xf32> -> vector<2x8x1xf32>
    %50 = vector.broadcast %49 : vector<2x8x1xf32> to vector<2x8x8xf32>
    %51 = arith.mulf %46, %50 : vector<2x8x8xf32>
    %52 = arith.truncf %51 : vector<2x8x8xf32> to vector<2x8x8xbf16>
    "tpu.trace_start"() <{level = 10 : i32, message = "bqk,bkd->bqd"}> : () -> ()
    %cst_19 = arith.constant dense<0.000000e+00> : vector<2x8x128xf32>
    %53 = tpu.matmul %52, %40, %cst_19 {dimension_numbers = #tpu.dot_dimension_numbers<[2], [1], [1], [2], [0, 0, 0, 1, 1, 2], [0], [0]>} : vector<2x8x8xbf16>, vector<2x8x128xbf16>, vector<2x8x128xf32> -> vector<2x8x128xf32>
    "tpu.trace_stop"() : () -> ()
    %54 = vector.shape_cast %53 : vector<2x8x128xf32> to vector<16x128xf32>
    %55 = vector.extract_strided_slice %14 {offsets = [0, 256], sizes = [16, 128], strides = [1, 1]} : vector<16x1536xbf16> to vector<16x128xbf16>
    %56 = vector.shape_cast %55 : vector<16x128xbf16> to vector<2x8x128xbf16>
    %57 = vector.extract_strided_slice %14 {offsets = [0, 768], sizes = [16, 128], strides = [1, 1]} : vector<16x1536xbf16> to vector<16x128xbf16>
    %58 = vector.shape_cast %57 : vector<16x128xbf16> to vector<2x8x128xbf16>
    %59 = vector.extract_strided_slice %14 {offsets = [0, 1280], sizes = [16, 128], strides = [1, 1]} : vector<16x1536xbf16> to vector<16x128xbf16>
    %60 = vector.shape_cast %59 : vector<16x128xbf16> to vector<2x8x128xbf16>
    "tpu.trace_start"() <{level = 10 : i32, message = "bqd,bkd->bqk"}> : () -> ()
    %cst_20 = arith.constant dense<0.000000e+00> : vector<2x8x8xf32>
    %61 = tpu.matmul %56, %58, %cst_20 {dimension_numbers = #tpu.dot_dimension_numbers<[2], [2], [1], [1], [0, 0, 0, 1, 1, 1], [0], [0]>} : vector<2x8x128xbf16>, vector<2x8x128xbf16>, vector<2x8x8xf32> -> vector<2x8x8xf32>
    "tpu.trace_stop"() : () -> ()
    %cst_21 = arith.constant dense<0xFF800000> : vector<2x8xf32>
    %62 = vector.multi_reduction <maximumf>, %61, %cst_21 [2] : vector<2x8x8xf32> to vector<2x8xf32>
    %63 = vector.shape_cast %62 : vector<2x8xf32> to vector<2x8x1xf32>
    %64 = vector.broadcast %63 : vector<2x8x1xf32> to vector<2x8x8xf32>
    %65 = arith.subf %61, %64 : vector<2x8x8xf32>
    %66 = math.exp %65 : vector<2x8x8xf32>
    %cst_22 = arith.constant dense<0.000000e+00> : vector<2x8xf32>
    %67 = vector.multi_reduction <add>, %66, %cst_22 [2] : vector<2x8x8xf32> to vector<2x8xf32>
    %68 = vector.shape_cast %67 : vector<2x8xf32> to vector<2x8x1xf32>
    %69 = tpu.reciprocal %68 {approx = true} : vector<2x8x1xf32> -> vector<2x8x1xf32>
    %70 = vector.broadcast %69 : vector<2x8x1xf32> to vector<2x8x8xf32>
    %71 = arith.mulf %66, %70 : vector<2x8x8xf32>
    %72 = arith.truncf %71 : vector<2x8x8xf32> to vector<2x8x8xbf16>
    "tpu.trace_start"() <{level = 10 : i32, message = "bqk,bkd->bqd"}> : () -> ()
    %cst_23 = arith.constant dense<0.000000e+00> : vector<2x8x128xf32>
    %73 = tpu.matmul %72, %60, %cst_23 {dimension_numbers = #tpu.dot_dimension_numbers<[2], [1], [1], [2], [0, 0, 0, 1, 1, 2], [0], [0]>} : vector<2x8x8xbf16>, vector<2x8x128xbf16>, vector<2x8x128xf32> -> vector<2x8x128xf32>
    "tpu.trace_stop"() : () -> ()
    %74 = vector.shape_cast %73 : vector<2x8x128xf32> to vector<16x128xf32>
    %75 = vector.extract_strided_slice %14 {offsets = [0, 384], sizes = [16, 128], strides = [1, 1]} : vector<16x1536xbf16> to vector<16x128xbf16>
    %76 = vector.shape_cast %75 : vector<16x128xbf16> to vector<2x8x128xbf16>
    %77 = vector.extract_strided_slice %14 {offsets = [0, 896], sizes = [16, 128], strides = [1, 1]} : vector<16x1536xbf16> to vector<16x128xbf16>
    %78 = vector.shape_cast %77 : vector<16x128xbf16> to vector<2x8x128xbf16>
    %79 = vector.extract_strided_slice %14 {offsets = [0, 1408], sizes = [16, 128], strides = [1, 1]} : vector<16x1536xbf16> to vector<16x128xbf16>
    %80 = vector.shape_cast %79 : vector<16x128xbf16> to vector<2x8x128xbf16>
    "tpu.trace_start"() <{level = 10 : i32, message = "bqd,bkd->bqk"}> : () -> ()
    %cst_24 = arith.constant dense<0.000000e+00> : vector<2x8x8xf32>
    %81 = tpu.matmul %76, %78, %cst_24 {dimension_numbers = #tpu.dot_dimension_numbers<[2], [2], [1], [1], [0, 0, 0, 1, 1, 1], [0], [0]>} : vector<2x8x128xbf16>, vector<2x8x128xbf16>, vector<2x8x8xf32> -> vector<2x8x8xf32>
    "tpu.trace_stop"() : () -> ()
    %cst_25 = arith.constant dense<0xFF800000> : vector<2x8xf32>
    %82 = vector.multi_reduction <maximumf>, %81, %cst_25 [2] : vector<2x8x8xf32> to vector<2x8xf32>
    %83 = vector.shape_cast %82 : vector<2x8xf32> to vector<2x8x1xf32>
    %84 = vector.broadcast %83 : vector<2x8x1xf32> to vector<2x8x8xf32>
    %85 = arith.subf %81, %84 : vector<2x8x8xf32>
    %86 = math.exp %85 : vector<2x8x8xf32>
    %cst_26 = arith.constant dense<0.000000e+00> : vector<2x8xf32>
    %87 = vector.multi_reduction <add>, %86, %cst_26 [2] : vector<2x8x8xf32> to vector<2x8xf32>
    %88 = vector.shape_cast %87 : vector<2x8xf32> to vector<2x8x1xf32>
    %89 = tpu.reciprocal %88 {approx = true} : vector<2x8x1xf32> -> vector<2x8x1xf32>
    %90 = vector.broadcast %89 : vector<2x8x1xf32> to vector<2x8x8xf32>
    %91 = arith.mulf %86, %90 : vector<2x8x8xf32>
    %92 = arith.truncf %91 : vector<2x8x8xf32> to vector<2x8x8xbf16>
    "tpu.trace_start"() <{level = 10 : i32, message = "bqk,bkd->bqd"}> : () -> ()
    %cst_27 = arith.constant dense<0.000000e+00> : vector<2x8x128xf32>
    %93 = tpu.matmul %92, %80, %cst_27 {dimension_numbers = #tpu.dot_dimension_numbers<[2], [1], [1], [2], [0, 0, 0, 1, 1, 2], [0], [0]>} : vector<2x8x8xbf16>, vector<2x8x128xbf16>, vector<2x8x128xf32> -> vector<2x8x128xf32>
    "tpu.trace_stop"() : () -> ()
    %94 = vector.shape_cast %93 : vector<2x8x128xf32> to vector<16x128xf32>
    %95 = tpu.concatenate %34, %54, %74, %94 in 1 : vector<16x128xf32>, vector<16x128xf32>, vector<16x128xf32>, vector<16x128xf32> -> vector<16x512xf32>
    %96 = arith.truncf %95 : vector<16x512xf32> to vector<16x512xbf16>
    %c0_28 = arith.constant 0 : index
    %c0_29 = arith.constant 0 : index
    %c0_30 = arith.constant 0 : index
    %97 = vector.load %arg5[%c0_28, %c0_29, %c0_30] : memref<2x512x128xbf16, #tpu.memory_space<vmem>>, vector<1x512x128xbf16>
    %98 = vector.shape_cast %97 : vector<1x512x128xbf16> to vector<512x128xbf16>
    %cst_31 = arith.constant dense<0.000000e+00> : vector<16x128xf32>
    %99 = tpu.matmul %96, %98, %cst_31 {dimension_numbers = #tpu.dot_dimension_numbers<[1], [0], [0], [1], [0, 0, 1, 1], [], []>} : vector<16x512xbf16>, vector<512x128xbf16>, vector<16x128xf32> -> vector<16x128xf32>
    %c0_32 = arith.constant 0 : index
    %c0_33 = arith.constant 0 : index
    %c0_34 = arith.constant 0 : index
    %100 = vector.load %arg6[%c0_32, %c0_33, %c0_34] : memref<2x1x128xf32, #tpu.memory_space<vmem>>, vector<1x1x128xf32>
    %101 = vector.shape_cast %100 : vector<1x1x128xf32> to vector<1x128xf32>
    %102 = vector.broadcast %101 : vector<1x128xf32> to vector<16x128xf32>
    %103 = arith.addf %99, %102 : vector<16x128xf32>
    %104 = arith.addf %5, %103 : vector<16x128xf32>
    %c0_35 = arith.constant 0 : index
    %c0_36 = arith.constant 0 : index
    %c0_37 = arith.constant 0 : index
    %105 = vector.load %arg11[%c0_35, %c0_36, %c0_37] : memref<2x1x128xf32, #tpu.memory_space<vmem>>, vector<1x1x128xf32>
    %106 = vector.shape_cast %105 : vector<1x1x128xf32> to vector<1x128xf32>
    %c0_38 = arith.constant 0 : index
    %c0_39 = arith.constant 0 : index
    %c0_40 = arith.constant 0 : index
    %107 = vector.load %arg12[%c0_38, %c0_39, %c0_40] : memref<2x1x128xf32, #tpu.memory_space<vmem>>, vector<1x1x128xf32>
    %108 = vector.shape_cast %107 : vector<1x1x128xf32> to vector<1x128xf32>
    %cst_41 = arith.constant dense<0.000000e+00> : vector<16xf32>
    %109 = vector.multi_reduction <add>, %104, %cst_41 [1] : vector<16x128xf32> to vector<16xf32>
    %110 = vector.shape_cast %109 : vector<16xf32> to vector<16x1xf32>
    %cst_42 = arith.constant 3.125000e-02 : f32
    %111 = vector.broadcast %cst_42 : f32 to vector<16x1xf32>
    %112 = arith.mulf %110, %111 : vector<16x1xf32>
    %113 = arith.mulf %104, %104 : vector<16x128xf32>
    %cst_43 = arith.constant dense<0.000000e+00> : vector<16xf32>
    %114 = vector.multi_reduction <add>, %113, %cst_43 [1] : vector<16x128xf32> to vector<16xf32>
    %115 = vector.shape_cast %114 : vector<16xf32> to vector<16x1xf32>
    %cst_44 = arith.constant 3.125000e-02 : f32
    %116 = vector.broadcast %cst_44 : f32 to vector<16x1xf32>
    %117 = arith.mulf %115, %116 : vector<16x1xf32>
    %118 = arith.mulf %112, %112 : vector<16x1xf32>
    %119 = arith.subf %117, %118 : vector<16x1xf32>
    %120 = vector.broadcast %112 : vector<16x1xf32> to vector<16x128xf32>
    %121 = arith.subf %104, %120 : vector<16x128xf32>
    %cst_45 = arith.constant 9.99999974E-6 : f32
    %122 = vector.broadcast %cst_45 : f32 to vector<16x1xf32>
    %123 = arith.addf %119, %122 : vector<16x1xf32>
    %124 = math.rsqrt %123 : vector<16x1xf32>
    %125 = vector.broadcast %124 : vector<16x1xf32> to vector<16x128xf32>
    %126 = arith.mulf %121, %125 : vector<16x128xf32>
    %127 = vector.broadcast %106 : vector<1x128xf32> to vector<16x128xf32>
    %128 = arith.mulf %126, %127 : vector<16x128xf32>
    %129 = vector.broadcast %108 : vector<1x128xf32> to vector<16x128xf32>
    %130 = arith.addf %128, %129 : vector<16x128xf32>
    %131 = arith.truncf %130 : vector<16x128xf32> to vector<16x128xbf16>
    %c0_46 = arith.constant 0 : index
    %c0_47 = arith.constant 0 : index
    %c0_48 = arith.constant 0 : index
    %132 = vector.load %arg7[%c0_46, %c0_47, %c0_48] : memref<2x128x2048xbf16, #tpu.memory_space<vmem>>, vector<1x128x2048xbf16>
    %133 = vector.shape_cast %132 : vector<1x128x2048xbf16> to vector<128x2048xbf16>
    %cst_49 = arith.constant dense<0.000000e+00> : vector<16x2048xf32>
    %134 = tpu.matmul %131, %133, %cst_49 {dimension_numbers = #tpu.dot_dimension_numbers<[1], [0], [0], [1], [0, 0, 1, 1], [], []>} : vector<16x128xbf16>, vector<128x2048xbf16>, vector<16x2048xf32> -> vector<16x2048xf32>
    %c0_50 = arith.constant 0 : index
    %c0_51 = arith.constant 0 : index
    %c0_52 = arith.constant 0 : index
    %135 = vector.load %arg8[%c0_50, %c0_51, %c0_52] : memref<2x1x2048xf32, #tpu.memory_space<vmem>>, vector<1x1x2048xf32>
    %136 = vector.shape_cast %135 : vector<1x1x2048xf32> to vector<1x2048xf32>
    %137 = vector.broadcast %136 : vector<1x2048xf32> to vector<16x2048xf32>
    %138 = arith.addf %134, %137 : vector<16x2048xf32>
    %cst_53 = arith.constant 0.000000e+00 : f32
    %139 = vector.broadcast %cst_53 : f32 to vector<16x2048xf32>
    %140 = arith.maximumf %138, %139 : vector<16x2048xf32>
    %141 = arith.truncf %140 : vector<16x2048xf32> to vector<16x2048xbf16>
    %c0_54 = arith.constant 0 : index
    %c0_55 = arith.constant 0 : index
    %c0_56 = arith.constant 0 : index
    %142 = vector.load %arg9[%c0_54, %c0_55, %c0_56] : memref<2x2048x128xbf16, #tpu.memory_space<vmem>>, vector<1x2048x128xbf16>
    %143 = vector.shape_cast %142 : vector<1x2048x128xbf16> to vector<2048x128xbf16>
    %cst_57 = arith.constant dense<0.000000e+00> : vector<16x128xf32>
    %144 = tpu.matmul %141, %143, %cst_57 {dimension_numbers = #tpu.dot_dimension_numbers<[1], [0], [0], [1], [0, 0, 1, 1], [], []>} : vector<16x2048xbf16>, vector<2048x128xbf16>, vector<16x128xf32> -> vector<16x128xf32>
    %c0_58 = arith.constant 0 : index
    %c0_59 = arith.constant 0 : index
    %c0_60 = arith.constant 0 : index
    %145 = vector.load %arg10[%c0_58, %c0_59, %c0_60] : memref<2x1x128xf32, #tpu.memory_space<vmem>>, vector<1x1x128xf32>
    %146 = vector.shape_cast %145 : vector<1x1x128xf32> to vector<1x128xf32>
    %147 = vector.broadcast %146 : vector<1x128xf32> to vector<16x128xf32>
    %148 = arith.addf %144, %147 : vector<16x128xf32>
    %149 = arith.addf %130, %148 : vector<16x128xf32>
    %c0_61 = arith.constant 0 : index
    %c0_62 = arith.constant 0 : index
    %c0_63 = arith.constant 0 : index
    %150 = vector.load %arg13[%c0_61, %c0_62, %c0_63] : memref<2x1x128xf32, #tpu.memory_space<vmem>>, vector<1x1x128xf32>
    %151 = vector.shape_cast %150 : vector<1x1x128xf32> to vector<1x128xf32>
    %c0_64 = arith.constant 0 : index
    %c0_65 = arith.constant 0 : index
    %c0_66 = arith.constant 0 : index
    %152 = vector.load %arg14[%c0_64, %c0_65, %c0_66] : memref<2x1x128xf32, #tpu.memory_space<vmem>>, vector<1x1x128xf32>
    %153 = vector.shape_cast %152 : vector<1x1x128xf32> to vector<1x128xf32>
    %cst_67 = arith.constant dense<0.000000e+00> : vector<16xf32>
    %154 = vector.multi_reduction <add>, %149, %cst_67 [1] : vector<16x128xf32> to vector<16xf32>
    %155 = vector.shape_cast %154 : vector<16xf32> to vector<16x1xf32>
    %cst_68 = arith.constant 3.125000e-02 : f32
    %156 = vector.broadcast %cst_68 : f32 to vector<16x1xf32>
    %157 = arith.mulf %155, %156 : vector<16x1xf32>
    %158 = arith.mulf %149, %149 : vector<16x128xf32>
    %cst_69 = arith.constant dense<0.000000e+00> : vector<16xf32>
    %159 = vector.multi_reduction <add>, %158, %cst_69 [1] : vector<16x128xf32> to vector<16xf32>
    %160 = vector.shape_cast %159 : vector<16xf32> to vector<16x1xf32>
    %cst_70 = arith.constant 3.125000e-02 : f32
    %161 = vector.broadcast %cst_70 : f32 to vector<16x1xf32>
    %162 = arith.mulf %160, %161 : vector<16x1xf32>
    %163 = arith.mulf %157, %157 : vector<16x1xf32>
    %164 = arith.subf %162, %163 : vector<16x1xf32>
    %165 = vector.broadcast %157 : vector<16x1xf32> to vector<16x128xf32>
    %166 = arith.subf %149, %165 : vector<16x128xf32>
    %cst_71 = arith.constant 9.99999974E-6 : f32
    %167 = vector.broadcast %cst_71 : f32 to vector<16x1xf32>
    %168 = arith.addf %164, %167 : vector<16x1xf32>
    %169 = math.rsqrt %168 : vector<16x1xf32>
    %170 = vector.broadcast %169 : vector<16x1xf32> to vector<16x128xf32>
    %171 = arith.mulf %166, %170 : vector<16x128xf32>
    %172 = vector.broadcast %151 : vector<1x128xf32> to vector<16x128xf32>
    %173 = arith.mulf %171, %172 : vector<16x128xf32>
    %174 = vector.broadcast %153 : vector<1x128xf32> to vector<16x128xf32>
    %175 = arith.addf %173, %174 : vector<16x128xf32>
    %176 = arith.truncf %175 : vector<16x128xf32> to vector<16x128xbf16>
    %c1 = arith.constant 1 : index
    %c0_72 = arith.constant 0 : index
    %c0_73 = arith.constant 0 : index
    %177 = vector.load %arg3[%c1, %c0_72, %c0_73] : memref<2x128x1536xbf16, #tpu.memory_space<vmem>>, vector<1x128x1536xbf16>
    %178 = vector.shape_cast %177 : vector<1x128x1536xbf16> to vector<128x1536xbf16>
    %cst_74 = arith.constant dense<0.000000e+00> : vector<16x1536xf32>
    %179 = tpu.matmul %176, %178, %cst_74 {dimension_numbers = #tpu.dot_dimension_numbers<[1], [0], [0], [1], [0, 0, 1, 1], [], []>} : vector<16x128xbf16>, vector<128x1536xbf16>, vector<16x1536xf32> -> vector<16x1536xf32>
    %c1_75 = arith.constant 1 : index
    %c0_76 = arith.constant 0 : index
    %c0_77 = arith.constant 0 : index
    %180 = vector.load %arg4[%c1_75, %c0_76, %c0_77] : memref<2x1x1536xf32, #tpu.memory_space<vmem>>, vector<1x1x1536xf32>
    %181 = vector.shape_cast %180 : vector<1x1x1536xf32> to vector<1x1536xf32>
    %182 = vector.broadcast %181 : vector<1x1536xf32> to vector<16x1536xf32>
    %183 = arith.addf %179, %182 : vector<16x1536xf32>
    %184 = arith.truncf %183 : vector<16x1536xf32> to vector<16x1536xbf16>
    %185 = vector.extract_strided_slice %184 {offsets = [0, 0], sizes = [16, 128], strides = [1, 1]} : vector<16x1536xbf16> to vector<16x128xbf16>
    %186 = vector.shape_cast %185 : vector<16x128xbf16> to vector<2x8x128xbf16>
    %187 = vector.extract_strided_slice %184 {offsets = [0, 512], sizes = [16, 128], strides = [1, 1]} : vector<16x1536xbf16> to vector<16x128xbf16>
    %188 = vector.shape_cast %187 : vector<16x128xbf16> to vector<2x8x128xbf16>
    %189 = vector.extract_strided_slice %184 {offsets = [0, 1024], sizes = [16, 128], strides = [1, 1]} : vector<16x1536xbf16> to vector<16x128xbf16>
    %190 = vector.shape_cast %189 : vector<16x128xbf16> to vector<2x8x128xbf16>
    "tpu.trace_start"() <{level = 10 : i32, message = "bqd,bkd->bqk"}> : () -> ()
    %cst_78 = arith.constant dense<0.000000e+00> : vector<2x8x8xf32>
    %191 = tpu.matmul %186, %188, %cst_78 {dimension_numbers = #tpu.dot_dimension_numbers<[2], [2], [1], [1], [0, 0, 0, 1, 1, 1], [0], [0]>} : vector<2x8x128xbf16>, vector<2x8x128xbf16>, vector<2x8x8xf32> -> vector<2x8x8xf32>
    "tpu.trace_stop"() : () -> ()
    %cst_79 = arith.constant dense<0xFF800000> : vector<2x8xf32>
    %192 = vector.multi_reduction <maximumf>, %191, %cst_79 [2] : vector<2x8x8xf32> to vector<2x8xf32>
    %193 = vector.shape_cast %192 : vector<2x8xf32> to vector<2x8x1xf32>
    %194 = vector.broadcast %193 : vector<2x8x1xf32> to vector<2x8x8xf32>
    %195 = arith.subf %191, %194 : vector<2x8x8xf32>
    %196 = math.exp %195 : vector<2x8x8xf32>
    %cst_80 = arith.constant dense<0.000000e+00> : vector<2x8xf32>
    %197 = vector.multi_reduction <add>, %196, %cst_80 [2] : vector<2x8x8xf32> to vector<2x8xf32>
    %198 = vector.shape_cast %197 : vector<2x8xf32> to vector<2x8x1xf32>
    %199 = tpu.reciprocal %198 {approx = true} : vector<2x8x1xf32> -> vector<2x8x1xf32>
    %200 = vector.broadcast %199 : vector<2x8x1xf32> to vector<2x8x8xf32>
    %201 = arith.mulf %196, %200 : vector<2x8x8xf32>
    %202 = arith.truncf %201 : vector<2x8x8xf32> to vector<2x8x8xbf16>
    "tpu.trace_start"() <{level = 10 : i32, message = "bqk,bkd->bqd"}> : () -> ()
    %cst_81 = arith.constant dense<0.000000e+00> : vector<2x8x128xf32>
    %203 = tpu.matmul %202, %190, %cst_81 {dimension_numbers = #tpu.dot_dimension_numbers<[2], [1], [1], [2], [0, 0, 0, 1, 1, 2], [0], [0]>} : vector<2x8x8xbf16>, vector<2x8x128xbf16>, vector<2x8x128xf32> -> vector<2x8x128xf32>
    "tpu.trace_stop"() : () -> ()
    %204 = vector.shape_cast %203 : vector<2x8x128xf32> to vector<16x128xf32>
    %205 = vector.extract_strided_slice %184 {offsets = [0, 128], sizes = [16, 128], strides = [1, 1]} : vector<16x1536xbf16> to vector<16x128xbf16>
    %206 = vector.shape_cast %205 : vector<16x128xbf16> to vector<2x8x128xbf16>
    %207 = vector.extract_strided_slice %184 {offsets = [0, 640], sizes = [16, 128], strides = [1, 1]} : vector<16x1536xbf16> to vector<16x128xbf16>
    %208 = vector.shape_cast %207 : vector<16x128xbf16> to vector<2x8x128xbf16>
    %209 = vector.extract_strided_slice %184 {offsets = [0, 1152], sizes = [16, 128], strides = [1, 1]} : vector<16x1536xbf16> to vector<16x128xbf16>
    %210 = vector.shape_cast %209 : vector<16x128xbf16> to vector<2x8x128xbf16>
    "tpu.trace_start"() <{level = 10 : i32, message = "bqd,bkd->bqk"}> : () -> ()
    %cst_82 = arith.constant dense<0.000000e+00> : vector<2x8x8xf32>
    %211 = tpu.matmul %206, %208, %cst_82 {dimension_numbers = #tpu.dot_dimension_numbers<[2], [2], [1], [1], [0, 0, 0, 1, 1, 1], [0], [0]>} : vector<2x8x128xbf16>, vector<2x8x128xbf16>, vector<2x8x8xf32> -> vector<2x8x8xf32>
    "tpu.trace_stop"() : () -> ()
    %cst_83 = arith.constant dense<0xFF800000> : vector<2x8xf32>
    %212 = vector.multi_reduction <maximumf>, %211, %cst_83 [2] : vector<2x8x8xf32> to vector<2x8xf32>
    %213 = vector.shape_cast %212 : vector<2x8xf32> to vector<2x8x1xf32>
    %214 = vector.broadcast %213 : vector<2x8x1xf32> to vector<2x8x8xf32>
    %215 = arith.subf %211, %214 : vector<2x8x8xf32>
    %216 = math.exp %215 : vector<2x8x8xf32>
    %cst_84 = arith.constant dense<0.000000e+00> : vector<2x8xf32>
    %217 = vector.multi_reduction <add>, %216, %cst_84 [2] : vector<2x8x8xf32> to vector<2x8xf32>
    %218 = vector.shape_cast %217 : vector<2x8xf32> to vector<2x8x1xf32>
    %219 = tpu.reciprocal %218 {approx = true} : vector<2x8x1xf32> -> vector<2x8x1xf32>
    %220 = vector.broadcast %219 : vector<2x8x1xf32> to vector<2x8x8xf32>
    %221 = arith.mulf %216, %220 : vector<2x8x8xf32>
    %222 = arith.truncf %221 : vector<2x8x8xf32> to vector<2x8x8xbf16>
    "tpu.trace_start"() <{level = 10 : i32, message = "bqk,bkd->bqd"}> : () -> ()
    %cst_85 = arith.constant dense<0.000000e+00> : vector<2x8x128xf32>
    %223 = tpu.matmul %222, %210, %cst_85 {dimension_numbers = #tpu.dot_dimension_numbers<[2], [1], [1], [2], [0, 0, 0, 1, 1, 2], [0], [0]>} : vector<2x8x8xbf16>, vector<2x8x128xbf16>, vector<2x8x128xf32> -> vector<2x8x128xf32>
    "tpu.trace_stop"() : () -> ()
    %224 = vector.shape_cast %223 : vector<2x8x128xf32> to vector<16x128xf32>
    %225 = vector.extract_strided_slice %184 {offsets = [0, 256], sizes = [16, 128], strides = [1, 1]} : vector<16x1536xbf16> to vector<16x128xbf16>
    %226 = vector.shape_cast %225 : vector<16x128xbf16> to vector<2x8x128xbf16>
    %227 = vector.extract_strided_slice %184 {offsets = [0, 768], sizes = [16, 128], strides = [1, 1]} : vector<16x1536xbf16> to vector<16x128xbf16>
    %228 = vector.shape_cast %227 : vector<16x128xbf16> to vector<2x8x128xbf16>
    %229 = vector.extract_strided_slice %184 {offsets = [0, 1280], sizes = [16, 128], strides = [1, 1]} : vector<16x1536xbf16> to vector<16x128xbf16>
    %230 = vector.shape_cast %229 : vector<16x128xbf16> to vector<2x8x128xbf16>
    "tpu.trace_start"() <{level = 10 : i32, message = "bqd,bkd->bqk"}> : () -> ()
    %cst_86 = arith.constant dense<0.000000e+00> : vector<2x8x8xf32>
    %231 = tpu.matmul %226, %228, %cst_86 {dimension_numbers = #tpu.dot_dimension_numbers<[2], [2], [1], [1], [0, 0, 0, 1, 1, 1], [0], [0]>} : vector<2x8x128xbf16>, vector<2x8x128xbf16>, vector<2x8x8xf32> -> vector<2x8x8xf32>
    "tpu.trace_stop"() : () -> ()
    %cst_87 = arith.constant dense<0xFF800000> : vector<2x8xf32>
    %232 = vector.multi_reduction <maximumf>, %231, %cst_87 [2] : vector<2x8x8xf32> to vector<2x8xf32>
    %233 = vector.shape_cast %232 : vector<2x8xf32> to vector<2x8x1xf32>
    %234 = vector.broadcast %233 : vector<2x8x1xf32> to vector<2x8x8xf32>
    %235 = arith.subf %231, %234 : vector<2x8x8xf32>
    %236 = math.exp %235 : vector<2x8x8xf32>
    %cst_88 = arith.constant dense<0.000000e+00> : vector<2x8xf32>
    %237 = vector.multi_reduction <add>, %236, %cst_88 [2] : vector<2x8x8xf32> to vector<2x8xf32>
    %238 = vector.shape_cast %237 : vector<2x8xf32> to vector<2x8x1xf32>
    %239 = tpu.reciprocal %238 {approx = true} : vector<2x8x1xf32> -> vector<2x8x1xf32>
    %240 = vector.broadcast %239 : vector<2x8x1xf32> to vector<2x8x8xf32>
    %241 = arith.mulf %236, %240 : vector<2x8x8xf32>
    %242 = arith.truncf %241 : vector<2x8x8xf32> to vector<2x8x8xbf16>
    "tpu.trace_start"() <{level = 10 : i32, message = "bqk,bkd->bqd"}> : () -> ()
    %cst_89 = arith.constant dense<0.000000e+00> : vector<2x8x128xf32>
    %243 = tpu.matmul %242, %230, %cst_89 {dimension_numbers = #tpu.dot_dimension_numbers<[2], [1], [1], [2], [0, 0, 0, 1, 1, 2], [0], [0]>} : vector<2x8x8xbf16>, vector<2x8x128xbf16>, vector<2x8x128xf32> -> vector<2x8x128xf32>
    "tpu.trace_stop"() : () -> ()
    %244 = vector.shape_cast %243 : vector<2x8x128xf32> to vector<16x128xf32>
    %245 = vector.extract_strided_slice %184 {offsets = [0, 384], sizes = [16, 128], strides = [1, 1]} : vector<16x1536xbf16> to vector<16x128xbf16>
    %246 = vector.shape_cast %245 : vector<16x128xbf16> to vector<2x8x128xbf16>
    %247 = vector.extract_strided_slice %184 {offsets = [0, 896], sizes = [16, 128], strides = [1, 1]} : vector<16x1536xbf16> to vector<16x128xbf16>
    %248 = vector.shape_cast %247 : vector<16x128xbf16> to vector<2x8x128xbf16>
    %249 = vector.extract_strided_slice %184 {offsets = [0, 1408], sizes = [16, 128], strides = [1, 1]} : vector<16x1536xbf16> to vector<16x128xbf16>
    %250 = vector.shape_cast %249 : vector<16x128xbf16> to vector<2x8x128xbf16>
    "tpu.trace_start"() <{level = 10 : i32, message = "bqd,bkd->bqk"}> : () -> ()
    %cst_90 = arith.constant dense<0.000000e+00> : vector<2x8x8xf32>
    %251 = tpu.matmul %246, %248, %cst_90 {dimension_numbers = #tpu.dot_dimension_numbers<[2], [2], [1], [1], [0, 0, 0, 1, 1, 1], [0], [0]>} : vector<2x8x128xbf16>, vector<2x8x128xbf16>, vector<2x8x8xf32> -> vector<2x8x8xf32>
    "tpu.trace_stop"() : () -> ()
    %cst_91 = arith.constant dense<0xFF800000> : vector<2x8xf32>
    %252 = vector.multi_reduction <maximumf>, %251, %cst_91 [2] : vector<2x8x8xf32> to vector<2x8xf32>
    %253 = vector.shape_cast %252 : vector<2x8xf32> to vector<2x8x1xf32>
    %254 = vector.broadcast %253 : vector<2x8x1xf32> to vector<2x8x8xf32>
    %255 = arith.subf %251, %254 : vector<2x8x8xf32>
    %256 = math.exp %255 : vector<2x8x8xf32>
    %cst_92 = arith.constant dense<0.000000e+00> : vector<2x8xf32>
    %257 = vector.multi_reduction <add>, %256, %cst_92 [2] : vector<2x8x8xf32> to vector<2x8xf32>
    %258 = vector.shape_cast %257 : vector<2x8xf32> to vector<2x8x1xf32>
    %259 = tpu.reciprocal %258 {approx = true} : vector<2x8x1xf32> -> vector<2x8x1xf32>
    %260 = vector.broadcast %259 : vector<2x8x1xf32> to vector<2x8x8xf32>
    %261 = arith.mulf %256, %260 : vector<2x8x8xf32>
    %262 = arith.truncf %261 : vector<2x8x8xf32> to vector<2x8x8xbf16>
    "tpu.trace_start"() <{level = 10 : i32, message = "bqk,bkd->bqd"}> : () -> ()
    %cst_93 = arith.constant dense<0.000000e+00> : vector<2x8x128xf32>
    %263 = tpu.matmul %262, %250, %cst_93 {dimension_numbers = #tpu.dot_dimension_numbers<[2], [1], [1], [2], [0, 0, 0, 1, 1, 2], [0], [0]>} : vector<2x8x8xbf16>, vector<2x8x128xbf16>, vector<2x8x128xf32> -> vector<2x8x128xf32>
    "tpu.trace_stop"() : () -> ()
    %264 = vector.shape_cast %263 : vector<2x8x128xf32> to vector<16x128xf32>
    %265 = tpu.concatenate %204, %224, %244, %264 in 1 : vector<16x128xf32>, vector<16x128xf32>, vector<16x128xf32>, vector<16x128xf32> -> vector<16x512xf32>
    %266 = arith.truncf %265 : vector<16x512xf32> to vector<16x512xbf16>
    %c1_94 = arith.constant 1 : index
    %c0_95 = arith.constant 0 : index
    %c0_96 = arith.constant 0 : index
    %267 = vector.load %arg5[%c1_94, %c0_95, %c0_96] : memref<2x512x128xbf16, #tpu.memory_space<vmem>>, vector<1x512x128xbf16>
    %268 = vector.shape_cast %267 : vector<1x512x128xbf16> to vector<512x128xbf16>
    %cst_97 = arith.constant dense<0.000000e+00> : vector<16x128xf32>
    %269 = tpu.matmul %266, %268, %cst_97 {dimension_numbers = #tpu.dot_dimension_numbers<[1], [0], [0], [1], [0, 0, 1, 1], [], []>} : vector<16x512xbf16>, vector<512x128xbf16>, vector<16x128xf32> -> vector<16x128xf32>
    %c1_98 = arith.constant 1 : index
    %c0_99 = arith.constant 0 : index
    %c0_100 = arith.constant 0 : index
    %270 = vector.load %arg6[%c1_98, %c0_99, %c0_100] : memref<2x1x128xf32, #tpu.memory_space<vmem>>, vector<1x1x128xf32>
    %271 = vector.shape_cast %270 : vector<1x1x128xf32> to vector<1x128xf32>
    %272 = vector.broadcast %271 : vector<1x128xf32> to vector<16x128xf32>
    %273 = arith.addf %269, %272 : vector<16x128xf32>
    %274 = arith.addf %175, %273 : vector<16x128xf32>
    %c1_101 = arith.constant 1 : index
    %c0_102 = arith.constant 0 : index
    %c0_103 = arith.constant 0 : index
    %275 = vector.load %arg11[%c1_101, %c0_102, %c0_103] : memref<2x1x128xf32, #tpu.memory_space<vmem>>, vector<1x1x128xf32>
    %276 = vector.shape_cast %275 : vector<1x1x128xf32> to vector<1x128xf32>
    %c1_104 = arith.constant 1 : index
    %c0_105 = arith.constant 0 : index
    %c0_106 = arith.constant 0 : index
    %277 = vector.load %arg12[%c1_104, %c0_105, %c0_106] : memref<2x1x128xf32, #tpu.memory_space<vmem>>, vector<1x1x128xf32>
    %278 = vector.shape_cast %277 : vector<1x1x128xf32> to vector<1x128xf32>
    %cst_107 = arith.constant dense<0.000000e+00> : vector<16xf32>
    %279 = vector.multi_reduction <add>, %274, %cst_107 [1] : vector<16x128xf32> to vector<16xf32>
    %280 = vector.shape_cast %279 : vector<16xf32> to vector<16x1xf32>
    %cst_108 = arith.constant 3.125000e-02 : f32
    %281 = vector.broadcast %cst_108 : f32 to vector<16x1xf32>
    %282 = arith.mulf %280, %281 : vector<16x1xf32>
    %283 = arith.mulf %274, %274 : vector<16x128xf32>
    %cst_109 = arith.constant dense<0.000000e+00> : vector<16xf32>
    %284 = vector.multi_reduction <add>, %283, %cst_109 [1] : vector<16x128xf32> to vector<16xf32>
    %285 = vector.shape_cast %284 : vector<16xf32> to vector<16x1xf32>
    %cst_110 = arith.constant 3.125000e-02 : f32
    %286 = vector.broadcast %cst_110 : f32 to vector<16x1xf32>
    %287 = arith.mulf %285, %286 : vector<16x1xf32>
    %288 = arith.mulf %282, %282 : vector<16x1xf32>
    %289 = arith.subf %287, %288 : vector<16x1xf32>
    %290 = vector.broadcast %282 : vector<16x1xf32> to vector<16x128xf32>
    %291 = arith.subf %274, %290 : vector<16x128xf32>
    %cst_111 = arith.constant 9.99999974E-6 : f32
    %292 = vector.broadcast %cst_111 : f32 to vector<16x1xf32>
    %293 = arith.addf %289, %292 : vector<16x1xf32>
    %294 = math.rsqrt %293 : vector<16x1xf32>
    %295 = vector.broadcast %294 : vector<16x1xf32> to vector<16x128xf32>
    %296 = arith.mulf %291, %295 : vector<16x128xf32>
    %297 = vector.broadcast %276 : vector<1x128xf32> to vector<16x128xf32>
    %298 = arith.mulf %296, %297 : vector<16x128xf32>
    %299 = vector.broadcast %278 : vector<1x128xf32> to vector<16x128xf32>
    %300 = arith.addf %298, %299 : vector<16x128xf32>
    %301 = arith.truncf %300 : vector<16x128xf32> to vector<16x128xbf16>
    %c1_112 = arith.constant 1 : index
    %c0_113 = arith.constant 0 : index
    %c0_114 = arith.constant 0 : index
    %302 = vector.load %arg7[%c1_112, %c0_113, %c0_114] : memref<2x128x2048xbf16, #tpu.memory_space<vmem>>, vector<1x128x2048xbf16>
    %303 = vector.shape_cast %302 : vector<1x128x2048xbf16> to vector<128x2048xbf16>
    %cst_115 = arith.constant dense<0.000000e+00> : vector<16x2048xf32>
    %304 = tpu.matmul %301, %303, %cst_115 {dimension_numbers = #tpu.dot_dimension_numbers<[1], [0], [0], [1], [0, 0, 1, 1], [], []>} : vector<16x128xbf16>, vector<128x2048xbf16>, vector<16x2048xf32> -> vector<16x2048xf32>
    %c1_116 = arith.constant 1 : index
    %c0_117 = arith.constant 0 : index
    %c0_118 = arith.constant 0 : index
    %305 = vector.load %arg8[%c1_116, %c0_117, %c0_118] : memref<2x1x2048xf32, #tpu.memory_space<vmem>>, vector<1x1x2048xf32>
    %306 = vector.shape_cast %305 : vector<1x1x2048xf32> to vector<1x2048xf32>
    %307 = vector.broadcast %306 : vector<1x2048xf32> to vector<16x2048xf32>
    %308 = arith.addf %304, %307 : vector<16x2048xf32>
    %cst_119 = arith.constant 0.000000e+00 : f32
    %309 = vector.broadcast %cst_119 : f32 to vector<16x2048xf32>
    %310 = arith.maximumf %308, %309 : vector<16x2048xf32>
    %311 = arith.truncf %310 : vector<16x2048xf32> to vector<16x2048xbf16>
    %c1_120 = arith.constant 1 : index
    %c0_121 = arith.constant 0 : index
    %c0_122 = arith.constant 0 : index
    %312 = vector.load %arg9[%c1_120, %c0_121, %c0_122] : memref<2x2048x128xbf16, #tpu.memory_space<vmem>>, vector<1x2048x128xbf16>
    %313 = vector.shape_cast %312 : vector<1x2048x128xbf16> to vector<2048x128xbf16>
    %cst_123 = arith.constant dense<0.000000e+00> : vector<16x128xf32>
    %314 = tpu.matmul %311, %313, %cst_123 {dimension_numbers = #tpu.dot_dimension_numbers<[1], [0], [0], [1], [0, 0, 1, 1], [], []>} : vector<16x2048xbf16>, vector<2048x128xbf16>, vector<16x128xf32> -> vector<16x128xf32>
    %c1_124 = arith.constant 1 : index
    %c0_125 = arith.constant 0 : index
    %c0_126 = arith.constant 0 : index
    %315 = vector.load %arg10[%c1_124, %c0_125, %c0_126] : memref<2x1x128xf32, #tpu.memory_space<vmem>>, vector<1x1x128xf32>
    %316 = vector.shape_cast %315 : vector<1x1x128xf32> to vector<1x128xf32>
    %317 = vector.broadcast %316 : vector<1x128xf32> to vector<16x128xf32>
    %318 = arith.addf %314, %317 : vector<16x128xf32>
    %319 = arith.addf %300, %318 : vector<16x128xf32>
    %c1_127 = arith.constant 1 : index
    %c0_128 = arith.constant 0 : index
    %c0_129 = arith.constant 0 : index
    %320 = vector.load %arg13[%c1_127, %c0_128, %c0_129] : memref<2x1x128xf32, #tpu.memory_space<vmem>>, vector<1x1x128xf32>
    %321 = vector.shape_cast %320 : vector<1x1x128xf32> to vector<1x128xf32>
    %c1_130 = arith.constant 1 : index
    %c0_131 = arith.constant 0 : index
    %c0_132 = arith.constant 0 : index
    %322 = vector.load %arg14[%c1_130, %c0_131, %c0_132] : memref<2x1x128xf32, #tpu.memory_space<vmem>>, vector<1x1x128xf32>
    %323 = vector.shape_cast %322 : vector<1x1x128xf32> to vector<1x128xf32>
    %cst_133 = arith.constant dense<0.000000e+00> : vector<16xf32>
    %324 = vector.multi_reduction <add>, %319, %cst_133 [1] : vector<16x128xf32> to vector<16xf32>
    %325 = vector.shape_cast %324 : vector<16xf32> to vector<16x1xf32>
    %cst_134 = arith.constant 3.125000e-02 : f32
    %326 = vector.broadcast %cst_134 : f32 to vector<16x1xf32>
    %327 = arith.mulf %325, %326 : vector<16x1xf32>
    %328 = arith.mulf %319, %319 : vector<16x128xf32>
    %cst_135 = arith.constant dense<0.000000e+00> : vector<16xf32>
    %329 = vector.multi_reduction <add>, %328, %cst_135 [1] : vector<16x128xf32> to vector<16xf32>
    %330 = vector.shape_cast %329 : vector<16xf32> to vector<16x1xf32>
    %cst_136 = arith.constant 3.125000e-02 : f32
    %331 = vector.broadcast %cst_136 : f32 to vector<16x1xf32>
    %332 = arith.mulf %330, %331 : vector<16x1xf32>
    %333 = arith.mulf %327, %327 : vector<16x1xf32>
    %334 = arith.subf %332, %333 : vector<16x1xf32>
    %335 = vector.broadcast %327 : vector<16x1xf32> to vector<16x128xf32>
    %336 = arith.subf %319, %335 : vector<16x128xf32>
    %cst_137 = arith.constant 9.99999974E-6 : f32
    %337 = vector.broadcast %cst_137 : f32 to vector<16x1xf32>
    %338 = arith.addf %334, %337 : vector<16x1xf32>
    %339 = math.rsqrt %338 : vector<16x1xf32>
    %340 = vector.broadcast %339 : vector<16x1xf32> to vector<16x128xf32>
    %341 = arith.mulf %336, %340 : vector<16x128xf32>
    %342 = vector.broadcast %321 : vector<1x128xf32> to vector<16x128xf32>
    %343 = arith.mulf %341, %342 : vector<16x128xf32>
    %344 = vector.broadcast %323 : vector<1x128xf32> to vector<16x128xf32>
    %345 = arith.addf %343, %344 : vector<16x128xf32>
    %346 = arith.truncf %345 : vector<16x128xf32> to vector<16x128xbf16>
    %c0_138 = arith.constant 0 : index
    %c0_139 = arith.constant 0 : index
    %347 = vector.load %arg15[%c0_138, %c0_139] : memref<128x128xbf16, #tpu.memory_space<vmem>>, vector<128x128xbf16>
    %cst_140 = arith.constant dense<0.000000e+00> : vector<16x128xf32>
    %348 = tpu.matmul %346, %347, %cst_140 {dimension_numbers = #tpu.dot_dimension_numbers<[1], [0], [0], [1], [0, 0, 1, 1], [], []>} : vector<16x128xbf16>, vector<128x128xbf16>, vector<16x128xf32> -> vector<16x128xf32>
    %c0_141 = arith.constant 0 : index
    %c0_142 = arith.constant 0 : index
    %349 = vector.load %arg16[%c0_141, %c0_142] : memref<1x128xf32, #tpu.memory_space<vmem>>, vector<1x128xf32>
    %350 = vector.broadcast %349 : vector<1x128xf32> to vector<16x128xf32>
    %351 = arith.addf %348, %350 : vector<16x128xf32>
    %352 = arith.negf %351 : vector<16x128xf32>
    %353 = math.exp %352 : vector<16x128xf32>
    %cst_143 = arith.constant 1.000000e+00 : f32
    %354 = vector.broadcast %cst_143 : f32 to vector<16x128xf32>
    %355 = arith.addf %354, %353 : vector<16x128xf32>
    %356 = arith.divf %354, %355 : vector<16x128xf32>
    %c0_144 = arith.constant 0 : index
    %c0_145 = arith.constant 0 : index
    %357 = vector.load %arg17[%c0_144, %c0_145] : memref<16x128xf32, #tpu.memory_space<vmem>>, vector<16x128xf32>
    tpu.vector_store %arg17[%c0_144, %c0_145], %356 {strides = array<i32>} : memref<16x128xf32, #tpu.memory_space<vmem>>, vector<16x128xf32>,
    return
  }
}

</mosaic_0001>

<llo_original>
// kernel: transformer_forward.1
$region0: #{transformer_forward.1}
  #allocation0 [shape = 'u32[]', space=smem, size = 0x4, offset = 0x4, fixed_abs, tag = 'smem constant byte address 0x4 - core index']
  #allocation1 [shape = 'u32[144,128]{1,0:T(1,128)}', space=vmem, size = 0x12000, scoped, tag = 'internal scratch']
  %s0 = inlined_call_operand.vmem [shape: bf16[16,128], index: 0, kind: input, shape index: {}]
  %s1 = inlined_call_operand.hbm [shape: bf16[128,128], index: 1, kind: input, shape index: {}]
  %s2 = inlined_call_operand.hbm [shape: f32[1,128], index: 2, kind: input, shape index: {}]
  %s3 = inlined_call_operand.hbm [shape: bf16[2,128,1536], index: 3, kind: input, shape index: {}]
  %s4 = inlined_call_operand.vmem [shape: f32[2,1,1536], index: 4, kind: input, shape index: {}]
  %s5 = inlined_call_operand.hbm [shape: bf16[2,512,128], index: 5, kind: input, shape index: {}]
  %s6 = inlined_call_operand.vmem [shape: f32[2,1,128], index: 6, kind: input, shape index: {}]
  %s7 = inlined_call_operand.hbm [shape: bf16[2,128,2048], index: 7, kind: input, shape index: {}]
  %s8 = inlined_call_operand.vmem [shape: f32[2,1,2048], index: 8, kind: input, shape index: {}]
  %s9 = inlined_call_operand.hbm [shape: bf16[2,2048,128], index: 9, kind: input, shape index: {}]
  %s10 = inlined_call_operand.vmem [shape: f32[2,1,128], index: 10, kind: input, shape index: {}]
  %s11 = inlined_call_operand.vmem [shape: f32[2,1,128], index: 11, kind: input, shape index: {}]
  %s12 = inlined_call_operand.vmem [shape: f32[2,1,128], index: 12, kind: input, shape index: {}]
  %s13 = inlined_call_operand.vmem [shape: f32[2,1,128], index: 13, kind: input, shape index: {}]
  %s14 = inlined_call_operand.vmem [shape: f32[2,1,128], index: 14, kind: input, shape index: {}]
  %s15 = inlined_call_operand.hbm [shape: bf16[128,128], index: 15, kind: input, shape index: {}]
  %s16 = inlined_call_operand.hbm [shape: f32[1,128], index: 16, kind: input, shape index: {}]
  %s17 = inlined_call_operand.vmem [shape: f32[16,128], index: 17, kind: output, shape index: {}]
  %s18 = sld [smem:[#allocation0]]
  $region110: #{transformer_forward.1} parent=0
    _
  %s20 = ssub.s32 1, %s18
  %s21 = scalar_select 0, %s20, %s18
  $region1: #{transformer_forward.1} parent=0
    #allocation2 [shape = 'u8[32768]{0}', space=vmem, size = 0x8000, scoped, tag = 'input window, operand 1, single buffered']
    #allocation3 [shape = 's32[1]{0}', space=sflag, size = 0x4, scoped, tag = 'scoped memory for transformer_forward.1']
    #allocation4 [shape = 'u8[512]{0}', space=vmem, size = 0x400, scoped, tag = 'input window, operand 2, single buffered']
    #allocation5 [shape = 's32[1]{0}', space=sflag, size = 0x4, scoped, tag = 'scoped memory for transformer_forward.1']
    #allocation6 [shape = 'u8[786432]{0}', space=vmem, size = 0xc0000, scoped, tag = 'input window, operand 3, single buffered']
    #allocation7 [shape = 'u8[262144]{0}', space=vmem, size = 0x40000, scoped, tag = 'input window, operand 5, single buffered']
    #allocation8 [shape = 's32[1]{0}', space=sflag, size = 0x4, scoped, tag = 'scoped memory for transformer_forward.1']
    #allocation9 [shape = 'u8[1048576]{0}', space=vmem, size = 0x100000, scoped, tag = 'input window, operand 7, single buffered']
    #allocation10 [shape = 'u8[1048576]{0}', space=vmem, size = 0x100000, scoped, tag = 'input window, operand 9, single buffered']
    #allocation11 [shape = 's32[1]{0}', space=sflag, size = 0x4, scoped, tag = 'scoped memory for transformer_forward.1']
    #allocation12 [shape = 'u8[32768]{0}', space=vmem, size = 0x8000, scoped, tag = 'input window, operand 15, single buffered']
    #allocation13 [shape = 'u8[512]{0}', space=vmem, size = 0x400, scoped, tag = 'input window, operand 16, single buffered']
    #allocation14 [shape = 's32[1]{0}', space=sflag, size = 0x4, scoped, tag = 'scoped memory for transformer_forward.1']
    %22 = vsyncpa [#allocation3], 0
    %23 = vsyncpa [#allocation5], 0
    %24 = vsyncpa [#allocation8], 0
    %25 = vsyncpa [#allocation11], 0
    %26 = vsyncpa [#allocation14], 0
    // Predicated region
    $region2: #{transformer_forward.1} parent=1 // pred_check
      _
    $region3: #{transformer_forward.1} parent=1 // pred_check_branch
      %28 = sbr.rel (0) target = $region5
    $region4: #{transformer_forward.1} parent=1 // pred_region
      _
    $region5: #{transformer_forward.1} parent=1 // pred_fallthru
      _
    // Predicated region
    $region6: #{transformer_forward.1} parent=1 // pred_check
      _
    $region7: #{transformer_forward.1} parent=1 // pred_check_branch
      %30 = sbr.rel (0) target = $region9
    $region8: #{transformer_forward.1} parent=1 // pred_region
      %s32 = ssub.s32 1024, 1024
      %33 = vsyncadd [#allocation3], %s32
      %s34 = sshll.u32 [#allocation2], 4
      %s35 = int_to_ptr.vmem [resolvable:$true] %s34
      %40 = dma.hbm_to_vmem [thread:$0]  %s1, 1024, %s35, [#allocation3], 64, 64, 4
    $region9: #{transformer_forward.1} parent=1 // pred_fallthru
      _
    // Predicated region
    $region10: #{transformer_forward.1} parent=1 // pred_check
      _
    $region11: #{transformer_forward.1} parent=1 // pred_check_branch
      %42 = sbr.rel (0) target = $region13
    $region12: #{transformer_forward.1} parent=1 // pred_region
      %s44 = ssub.s32 16, 16
      %45 = vsyncadd [#allocation5], %s44
      %s47 = sshll.u32 [#allocation4], 4
      %s48 = int_to_ptr.vmem [resolvable:$true] %s47
      %50 = dma.hbm_to_vmem [thread:$0]  %s2, 16, %s48, [#allocation5]
    $region13: #{transformer_forward.1} parent=1 // pred_fallthru
      _
    // Predicated region
    $region14: #{transformer_forward.1} parent=1 // pred_check
      _
    $region15: #{transformer_forward.1} parent=1 // pred_check_branch
      %52 = sbr.rel (0) target = $region17
    $region16: #{transformer_forward.1} parent=1 // pred_region
      %s54 = ssub.s32 24576, 24576
      %55 = vsyncadd [#allocation5], %s54
      %s56 = sshll.u32 [#allocation6], 4
      %s57 = int_to_ptr.vmem [resolvable:$true] %s56
      %62 = dma.hbm_to_vmem [thread:$0]  %s3, 24576, %s57, [#allocation5], 768, 768, 48
    $region17: #{transformer_forward.1} parent=1 // pred_fallthru
      _
    // Predicated region
    $region18: #{transformer_forward.1} parent=1 // pred_check
      _
    $region19: #{transformer_forward.1} parent=1 // pred_check_branch
      %64 = sbr.rel (0) target = $region21
    $region20: #{transformer_forward.1} parent=1 // pred_region
      _
    $region21: #{transformer_forward.1} parent=1 // pred_fallthru
      _
    // Predicated region
    $region22: #{transformer_forward.1} parent=1 // pred_check
      _
    $region23: #{transformer_forward.1} parent=1 // pred_check_branch
      %66 = sbr.rel (0) target = $region25
    $region24: #{transformer_forward.1} parent=1 // pred_region
      %s68 = ssub.s32 8192, 8192
      %69 = vsyncadd [#allocation8], %s68
      %s70 = sshll.u32 [#allocation7], 4
      %s71 = int_to_ptr.vmem [resolvable:$true] %s70
      %76 = dma.hbm_to_vmem [thread:$0]  %s5, 8192, %s71, [#allocation8], 64, 64, 4
    $region25: #{transformer_forward.1} parent=1 // pred_fallthru
      _
    // Predicated region
    $region26: #{transformer_forward.1} parent=1 // pred_check
      _
    $region27: #{transformer_forward.1} parent=1 // pred_check_branch
      %78 = sbr.rel (0) target = $region29
    $region28: #{transformer_forward.1} parent=1 // pred_region
      _
    $region29: #{transformer_forward.1} parent=1 // pred_fallthru
      _
    // Predicated region
    $region30: #{transformer_forward.1} parent=1 // pred_check
      _
    $region31: #{transformer_forward.1} parent=1 // pred_check_branch
      %80 = sbr.rel (0) target = $region33
    $region32: #{transformer_forward.1} parent=1 // pred_region
      %s82 = ssub.s32 32768, 32768
      %83 = vsyncadd [#allocation8], %s82
      %s84 = sshll.u32 [#allocation9], 4
      %s85 = int_to_ptr.vmem [resolvable:$true] %s84
      %90 = dma.hbm_to_vmem [thread:$0]  %s7, 32768, %s85, [#allocation8], 1024, 1024, 64
    $region33: #{transformer_forward.1} parent=1 // pred_fallthru
      _
    // Predicated region
    $region34: #{transformer_forward.1} parent=1 // pred_check
      _
    $region35: #{transformer_forward.1} parent=1 // pred_check_branch
      %92 = sbr.rel (0) target = $region37
    $region36: #{transformer_forward.1} parent=1 // pred_region
      _
    $region37: #{transformer_forward.1} parent=1 // pred_fallthru
      _
    // Predicated region
    $region38: #{transformer_forward.1} parent=1 // pred_check
      _
    $region39: #{transformer_forward.1} parent=1 // pred_check_branch
      %94 = sbr.rel (0) target = $region41
    $region40: #{transformer_forward.1} parent=1 // pred_region
      %s96 = ssub.s32 32768, 32768
      %97 = vsyncadd [#allocation11], %s96
      %s98 = sshll.u32 [#allocation10], 4
      %s99 = int_to_ptr.vmem [resolvable:$true] %s98
      %104 = dma.hbm_to_vmem [thread:$0]  %s9, 32768, %s99, [#allocation11], 64, 64, 4
    $region41: #{transformer_forward.1} parent=1 // pred_fallthru
      _
    // Predicated region
    $region42: #{transformer_forward.1} parent=1 // pred_check
      _
    $region43: #{transformer_forward.1} parent=1 // pred_check_branch
      %106 = sbr.rel (0) target = $region45
    $region44: #{transformer_forward.1} parent=1 // pred_region
      _
    $region45: #{transformer_forward.1} parent=1 // pred_fallthru
      _
    // Predicated region
    $region46: #{transformer_forward.1} parent=1 // pred_check
      _
    $region47: #{transformer_forward.1} parent=1 // pred_check_branch
      %108 = sbr.rel (0) target = $region49
    $region48: #{transformer_forward.1} parent=1 // pred_region
      _
    $region49: #{transformer_forward.1} parent=1 // pred_fallthru
      _
    // Predicated region
    $region50: #{transformer_forward.1} parent=1 // pred_check
      _
    $region51: #{transformer_forward.1} parent=1 // pred_check_branch
      %110 = sbr.rel (0) target = $region53
    $region52: #{transformer_forward.1} parent=1 // pred_region
      _
    $region53: #{transformer_forward.1} parent=1 // pred_fallthru
      _
    // Predicated region
    $region54: #{transformer_forward.1} parent=1 // pred_check
      _
    $region55: #{transformer_forward.1} parent=1 // pred_check_branch
      %112 = sbr.rel (0) target = $region57
    $region56: #{transformer_forward.1} parent=1 // pred_region
      _
    $region57: #{transformer_forward.1} parent=1 // pred_fallthru
      _
    // Predicated region
    $region58: #{transformer_forward.1} parent=1 // pred_check
      _
    $region59: #{transformer_forward.1} parent=1 // pred_check_branch
      %114 = sbr.rel (0) target = $region61
    $region60: #{transformer_forward.1} parent=1 // pred_region
      _
    $region61: #{transformer_forward.1} parent=1 // pred_fallthru
      _
    // Predicated region
    $region62: #{transformer_forward.1} parent=1 // pred_check
      _
    $region63: #{transformer_forward.1} parent=1 // pred_check_branch
      %116 = sbr.rel (0) target = $region65
    $region64: #{transformer_forward.1} parent=1 // pred_region
      %s118 = ssub.s32 1024, 1024
      %119 = vsyncadd [#allocation11], %s118
      %s120 = sshll.u32 [#allocation12], 4
      %s121 = int_to_ptr.vmem [resolvable:$true] %s120
      %126 = dma.hbm_to_vmem [thread:$0]  %s15, 1024, %s121, [#allocation11], 64, 64, 4
    $region65: #{transformer_forward.1} parent=1 // pred_fallthru
      _
    // Predicated region
    $region66: #{transformer_forward.1} parent=1 // pred_check
      _
    $region67: #{transformer_forward.1} parent=1 // pred_check_branch
      %128 = sbr.rel (0) target = $region69
    $region68: #{transformer_forward.1} parent=1 // pred_region
      %s130 = ssub.s32 16, 16
      %131 = vsyncadd [#allocation14], %s130
      %s133 = sshll.u32 [#allocation13], 4
      %s134 = int_to_ptr.vmem [resolvable:$true] %s133
      %136 = dma.hbm_to_vmem [thread:$0]  %s16, 16, %s134, [#allocation14]
    $region69: #{transformer_forward.1} parent=1 // pred_fallthru
      _
    // Predicated region
    $region70: #{transformer_forward.1} parent=1 // pred_check
      _
    $region71: #{transformer_forward.1} parent=1 // pred_check_branch
      %138 = sbr.rel (0) target = $region73
    $region72: #{transformer_forward.1} parent=1 // pred_region
      %139 = dma.done [#allocation3], 1024
    $region73: #{transformer_forward.1} parent=1 // pred_fallthru
      _
    // Predicated region
    $region74: #{transformer_forward.1} parent=1 // pred_check
      _
    $region75: #{transformer_forward.1} parent=1 // pred_check_branch
      %141 = sbr.rel (0) target = $region77
    $region76: #{transformer_forward.1} parent=1 // pred_region
      %142 = dma.done [#allocation5], 16
    $region77: #{transformer_forward.1} parent=1 // pred_fallthru
      _
    // Predicated region
    $region78: #{transformer_forward.1} parent=1 // pred_check
      _
    $region79: #{transformer_forward.1} parent=1 // pred_check_branch
      %144 = sbr.rel (0) target = $region81
    $region80: #{transformer_forward.1} parent=1 // pred_region
      %145 = dma.done [#allocation5], 24576
    $region81: #{transformer_forward.1} parent=1 // pred_fallthru
      _
    // Predicated region
    $region82: #{transformer_forward.1} parent=1 // pred_check
      _
    $region83: #{transformer_forward.1} parent=1 // pred_check_branch
      %147 = sbr.rel (0) target = $region85
    $region84: #{transformer_forward.1} parent=1 // pred_region
      %148 = dma.done [#allocation8], 8192
    $region85: #{transformer_forward.1} parent=1 // pred_fallthru
      _
    // Predicated region
    $region86: #{transformer_forward.1} parent=1 // pred_check
      _
    $region87: #{transformer_forward.1} parent=1 // pred_check_branch
      %150 = sbr.rel (0) target = $region89
    $region88: #{transformer_forward.1} parent=1 // pred_region
      %151 = dma.done [#allocation8], 32768
    $region89: #{transformer_forward.1} parent=1 // pred_fallthru
      _
    // Predicated region
    $region90: #{transformer_forward.1} parent=1 // pred_check
      _
    $region91: #{transformer_forward.1} parent=1 // pred_check_branch
      %153 = sbr.rel (0) target = $region93
    $region92: #{transformer_forward.1} parent=1 // pred_region
      %154 = dma.done [#allocation11], 32768
    $region93: #{transformer_forward.1} parent=1 // pred_fallthru
      _
    // Predicated region
    $region94: #{transformer_forward.1} parent=1 // pred_check
      _
    $region95: #{transformer_forward.1} parent=1 // pred_check_branch
      %156 = sbr.rel (0) target = $region97
    $region96: #{transformer_forward.1} parent=1 // pred_region
      %157 = dma.done [#allocation11], 1024
    $region97: #{transformer_forward.1} parent=1 // pred_fallthru
      _
    // Predicated region
    $region98: #{transformer_forward.1} parent=1 // pred_check
      _
    $region99: #{transformer_forward.1} parent=1 // pred_check_branch
      %159 = sbr.rel (0) target = $region101
    $region100: #{transformer_forward.1} parent=1 // pred_region
      %160 = dma.done [#allocation14], 16
    $region101: #{transformer_forward.1} parent=1 // pred_fallthru
      _
    %v162 = vld [vmem:[%s0] sm:$0xf]
    %v163 = vld [vmem:[%s0 + $0x4] sm:$0xf]
    %v164 = vld [vmem:[#allocation2] sm:$0xf]
    %v165 = vld [vmem:[#allocation2 + $0x4] sm:$0xf]
    %v166 = vld [vmem:[#allocation2 + $0x8] sm:$0xf]
    %v167 = vld [vmem:[#allocation2 + $0xc] sm:$0xf]
    %v168 = vld [vmem:[#allocation2 + $0x10] sm:$0xf]
    %v169 = vld [vmem:[#allocation2 + $0x14] sm:$0xf]
    %v170 = vld [vmem:[#allocation2 + $0x18] sm:$0xf]
    %v171 = vld [vmem:[#allocation2 + $0x1c] sm:$0xf]
    %v172 = vld [vmem:[#allocation2 + $0x20] sm:$0xf]
    %v173 = vld [vmem:[#allocation2 + $0x24] sm:$0xf]
    %v174 = vld [vmem:[#allocation2 + $0x28] sm:$0xf]
    %v175 = vld [vmem:[#allocation2 + $0x2c] sm:$0xf]
    %v176 = vld [vmem:[#allocation2 + $0x30] sm:$0xf]
    %v177 = vld [vmem:[#allocation2 + $0x34] sm:$0xf]
    %v178 = vld [vmem:[#allocation2 + $0x38] sm:$0xf]
    %v179 = vld [vmem:[#allocation2 + $0x3c] sm:$0xf]
    %v180 = vld [vmem:[#allocation4] sm:$0x1]
    %v182 = vlaneseq
    %v183 = vshrl.u32 %v182, 7
    %v184 = vsub.s32 0, %v183
    %v185 = vrot.slane %v180, %v184
    %v189 = vunpack.c.l.b16 %v162
    %v190 = vunpack.c.l.b16 %v163
    %v191 = vpack.c.b16 %v190, %v189
    %v209 = vunpack.c.l.b16 %v164
    %v210 = vunpack.c.l.b16 %v165
    %v211 = vunpack.c.l.b16 %v166
    %v212 = vunpack.c.l.b16 %v167
    %v213 = vunpack.c.l.b16 %v168
    %v214 = vunpack.c.l.b16 %v169
    %v215 = vunpack.c.l.b16 %v170
    %v216 = vunpack.c.l.b16 %v171
    %v217 = vunpack.c.l.b16 %v172
    %v218 = vunpack.c.l.b16 %v173
    %v219 = vunpack.c.l.b16 %v174
    %v220 = vunpack.c.l.b16 %v175
    %v221 = vunpack.c.l.b16 %v176
    %v222 = vunpack.c.l.b16 %v177
    %v223 = vunpack.c.l.b16 %v178
    %v224 = vunpack.c.l.b16 %v179
    %v225 = vpack.c.b16 %v210, %v209
    %v226 = vpack.c.b16 %v212, %v211
    %v227 = vpack.c.b16 %v214, %v213
    %v228 = vpack.c.b16 %v216, %v215
    %v229 = vpack.c.b16 %v218, %v217
    %v230 = vpack.c.b16 %v220, %v219
    %v231 = vpack.c.b16 %v222, %v221
    %v232 = vpack.c.b16 %v224, %v223
    %241 = vmatprep.subr.bf16.mxu0 0
    %242 = vmatpush1.bf16.msra.mxu0 %v225
    %243 = vmatprep.subr.bf16.mxu0 0
    %244 = vmatpush1.bf16.msra.mxu0 %v226
    %245 = vmatprep.subr.bf16.mxu0 0
    %246 = vmatpush1.bf16.msra.mxu0 %v227
    %247 = vmatprep.subr.bf16.mxu0 0
    %248 = vmatpush1.bf16.msra.mxu0 %v228
    %249 = vmatprep.subr.bf16.mxu0 0
    %250 = vmatpush1.bf16.msra.mxu0 %v229
    %251 = vmatprep.subr.bf16.mxu0 0
    %252 = vmatpush1.bf16.msra.mxu0 %v230
    %253 = vmatprep.subr.bf16.mxu0 0
    %254 = vmatpush1.bf16.msra.mxu0 %v231
    %255 = vmatprep.subr.bf16.mxu0 0
    %256 = vmatpush1.bf16.msra.mxu0 %v232
    %257 = vmatprep.subr.bf16.mxu0 0
    %258 = vmatpush1.bf16.msra.mxu0 0
    %259 = vmatprep.subr.bf16.mxu0 0
    %260 = vmatpush1.bf16.msra.mxu0 0
    %261 = vmatprep.subr.bf16.mxu0 0
    %262 = vmatpush1.bf16.msra.mxu0 0
    %263 = vmatprep.subr.bf16.mxu0 0
    %264 = vmatpush1.bf16.msra.mxu0 0
    %265 = vmatprep.subr.bf16.mxu0 0
    %266 = vmatpush1.bf16.msra.mxu0 0
    %267 = vmatprep.subr.bf16.mxu0 0
    %268 = vmatpush1.bf16.msra.mxu0 0
    %269 = vmatprep.subr.bf16.mxu0 0
    %270 = vmatpush1.bf16.msra.mxu0 0
    %271 = vmatprep.subr.bf16.mxu0 0
    %272 = vmatpush1.bf16.msra.mxu0 0
    %273 = vmatprep.mubr.bf16.mxu0 0
    %274 = vmatmul.mubr.bf16.gmra.mrb[0].mxu0 %v191
    %v275 = vpop.f32.mrb[0].mxu0
    %v276 = vadd.f32 %v185, %v275
    %v277 = vpop.f32.mrb[0].mxu0
    %v278 = vpop.f32.mrb[0].mxu0
    %v279 = vadd.f32 %v185, %v278
    %v280 = vpop.f32.mrb[0].mxu0
    %281 = vdwg.mxu0
    %v282 = vpack.c.bf16 %v279, %v276
    %v283 = vld [vmem:[#allocation6] sm:$0xff]
    %v284 = vld [vmem:[#allocation6 + $0x8] sm:$0xff]
    %v285 = vld [vmem:[#allocation6 + $0x10] sm:$0xff]
    %v286 = vld [vmem:[#allocation6 + $0x18] sm:$0xff]
    %v287 = vld [vmem:[#allocation6 + $0x20] sm:$0xff]
    %v288 = vld [vmem:[#allocation6 + $0x28] sm:$0xff]
    %v289 = vld [vmem:[#allocation6 + $0x30] sm:$0xff]
    %v290 = vld [vmem:[#allocation6 + $0x38] sm:$0xff]
    %v291 = vld [vmem:[#allocation6 + $0x40] sm:$0xff]
    %v292 = vld [vmem:[#allocation6 + $0x48] sm:$0xff]
    %v293 = vld [vmem:[#allocation6 + $0x50] sm:$0xff]
    %v294 = vld [vmem:[#allocation6 + $0x58] sm:$0xff]
    %v295 = vld [vmem:[#allocation6 + $0x60] sm:$0xff]
    %v296 = vld [vmem:[#allocation6 + $0x68] sm:$0xff]
    %v297 = vld [vmem:[#allocation6 + $0x70] sm:$0xff]
    %v298 = vld [vmem:[#allocation6 + $0x78] sm:$0xff]
    %v299 = vld [vmem:[#allocation6 + $0x80] sm:$0xff]
    %v300 = vld [vmem:[#allocation6 + $0x88] sm:$0xff]
    %v301 = vld [vmem:[#allocation6 + $0x90] sm:$0xff]
    %v302 = vld [vmem:[#allocation6 + $0x98] sm:$0xff]
    %v303 = vld [vmem:[#allocation6 + $0xa0] sm:$0xff]
    %v304 = vld [vmem:[#allocation6 + $0xa8] sm:$0xff]
    %v305 = vld [vmem:[#allocation6 + $0xb0] sm:$0xff]
    %v306 = vld [vmem:[#allocation6 + $0xb8] sm:$0xff]
    %v307 = vld [vmem:[#allocation6 + $0xc0] sm:$0xff]
    %v308 = vld [vmem:[#allocation6 + $0xc8] sm:$0xff]
    %v309 = vld [vmem:[#allocation6 + $0xd0] sm:$0xff]
    %v310 = vld [vmem:[#allocation6 + $0xd8] sm:$0xff]
    %v311 = vld [vmem:[#allocation6 + $0xe0] sm:$0xff]
    %v312 = vld [vmem:[#allocation6 + $0xe8] sm:$0xff]
    %v313 = vld [vmem:[#allocation6 + $0xf0] sm:$0xff]
    %v314 = vld [vmem:[#allocation6 + $0xf8] sm:$0xff]
    %v315 = vld [vmem:[#allocation6 + $0x100] sm:$0xff]
    %v316 = vld [vmem:[#allocation6 + $0x108] sm:$0xff]
    %v317 = vld [vmem:[#allocation6 + $0x110] sm:$0xff]
    %v318 = vld [vmem:[#allocation6 + $0x118] sm:$0xff]
    %v319 = vld [vmem:[#allocation6 + $0x120] sm:$0xff]
    %v320 = vld [vmem:[#allocation6 + $0x128] sm:$0xff]
    %v321 = vld [vmem:[#allocation6 + $0x130] sm:$0xff]
    %v322 = vld [vmem:[#allocation6 + $0x138] sm:$0xff]
    %v323 = vld [vmem:[#allocation6 + $0x140] sm:$0xff]
    %v324 = vld [vmem:[#allocation6 + $0x148] sm:$0xff]
    %v325 = vld [vmem:[#allocation6 + $0x150] sm:$0xff]
    %v326 = vld [vmem:[#allocation6 + $0x158] sm:$0xff]
    %v327 = vld [vmem:[#allocation6 + $0x160] sm:$0xff]
    %v328 = vld [vmem:[#allocation6 + $0x168] sm:$0xff]
    %v329 = vld [vmem:[#allocation6 + $0x170] sm:$0xff]
    %v330 = vld [vmem:[#allocation6 + $0x178] sm:$0xff]
    %v331 = vld [vmem:[#allocation6 + $0x180] sm:$0xff]
    %v332 = vld [vmem:[#allocation6 + $0x188] sm:$0xff]
    %v333 = vld [vmem:[#allocation6 + $0x190] sm:$0xff]
    %v334 = vld [vmem:[#allocation6 + $0x198] sm:$0xff]
    %v335 = vld [vmem:[#allocation6 + $0x1a0] sm:$0xff]
    %v336 = vld [vmem:[#allocation6 + $0x1a8] sm:$0xff]
    %v337 = vld [vmem:[#allocation6 + $0x1b0] sm:$0xff]
    %v338 = vld [vmem:[#allocation6 + $0x1b8] sm:$0xff]
    %v339 = vld [vmem:[#allocation6 + $0x1c0] sm:$0xff]
    %v340 = vld [vmem:[#allocation6 + $0x1c8] sm:$0xff]
    %v341 = vld [vmem:[#allocation6 + $0x1d0] sm:$0xff]
    %v342 = vld [vmem:[#allocation6 + $0x1d8] sm:$0xff]
    %v343 = vld [vmem:[#allocation6 + $0x1e0] sm:$0xff]
    %v344 = vld [vmem:[#allocation6 + $0x1e8] sm:$0xff]
    %v345 = vld [vmem:[#allocation6 + $0x1f0] sm:$0xff]
    %v346 = vld [vmem:[#allocation6 + $0x1f8] sm:$0xff]
    %v347 = vld [vmem:[#allocation6 + $0x200] sm:$0xff]
    %v348 = vld [vmem:[#allocation6 + $0x208] sm:$0xff]
    %v349 = vld [vmem:[#allocation6 + $0x210] sm:$0xff]
    %v350 = vld [vmem:[#allocation6 + $0x218] sm:$0xff]
    %v351 = vld [vmem:[#allocation6 + $0x220] sm:$0xff]
    %v352 = vld [vmem:[#allocation6 + $0x228] sm:$0xff]
    %v353 = vld [vmem:[#allocation6 + $0x230] sm:$0xff]
    %v354 = vld [vmem:[#allocation6 + $0x238] sm:$0xff]
    %v355 = vld [vmem:[#allocation6 + $0x240] sm:$0xff]
    %v356 = vld [vmem:[#allocation6 + $0x248] sm:$0xff]
    %v357 = vld [vmem:[#allocation6 + $0x250] sm:$0xff]
    %v358 = vld [vmem:[#allocation6 + $0x258] sm:$0xff]
    %v359 = vld [vmem:[#allocation6 + $0x260] sm:$0xff]
    %v360 = vld [vmem:[#allocation6 + $0x268] sm:$0xff]
    %v361 = vld [vmem:[#allocation6 + $0x270] sm:$0xff]
    %v362 = vld [vmem:[#allocation6 + $0x278] sm:$0xff]
    %v363 = vld [vmem:[#allocation6 + $0x280] sm:$0xff]
    %v364 = vld [vmem:[#allocation6 + $0x288] sm:$0xff]
    %v365 = vld [vmem:[#allocation6 + $0x290] sm:$0xff]
    %v366 = vld [vmem:[#allocation6 + $0x298] sm:$0xff]
    %v367 = vld [vmem:[#allocation6 + $0x2a0] sm:$0xff]
    %v368 = vld [vmem:[#allocation6 + $0x2a8] sm:$0xff]
    %v369 = vld [vmem:[#allocation6 + $0x2b0] sm:$0xff]
    %v370 = vld [vmem:[#allocation6 + $0x2b8] sm:$0xff]
    %v371 = vld [vmem:[#allocation6 + $0x2c0] sm:$0xff]
    %v372 = vld [vmem:[#allocation6 + $0x2c8] sm:$0xff]
    %v373 = vld [vmem:[#allocation6 + $0x2d0] sm:$0xff]
    %v374 = vld [vmem:[#allocation6 + $0x2d8] sm:$0xff]
    %v375 = vld [vmem:[#allocation6 + $0x2e0] sm:$0xff]
    %v376 = vld [vmem:[#allocation6 + $0x2e8] sm:$0xff]
    %v377 = vld [vmem:[#allocation6 + $0x2f0] sm:$0xff]
    %v378 = vld [vmem:[#allocation6 + $0x2f8] sm:$0xff]
    %v379 = vld [vmem:[%s4] sm:$0xff]
    %v380 = vld [vmem:[%s4 + $0x8] sm:$0xf]
    %v383 = vlaneseq
    %v384 = vshrl.u32 %v383, 7
    %v385 = vsub.s32 0, %v384
    %v386 = vrot.slane %v379, %v385
    %v387 = vlaneseq
    %v388 = vshrl.u32 %v387, 7
    %v389 = vsub.s32 1, %v388
    %v390 = vrot.slane %v379, %v389
    %v391 = vlaneseq
    %v392 = vshrl.u32 %v391, 7
    %v393 = vsub.s32 2, %v392
    %v394 = vrot.slane %v379, %v393
    %v395 = vlaneseq
    %v396 = vshrl.u32 %v395, 7
    %v397 = vsub.s32 3, %v396
    %v398 = vrot.slane %v379, %v397
    %v399 = vlaneseq
    %v400 = vshrl.u32 %v399, 7
    %v401 = vsub.s32 4, %v400
    %v402 = vrot.slane %v379, %v401
    %v403 = vlaneseq
    %v404 = vshrl.u32 %v403, 7
    %v405 = vsub.s32 5, %v404
    %v406 = vrot.slane %v379, %v405
    %v407 = vlaneseq
    %v408 = vshrl.u32 %v407, 7
    %v409 = vsub.s32 6, %v408
    %v410 = vrot.slane %v379, %v409
    %v411 = vlaneseq
    %v412 = vshrl.u32 %v411, 7
    %v413 = vsub.s32 7, %v412
    %v414 = vrot.slane %v379, %v413
    %v415 = vlaneseq
    %v416 = vshrl.u32 %v415, 7
    %v417 = vsub.s32 0, %v416
    %v418 = vrot.slane %v380, %v417
    %v419 = vlaneseq
    %v420 = vshrl.u32 %v419, 7
    %v421 = vsub.s32 1, %v420
    %v422 = vrot.slane %v380, %v421
    %v423 = vlaneseq
    %v424 = vshrl.u32 %v423, 7
    %v425 = vsub.s32 2, %v424
    %v426 = vrot.slane %v380, %v425
    %v427 = vlaneseq
    %v428 = vshrl.u32 %v427, 7
    %v429 = vsub.s32 3, %v428
    %v430 = vrot.slane %v380, %v429
    %v539 = vunpack.c.l.b16 %v283
    %v540 = vunpack.c.h.b16 %v283
    %v541 = vunpack.c.l.b16 %v284
    %v542 = vunpack.c.h.b16 %v284
    %v543 = vunpack.c.l.b16 %v285
    %v544 = vunpack.c.h.b16 %v285
    %v545 = vunpack.c.l.b16 %v286
    %v546 = vunpack.c.h.b16 %v286
    %v547 = vunpack.c.l.b16 %v287
    %v548 = vunpack.c.h.b16 %v287
    %v549 = vunpack.c.l.b16 %v288
    %v550 = vunpack.c.h.b16 %v288
    %v551 = vunpack.c.l.b16 %v289
    %v552 = vunpack.c.h.b16 %v289
    %v553 = vunpack.c.l.b16 %v290
    %v554 = vunpack.c.h.b16 %v290
    %v555 = vunpack.c.l.b16 %v291
    %v556 = vunpack.c.h.b16 %v291
    %v557 = vunpack.c.l.b16 %v292
    %v558 = vunpack.c.h.b16 %v292
    %v559 = vunpack.c.l.b16 %v293
    %v560 = vunpack.c.h.b16 %v293
    %v561 = vunpack.c.l.b16 %v294
    %v562 = vunpack.c.h.b16 %v294
    %v563 = vunpack.c.l.b16 %v295
    %v564 = vunpack.c.h.b16 %v295
    %v565 = vunpack.c.l.b16 %v296
    %v566 = vunpack.c.h.b16 %v296
    %v567 = vunpack.c.l.b16 %v297
    %v568 = vunpack.c.h.b16 %v297
    %v569 = vunpack.c.l.b16 %v298
    %v570 = vunpack.c.h.b16 %v298
    %v571 = vunpack.c.l.b16 %v299
    %v572 = vunpack.c.h.b16 %v299
    %v573 = vunpack.c.l.b16 %v300
    %v574 = vunpack.c.h.b16 %v300
    %v575 = vunpack.c.l.b16 %v301
    %v576 = vunpack.c.h.b16 %v301
    %v577 = vunpack.c.l.b16 %v302
    %v578 = vunpack.c.h.b16 %v302
    %v579 = vunpack.c.l.b16 %v303
    %v580 = vunpack.c.h.b16 %v303
    %v581 = vunpack.c.l.b16 %v304
    %v582 = vunpack.c.h.b16 %v304
    %v583 = vunpack.c.l.b16 %v305
    %v584 = vunpack.c.h.b16 %v305
    %v585 = vunpack.c.l.b16 %v306
    %v586 = vunpack.c.h.b16 %v306
    %v587 = vunpack.c.l.b16 %v307
    %v588 = vunpack.c.h.b16 %v307
    %v589 = vunpack.c.l.b16 %v308
    %v590 = vunpack.c.h.b16 %v308
    %v591 = vunpack.c.l.b16 %v309
    %v592 = vunpack.c.h.b16 %v309
    %v593 = vunpack.c.l.b16 %v310
    %v594 = vunpack.c.h.b16 %v310
    %v595 = vunpack.c.l.b16 %v311
    %v596 = vunpack.c.h.b16 %v311
    %v597 = vunpack.c.l.b16 %v312
    %v598 = vunpack.c.h.b16 %v312
    %v599 = vunpack.c.l.b16 %v313
    %v600 = vunpack.c.h.b16 %v313
    %v601 = vunpack.c.l.b16 %v314
    %v602 = vunpack.c.h.b16 %v314
    %v603 = vunpack.c.l.b16 %v315
    %v604 = vunpack.c.h.b16 %v315
    %v605 = vunpack.c.l.b16 %v316
    %v606 = vunpack.c.h.b16 %v316
    %v607 = vunpack.c.l.b16 %v317
    %v608 = vunpack.c.h.b16 %v317
    %v609 = vunpack.c.l.b16 %v318
    %v610 = vunpack.c.h.b16 %v318
    %v611 = vunpack.c.l.b16 %v319
    %v612 = vunpack.c.h.b16 %v319
    %v613 = vunpack.c.l.b16 %v320
    %v614 = vunpack.c.h.b16 %v320
    %v615 = vunpack.c.l.b16 %v321
    %v616 = vunpack.c.h.b16 %v321
    %v617 = vunpack.c.l.b16 %v322
    %v618 = vunpack.c.h.b16 %v322
    %v619 = vunpack.c.l.b16 %v323
    %v620 = vunpack.c.h.b16 %v323
    %v621 = vunpack.c.l.b16 %v324
    %v622 = vunpack.c.h.b16 %v324
    %v623 = vunpack.c.l.b16 %v325
    %v624 = vunpack.c.h.b16 %v325
    %v625 = vunpack.c.l.b16 %v326
    %v626 = vunpack.c.h.b16 %v326
    %v627 = vunpack.c.l.b16 %v327
    %v628 = vunpack.c.h.b16 %v327
    %v629 = vunpack.c.l.b16 %v328
    %v630 = vunpack.c.h.b16 %v328
    %v631 = vunpack.c.l.b16 %v329
    %v632 = vunpack.c.h.b16 %v329
    %v633 = vunpack.c.l.b16 %v330
    %v634 = vunpack.c.h.b16 %v330
    %v635 = vunpack.c.l.b16 %v331
    %v636 = vunpack.c.h.b16 %v331
    %v637 = vunpack.c.l.b16 %v332
    %v638 = vunpack.c.h.b16 %v332
    %v639 = vunpack.c.l.b16 %v333
    %v640 = vunpack.c.h.b16 %v333
    %v641 = vunpack.c.l.b16 %v334
    %v642 = vunpack.c.h.b16 %v334
    %v643 = vunpack.c.l.b16 %v335
    %v644 = vunpack.c.h.b16 %v335
    %v645 = vunpack.c.l.b16 %v336
    %v646 = vunpack.c.h.b16 %v336
    %v647 = vunpack.c.l.b16 %v337
    %v648 = vunpack.c.h.b16 %v337
    %v649 = vunpack.c.l.b16 %v338
    %v650 = vunpack.c.h.b16 %v338
    %v651 = vunpack.c.l.b16 %v339
    %v652 = vunpack.c.h.b16 %v339
    %v653 = vunpack.c.l.b16 %v340
    %v654 = vunpack.c.h.b16 %v340
    %v655 = vunpack.c.l.b16 %v341
    %v656 = vunpack.c.h.b16 %v341
    %v657 = vunpack.c.l.b16 %v342
    %v658 = vunpack.c.h.b16 %v342
    %v659 = vunpack.c.l.b16 %v343
    %v660 = vunpack.c.h.b16 %v343
    %v661 = vunpack.c.l.b16 %v344
    %v662 = vunpack.c.h.b16 %v344
    %v663 = vunpack.c.l.b16 %v345
    %v664 = vunpack.c.h.b16 %v345
    %v665 = vunpack.c.l.b16 %v346
    %v666 = vunpack.c.h.b16 %v346
    %v667 = vunpack.c.l.b16 %v347
    %v668 = vunpack.c.h.b16 %v347
    %v669 = vunpack.c.l.b16 %v348
    %v670 = vunpack.c.h.b16 %v348
    %v671 = vunpack.c.l.b16 %v349
    %v672 = vunpack.c.h.b16 %v349
    %v673 = vunpack.c.l.b16 %v350
    %v674 = vunpack.c.h.b16 %v350
    %v675 = vunpack.c.l.b16 %v351
    %v676 = vunpack.c.h.b16 %v351
    %v677 = vunpack.c.l.b16 %v352
    %v678 = vunpack.c.h.b16 %v352
    %v679 = vunpack.c.l.b16 %v353
    %v680 = vunpack.c.h.b16 %v353
    %v681 = vunpack.c.l.b16 %v354
    %v682 = vunpack.c.h.b16 %v354
    %v683 = vunpack.c.l.b16 %v355
    %v684 = vunpack.c.h.b16 %v355
    %v685 = vunpack.c.l.b16 %v356
    %v686 = vunpack.c.h.b16 %v356
    %v687 = vunpack.c.l.b16 %v357
    %v688 = vunpack.c.h.b16 %v357
    %v689 = vunpack.c.l.b16 %v358
    %v690 = vunpack.c.h.b16 %v358
    %v691 = vunpack.c.l.b16 %v359
    %v692 = vunpack.c.h.b16 %v359
    %v693 = vunpack.c.l.b16 %v360
    %v694 = vunpack.c.h.b16 %v360
    %v695 = vunpack.c.l.b16 %v361
    %v696 = vunpack.c.h.b16 %v361
    %v697 = vunpack.c.l.b16 %v362
    %v698 = vunpack.c.h.b16 %v362
    %v699 = vunpack.c.l.b16 %v363
    %v700 = vunpack.c.h.b16 %v363
    %v701 = vunpack.c.l.b16 %v364
    %v702 = vunpack.c.h.b16 %v364
    %v703 = vunpack.c.l.b16 %v365
    %v704 = vunpack.c.h.b16 %v365
    %v705 = vunpack.c.l.b16 %v366
    %v706 = vunpack.c.h.b16 %v366
    %v707 = vunpack.c.l.b16 %v367
    %v708 = vunpack.c.h.b16 %v367
    %v709 = vunpack.c.l.b16 %v368
    %v710 = vunpack.c.h.b16 %v368
    %v711 = vunpack.c.l.b16 %v369
    %v712 = vunpack.c.h.b16 %v369
    %v713 = vunpack.c.l.b16 %v370
    %v714 = vunpack.c.h.b16 %v370
    %v715 = vunpack.c.l.b16 %v371
    %v716 = vunpack.c.h.b16 %v371
    %v717 = vunpack.c.l.b16 %v372
    %v718 = vunpack.c.h.b16 %v372
    %v719 = vunpack.c.l.b16 %v373
    %v720 = vunpack.c.h.b16 %v373
    %v721 = vunpack.c.l.b16 %v374
    %v722 = vunpack.c.h.b16 %v374
    %v723 = vunpack.c.l.b16 %v375
    %v724 = vunpack.c.h.b16 %v375
    %v725 = vunpack.c.l.b16 %v376
    %v726 = vunpack.c.h.b16 %v376
    %v727 = vunpack.c.l.b16 %v377
    %v728 = vunpack.c.h.b16 %v377
    %v729 = vunpack.c.l.b16 %v378
    %v730 = vunpack.c.h.b16 %v378
    %v731 = vpack.c.b16 %v551, %v539
    %v732 = vpack.c.b16 %v552, %v540
    %v733 = vpack.c.b16 %v553, %v541
    %v734 = vpack.c.b16 %v554, %v542
    %v735 = vpack.c.b16 %v555, %v543
    %v736 = vpack.c.b16 %v556, %v544
    %v737 = vpack.c.b16 %v557, %v545
    %v738 = vpack.c.b16 %v558, %v546
    %v739 = vpack.c.b16 %v559, %v547
    %v740 = vpack.c.b16 %v560, %v548
    %v741 = vpack.c.b16 %v561, %v549
    %v742 = vpack.c.b16 %v562, %v550
    %v743 = vpack.c.b16 %v575, %v563
    %v744 = vpack.c.b16 %v576, %v564
    %v745 = vpack.c.b16 %v577, %v565
    %v746 = vpack.c.b16 %v578, %v566
    %v747 = vpack.c.b16 %v579, %v567
    %v748 = vpack.c.b16 %v580, %v568
    %v749 = vpack.c.b16 %v581, %v569
    %v750 = vpack.c.b16 %v582, %v570
    %v751 = vpack.c.b16 %v583, %v571
    %v752 = vpack.c.b16 %v584, %v572
    %v753 = vpack.c.b16 %v585, %v573
    %v754 = vpack.c.b16 %v586, %v574
    %v755 = vpack.c.b16 %v599, %v587
    %v756 = vpack.c.b16 %v600, %v588
    %v757 = vpack.c.b16 %v601, %v589
    %v758 = vpack.c.b16 %v602, %v590
    %v759 = vpack.c.b16 %v603, %v591
    %v760 = vpack.c.b16 %v604, %v592
    %v761 = vpack.c.b16 %v605, %v593
    %v762 = vpack.c.b16 %v606, %v594
    %v763 = vpack.c.b16 %v607, %v595
    %v764 = vpack.c.b16 %v608, %v596
    %v765 = vpack.c.b16 %v609, %v597
    %v766 = vpack.c.b16 %v610, %v598
    %v767 = vpack.c.b16 %v623, %v611
    %v768 = vpack.c.b16 %v624, %v612
    %v769 = vpack.c.b16 %v625, %v613
    %v770 = vpack.c.b16 %v626, %v614
    %v771 = vpack.c.b16 %v627, %v615
    %v772 = vpack.c.b16 %v628, %v616
    %v773 = vpack.c.b16 %v629, %v617
    %v774 = vpack.c.b16 %v630, %v618
    %v775 = vpack.c.b16 %v631, %v619
    %v776 = vpack.c.b16 %v632, %v620
    %v777 = vpack.c.b16 %v633, %v621
    %v778 = vpack.c.b16 %v634, %v622
    %v779 = vpack.c.b16 %v647, %v635
    %v780 = vpack.c.b16 %v648, %v636
    %v781 = vpack.c.b16 %v649, %v637
    %v782 = vpack.c.b16 %v650, %v638
    %v783 = vpack.c.b16 %v651, %v639
    %v784 = vpack.c.b16 %v652, %v640
    %v785 = vpack.c.b16 %v653, %v641
    %v786 = vpack.c.b16 %v654, %v642
    %v787 = vpack.c.b16 %v655, %v643
    %v788 = vpack.c.b16 %v656, %v644
    %v789 = vpack.c.b16 %v657, %v645
    %v790 = vpack.c.b16 %v658, %v646
    %v791 = vpack.c.b16 %v671, %v659
    %v792 = vpack.c.b16 %v672, %v660
    %v793 = vpack.c.b16 %v673, %v661
    %v794 = vpack.c.b16 %v674, %v662
    %v795 = vpack.c.b16 %v675, %v663
    %v796 = vpack.c.b16 %v676, %v664
    %v797 = vpack.c.b16 %v677, %v665
    %v798 = vpack.c.b16 %v678, %v666
    %v799 = vpack.c.b16 %v679, %v667
    %v800 = vpack.c.b16 %v680, %v668
    %v801 = vpack.c.b16 %v681, %v669
    %v802 = vpack.c.b16 %v682, %v670
    %v803 = vpack.c.b16 %v695, %v683
    %v804 = vpack.c.b16 %v696, %v684
    %v805 = vpack.c.b16 %v697, %v685
    %v806 = vpack.c.b16 %v698, %v686
    %v807 = vpack.c.b16 %v699, %v687
    %v808 = vpack.c.b16 %v700, %v688
    %v809 = vpack.c.b16 %v701, %v689
    %v810 = vpack.c.b16 %v702, %v690
    %v811 = vpack.c.b16 %v703, %v691
    %v812 = vpack.c.b16 %v704, %v692
    %v813 = vpack.c.b16 %v705, %v693
    %v814 = vpack.c.b16 %v706, %v694
    %v815 = vpack.c.b16 %v719, %v707
    %v816 = vpack.c.b16 %v720, %v708
    %v817 = vpack.c.b16 %v721, %v709
    %v818 = vpack.c.b16 %v722, %v710
    %v819 = vpack.c.b16 %v723, %v711
    %v820 = vpack.c.b16 %v724, %v712
    %v821 = vpack.c.b16 %v725, %v713
    %v822 = vpack.c.b16 %v726, %v714
    %v823 = vpack.c.b16 %v727, %v715
    %v824 = vpack.c.b16 %v728, %v716
    %v825 = vpack.c.b16 %v729, %v717
    %v826 = vpack.c.b16 %v730, %v718
    %923 = vmatprep.subr.bf16.mxu0 %v732
    %924 = vmatpush1.bf16.msra.mxu0 %v731
    %925 = vmatprep.subr.bf16.mxu0 %v744
    %926 = vmatpush1.bf16.msra.mxu0 %v743
    %927 = vmatprep.subr.bf16.mxu0 %v756
    %928 = vmatpush1.bf16.msra.mxu0 %v755
    %929 = vmatprep.subr.bf16.mxu0 %v768
    %930 = vmatpush1.bf16.msra.mxu0 %v767
    %931 = vmatprep.subr.bf16.mxu0 %v780
    %932 = vmatpush1.bf16.msra.mxu0 %v779
    %933 = vmatprep.subr.bf16.mxu0 %v792
    %934 = vmatpush1.bf16.msra.mxu0 %v791
    %935 = vmatprep.subr.bf16.mxu0 %v804
    %936 = vmatpush1.bf16.msra.mxu0 %v803
    %937 = vmatprep.subr.bf16.mxu0 %v816
    %938 = vmatpush1.bf16.msra.mxu0 %v815
    %939 = vmatprep.subr.bf16.mxu0 0
    %940 = vmatpush1.bf16.msra.mxu0 0
    %941 = vmatprep.subr.bf16.mxu0 0
    %942 = vmatpush1.bf16.msra.mxu0 0
    %943 = vmatprep.subr.bf16.mxu0 0
    %944 = vmatpush1.bf16.msra.mxu0 0
    %945 = vmatprep.subr.bf16.mxu0 0
    %946 = vmatpush1.bf16.msra.mxu0 0
    %947 = vmatprep.subr.bf16.mxu0 0
    %948 = vmatpush1.bf16.msra.mxu0 0
    %949 = vmatprep.subr.bf16.mxu0 0
    %950 = vmatpush1.bf16.msra.mxu0 0
    %951 = vmatprep.subr.bf16.mxu0 0
    %952 = vmatpush1.bf16.msra.mxu0 0
    %953 = vmatprep.subr.bf16.mxu0 0
    %954 = vmatpush1.bf16.msra.mxu0 0
    %955 = vmatprep.mubr.bf16.mxu0 0
    %956 = vmatmul.mubr.bf16.gmra.mrb[0].mxu0 %v282
    %v957 = vpop.f32.mrb[0].mxu0
    %v958 = vadd.f32 %v386, %v957
    %v959 = vpop.f32.mrb[0].mxu0
    %v960 = vadd.f32 %v390, %v959
    %v961 = vpop.f32.mrb[0].mxu0
    %v962 = vadd.f32 %v386, %v961
    %v963 = vpop.f32.mrb[0].mxu0
    %v964 = vadd.f32 %v390, %v963
    %965 = vdwg.mxu0
    %966 = vmatprep.subr.bf16.mxu0 %v734
    %967 = vmatpush1.bf16.msra.mxu0 %v733
    %968 = vmatprep.subr.bf16.mxu0 %v746
    %969 = vmatpush1.bf16.msra.mxu0 %v745
    %970 = vmatprep.subr.bf16.mxu0 %v758
    %971 = vmatpush1.bf16.msra.mxu0 %v757
    %972 = vmatprep.subr.bf16.mxu0 %v770
    %973 = vmatpush1.bf16.msra.mxu0 %v769
    %974 = vmatprep.subr.bf16.mxu0 %v782
    %975 = vmatpush1.bf16.msra.mxu0 %v781
    %976 = vmatprep.subr.bf16.mxu0 %v794
    %977 = vmatpush1.bf16.msra.mxu0 %v793
    %978 = vmatprep.subr.bf16.mxu0 %v806
    %979 = vmatpush1.bf16.msra.mxu0 %v805
    %980 = vmatprep.subr.bf16.mxu0 %v818
    %981 = vmatpush1.bf16.msra.mxu0 %v817
    %982 = vmatprep.subr.bf16.mxu0 0
    %983 = vmatpush1.bf16.msra.mxu0 0
    %984 = vmatprep.subr.bf16.mxu0 0
    %985 = vmatpush1.bf16.msra.mxu0 0
    %986 = vmatprep.subr.bf16.mxu0 0
    %987 = vmatpush1.bf16.msra.mxu0 0
    %988 = vmatprep.subr.bf16.mxu0 0
    %989 = vmatpush1.bf16.msra.mxu0 0
    %990 = vmatprep.subr.bf16.mxu0 0
    %991 = vmatpush1.bf16.msra.mxu0 0
    %992 = vmatprep.subr.bf16.mxu0 0
    %993 = vmatpush1.bf16.msra.mxu0 0
    %994 = vmatprep.subr.bf16.mxu0 0
    %995 = vmatpush1.bf16.msra.mxu0 0
    %996 = vmatprep.subr.bf16.mxu0 0
    %997 = vmatpush1.bf16.msra.mxu0 0
    %998 = vmatprep.mubr.bf16.mxu0 0
    %999 = vmatmul.mubr.bf16.gmra.mrb[0].mxu0 %v282
    %v1000 = vpop.f32.mrb[0].mxu0
    %v1001 = vadd.f32 %v394, %v1000
    %v1002 = vpop.f32.mrb[0].mxu0
    %v1003 = vadd.f32 %v398, %v1002
    %v1004 = vpop.f32.mrb[0].mxu0
    %v1005 = vadd.f32 %v394, %v1004
    %v1006 = vpop.f32.mrb[0].mxu0
    %v1007 = vadd.f32 %v398, %v1006
    %1008 = vdwg.mxu0
    %1009 = vmatprep.subr.bf16.mxu0 %v736
    %1010 = vmatpush1.bf16.msra.mxu0 %v735
    %1011 = vmatprep.subr.bf16.mxu0 %v748
    %1012 = vmatpush1.bf16.msra.mxu0 %v747
    %1013 = vmatprep.subr.bf16.mxu0 %v760
    %1014 = vmatpush1.bf16.msra.mxu0 %v759
    %1015 = vmatprep.subr.bf16.mxu0 %v772
    %1016 = vmatpush1.bf16.msra.mxu0 %v771
    %1017 = vmatprep.subr.bf16.mxu0 %v784
    %1018 = vmatpush1.bf16.msra.mxu0 %v783
    %1019 = vmatprep.subr.bf16.mxu0 %v796
    %1020 = vmatpush1.bf16.msra.mxu0 %v795
    %1021 = vmatprep.subr.bf16.mxu0 %v808
    %1022 = vmatpush1.bf16.msra.mxu0 %v807
    %1023 = vmatprep.subr.bf16.mxu0 %v820
    %1024 = vmatpush1.bf16.msra.mxu0 %v819
    %1025 = vmatprep.subr.bf16.mxu0 0
    %1026 = vmatpush1.bf16.msra.mxu0 0
    %1027 = vmatprep.subr.bf16.mxu0 0
    %1028 = vmatpush1.bf16.msra.mxu0 0
    %1029 = vmatprep.subr.bf16.mxu0 0
    %1030 = vmatpush1.bf16.msra.mxu0 0
    %1031 = vmatprep.subr.bf16.mxu0 0
    %1032 = vmatpush1.bf16.msra.mxu0 0
    %1033 = vmatprep.subr.bf16.mxu0 0
    %1034 = vmatpush1.bf16.msra.mxu0 0
    %1035 = vmatprep.subr.bf16.mxu0 0
    %1036 = vmatpush1.bf16.msra.mxu0 0
    %1037 = vmatprep.subr.bf16.mxu0 0
    %1038 = vmatpush1.bf16.msra.mxu0 0
    %1039 = vmatprep.subr.bf16.mxu0 0
    %1040 = vmatpush1.bf16.msra.mxu0 0
    %1041 = vmatprep.mubr.bf16.mxu0 0
    %1042 = vmatmul.mubr.bf16.gmra.mrb[0].mxu0 %v282
    %v1043 = vpop.f32.mrb[0].mxu0
    %v1044 = vadd.f32 %v402, %v1043
    %v1045 = vpop.f32.mrb[0].mxu0
    %v1046 = vadd.f32 %v406, %v1045
    %v1047 = vpop.f32.mrb[0].mxu0
    %v1048 = vadd.f32 %v402, %v1047
    %v1049 = vpop.f32.mrb[0].mxu0
    %v1050 = vadd.f32 %v406, %v1049
    %1051 = vdwg.mxu0
    %1052 = vmatprep.subr.bf16.mxu0 %v738
    %1053 = vmatpush1.bf16.msra.mxu0 %v737
    %1054 = vmatprep.subr.bf16.mxu0 %v750
    %1055 = vmatpush1.bf16.msra.mxu0 %v749
    %1056 = vmatprep.subr.bf16.mxu0 %v762
    %1057 = vmatpush1.bf16.msra.mxu0 %v761
    %1058 = vmatprep.subr.bf16.mxu0 %v774
    %1059 = vmatpush1.bf16.msra.mxu0 %v773
    %1060 = vmatprep.subr.bf16.mxu0 %v786
    %1061 = vmatpush1.bf16.msra.mxu0 %v785
    %1062 = vmatprep.subr.bf16.mxu0 %v798
    %1063 = vmatpush1.bf16.msra.mxu0 %v797
    %1064 = vmatprep.subr.bf16.mxu0 %v810
    %1065 = vmatpush1.bf16.msra.mxu0 %v809
    %1066 = vmatprep.subr.bf16.mxu0 %v822
    %1067 = vmatpush1.bf16.msra.mxu0 %v821
    %1068 = vmatprep.subr.bf16.mxu0 0
    %1069 = vmatpush1.bf16.msra.mxu0 0
    %1070 = vmatprep.subr.bf16.mxu0 0
    %1071 = vmatpush1.bf16.msra.mxu0 0
    %1072 = vmatprep.subr.bf16.mxu0 0
    %1073 = vmatpush1.bf16.msra.mxu0 0
    %1074 = vmatprep.subr.bf16.mxu0 0
    %1075 = vmatpush1.bf16.msra.mxu0 0
    %1076 = vmatprep.subr.bf16.mxu0 0
    %1077 = vmatpush1.bf16.msra.mxu0 0
    %1078 = vmatprep.subr.bf16.mxu0 0
    %1079 = vmatpush1.bf16.msra.mxu0 0
    %1080 = vmatprep.subr.bf16.mxu0 0
    %1081 = vmatpush1.bf16.msra.mxu0 0
    %1082 = vmatprep.subr.bf16.mxu0 0
    %1083 = vmatpush1.bf16.msra.mxu0 0
    %1084 = vmatprep.mubr.bf16.mxu0 0
    %1085 = vmatmul.mubr.bf16.gmra.mrb[0].mxu0 %v282
    %v1086 = vpop.f32.mrb[0].mxu0
    %v1087 = vadd.f32 %v410, %v1086
    %v1088 = vpop.f32.mrb[0].mxu0
    %v1089 = vadd.f32 %v414, %v1088
    %v1090 = vpop.f32.mrb[0].mxu0
    %v1091 = vadd.f32 %v410, %v1090
    %v1092 = vpop.f32.mrb[0].mxu0
    %v1093 = vadd.f32 %v414, %v1092
    %1094 = vdwg.mxu0
    %1095 = vmatprep.subr.bf16.mxu0 %v740
    %1096 = vmatpush1.bf16.msra.mxu0 %v739
    %1097 = vmatprep.subr.bf16.mxu0 %v752
    %1098 = vmatpush1.bf16.msra.mxu0 %v751
    %1099 = vmatprep.subr.bf16.mxu0 %v764
    %1100 = vmatpush1.bf16.msra.mxu0 %v763
    %1101 = vmatprep.subr.bf16.mxu0 %v776
    %1102 = vmatpush1.bf16.msra.mxu0 %v775
    %1103 = vmatprep.subr.bf16.mxu0 %v788
    %1104 = vmatpush1.bf16.msra.mxu0 %v787
    %1105 = vmatprep.subr.bf16.mxu0 %v800
    %1106 = vmatpush1.bf16.msra.mxu0 %v799
    %1107 = vmatprep.subr.bf16.mxu0 %v812
    %1108 = vmatpush1.bf16.msra.mxu0 %v811
    %1109 = vmatprep.subr.bf16.mxu0 %v824
    %1110 = vmatpush1.bf16.msra.mxu0 %v823
    %1111 = vmatprep.subr.bf16.mxu0 0
    %1112 = vmatpush1.bf16.msra.mxu0 0
    %1113 = vmatprep.subr.bf16.mxu0 0
    %1114 = vmatpush1.bf16.msra.mxu0 0
    %1115 = vmatprep.subr.bf16.mxu0 0
    %1116 = vmatpush1.bf16.msra.mxu0 0
    %1117 = vmatprep.subr.bf16.mxu0 0
    %1118 = vmatpush1.bf16.msra.mxu0 0
    %1119 = vmatprep.subr.bf16.mxu0 0
    %1120 = vmatpush1.bf16.msra.mxu0 0
    %1121 = vmatprep.subr.bf16.mxu0 0
    %1122 = vmatpush1.bf16.msra.mxu0 0
    %1123 = vmatprep.subr.bf16.mxu0 0
    %1124 = vmatpush1.bf16.msra.mxu0 0
    %1125 = vmatprep.subr.bf16.mxu0 0
    %1126 = vmatpush1.bf16.msra.mxu0 0
    %1127 = vmatprep.mubr.bf16.mxu0 0
    %1128 = vmatmul.mubr.bf16.gmra.mrb[0].mxu0 %v282
    %v1129 = vpop.f32.mrb[0].mxu0
    %v1130 = vadd.f32 %v418, %v1129
    %v1131 = vpop.f32.mrb[0].mxu0
    %v1132 = vadd.f32 %v422, %v1131
    %v1133 = vpop.f32.mrb[0].mxu0
    %v1134 = vadd.f32 %v418, %v1133
    %v1135 = vpop.f32.mrb[0].mxu0
    %v1136 = vadd.f32 %v422, %v1135
    %1137 = vdwg.mxu0
    %1138 = vmatprep.subr.bf16.mxu0 %v742
    %1139 = vmatpush1.bf16.msra.mxu0 %v741
    %1140 = vmatprep.subr.bf16.mxu0 %v754
    %1141 = vmatpush1.bf16.msra.mxu0 %v753
    %1142 = vmatprep.subr.bf16.mxu0 %v766
    %1143 = vmatpush1.bf16.msra.mxu0 %v765
    %1144 = vmatprep.subr.bf16.mxu0 %v778
    %1145 = vmatpush1.bf16.msra.mxu0 %v777
    %1146 = vmatprep.subr.bf16.mxu0 %v790
    %1147 = vmatpush1.bf16.msra.mxu0 %v789
    %1148 = vmatprep.subr.bf16.mxu0 %v802
    %1149 = vmatpush1.bf16.msra.mxu0 %v801
    %1150 = vmatprep.subr.bf16.mxu0 %v814
    %1151 = vmatpush1.bf16.msra.mxu0 %v813
    %1152 = vmatprep.subr.bf16.mxu0 %v826
    %1153 = vmatpush1.bf16.msra.mxu0 %v825
    %1154 = vmatprep.subr.bf16.mxu0 0
    %1155 = vmatpush1.bf16.msra.mxu0 0
    %1156 = vmatprep.subr.bf16.mxu0 0
    %1157 = vmatpush1.bf16.msra.mxu0 0
    %1158 = vmatprep.subr.bf16.mxu0 0
    %1159 = vmatpush1.bf16.msra.mxu0 0
    %1160 = vmatprep.subr.bf16.mxu0 0
    %1161 = vmatpush1.bf16.msra.mxu0 0
    %1162 = vmatprep.subr.bf16.mxu0 0
    %1163 = vmatpush1.bf16.msra.mxu0 0
    %1164 = vmatprep.subr.bf16.mxu0 0
    %1165 = vmatpush1.bf16.msra.mxu0 0
    %1166 = vmatprep.subr.bf16.mxu0 0
    %1167 = vmatpush1.bf16.msra.mxu0 0
    %1168 = vmatprep.subr.bf16.mxu0 0
    %1169 = vmatpush1.bf16.msra.mxu0 0
    %1170 = vmatprep.mubr.bf16.mxu0 0
    %1171 = vmatmul.mubr.bf16.gmra.mrb[0].mxu0 %v282
    %v1172 = vpop.f32.mrb[0].mxu0
    %v1173 = vadd.f32 %v426, %v1172
    %v1174 = vpop.f32.mrb[0].mxu0
    %v1175 = vadd.f32 %v430, %v1174
    %v1176 = vpop.f32.mrb[0].mxu0
    %v1177 = vadd.f32 %v426, %v1176
    %v1178 = vpop.f32.mrb[0].mxu0
    %v1179 = vadd.f32 %v430, %v1178
    %1180 = vdwg.mxu0
    %v1181 = vpack.c.bf16 %v962, %v958
    %v1182 = vpack.c.bf16 %v964, %v960
    %v1183 = vpack.c.bf16 %v1005, %v1001
    %v1184 = vpack.c.bf16 %v1007, %v1003
    %v1185 = vpack.c.bf16 %v1048, %v1044
    %v1186 = vpack.c.bf16 %v1050, %v1046
    %v1187 = vpack.c.bf16 %v1091, %v1087
    %v1188 = vpack.c.bf16 %v1093, %v1089
    %v1189 = vpack.c.bf16 %v1134, %v1130
    %v1190 = vpack.c.bf16 %v1136, %v1132
    %v1191 = vpack.c.bf16 %v1177, %v1173
    %v1192 = vpack.c.bf16 %v1179, %v1175
    %v1194 = vunpack.c.l.b16 %v1181
    %v1195 = vunpack.c.h.b16 %v1181
    %v1196 = vpack.c.b16 %v1194, %v1194
    %v1197 = vpack.c.b16 %v1195, %v1195
    %v1201 = vunpack.c.l.b16 %v1185
    %v1202 = vunpack.c.h.b16 %v1185
    %v1203 = vpack.c.b16 %v1201, %v1201
    %v1204 = vpack.c.b16 %v1202, %v1202
    %v1208 = vunpack.c.l.b16 %v1189
    %v1209 = vunpack.c.h.b16 %v1189
    %v1210 = vpack.c.b16 %v1208, %v1208
    %v1211 = vpack.c.b16 %v1209, %v1209
    %1212 = vmatprep.subr.bf16.mxu0 0
    %1213 = vmatpush1.bf16.xpose.msra.mxu0 %v1203
    %1214 = vmatprep.subr.bf16.mxu0 0
    %1215 = vmatpush1.bf16.xpose.msra.mxu0 0
    %1216 = vmatprep.subr.bf16.mxu0 0
    %1217 = vmatpush1.bf16.xpose.msra.mxu0 0
    %1218 = vmatprep.subr.bf16.mxu0 0
    %1219 = vmatpush1.bf16.xpose.msra.mxu0 0
    %1220 = vmatprep.subr.bf16.mxu0 0
    %1221 = vmatpush1.bf16.xpose.msra.mxu0 0
    %1222 = vmatprep.subr.bf16.mxu0 0
    %1223 = vmatpush1.bf16.xpose.msra.mxu0 0
    %1224 = vmatprep.subr.bf16.mxu0 0
    %1225 = vmatpush1.bf16.xpose.msra.mxu0 0
    %1226 = vmatprep.subr.bf16.mxu0 0
    %1227 = vmatpush1.bf16.xpose.msra.mxu0 0
    %1228 = vmatprep.subr.bf16.mxu0 0
    %1229 = vmatpush1.bf16.xpose.msra.mxu0 0
    %1230 = vmatprep.subr.bf16.mxu0 0
    %1231 = vmatpush1.bf16.xpose.msra.mxu0 0
    %1232 = vmatprep.subr.bf16.mxu0 0
    %1233 = vmatpush1.bf16.xpose.msra.mxu0 0
    %1234 = vmatprep.subr.bf16.mxu0 0
    %1235 = vmatpush1.bf16.xpose.msra.mxu0 0
    %1236 = vmatprep.subr.bf16.mxu0 0
    %1237 = vmatpush1.bf16.xpose.msra.mxu0 0
    %1238 = vmatprep.subr.bf16.mxu0 0
    %1239 = vmatpush1.bf16.xpose.msra.mxu0 0
    %1240 = vmatprep.subr.bf16.mxu0 0
    %1241 = vmatpush1.bf16.xpose.msra.mxu0 0
    %1242 = vmatprep.subr.bf16.mxu0 0
    %1243 = vmatpush1.bf16.xpose.msra.mxu0 0
    %1244 = vmatprep.mubr.bf16.mxu0 0
    %1245 = vmatmul.mubr.bf16.gmra.mrb[0].mxu0 %v1196
    %v1246 = vpop.f32.mrb[0].mxu0
    %v1247 = vadd.f32 0.0, %v1246
    %v1248 = vpop.f32.mrb[0].mxu0
    %v1249 = vpop.f32.mrb[0].mxu0
    %v1250 = vpop.f32.mrb[0].mxu0
    %1251 = vdwg.mxu0
    %1252 = vmatprep.subr.bf16.mxu0 0
    %1253 = vmatpush1.bf16.xpose.msra.mxu0 %v1204
    %1254 = vmatprep.subr.bf16.mxu0 0
    %1255 = vmatpush1.bf16.xpose.msra.mxu0 0
    %1256 = vmatprep.subr.bf16.mxu0 0
    %1257 = vmatpush1.bf16.xpose.msra.mxu0 0
    %1258 = vmatprep.subr.bf16.mxu0 0
    %1259 = vmatpush1.bf16.xpose.msra.mxu0 0
    %1260 = vmatprep.subr.bf16.mxu0 0
    %1261 = vmatpush1.bf16.xpose.msra.mxu0 0
    %1262 = vmatprep.subr.bf16.mxu0 0
    %1263 = vmatpush1.bf16.xpose.msra.mxu0 0
    %1264 = vmatprep.subr.bf16.mxu0 0
    %1265 = vmatpush1.bf16.xpose.msra.mxu0 0
    %1266 = vmatprep.subr.bf16.mxu0 0
    %1267 = vmatpush1.bf16.xpose.msra.mxu0 0
    %1268 = vmatprep.subr.bf16.mxu0 0
    %1269 = vmatpush1.bf16.xpose.msra.mxu0 0
    %1270 = vmatprep.subr.bf16.mxu0 0
    %1271 = vmatpush1.bf16.xpose.msra.mxu0 0
    %1272 = vmatprep.subr.bf16.mxu0 0
    %1273 = vmatpush1.bf16.xpose.msra.mxu0 0
    %1274 = vmatprep.subr.bf16.mxu0 0
    %1275 = vmatpush1.bf16.xpose.msra.mxu0 0
    %1276 = vmatprep.subr.bf16.mxu0 0
    %1277 = vmatpush1.bf16.xpose.msra.mxu0 0
    %1278 = vmatprep.subr.bf16.mxu0 0
    %1279 = vmatpush1.bf16.xpose.msra.mxu0 0
    %1280 = vmatprep.subr.bf16.mxu0 0
    %1281 = vmatpush1.bf16.xpose.msra.mxu0 0
    %1282 = vmatprep.subr.bf16.mxu0 0
    %1283 = vmatpush1.bf16.xpose.msra.mxu0 0
    %1284 = vmatprep.mubr.bf16.mxu0 0
    %1285 = vmatmul.mubr.bf16.gmra.mrb[0].mxu0 %v1197
    %v1286 = vpop.f32.mrb[0].mxu0
    %v1287 = vadd.f32 0.0, %v1286
    %v1288 = vpop.f32.mrb[0].mxu0
    %v1289 = vpop.f32.mrb[0].mxu0
    %v1290 = vpop.f32.mrb[0].mxu0
    %1291 = vdwg.mxu0
    %vm1292 = vcmask 64512
    %v1293 = vsel %vm1292, %v1247, -inf
    %1294 = vmax.xlane.f32.xlu0 %v1293
    %v1295 = vpop.xlane.xlu0 %1294
    %v1296 = vsel %vm1292, %v1287, -inf
    %1297 = vmax.xlane.f32.xlu0 %v1296
    %v1298 = vpop.xlane.xlu0 %1297
    %v1299 = vsub.f32 %v1247, %v1295
    %v1300 = vsub.f32 %v1287, %v1298
    %v1301 = vmul.f32 %v1299, 1.442695
    %v1302 = vpow.pop %v1301
    %v1303 = vmul.f32 %v1300, 1.442695
    %v1304 = vpow.pop %v1303
    %v1305 = vsel %vm1292, %v1302, 0.0
    %1306 = vadd.xlane.f32.xlu0 %v1305
    %v1307 = vpop.xlane.xlu0 %1306
    %v1308 = vsel %vm1292, %v1304, 0.0
    %1309 = vadd.xlane.f32.xlu0 %v1308
    %v1310 = vpop.xlane.xlu0 %1309
    %v1311 = vrcp.pop %v1307
    %v1312 = vrcp.pop %v1310
    %v1313 = vmul.f32 %v1302, %v1311
    %v1314 = vmul.f32 %v1304, %v1312
    %v1315 = vpack.c.bf16 %v1313, %v1313
    %v1316 = vpack.c.bf16 %v1314, %v1314
    %v1318 = vsel %vm1292, %v1315, 0
    %vm1320 = vcmask 1043456
    %v1322 = vsel %vm1320, %v1210, 0
    %1324 = vmatprep.subr.bf16.mxu0 0
    %1325 = vmatpush1.bf16.msra.mxu0 %v1322
    %1326 = vmatprep.subr.bf16.mxu0 0
    %1327 = vmatpush1.bf16.msra.mxu0 0
    %1328 = vmatprep.subr.bf16.mxu0 0
    %1329 = vmatpush1.bf16.msra.mxu0 0
    %1330 = vmatprep.subr.bf16.mxu0 0
    %1331 = vmatpush1.bf16.msra.mxu0 0
    %1332 = vmatprep.subr.bf16.mxu0 0
    %1333 = vmatpush1.bf16.msra.mxu0 0
    %1334 = vmatprep.subr.bf16.mxu0 0
    %1335 = vmatpush1.bf16.msra.mxu0 0
    %1336 = vmatprep.subr.bf16.mxu0 0
    %1337 = vmatpush1.bf16.msra.mxu0 0
    %1338 = vmatprep.subr.bf16.mxu0 0
    %1339 = vmatpush1.bf16.msra.mxu0 0
    %1340 = vmatprep.subr.bf16.mxu0 0
    %1341 = vmatpush1.bf16.msra.mxu0 0
    %1342 = vmatprep.subr.bf16.mxu0 0
    %1343 = vmatpush1.bf16.msra.mxu0 0
    %1344 = vmatprep.subr.bf16.mxu0 0
    %1345 = vmatpush1.bf16.msra.mxu0 0
    %1346 = vmatprep.subr.bf16.mxu0 0
    %1347 = vmatpush1.bf16.msra.mxu0 0
    %1348 = vmatprep.subr.bf16.mxu0 0
    %1349 = vmatpush1.bf16.msra.mxu0 0
    %1350 = vmatprep.subr.bf16.mxu0 0
    %1351 = vmatpush1.bf16.msra.mxu0 0
    %1352 = vmatprep.subr.bf16.mxu0 0
    %1353 = vmatpush1.bf16.msra.mxu0 0
    %1354 = vmatprep.subr.bf16.mxu0 0
    %1355 = vmatpush1.bf16.msra.mxu0 0
    %1356 = vmatprep.mubr.bf16.mxu0 0
    %1357 = vmatmul.mubr.bf16.gmra.mrb[0].mxu0 %v1318
    %v1358 = vpop.f32.mrb[0].mxu0
    %v1359 = vadd.f32 0.0, %v1358
    %v1360 = vpop.f32.mrb[0].mxu0
    %v1361 = vpop.f32.mrb[0].mxu0
    %v1362 = vpop.f32.mrb[0].mxu0
    %1363 = vdwg.mxu0
    %v1365 = vsel %vm1292, %v1316, 0
    %v1368 = vsel %vm1320, %v1211, 0
    %1370 = vmatprep.subr.bf16.mxu0 0
    %1371 = vmatpush1.bf16.msra.mxu0 %v1368
    %1372 = vmatprep.subr.bf16.mxu0 0
    %1373 = vmatpush1.bf16.msra.mxu0 0
    %1374 = vmatprep.subr.bf16.mxu0 0
    %1375 = vmatpush1.bf16.msra.mxu0 0
    %1376 = vmatprep.subr.bf16.mxu0 0
    %1377 = vmatpush1.bf16.msra.mxu0 0
    %1378 = vmatprep.subr.bf16.mxu0 0
    %1379 = vmatpush1.bf16.msra.mxu0 0
    %1380 = vmatprep.subr.bf16.mxu0 0
    %1381 = vmatpush1.bf16.msra.mxu0 0
    %1382 = vmatprep.subr.bf16.mxu0 0
    %1383 = vmatpush1.bf16.msra.mxu0 0
    %1384 = vmatprep.subr.bf16.mxu0 0
    %1385 = vmatpush1.bf16.msra.mxu0 0
    %1386 = vmatprep.subr.bf16.mxu0 0
    %1387 = vmatpush1.bf16.msra.mxu0 0
    %1388 = vmatprep.subr.bf16.mxu0 0
    %1389 = vmatpush1.bf16.msra.mxu0 0
    %1390 = vmatprep.subr.bf16.mxu0 0
    %1391 = vmatpush1.bf16.msra.mxu0 0
    %1392 = vmatprep.subr.bf16.mxu0 0
    %1393 = vmatpush1.bf16.msra.mxu0 0
    %1394 = vmatprep.subr.bf16.mxu0 0
    %1395 = vmatpush1.bf16.msra.mxu0 0
    %1396 = vmatprep.subr.bf16.mxu0 0
    %1397 = vmatpush1.bf16.msra.mxu0 0
    %1398 = vmatprep.subr.bf16.mxu0 0
    %1399 = vmatpush1.bf16.msra.mxu0 0
    %1400 = vmatprep.subr.bf16.mxu0 0
    %1401 = vmatpush1.bf16.msra.mxu0 0
    %1402 = vmatprep.mubr.bf16.mxu0 0
    %1403 = vmatmul.mubr.bf16.gmra.mrb[0].mxu0 %v1365
    %v1404 = vpop.f32.mrb[0].mxu0
    %v1405 = vadd.f32 0.0, %v1404
    %v1406 = vpop.f32.mrb[0].mxu0
    %v1407 = vpop.f32.mrb[0].mxu0
    %v1408 = vpop.f32.mrb[0].mxu0
    %1409 = vdwg.mxu0
    %v1411 = vunpack.c.l.b16 %v1182
    %v1412 = vunpack.c.h.b16 %v1182
    %v1413 = vpack.c.b16 %v1411, %v1411
    %v1414 = vpack.c.b16 %v1412, %v1412
    %v1418 = vunpack.c.l.b16 %v1186
    %v1419 = vunpack.c.h.b16 %v1186
    %v1420 = vpack.c.b16 %v1418, %v1418
    %v1421 = vpack.c.b16 %v1419, %v1419
    %v1425 = vunpack.c.l.b16 %v1190
    %v1426 = vunpack.c.h.b16 %v1190
    %v1427 = vpack.c.b16 %v1425, %v1425
    %v1428 = vpack.c.b16 %v1426, %v1426
    %1429 = vmatprep.subr.bf16.mxu0 0
    %1430 = vmatpush1.bf16.xpose.msra.mxu0 %v1420
    %1431 = vmatprep.subr.bf16.mxu0 0
    %1432 = vmatpush1.bf16.xpose.msra.mxu0 0
    %1433 = vmatprep.subr.bf16.mxu0 0
    %1434 = vmatpush1.bf16.xpose.msra.mxu0 0
    %1435 = vmatprep.subr.bf16.mxu0 0
    %1436 = vmatpush1.bf16.xpose.msra.mxu0 0
    %1437 = vmatprep.subr.bf16.mxu0 0
    %1438 = vmatpush1.bf16.xpose.msra.mxu0 0
    %1439 = vmatprep.subr.bf16.mxu0 0
    %1440 = vmatpush1.bf16.xpose.msra.mxu0 0
    %1441 = vmatprep.subr.bf16.mxu0 0
    %1442 = vmatpush1.bf16.xpose.msra.mxu0 0
    %1443 = vmatprep.subr.bf16.mxu0 0
    %1444 = vmatpush1.bf16.xpose.msra.mxu0 0
    %1445 = vmatprep.subr.bf16.mxu0 0
    %1446 = vmatpush1.bf16.xpose.msra.mxu0 0
    %1447 = vmatprep.subr.bf16.mxu0 0
    %1448 = vmatpush1.bf16.xpose.msra.mxu0 0
    %1449 = vmatprep.subr.bf16.mxu0 0
    %1450 = vmatpush1.bf16.xpose.msra.mxu0 0
    %1451 = vmatprep.subr.bf16.mxu0 0
    %1452 = vmatpush1.bf16.xpose.msra.mxu0 0
    %1453 = vmatprep.subr.bf16.mxu0 0
    %1454 = vmatpush1.bf16.xpose.msra.mxu0 0
    %1455 = vmatprep.subr.bf16.mxu0 0
    %1456 = vmatpush1.bf16.xpose.msra.mxu0 0
    %1457 = vmatprep.subr.bf16.mxu0 0
    %1458 = vmatpush1.bf16.xpose.msra.mxu0 0
    %1459 = vmatprep.subr.bf16.mxu0 0
    %1460 = vmatpush1.bf16.xpose.msra.mxu0 0
    %1461 = vmatprep.mubr.bf16.mxu0 0
    %1462 = vmatmul.mubr.bf16.gmra.mrb[0].mxu0 %v1413
    %v1463 = vpop.f32.mrb[0].mxu0
    %v1464 = vadd.f32 0.0, %v1463
    %v1465 = vpop.f32.mrb[0].mxu0
    %v1466 = vpop.f32.mrb[0].mxu0
    %v1467 = vpop.f32.mrb[0].mxu0
    %1468 = vdwg.mxu0
    %1469 = vmatprep.subr.bf16.mxu0 0
    %1470 = vmatpush1.bf16.xpose.msra.mxu0 %v1421
    %1471 = vmatprep.subr.bf16.mxu0 0
    %1472 = vmatpush1.bf16.xpose.msra.mxu0 0
    %1473 = vmatprep.subr.bf16.mxu0 0
    %1474 = vmatpush1.bf16.xpose.msra.mxu0 0
    %1475 = vmatprep.subr.bf16.mxu0 0
    %1476 = vmatpush1.bf16.xpose.msra.mxu0 0
    %1477 = vmatprep.subr.bf16.mxu0 0
    %1478 = vmatpush1.bf16.xpose.msra.mxu0 0
    %1479 = vmatprep.subr.bf16.mxu0 0
    %1480 = vmatpush1.bf16.xpose.msra.mxu0 0
    %1481 = vmatprep.subr.bf16.mxu0 0
    %1482 = vmatpush1.bf16.xpose.msra.mxu0 0
    %1483 = vmatprep.subr.bf16.mxu0 0
    %1484 = vmatpush1.bf16.xpose.msra.mxu0 0
    %1485 = vmatprep.subr.bf16.mxu0 0
    %1486 = vmatpush1.bf16.xpose.msra.mxu0 0
    %1487 = vmatprep.subr.bf16.mxu0 0
    %1488 = vmatpush1.bf16.xpose.msra.mxu0 0
    %1489 = vmatprep.subr.bf16.mxu0 0
    %1490 = vmatpush1.bf16.xpose.msra.mxu0 0
    %1491 = vmatprep.subr.bf16.mxu0 0
    %1492 = vmatpush1.bf16.xpose.msra.mxu0 0
    %1493 = vmatprep.subr.bf16.mxu0 0
    %1494 = vmatpush1.bf16.xpose.msra.mxu0 0
    %1495 = vmatprep.subr.bf16.mxu0 0
    %1496 = vmatpush1.bf16.xpose.msra.mxu0 0
    %1497 = vmatprep.subr.bf16.mxu0 0
    %1498 = vmatpush1.bf16.xpose.msra.mxu0 0
    %1499 = vmatprep.subr.bf16.mxu0 0
    %1500 = vmatpush1.bf16.xpose.msra.mxu0 0
    %1501 = vmatprep.mubr.bf16.mxu0 0
    %1502 = vmatmul.mubr.bf16.gmra.mrb[0].mxu0 %v1414
    %v1503 = vpop.f32.mrb[0].mxu0
    %v1504 = vadd.f32 0.0, %v1503
    %v1505 = vpop.f32.mrb[0].mxu0
    %v1506 = vpop.f32.mrb[0].mxu0
    %v1507 = vpop.f32.mrb[0].mxu0
    %1508 = vdwg.mxu0
    %v1509 = vsel %vm1292, %v1464, -inf
    %1510 = vmax.xlane.f32.xlu0 %v1509
    %v1511 = vpop.xlane.xlu0 %1510
    %v1512 = vsel %vm1292, %v1504, -inf
    %1513 = vmax.xlane.f32.xlu0 %v1512
    %v1514 = vpop.xlane.xlu0 %1513
    %v1515 = vsub.f32 %v1464, %v1511
    %v1516 = vsub.f32 %v1504, %v1514
    %v1517 = vmul.f32 %v1515, 1.442695
    %v1518 = vpow.pop %v1517
    %v1519 = vmul.f32 %v1516, 1.442695
    %v1520 = vpow.pop %v1519
    %v1521 = vsel %vm1292, %v1518, 0.0
    %1522 = vadd.xlane.f32.xlu0 %v1521
    %v1523 = vpop.xlane.xlu0 %1522
    %v1524 = vsel %vm1292, %v1520, 0.0
    %1525 = vadd.xlane.f32.xlu0 %v1524
    %v1526 = vpop.xlane.xlu0 %1525
    %v1527 = vrcp.pop %v1523
    %v1528 = vrcp.pop %v1526
    %v1529 = vmul.f32 %v1518, %v1527
    %v1530 = vmul.f32 %v1520, %v1528
    %v1531 = vpack.c.bf16 %v1529, %v1529
    %v1532 = vpack.c.bf16 %v1530, %v1530
    %v1534 = vsel %vm1292, %v1531, 0
    %v1537 = vsel %vm1320, %v1427, 0
    %1539 = vmatprep.subr.bf16.mxu0 0
    %1540 = vmatpush1.bf16.msra.mxu0 %v1537
    %1541 = vmatprep.subr.bf16.mxu0 0
    %1542 = vmatpush1.bf16.msra.mxu0 0
    %1543 = vmatprep.subr.bf16.mxu0 0
    %1544 = vmatpush1.bf16.msra.mxu0 0
    %1545 = vmatprep.subr.bf16.mxu0 0
    %1546 = vmatpush1.bf16.msra.mxu0 0
    %1547 = vmatprep.subr.bf16.mxu0 0
    %1548 = vmatpush1.bf16.msra.mxu0 0
    %1549 = vmatprep.subr.bf16.mxu0 0
    %1550 = vmatpush1.bf16.msra.mxu0 0
    %1551 = vmatprep.subr.bf16.mxu0 0
    %1552 = vmatpush1.bf16.msra.mxu0 0
    %1553 = vmatprep.subr.bf16.mxu0 0
    %1554 = vmatpush1.bf16.msra.mxu0 0
    %1555 = vmatprep.subr.bf16.mxu0 0
    %1556 = vmatpush1.bf16.msra.mxu0 0
    %1557 = vmatprep.subr.bf16.mxu0 0
    %1558 = vmatpush1.bf16.msra.mxu0 0
    %1559 = vmatprep.subr.bf16.mxu0 0
    %1560 = vmatpush1.bf16.msra.mxu0 0
    %1561 = vmatprep.subr.bf16.mxu0 0
    %1562 = vmatpush1.bf16.msra.mxu0 0
    %1563 = vmatprep.subr.bf16.mxu0 0
    %1564 = vmatpush1.bf16.msra.mxu0 0
    %1565 = vmatprep.subr.bf16.mxu0 0
    %1566 = vmatpush1.bf16.msra.mxu0 0
    %1567 = vmatprep.subr.bf16.mxu0 0
    %1568 = vmatpush1.bf16.msra.mxu0 0
    %1569 = vmatprep.subr.bf16.mxu0 0
    %1570 = vmatpush1.bf16.msra.mxu0 0
    %1571 = vmatprep.mubr.bf16.mxu0 0
    %1572 = vmatmul.mubr.bf16.gmra.mrb[0].mxu0 %v1534
    %v1573 = vpop.f32.mrb[0].mxu0
    %v1574 = vadd.f32 0.0, %v1573
    %v1575 = vpop.f32.mrb[0].mxu0
    %v1576 = vpop.f32.mrb[0].mxu0
    %v1577 = vpop.f32.mrb[0].mxu0
    %1578 = vdwg.mxu0
    %v1580 = vsel %vm1292, %v1532, 0
    %v1583 = vsel %vm1320, %v1428, 0
    %1585 = vmatprep.subr.bf16.mxu0 0
    %1586 = vmatpush1.bf16.msra.mxu0 %v1583
    %1587 = vmatprep.subr.bf16.mxu0 0
    %1588 = vmatpush1.bf16.msra.mxu0 0
    %1589 = vmatprep.subr.bf16.mxu0 0
    %1590 = vmatpush1.bf16.msra.mxu0 0
    %1591 = vmatprep.subr.bf16.mxu0 0
    %1592 = vmatpush1.bf16.msra.mxu0 0
    %1593 = vmatprep.subr.bf16.mxu0 0
    %1594 = vmatpush1.bf16.msra.mxu0 0
    %1595 = vmatprep.subr.bf16.mxu0 0
    %1596 = vmatpush1.bf16.msra.mxu0 0
    %1597 = vmatprep.subr.bf16.mxu0 0
    %1598 = vmatpush1.bf16.msra.mxu0 0
    %1599 = vmatprep.subr.bf16.mxu0 0
    %1600 = vmatpush1.bf16.msra.mxu0 0
    %1601 = vmatprep.subr.bf16.mxu0 0
    %1602 = vmatpush1.bf16.msra.mxu0 0
    %1603 = vmatprep.subr.bf16.mxu0 0
    %1604 = vmatpush1.bf16.msra.mxu0 0
    %1605 = vmatprep.subr.bf16.mxu0 0
    %1606 = vmatpush1.bf16.msra.mxu0 0
    %1607 = vmatprep.subr.bf16.mxu0 0
    %1608 = vmatpush1.bf16.msra.mxu0 0
    %1609 = vmatprep.subr.bf16.mxu0 0
    %1610 = vmatpush1.bf16.msra.mxu0 0
    %1611 = vmatprep.subr.bf16.mxu0 0
    %1612 = vmatpush1.bf16.msra.mxu0 0
    %1613 = vmatprep.subr.bf16.mxu0 0
    %1614 = vmatpush1.bf16.msra.mxu0 0
    %1615 = vmatprep.subr.bf16.mxu0 0
    %1616 = vmatpush1.bf16.msra.mxu0 0
    %1617 = vmatprep.mubr.bf16.mxu0 0
    %1618 = vmatmul.mubr.bf16.gmra.mrb[0].mxu0 %v1580
    %v1619 = vpop.f32.mrb[0].mxu0
    %v1620 = vadd.f32 0.0, %v1619
    %v1621 = vpop.f32.mrb[0].mxu0
    %v1622 = vpop.f32.mrb[0].mxu0
    %v1623 = vpop.f32.mrb[0].mxu0
    %1624 = vdwg.mxu0
    %v1626 = vunpack.c.l.b16 %v1183
    %v1627 = vunpack.c.h.b16 %v1183
    %v1628 = vpack.c.b16 %v1626, %v1626
    %v1629 = vpack.c.b16 %v1627, %v1627
    %v1633 = vunpack.c.l.b16 %v1187
    %v1634 = vunpack.c.h.b16 %v1187
    %v1635 = vpack.c.b16 %v1633, %v1633
    %v1636 = vpack.c.b16 %v1634, %v1634
    %v1640 = vunpack.c.l.b16 %v1191
    %v1641 = vunpack.c.h.b16 %v1191
    %v1642 = vpack.c.b16 %v1640, %v1640
    %v1643 = vpack.c.b16 %v1641, %v1641
    %1644 = vmatprep.subr.bf16.mxu0 0
    %1645 = vmatpush1.bf16.xpose.msra.mxu0 %v1635
    %1646 = vmatprep.subr.bf16.mxu0 0
    %1647 = vmatpush1.bf16.xpose.msra.mxu0 0
    %1648 = vmatprep.subr.bf16.mxu0 0
    %1649 = vmatpush1.bf16.xpose.msra.mxu0 0
    %1650 = vmatprep.subr.bf16.mxu0 0
    %1651 = vmatpush1.bf16.xpose.msra.mxu0 0
    %1652 = vmatprep.subr.bf16.mxu0 0
    %1653 = vmatpush1.bf16.xpose.msra.mxu0 0
    %1654 = vmatprep.subr.bf16.mxu0 0
    %1655 = vmatpush1.bf16.xpose.msra.mxu0 0
    %1656 = vmatprep.subr.bf16.mxu0 0
    %1657 = vmatpush1.bf16.xpose.msra.mxu0 0
    %1658 = vmatprep.subr.bf16.mxu0 0
    %1659 = vmatpush1.bf16.xpose.msra.mxu0 0
    %1660 = vmatprep.subr.bf16.mxu0 0
    %1661 = vmatpush1.bf16.xpose.msra.mxu0 0
    %1662 = vmatprep.subr.bf16.mxu0 0
    %1663 = vmatpush1.bf16.xpose.msra.mxu0 0
    %1664 = vmatprep.subr.bf16.mxu0 0
    %1665 = vmatpush1.bf16.xpose.msra.mxu0 0
    %1666 = vmatprep.subr.bf16.mxu0 0
    %1667 = vmatpush1.bf16.xpose.msra.mxu0 0
    %1668 = vmatprep.subr.bf16.mxu0 0
    %1669 = vmatpush1.bf16.xpose.msra.mxu0 0
    %1670 = vmatprep.subr.bf16.mxu0 0
    %1671 = vmatpush1.bf16.xpose.msra.mxu0 0
    %1672 = vmatprep.subr.bf16.mxu0 0
    %1673 = vmatpush1.bf16.xpose.msra.mxu0 0
    %1674 = vmatprep.subr.bf16.mxu0 0
    %1675 = vmatpush1.bf16.xpose.msra.mxu0 0
    %1676 = vmatprep.mubr.bf16.mxu0 0
    %1677 = vmatmul.mubr.bf16.gmra.mrb[0].mxu0 %v1628
    %v1678 = vpop.f32.mrb[0].mxu0
    %v1679 = vadd.f32 0.0, %v1678
    %v1680 = vpop.f32.mrb[0].mxu0
    %v1681 = vpop.f32.mrb[0].mxu0
    %v1682 = vpop.f32.mrb[0].mxu0
    %1683 = vdwg.mxu0
    %1684 = vmatprep.subr.bf16.mxu0 0
    %1685 = vmatpush1.bf16.xpose.msra.mxu0 %v1636
    %1686 = vmatprep.subr.bf16.mxu0 0
    %1687 = vmatpush1.bf16.xpose.msra.mxu0 0
    %1688 = vmatprep.subr.bf16.mxu0 0
    %1689 = vmatpush1.bf16.xpose.msra.mxu0 0
    %1690 = vmatprep.subr.bf16.mxu0 0
    %1691 = vmatpush1.bf16.xpose.msra.mxu0 0
    %1692 = vmatprep.subr.bf16.mxu0 0
    %1693 = vmatpush1.bf16.xpose.msra.mxu0 0
    %1694 = vmatprep.subr.bf16.mxu0 0
    %1695 = vmatpush1.bf16.xpose.msra.mxu0 0
    %1696 = vmatprep.subr.bf16.mxu0 0
    %1697 = vmatpush1.bf16.xpose.msra.mxu0 0
    %1698 = vmatprep.subr.bf16.mxu0 0
    %1699 = vmatpush1.bf16.xpose.msra.mxu0 0
    %1700 = vmatprep.subr.bf16.mxu0 0
    %1701 = vmatpush1.bf16.xpose.msra.mxu0 0
    %1702 = vmatprep.subr.bf16.mxu0 0
    %1703 = vmatpush1.bf16.xpose.msra.mxu0 0
    %1704 = vmatprep.subr.bf16.mxu0 0
    %1705 = vmatpush1.bf16.xpose.msra.mxu0 0
    %1706 = vmatprep.subr.bf16.mxu0 0
    %1707 = vmatpush1.bf16.xpose.msra.mxu0 0
    %1708 = vmatprep.subr.bf16.mxu0 0
    %1709 = vmatpush1.bf16.xpose.msra.mxu0 0
    %1710 = vmatprep.subr.bf16.mxu0 0
    %1711 = vmatpush1.bf16.xpose.msra.mxu0 0
    %1712 = vmatprep.subr.bf16.mxu0 0
    %1713 = vmatpush1.bf16.xpose.msra.mxu0 0
    %1714 = vmatprep.subr.bf16.mxu0 0
    %1715 = vmatpush1.bf16.xpose.msra.mxu0 0
    %1716 = vmatprep.mubr.bf16.mxu0 0
    %1717 = vmatmul.mubr.bf16.gmra.mrb[0].mxu0 %v1629
    %v1718 = vpop.f32.mrb[0].mxu0
    %v1719 = vadd.f32 0.0, %v1718
    %v1720 = vpop.f32.mrb[0].mxu0
    %v1721 = vpop.f32.mrb[0].mxu0
    %v1722 = vpop.f32.mrb[0].mxu0
    %1723 = vdwg.mxu0
    %v1724 = vsel %vm1292, %v1679, -inf
    %1725 = vmax.xlane.f32.xlu0 %v1724
    %v1726 = vpop.xlane.xlu0 %1725
    %v1727 = vsel %vm1292, %v1719, -inf
    %1728 = vmax.xlane.f32.xlu0 %v1727
    %v1729 = vpop.xlane.xlu0 %1728
    %v1730 = vsub.f32 %v1679, %v1726
    %v1731 = vsub.f32 %v1719, %v1729
    %v1732 = vmul.f32 %v1730, 1.442695
    %v1733 = vpow.pop %v1732
    %v1734 = vmul.f32 %v1731, 1.442695
    %v1735 = vpow.pop %v1734
    %v1736 = vsel %vm1292, %v1733, 0.0
    %1737 = vadd.xlane.f32.xlu0 %v1736
    %v1738 = vpop.xlane.xlu0 %1737
    %v1739 = vsel %vm1292, %v1735, 0.0
    %1740 = vadd.xlane.f32.xlu0 %v1739
    %v1741 = vpop.xlane.xlu0 %1740
    %v1742 = vrcp.pop %v1738
    %v1743 = vrcp.pop %v1741
    %v1744 = vmul.f32 %v1733, %v1742
    %v1745 = vmul.f32 %v1735, %v1743
    %v1746 = vpack.c.bf16 %v1744, %v1744
    %v1747 = vpack.c.bf16 %v1745, %v1745
    %v1749 = vsel %vm1292, %v1746, 0
    %v1752 = vsel %vm1320, %v1642, 0
    %1754 = vmatprep.subr.bf16.mxu0 0
    %1755 = vmatpush1.bf16.msra.mxu0 %v1752
    %1756 = vmatprep.subr.bf16.mxu0 0
    %1757 = vmatpush1.bf16.msra.mxu0 0
    %1758 = vmatprep.subr.bf16.mxu0 0
    %1759 = vmatpush1.bf16.msra.mxu0 0
    %1760 = vmatprep.subr.bf16.mxu0 0
    %1761 = vmatpush1.bf16.msra.mxu0 0
    %1762 = vmatprep.subr.bf16.mxu0 0
    %1763 = vmatpush1.bf16.msra.mxu0 0
    %1764 = vmatprep.subr.bf16.mxu0 0
    %1765 = vmatpush1.bf16.msra.mxu0 0
    %1766 = vmatprep.subr.bf16.mxu0 0
    %1767 = vmatpush1.bf16.msra.mxu0 0
    %1768 = vmatprep.subr.bf16.mxu0 0
    %1769 = vmatpush1.bf16.msra.mxu0 0
    %1770 = vmatprep.subr.bf16.mxu0 0
    %1771 = vmatpush1.bf16.msra.mxu0 0
    %1772 = vmatprep.subr.bf16.mxu0 0
    %1773 = vmatpush1.bf16.msra.mxu0 0
    %1774 = vmatprep.subr.bf16.mxu0 0
    %1775 = vmatpush1.bf16.msra.mxu0 0
    %1776 = vmatprep.subr.bf16.mxu0 0
    %1777 = vmatpush1.bf16.msra.mxu0 0
    %1778 = vmatprep.subr.bf16.mxu0 0
    %1779 = vmatpush1.bf16.msra.mxu0 0
    %1780 = vmatprep.subr.bf16.mxu0 0
    %1781 = vmatpush1.bf16.msra.mxu0 0
    %1782 = vmatprep.subr.bf16.mxu0 0
    %1783 = vmatpush1.bf16.msra.mxu0 0
    %1784 = vmatprep.subr.bf16.mxu0 0
    %1785 = vmatpush1.bf16.msra.mxu0 0
    %1786 = vmatprep.mubr.bf16.mxu0 0
    %1787 = vmatmul.mubr.bf16.gmra.mrb[0].mxu0 %v1749
    %v1788 = vpop.f32.mrb[0].mxu0
    %v1789 = vadd.f32 0.0, %v1788
    %v1790 = vpop.f32.mrb[0].mxu0
    %v1791 = vpop.f32.mrb[0].mxu0
    %v1792 = vpop.f32.mrb[0].mxu0
    %1793 = vdwg.mxu0
    %v1795 = vsel %vm1292, %v1747, 0
    %v1798 = vsel %vm1320, %v1643, 0
    %1800 = vmatprep.subr.bf16.mxu0 0
    %1801 = vmatpush1.bf16.msra.mxu0 %v1798
    %1802 = vmatprep.subr.bf16.mxu0 0
    %1803 = vmatpush1.bf16.msra.mxu0 0
    %1804 = vmatprep.subr.bf16.mxu0 0
    %1805 = vmatpush1.bf16.msra.mxu0 0
    %1806 = vmatprep.subr.bf16.mxu0 0
    %1807 = vmatpush1.bf16.msra.mxu0 0
    %1808 = vmatprep.subr.bf16.mxu0 0
    %1809 = vmatpush1.bf16.msra.mxu0 0
    %1810 = vmatprep.subr.bf16.mxu0 0
    %1811 = vmatpush1.bf16.msra.mxu0 0
    %1812 = vmatprep.subr.bf16.mxu0 0
    %1813 = vmatpush1.bf16.msra.mxu0 0
    %1814 = vmatprep.subr.bf16.mxu0 0
    %1815 = vmatpush1.bf16.msra.mxu0 0
    %1816 = vmatprep.subr.bf16.mxu0 0
    %1817 = vmatpush1.bf16.msra.mxu0 0
    %1818 = vmatprep.subr.bf16.mxu0 0
    %1819 = vmatpush1.bf16.msra.mxu0 0
    %1820 = vmatprep.subr.bf16.mxu0 0
    %1821 = vmatpush1.bf16.msra.mxu0 0
    %1822 = vmatprep.subr.bf16.mxu0 0
    %1823 = vmatpush1.bf16.msra.mxu0 0
    %1824 = vmatprep.subr.bf16.mxu0 0
    %1825 = vmatpush1.bf16.msra.mxu0 0
    %1826 = vmatprep.subr.bf16.mxu0 0
    %1827 = vmatpush1.bf16.msra.mxu0 0
    %1828 = vmatprep.subr.bf16.mxu0 0
    %1829 = vmatpush1.bf16.msra.mxu0 0
    %1830 = vmatprep.subr.bf16.mxu0 0
    %1831 = vmatpush1.bf16.msra.mxu0 0
    %1832 = vmatprep.mubr.bf16.mxu0 0
    %1833 = vmatmul.mubr.bf16.gmra.mrb[0].mxu0 %v1795
    %v1834 = vpop.f32.mrb[0].mxu0
    %v1835 = vadd.f32 0.0, %v1834
    %v1836 = vpop.f32.mrb[0].mxu0
    %v1837 = vpop.f32.mrb[0].mxu0
    %v1838 = vpop.f32.mrb[0].mxu0
    %1839 = vdwg.mxu0
    %v1841 = vunpack.c.l.b16 %v1184
    %v1842 = vunpack.c.h.b16 %v1184
    %v1843 = vpack.c.b16 %v1841, %v1841
    %v1844 = vpack.c.b16 %v1842, %v1842
    %v1848 = vunpack.c.l.b16 %v1188
    %v1849 = vunpack.c.h.b16 %v1188
    %v1850 = vpack.c.b16 %v1848, %v1848
    %v1851 = vpack.c.b16 %v1849, %v1849
    %v1855 = vunpack.c.l.b16 %v1192
    %v1856 = vunpack.c.h.b16 %v1192
    %v1857 = vpack.c.b16 %v1855, %v1855
    %v1858 = vpack.c.b16 %v1856, %v1856
    %1859 = vmatprep.subr.bf16.mxu0 0
    %1860 = vmatpush1.bf16.xpose.msra.mxu0 %v1850
    %1861 = vmatprep.subr.bf16.mxu0 0
    %1862 = vmatpush1.bf16.xpose.msra.mxu0 0
    %1863 = vmatprep.subr.bf16.mxu0 0
    %1864 = vmatpush1.bf16.xpose.msra.mxu0 0
    %1865 = vmatprep.subr.bf16.mxu0 0
    %1866 = vmatpush1.bf16.xpose.msra.mxu0 0
    %1867 = vmatprep.subr.bf16.mxu0 0
    %1868 = vmatpush1.bf16.xpose.msra.mxu0 0
    %1869 = vmatprep.subr.bf16.mxu0 0
    %1870 = vmatpush1.bf16.xpose.msra.mxu0 0
    %1871 = vmatprep.subr.bf16.mxu0 0
    %1872 = vmatpush1.bf16.xpose.msra.mxu0 0
    %1873 = vmatprep.subr.bf16.mxu0 0
    %1874 = vmatpush1.bf16.xpose.msra.mxu0 0
    %1875 = vmatprep.subr.bf16.mxu0 0
    %1876 = vmatpush1.bf16.xpose.msra.mxu0 0
    %1877 = vmatprep.subr.bf16.mxu0 0
    %1878 = vmatpush1.bf16.xpose.msra.mxu0 0
    %1879 = vmatprep.subr.bf16.mxu0 0
    %1880 = vmatpush1.bf16.xpose.msra.mxu0 0
    %1881 = vmatprep.subr.bf16.mxu0 0
    %1882 = vmatpush1.bf16.xpose.msra.mxu0 0
    %1883 = vmatprep.subr.bf16.mxu0 0
    %1884 = vmatpush1.bf16.xpose.msra.mxu0 0
    %1885 = vmatprep.subr.bf16.mxu0 0
    %1886 = vmatpush1.bf16.xpose.msra.mxu0 0
    %1887 = vmatprep.subr.bf16.mxu0 0
    %1888 = vmatpush1.bf16.xpose.msra.mxu0 0
    %1889 = vmatprep.subr.bf16.mxu0 0
    %1890 = vmatpush1.bf16.xpose.msra.mxu0 0
    %1891 = vmatprep.mubr.bf16.mxu0 0
    %1892 = vmatmul.mubr.bf16.gmra.mrb[0].mxu0 %v1843
    %v1893 = vpop.f32.mrb[0].mxu0
    %v1894 = vadd.f32 0.0, %v1893
    %v1895 = vpop.f32.mrb[0].mxu0
    %v1896 = vpop.f32.mrb[0].mxu0
    %v1897 = vpop.f32.mrb[0].mxu0
    %1898 = vdwg.mxu0
    %1899 = vmatprep.subr.bf16.mxu0 0
    %1900 = vmatpush1.bf16.xpose.msra.mxu0 %v1851
    %1901 = vmatprep.subr.bf16.mxu0 0
    %1902 = vmatpush1.bf16.xpose.msra.mxu0 0
    %1903 = vmatprep.subr.bf16.mxu0 0
    %1904 = vmatpush1.bf16.xpose.msra.mxu0 0
    %1905 = vmatprep.subr.bf16.mxu0 0
    %1906 = vmatpush1.bf16.xpose.msra.mxu0 0
    %1907 = vmatprep.subr.bf16.mxu0 0
    %1908 = vmatpush1.bf16.xpose.msra.mxu0 0
    %1909 = vmatprep.subr.bf16.mxu0 0
    %1910 = vmatpush1.bf16.xpose.msra.mxu0 0
    %1911 = vmatprep.subr.bf16.mxu0 0
    %1912 = vmatpush1.bf16.xpose.msra.mxu0 0
    %1913 = vmatprep.subr.bf16.mxu0 0
    %1914 = vmatpush1.bf16.xpose.msra.mxu0 0
    %1915 = vmatprep.subr.bf16.mxu0 0
    %1916 = vmatpush1.bf16.xpose.msra.mxu0 0
    %1917 = vmatprep.subr.bf16.mxu0 0
    %1918 = vmatpush1.bf16.xpose.msra.mxu0 0
    %1919 = vmatprep.subr.bf16.mxu0 0
    %1920 = vmatpush1.bf16.xpose.msra.mxu0 0
    %1921 = vmatprep.subr.bf16.mxu0 0
    %1922 = vmatpush1.bf16.xpose.msra.mxu0 0
    %1923 = vmatprep.subr.bf16.mxu0 0
    %1924 = vmatpush1.bf16.xpose.msra.mxu0 0
    %1925 = vmatprep.subr.bf16.mxu0 0
    %1926 = vmatpush1.bf16.xpose.msra.mxu0 0
    %1927 = vmatprep.subr.bf16.mxu0 0
    %1928 = vmatpush1.bf16.xpose.msra.mxu0 0
    %1929 = vmatprep.subr.bf16.mxu0 0
    %1930 = vmatpush1.bf16.xpose.msra.mxu0 0
    %1931 = vmatprep.mubr.bf16.mxu0 0
    %1932 = vmatmul.mubr.bf16.gmra.mrb[0].mxu0 %v1844
    %v1933 = vpop.f32.mrb[0].mxu0
    %v1934 = vadd.f32 0.0, %v1933
    %v1935 = vpop.f32.mrb[0].mxu0
    %v1936 = vpop.f32.mrb[0].mxu0
    %v1937 = vpop.f32.mrb[0].mxu0
    %1938 = vdwg.mxu0
    %v1939 = vsel %vm1292, %v1894, -inf
    %1940 = vmax.xlane.f32.xlu0 %v1939
    %v1941 = vpop.xlane.xlu0 %1940
    %v1942 = vsel %vm1292, %v1934, -inf
    %1943 = vmax.xlane.f32.xlu0 %v1942
    %v1944 = vpop.xlane.xlu0 %1943
    %v1945 = vsub.f32 %v1894, %v1941
    %v1946 = vsub.f32 %v1934, %v1944
    %v1947 = vmul.f32 %v1945, 1.442695
    %v1948 = vpow.pop %v1947
    %v1949 = vmul.f32 %v1946, 1.442695
    %v1950 = vpow.pop %v1949
    %v1951 = vsel %vm1292, %v1948, 0.0
    %1952 = vadd.xlane.f32.xlu0 %v1951
    %v1953 = vpop.xlane.xlu0 %1952
    %v1954 = vsel %vm1292, %v1950, 0.0
    %1955 = vadd.xlane.f32.xlu0 %v1954
    %v1956 = vpop.xlane.xlu0 %1955
    %v1957 = vrcp.pop %v1953
    %v1958 = vrcp.pop %v1956
    %v1959 = vmul.f32 %v1948, %v1957
    %v1960 = vmul.f32 %v1950, %v1958
    %v1961 = vpack.c.bf16 %v1959, %v1959
    %v1962 = vpack.c.bf16 %v1960, %v1960
    %v1964 = vsel %vm1292, %v1961, 0
    %v1967 = vsel %vm1320, %v1857, 0
    %1969 = vmatprep.subr.bf16.mxu0 0
    %1970 = vmatpush1.bf16.msra.mxu0 %v1967
    %1971 = vmatprep.subr.bf16.mxu0 0
    %1972 = vmatpush1.bf16.msra.mxu0 0
    %1973 = vmatprep.subr.bf16.mxu0 0
    %1974 = vmatpush1.bf16.msra.mxu0 0
    %1975 = vmatprep.subr.bf16.mxu0 0
    %1976 = vmatpush1.bf16.msra.mxu0 0
    %1977 = vmatprep.subr.bf16.mxu0 0
    %1978 = vmatpush1.bf16.msra.mxu0 0
    %1979 = vmatprep.subr.bf16.mxu0 0
    %1980 = vmatpush1.bf16.msra.mxu0 0
    %1981 = vmatprep.subr.bf16.mxu0 0
    %1982 = vmatpush1.bf16.msra.mxu0 0
    %1983 = vmatprep.subr.bf16.mxu0 0
    %1984 = vmatpush1.bf16.msra.mxu0 0
    %1985 = vmatprep.subr.bf16.mxu0 0
    %1986 = vmatpush1.bf16.msra.mxu0 0
    %1987 = vmatprep.subr.bf16.mxu0 0
    %1988 = vmatpush1.bf16.msra.mxu0 0
    %1989 = vmatprep.subr.bf16.mxu0 0
    %1990 = vmatpush1.bf16.msra.mxu0 0
    %1991 = vmatprep.subr.bf16.mxu0 0
    %1992 = vmatpush1.bf16.msra.mxu0 0
    %1993 = vmatprep.subr.bf16.mxu0 0
    %1994 = vmatpush1.bf16.msra.mxu0 0
    %1995 = vmatprep.subr.bf16.mxu0 0
    %1996 = vmatpush1.bf16.msra.mxu0 0
    %1997 = vmatprep.subr.bf16.mxu0 0
    %1998 = vmatpush1.bf16.msra.mxu0 0
    %1999 = vmatprep.subr.bf16.mxu0 0
    %2000 = vmatpush1.bf16.msra.mxu0 0
    %2001 = vmatprep.mubr.bf16.mxu0 0
    %2002 = vmatmul.mubr.bf16.gmra.mrb[0].mxu0 %v1964
    %v2003 = vpop.f32.mrb[0].mxu0
    %v2004 = vadd.f32 0.0, %v2003
    %v2005 = vpop.f32.mrb[0].mxu0
    %v2006 = vpop.f32.mrb[0].mxu0
    %v2007 = vpop.f32.mrb[0].mxu0
    %2008 = vdwg.mxu0
    %v2010 = vsel %vm1292, %v1962, 0
    %v2013 = vsel %vm1320, %v1858, 0
    %2015 = vmatprep.subr.bf16.mxu0 0
    %2016 = vmatpush1.bf16.msra.mxu0 %v2013
    %2017 = vmatprep.subr.bf16.mxu0 0
    %2018 = vmatpush1.bf16.msra.mxu0 0
    %2019 = vmatprep.subr.bf16.mxu0 0
    %2020 = vmatpush1.bf16.msra.mxu0 0
    %2021 = vmatprep.subr.bf16.mxu0 0
    %2022 = vmatpush1.bf16.msra.mxu0 0
    %2023 = vmatprep.subr.bf16.mxu0 0
    %2024 = vmatpush1.bf16.msra.mxu0 0
    %2025 = vmatprep.subr.bf16.mxu0 0
    %2026 = vmatpush1.bf16.msra.mxu0 0
    %2027 = vmatprep.subr.bf16.mxu0 0
    %2028 = vmatpush1.bf16.msra.mxu0 0
    %2029 = vmatprep.subr.bf16.mxu0 0
    %2030 = vmatpush1.bf16.msra.mxu0 0
    %2031 = vmatprep.subr.bf16.mxu0 0
    %2032 = vmatpush1.bf16.msra.mxu0 0
    %2033 = vmatprep.subr.bf16.mxu0 0
    %2034 = vmatpush1.bf16.msra.mxu0 0
    %2035 = vmatprep.subr.bf16.mxu0 0
    %2036 = vmatpush1.bf16.msra.mxu0 0
    %2037 = vmatprep.subr.bf16.mxu0 0
    %2038 = vmatpush1.bf16.msra.mxu0 0
    %2039 = vmatprep.subr.bf16.mxu0 0
    %2040 = vmatpush1.bf16.msra.mxu0 0
    %2041 = vmatprep.subr.bf16.mxu0 0
    %2042 = vmatpush1.bf16.msra.mxu0 0
    %2043 = vmatprep.subr.bf16.mxu0 0
    %2044 = vmatpush1.bf16.msra.mxu0 0
    %2045 = vmatprep.subr.bf16.mxu0 0
    %2046 = vmatpush1.bf16.msra.mxu0 0
    %2047 = vmatprep.mubr.bf16.mxu0 0
    %2048 = vmatmul.mubr.bf16.gmra.mrb[0].mxu0 %v2010
    %v2049 = vpop.f32.mrb[0].mxu0
    %v2050 = vadd.f32 0.0, %v2049
    %v2051 = vpop.f32.mrb[0].mxu0
    %v2052 = vpop.f32.mrb[0].mxu0
    %v2053 = vpop.f32.mrb[0].mxu0
    %2054 = vdwg.mxu0
    %v2055 = vpack.c.bf16 %v1405, %v1359
    %v2056 = vpack.c.bf16 %v1620, %v1574
    %v2057 = vpack.c.bf16 %v1835, %v1789
    %v2058 = vpack.c.bf16 %v2050, %v2004
    %v2059 = vld [vmem:[#allocation7] sm:$0xf]
    %v2060 = vld [vmem:[#allocation7 + $0x4] sm:$0xf]
    %v2061 = vld [vmem:[#allocation7 + $0x8] sm:$0xf]
    %v2062 = vld [vmem:[#allocation7 + $0xc] sm:$0xf]
    %v2063 = vld [vmem:[#allocation7 + $0x10] sm:$0xf]
    %v2064 = vld [vmem:[#allocation7 + $0x14] sm:$0xf]
    %v2065 = vld [vmem:[#allocation7 + $0x18] sm:$0xf]
    %v2066 = vld [vmem:[#allocation7 + $0x1c] sm:$0xf]
    %v2067 = vld [vmem:[#allocation7 + $0x20] sm:$0xf]
    %v2068 = vld [vmem:[#allocation7 + $0x24] sm:$0xf]
    %v2069 = vld [vmem:[#allocation7 + $0x28] sm:$0xf]
    %v2070 = vld [vmem:[#allocation7 + $0x2c] sm:$0xf]
    %v2071 = vld [vmem:[#allocation7 + $0x30] sm:$0xf]
    %v2072 = vld [vmem:[#allocation7 + $0x34] sm:$0xf]
    %v2073 = vld [vmem:[#allocation7 + $0x38] sm:$0xf]
    %v2074 = vld [vmem:[#allocation7 + $0x3c] sm:$0xf]
    %v2075 = vld [vmem:[#allocation7 + $0x40] sm:$0xf]
    %v2076 = vld [vmem:[#allocation7 + $0x44] sm:$0xf]
    %v2077 = vld [vmem:[#allocation7 + $0x48] sm:$0xf]
    %v2078 = vld [vmem:[#allocation7 + $0x4c] sm:$0xf]
    %v2079 = vld [vmem:[#allocation7 + $0x50] sm:$0xf]
    %v2080 = vld [vmem:[#allocation7 + $0x54] sm:$0xf]
    %v2081 = vld [vmem:[#allocation7 + $0x58] sm:$0xf]
    %v2082 = vld [vmem:[#allocation7 + $0x5c] sm:$0xf]
    %v2083 = vld [vmem:[#allocation7 + $0x60] sm:$0xf]
    %v2084 = vld [vmem:[#allocation7 + $0x64] sm:$0xf]
    %v2085 = vld [vmem:[#allocation7 + $0x68] sm:$0xf]
    %v2086 = vld [vmem:[#allocation7 + $0x6c] sm:$0xf]
    %v2087 = vld [vmem:[#allocation7 + $0x70] sm:$0xf]
    %v2088 = vld [vmem:[#allocation7 + $0x74] sm:$0xf]
    %v2089 = vld [vmem:[#allocation7 + $0x78] sm:$0xf]
    %v2090 = vld [vmem:[#allocation7 + $0x7c] sm:$0xf]
    %v2091 = vld [vmem:[#allocation7 + $0x80] sm:$0xf]
    %v2092 = vld [vmem:[#allocation7 + $0x84] sm:$0xf]
    %v2093 = vld [vmem:[#allocation7 + $0x88] sm:$0xf]
    %v2094 = vld [vmem:[#allocation7 + $0x8c] sm:$0xf]
    %v2095 = vld [vmem:[#allocation7 + $0x90] sm:$0xf]
    %v2096 = vld [vmem:[#allocation7 + $0x94] sm:$0xf]
    %v2097 = vld [vmem:[#allocation7 + $0x98] sm:$0xf]
    %v2098 = vld [vmem:[#allocation7 + $0x9c] sm:$0xf]
    %v2099 = vld [vmem:[#allocation7 + $0xa0] sm:$0xf]
    %v2100 = vld [vmem:[#allocation7 + $0xa4] sm:$0xf]
    %v2101 = vld [vmem:[#allocation7 + $0xa8] sm:$0xf]
    %v2102 = vld [vmem:[#allocation7 + $0xac] sm:$0xf]
    %v2103 = vld [vmem:[#allocation7 + $0xb0] sm:$0xf]
    %v2104 = vld [vmem:[#allocation7 + $0xb4] sm:$0xf]
    %v2105 = vld [vmem:[#allocation7 + $0xb8] sm:$0xf]
    %v2106 = vld [vmem:[#allocation7 + $0xbc] sm:$0xf]
    %v2107 = vld [vmem:[#allocation7 + $0xc0] sm:$0xf]
    %v2108 = vld [vmem:[#allocation7 + $0xc4] sm:$0xf]
    %v2109 = vld [vmem:[#allocation7 + $0xc8] sm:$0xf]
    %v2110 = vld [vmem:[#allocation7 + $0xcc] sm:$0xf]
    %v2111 = vld [vmem:[#allocation7 + $0xd0] sm:$0xf]
    %v2112 = vld [vmem:[#allocation7 + $0xd4] sm:$0xf]
    %v2113 = vld [vmem:[#allocation7 + $0xd8] sm:$0xf]
    %v2114 = vld [vmem:[#allocation7 + $0xdc] sm:$0xf]
    %v2115 = vld [vmem:[#allocation7 + $0xe0] sm:$0xf]
    %v2116 = vld [vmem:[#allocation7 + $0xe4] sm:$0xf]
    %v2117 = vld [vmem:[#allocation7 + $0xe8] sm:$0xf]
    %v2118 = vld [vmem:[#allocation7 + $0xec] sm:$0xf]
    %v2119 = vld [vmem:[#allocation7 + $0xf0] sm:$0xf]
    %v2120 = vld [vmem:[#allocation7 + $0xf4] sm:$0xf]
    %v2121 = vld [vmem:[#allocation7 + $0xf8] sm:$0xf]
    %v2122 = vld [vmem:[#allocation7 + $0xfc] sm:$0xf]
    %v2123 = vld [vmem:[%s6] sm:$0x1]
    %v2125 = vlaneseq
    %v2126 = vshrl.u32 %v2125, 7
    %v2127 = vsub.s32 0, %v2126
    %v2128 = vrot.slane %v2123, %v2127
    %v2194 = vunpack.c.l.b16 %v2059
    %v2195 = vunpack.c.l.b16 %v2060
    %v2196 = vunpack.c.l.b16 %v2061
    %v2197 = vunpack.c.l.b16 %v2062
    %v2198 = vunpack.c.l.b16 %v2063
    %v2199 = vunpack.c.l.b16 %v2064
    %v2200 = vunpack.c.l.b16 %v2065
    %v2201 = vunpack.c.l.b16 %v2066
    %v2202 = vunpack.c.l.b16 %v2067
    %v2203 = vunpack.c.l.b16 %v2068
    %v2204 = vunpack.c.l.b16 %v2069
    %v2205 = vunpack.c.l.b16 %v2070
    %v2206 = vunpack.c.l.b16 %v2071
    %v2207 = vunpack.c.l.b16 %v2072
    %v2208 = vunpack.c.l.b16 %v2073
    %v2209 = vunpack.c.l.b16 %v2074
    %v2210 = vunpack.c.l.b16 %v2075
    %v2211 = vunpack.c.l.b16 %v2076
    %v2212 = vunpack.c.l.b16 %v2077
    %v2213 = vunpack.c.l.b16 %v2078
    %v2214 = vunpack.c.l.b16 %v2079
    %v2215 = vunpack.c.l.b16 %v2080
    %v2216 = vunpack.c.l.b16 %v2081
    %v2217 = vunpack.c.l.b16 %v2082
    %v2218 = vunpack.c.l.b16 %v2083
    %v2219 = vunpack.c.l.b16 %v2084
    %v2220 = vunpack.c.l.b16 %v2085
    %v2221 = vunpack.c.l.b16 %v2086
    %v2222 = vunpack.c.l.b16 %v2087
    %v2223 = vunpack.c.l.b16 %v2088
    %v2224 = vunpack.c.l.b16 %v2089
    %v2225 = vunpack.c.l.b16 %v2090
    %v2226 = vunpack.c.l.b16 %v2091
    %v2227 = vunpack.c.l.b16 %v2092
    %v2228 = vunpack.c.l.b16 %v2093
    %v2229 = vunpack.c.l.b16 %v2094
    %v2230 = vunpack.c.l.b16 %v2095
    %v2231 = vunpack.c.l.b16 %v2096
    %v2232 = vunpack.c.l.b16 %v2097
    %v2233 = vunpack.c.l.b16 %v2098
    %v2234 = vunpack.c.l.b16 %v2099
    %v2235 = vunpack.c.l.b16 %v2100
    %v2236 = vunpack.c.l.b16 %v2101
    %v2237 = vunpack.c.l.b16 %v2102
    %v2238 = vunpack.c.l.b16 %v2103
    %v2239 = vunpack.c.l.b16 %v2104
    %v2240 = vunpack.c.l.b16 %v2105
    %v2241 = vunpack.c.l.b16 %v2106
    %v2242 = vunpack.c.l.b16 %v2107
    %v2243 = vunpack.c.l.b16 %v2108
    %v2244 = vunpack.c.l.b16 %v2109
    %v2245 = vunpack.c.l.b16 %v2110
    %v2246 = vunpack.c.l.b16 %v2111
    %v2247 = vunpack.c.l.b16 %v2112
    %v2248 = vunpack.c.l.b16 %v2113
    %v2249 = vunpack.c.l.b16 %v2114
    %v2250 = vunpack.c.l.b16 %v2115
    %v2251 = vunpack.c.l.b16 %v2116
    %v2252 = vunpack.c.l.b16 %v2117
    %v2253 = vunpack.c.l.b16 %v2118
    %v2254 = vunpack.c.l.b16 %v2119
    %v2255 = vunpack.c.l.b16 %v2120
    %v2256 = vunpack.c.l.b16 %v2121
    %v2257 = vunpack.c.l.b16 %v2122
    %v2258 = vpack.c.b16 %v2195, %v2194
    %v2259 = vpack.c.b16 %v2197, %v2196
    %v2260 = vpack.c.b16 %v2199, %v2198
    %v2261 = vpack.c.b16 %v2201, %v2200
    %v2262 = vpack.c.b16 %v2203, %v2202
    %v2263 = vpack.c.b16 %v2205, %v2204
    %v2264 = vpack.c.b16 %v2207, %v2206
    %v2265 = vpack.c.b16 %v2209, %v2208
    %v2266 = vpack.c.b16 %v2211, %v2210
    %v2267 = vpack.c.b16 %v2213, %v2212
    %v2268 = vpack.c.b16 %v2215, %v2214
    %v2269 = vpack.c.b16 %v2217, %v2216
    %v2270 = vpack.c.b16 %v2219, %v2218
    %v2271 = vpack.c.b16 %v2221, %v2220
    %v2272 = vpack.c.b16 %v2223, %v2222
    %v2273 = vpack.c.b16 %v2225, %v2224
    %v2274 = vpack.c.b16 %v2227, %v2226
    %v2275 = vpack.c.b16 %v2229, %v2228
    %v2276 = vpack.c.b16 %v2231, %v2230
    %v2277 = vpack.c.b16 %v2233, %v2232
    %v2278 = vpack.c.b16 %v2235, %v2234
    %v2279 = vpack.c.b16 %v2237, %v2236
    %v2280 = vpack.c.b16 %v2239, %v2238
    %v2281 = vpack.c.b16 %v2241, %v2240
    %v2282 = vpack.c.b16 %v2243, %v2242
    %v2283 = vpack.c.b16 %v2245, %v2244
    %v2284 = vpack.c.b16 %v2247, %v2246
    %v2285 = vpack.c.b16 %v2249, %v2248
    %v2286 = vpack.c.b16 %v2251, %v2250
    %v2287 = vpack.c.b16 %v2253, %v2252
    %v2288 = vpack.c.b16 %v2255, %v2254
    %v2289 = vpack.c.b16 %v2257, %v2256
    %2322 = vmatprep.subr.bf16.mxu0 0
    %2323 = vmatpush1.bf16.msra.mxu0 %v2258
    %2324 = vmatprep.subr.bf16.mxu0 0
    %2325 = vmatpush1.bf16.msra.mxu0 %v2259
    %2326 = vmatprep.subr.bf16.mxu0 0
    %2327 = vmatpush1.bf16.msra.mxu0 %v2260
    %2328 = vmatprep.subr.bf16.mxu0 0
    %2329 = vmatpush1.bf16.msra.mxu0 %v2261
    %2330 = vmatprep.subr.bf16.mxu0 0
    %2331 = vmatpush1.bf16.msra.mxu0 %v2262
    %2332 = vmatprep.subr.bf16.mxu0 0
    %2333 = vmatpush1.bf16.msra.mxu0 %v2263
    %2334 = vmatprep.subr.bf16.mxu0 0
    %2335 = vmatpush1.bf16.msra.mxu0 %v2264
    %2336 = vmatprep.subr.bf16.mxu0 0
    %2337 = vmatpush1.bf16.msra.mxu0 %v2265
    %2338 = vmatprep.subr.bf16.mxu0 0
    %2339 = vmatpush1.bf16.msra.mxu0 %v2266
    %2340 = vmatprep.subr.bf16.mxu0 0
    %2341 = vmatpush1.bf16.msra.mxu0 %v2267
    %2342 = vmatprep.subr.bf16.mxu0 0
    %2343 = vmatpush1.bf16.msra.mxu0 %v2268
    %2344 = vmatprep.subr.bf16.mxu0 0
    %2345 = vmatpush1.bf16.msra.mxu0 %v2269
    %2346 = vmatprep.subr.bf16.mxu0 0
    %2347 = vmatpush1.bf16.msra.mxu0 %v2270
    %2348 = vmatprep.subr.bf16.mxu0 0
    %2349 = vmatpush1.bf16.msra.mxu0 %v2271
    %2350 = vmatprep.subr.bf16.mxu0 0
    %2351 = vmatpush1.bf16.msra.mxu0 %v2272
    %2352 = vmatprep.subr.bf16.mxu0 0
    %2353 = vmatpush1.bf16.msra.mxu0 %v2273
    %2354 = vmatprep.mubr.bf16.mxu0 %v2056
    %2355 = vmatmul.mubr.bf16.gmra.mrb[0].mxu0 %v2055
    %v2356 = vpop.f32.mrb[0].mxu0
    %v2357 = vadd.f32 %v2128, %v2356
    %v2358 = vpop.f32.mrb[0].mxu0
    %v2359 = vpop.f32.mrb[0].mxu0
    %v2360 = vadd.f32 %v2128, %v2359
    %v2361 = vpop.f32.mrb[0].mxu0
    %2362 = vdwg.mxu0
    %2363 = vmatprep.subr.bf16.mxu0 0
    %2364 = vmatpush1.bf16.msra.mxu0 %v2274
    %2365 = vmatprep.subr.bf16.mxu0 0
    %2366 = vmatpush1.bf16.msra.mxu0 %v2275
    %2367 = vmatprep.subr.bf16.mxu0 0
    %2368 = vmatpush1.bf16.msra.mxu0 %v2276
    %2369 = vmatprep.subr.bf16.mxu0 0
    %2370 = vmatpush1.bf16.msra.mxu0 %v2277
    %2371 = vmatprep.subr.bf16.mxu0 0
    %2372 = vmatpush1.bf16.msra.mxu0 %v2278
    %2373 = vmatprep.subr.bf16.mxu0 0
    %2374 = vmatpush1.bf16.msra.mxu0 %v2279
    %2375 = vmatprep.subr.bf16.mxu0 0
    %2376 = vmatpush1.bf16.msra.mxu0 %v2280
    %2377 = vmatprep.subr.bf16.mxu0 0
    %2378 = vmatpush1.bf16.msra.mxu0 %v2281
    %2379 = vmatprep.subr.bf16.mxu0 0
    %2380 = vmatpush1.bf16.msra.mxu0 %v2282
    %2381 = vmatprep.subr.bf16.mxu0 0
    %2382 = vmatpush1.bf16.msra.mxu0 %v2283
    %2383 = vmatprep.subr.bf16.mxu0 0
    %2384 = vmatpush1.bf16.msra.mxu0 %v2284
    %2385 = vmatprep.subr.bf16.mxu0 0
    %2386 = vmatpush1.bf16.msra.mxu0 %v2285
    %2387 = vmatprep.subr.bf16.mxu0 0
    %2388 = vmatpush1.bf16.msra.mxu0 %v2286
    %2389 = vmatprep.subr.bf16.mxu0 0
    %2390 = vmatpush1.bf16.msra.mxu0 %v2287
    %2391 = vmatprep.subr.bf16.mxu0 0
    %2392 = vmatpush1.bf16.msra.mxu0 %v2288
    %2393 = vmatprep.subr.bf16.mxu0 0
    %2394 = vmatpush1.bf16.msra.mxu0 %v2289
    %2395 = vmatprep.mubr.bf16.mxu0 %v2058
    %2396 = vmatmul.mubr.bf16.gmra.mrb[0].mxu0 %v2057
    %v2397 = vpop.f32.mrb[0].mxu0
    %v2398 = vadd.f32 %v2357, %v2397
    %v2399 = vpop.f32.mrb[0].mxu0
    %v2400 = vpop.f32.mrb[0].mxu0
    %v2401 = vadd.f32 %v2360, %v2400
    %v2402 = vpop.f32.mrb[0].mxu0
    %2403 = vdwg.mxu0
    %v2404 = vadd.f32 %v276, %v2398
    %v2405 = vadd.f32 %v279, %v2401
    %v2406 = vld [vmem:[%s11] sm:$0x1]
    %v2407 = vld [vmem:[%s12] sm:$0x1]
    %2408 = vadd.xlane.f32.xlu0 %v2404
    %v2409 = vpop.xlane.xlu0 %2408
    %2410 = vadd.xlane.f32.xlu0 %v2405
    %v2411 = vpop.xlane.xlu0 %2410
    %v2412 = vmul.f32 %v2409, 0.03125
    %v2413 = vmul.f32 %v2411, 0.03125
    %v2414 = vmul.f32 %v2404, %v2404
    %v2415 = vmul.f32 %v2405, %v2405
    %2416 = vadd.xlane.f32.xlu0 %v2414
    %v2417 = vpop.xlane.xlu0 %2416
    %2418 = vadd.xlane.f32.xlu0 %v2415
    %v2419 = vpop.xlane.xlu0 %2418
    %v2420 = vmul.f32 %v2417, 0.03125
    %v2421 = vmul.f32 %v2419, 0.03125
    %v2422 = vmul.f32 %v2412, %v2412
    %v2423 = vmul.f32 %v2413, %v2413
    %v2424 = vsub.f32 %v2420, %v2422
    %v2425 = vsub.f32 %v2421, %v2423
    %v2426 = vsub.f32 %v2404, %v2412
    %v2427 = vsub.f32 %v2405, %v2413
    %v2428 = vadd.f32 %v2424, 1e-05
    %v2429 = vadd.f32 %v2425, 1e-05
    %v2430 = vrsqrt.pop %v2428
    %v2431 = vrsqrt.pop %v2429
    %v2432 = vmul.f32 %v2426, %v2430
    %v2433 = vmul.f32 %v2427, %v2431
    %v2435 = vlaneseq
    %v2436 = vshrl.u32 %v2435, 7
    %v2437 = vsub.s32 0, %v2436
    %v2438 = vrot.slane %v2406, %v2437
    %v2440 = vmul.f32 %v2432, %v2438
    %v2441 = vmul.f32 %v2433, %v2438
    %v2443 = vlaneseq
    %v2444 = vshrl.u32 %v2443, 7
    %v2445 = vsub.s32 0, %v2444
    %v2446 = vrot.slane %v2407, %v2445
    %v2448 = vadd.f32 %v2440, %v2446
    %v2449 = vadd.f32 %v2441, %v2446
    %v2450 = vpack.c.bf16 %v2449, %v2448
    %v2451 = vld [vmem:[#allocation9] sm:$0xff]
    %v2452 = vld [vmem:[#allocation9 + $0x8] sm:$0xff]
    %v2453 = vld [vmem:[#allocation9 + $0x10] sm:$0xff]
    %v2454 = vld [vmem:[#allocation9 + $0x18] sm:$0xff]
    %v2455 = vld [vmem:[#allocation9 + $0x20] sm:$0xff]
    %v2456 = vld [vmem:[#allocation9 + $0x28] sm:$0xff]
    %v2457 = vld [vmem:[#allocation9 + $0x30] sm:$0xff]
    %v2458 = vld [vmem:[#allocation9 + $0x38] sm:$0xff]
    %v2459 = vld [vmem:[#allocation9 + $0x40] sm:$0xff]
    %v2460 = vld [vmem:[#allocation9 + $0x48] sm:$0xff]
    %v2461 = vld [vmem:[#allocation9 + $0x50] sm:$0xff]
    %v2462 = vld [vmem:[#allocation9 + $0x58] sm:$0xff]
    %v2463 = vld [vmem:[#allocation9 + $0x60] sm:$0xff]
    %v2464 = vld [vmem:[#allocation9 + $0x68] sm:$0xff]
    %v2465 = vld [vmem:[#allocation9 + $0x70] sm:$0xff]
    %v2466 = vld [vmem:[#allocation9 + $0x78] sm:$0xff]
    %v2467 = vld [vmem:[#allocation9 + $0x80] sm:$0xff]
    %v2468 = vld [vmem:[#allocation9 + $0x88] sm:$0xff]
    %v2469 = vld [vmem:[#allocation9 + $0x90] sm:$0xff]
    %v2470 = vld [vmem:[#allocation9 + $0x98] sm:$0xff]
    %v2471 = vld [vmem:[#allocation9 + $0xa0] sm:$0xff]
    %v2472 = vld [vmem:[#allocation9 + $0xa8] sm:$0xff]
    %v2473 = vld [vmem:[#allocation9 + $0xb0] sm:$0xff]
    %v2474 = vld [vmem:[#allocation9 + $0xb8] sm:$0xff]
    %v2475 = vld [vmem:[#allocation9 + $0xc0] sm:$0xff]
    %v2476 = vld [vmem:[#allocation9 + $0xc8] sm:$0xff]
    %v2477 = vld [vmem:[#allocation9 + $0xd0] sm:$0xff]
    %v2478 = vld [vmem:[#allocation9 + $0xd8] sm:$0xff]
    %v2479 = vld [vmem:[#allocation9 + $0xe0] sm:$0xff]
    %v2480 = vld [vmem:[#allocation9 + $0xe8] sm:$0xff]
    %v2481 = vld [vmem:[#allocation9 + $0xf0] sm:$0xff]
    %v2482 = vld [vmem:[#allocation9 + $0xf8] sm:$0xff]
    %v2483 = vld [vmem:[#allocation9 + $0x100] sm:$0xff]
    %v2484 = vld [vmem:[#allocation9 + $0x108] sm:$0xff]
    %v2485 = vld [vmem:[#allocation9 + $0x110] sm:$0xff]
    %v2486 = vld [vmem:[#allocation9 + $0x118] sm:$0xff]
    %v2487 = vld [vmem:[#allocation9 + $0x120] sm:$0xff]
    %v2488 = vld [vmem:[#allocation9 + $0x128] sm:$0xff]
    %v2489 = vld [vmem:[#allocation9 + $0x130] sm:$0xff]
    %v2490 = vld [vmem:[#allocation9 + $0x138] sm:$0xff]
    %v2491 = vld [vmem:[#allocation9 + $0x140] sm:$0xff]
    %v2492 = vld [vmem:[#allocation9 + $0x148] sm:$0xff]
    %v2493 = vld [vmem:[#allocation9 + $0x150] sm:$0xff]
    %v2494 = vld [vmem:[#allocation9 + $0x158] sm:$0xff]
    %v2495 = vld [vmem:[#allocation9 + $0x160] sm:$0xff]
    %v2496 = vld [vmem:[#allocation9 + $0x168] sm:$0xff]
    %v2497 = vld [vmem:[#allocation9 + $0x170] sm:$0xff]
    %v2498 = vld [vmem:[#allocation9 + $0x178] sm:$0xff]
    %v2499 = vld [vmem:[#allocation9 + $0x180] sm:$0xff]
    %v2500 = vld [vmem:[#allocation9 + $0x188] sm:$0xff]
    %v2501 = vld [vmem:[#allocation9 + $0x190] sm:$0xff]
    %v2502 = vld [vmem:[#allocation9 + $0x198] sm:$0xff]
    %v2503 = vld [vmem:[#allocation9 + $0x1a0] sm:$0xff]
    %v2504 = vld [vmem:[#allocation9 + $0x1a8] sm:$0xff]
    %v2505 = vld [vmem:[#allocation9 + $0x1b0] sm:$0xff]
    %v2506 = vld [vmem:[#allocation9 + $0x1b8] sm:$0xff]
    %v2507 = vld [vmem:[#allocation9 + $0x1c0] sm:$0xff]
    %v2508 = vld [vmem:[#allocation9 + $0x1c8] sm:$0xff]
    %v2509 = vld [vmem:[#allocation9 + $0x1d0] sm:$0xff]
    %v2510 = vld [vmem:[#allocation9 + $0x1d8] sm:$0xff]
    %v2511 = vld [vmem:[#allocation9 + $0x1e0] sm:$0xff]
    %v2512 = vld [vmem:[#allocation9 + $0x1e8] sm:$0xff]
    %v2513 = vld [vmem:[#allocation9 + $0x1f0] sm:$0xff]
    %v2514 = vld [vmem:[#allocation9 + $0x1f8] sm:$0xff]
    %v2515 = vld [vmem:[#allocation9 + $0x200] sm:$0xff]
    %v2516 = vld [vmem:[#allocation9 + $0x208] sm:$0xff]
    %v2517 = vld [vmem:[#allocation9 + $0x210] sm:$0xff]
    %v2518 = vld [vmem:[#allocation9 + $0x218] sm:$0xff]
    %v2519 = vld [vmem:[#allocation9 + $0x220] sm:$0xff]
    %v2520 = vld [vmem:[#allocation9 + $0x228] sm:$0xff]
    %v2521 = vld [vmem:[#allocation9 + $0x230] sm:$0xff]
    %v2522 = vld [vmem:[#allocation9 + $0x238] sm:$0xff]
    %v2523 = vld [vmem:[#allocation9 + $0x240] sm:$0xff]
    %v2524 = vld [vmem:[#allocation9 + $0x248] sm:$0xff]
    %v2525 = vld [vmem:[#allocation9 + $0x250] sm:$0xff]
    %v2526 = vld [vmem:[#allocation9 + $0x258] sm:$0xff]
    %v2527 = vld [vmem:[#allocation9 + $0x260] sm:$0xff]
    %v2528 = vld [vmem:[#allocation9 + $0x268] sm:$0xff]
    %v2529 = vld [vmem:[#allocation9 + $0x270] sm:$0xff]
    %v2530 = vld [vmem:[#allocation9 + $0x278] sm:$0xff]
    %v2531 = vld [vmem:[#allocation9 + $0x280] sm:$0xff]
    %v2532 = vld [vmem:[#allocation9 + $0x288] sm:$0xff]
    %v2533 = vld [vmem:[#allocation9 + $0x290] sm:$0xff]
    %v2534 = vld [vmem:[#allocation9 + $0x298] sm:$0xff]
    %v2535 = vld [vmem:[#allocation9 + $0x2a0] sm:$0xff]
    %v2536 = vld [vmem:[#allocation9 + $0x2a8] sm:$0xff]
    %v2537 = vld [vmem:[#allocation9 + $0x2b0] sm:$0xff]
    %v2538 = vld [vmem:[#allocation9 + $0x2b8] sm:$0xff]
    %v2539 = vld [vmem:[#allocation9 + $0x2c0] sm:$0xff]
    %v2540 = vld [vmem:[#allocation9 + $0x2c8] sm:$0xff]
    %v2541 = vld [vmem:[#allocation9 + $0x2d0] sm:$0xff]
    %v2542 = vld [vmem:[#allocation9 + $0x2d8] sm:$0xff]
    %v2543 = vld [vmem:[#allocation9 + $0x2e0] sm:$0xff]
    %v2544 = vld [vmem:[#allocation9 + $0x2e8] sm:$0xff]
    %v2545 = vld [vmem:[#allocation9 + $0x2f0] sm:$0xff]
    %v2546 = vld [vmem:[#allocation9 + $0x2f8] sm:$0xff]
    %v2547 = vld [vmem:[#allocation9 + $0x300] sm:$0xff]
    %v2548 = vld [vmem:[#allocation9 + $0x308] sm:$0xff]
    %v2549 = vld [vmem:[#allocation9 + $0x310] sm:$0xff]
    %v2550 = vld [vmem:[#allocation9 + $0x318] sm:$0xff]
    %v2551 = vld [vmem:[#allocation9 + $0x320] sm:$0xff]
    %v2552 = vld [vmem:[#allocation9 + $0x328] sm:$0xff]
    %v2553 = vld [vmem:[#allocation9 + $0x330] sm:$0xff]
    %v2554 = vld [vmem:[#allocation9 + $0x338] sm:$0xff]
    %v2555 = vld [vmem:[#allocation9 + $0x340] sm:$0xff]
    %v2556 = vld [vmem:[#allocation9 + $0x348] sm:$0xff]
    %v2557 = vld [vmem:[#allocation9 + $0x350] sm:$0xff]
    %v2558 = vld [vmem:[#allocation9 + $0x358] sm:$0xff]
    %v2559 = vld [vmem:[#allocation9 + $0x360] sm:$0xff]
    %v2560 = vld [vmem:[#allocation9 + $0x368] sm:$0xff]
    %v2561 = vld [vmem:[#allocation9 + $0x370] sm:$0xff]
    %v2562 = vld [vmem:[#allocation9 + $0x378] sm:$0xff]
    %v2563 = vld [vmem:[#allocation9 + $0x380] sm:$0xff]
    %v2564 = vld [vmem:[#allocation9 + $0x388] sm:$0xff]
    %v2565 = vld [vmem:[#allocation9 + $0x390] sm:$0xff]
    %v2566 = vld [vmem:[#allocation9 + $0x398] sm:$0xff]
    %v2567 = vld [vmem:[#allocation9 + $0x3a0] sm:$0xff]
    %v2568 = vld [vmem:[#allocation9 + $0x3a8] sm:$0xff]
    %v2569 = vld [vmem:[#allocation9 + $0x3b0] sm:$0xff]
    %v2570 = vld [vmem:[#allocation9 + $0x3b8] sm:$0xff]
    %v2571 = vld [vmem:[#allocation9 + $0x3c0] sm:$0xff]
    %v2572 = vld [vmem:[#allocation9 + $0x3c8] sm:$0xff]
    %v2573 = vld [vmem:[#allocation9 + $0x3d0] sm:$0xff]
    %v2574 = vld [vmem:[#allocation9 + $0x3d8] sm:$0xff]
    %v2575 = vld [vmem:[#allocation9 + $0x3e0] sm:$0xff]
    %v2576 = vld [vmem:[#allocation9 + $0x3e8] sm:$0xff]
    %v2577 = vld [vmem:[#allocation9 + $0x3f0] sm:$0xff]
    %v2578 = vld [vmem:[#allocation9 + $0x3f8] sm:$0xff]
    %v2579 = vld [vmem:[%s8] sm:$0xff]
    %v2580 = vld [vmem:[%s8 + $0x8] sm:$0xff]
    %v2583 = vlaneseq
    %v2584 = vshrl.u32 %v2583, 7
    %v2585 = vsub.s32 0, %v2584
    %v2586 = vrot.slane %v2579, %v2585
    %v2587 = vlaneseq
    %v2588 = vshrl.u32 %v2587, 7
    %v2589 = vsub.s32 1, %v2588
    %v2590 = vrot.slane %v2579, %v2589
    %v2591 = vlaneseq
    %v2592 = vshrl.u32 %v2591, 7
    %v2593 = vsub.s32 2, %v2592
    %v2594 = vrot.slane %v2579, %v2593
    %v2595 = vlaneseq
    %v2596 = vshrl.u32 %v2595, 7
    %v2597 = vsub.s32 3, %v2596
    %v2598 = vrot.slane %v2579, %v2597
    %v2599 = vlaneseq
    %v2600 = vshrl.u32 %v2599, 7
    %v2601 = vsub.s32 4, %v2600
    %v2602 = vrot.slane %v2579, %v2601
    %v2603 = vlaneseq
    %v2604 = vshrl.u32 %v2603, 7
    %v2605 = vsub.s32 5, %v2604
    %v2606 = vrot.slane %v2579, %v2605
    %v2607 = vlaneseq
    %v2608 = vshrl.u32 %v2607, 7
    %v2609 = vsub.s32 6, %v2608
    %v2610 = vrot.slane %v2579, %v2609
    %v2611 = vlaneseq
    %v2612 = vshrl.u32 %v2611, 7
    %v2613 = vsub.s32 7, %v2612
    %v2614 = vrot.slane %v2579, %v2613
    %v2615 = vlaneseq
    %v2616 = vshrl.u32 %v2615, 7
    %v2617 = vsub.s32 0, %v2616
    %v2618 = vrot.slane %v2580, %v2617
    %v2619 = vlaneseq
    %v2620 = vshrl.u32 %v2619, 7
    %v2621 = vsub.s32 1, %v2620
    %v2622 = vrot.slane %v2580, %v2621
    %v2623 = vlaneseq
    %v2624 = vshrl.u32 %v2623, 7
    %v2625 = vsub.s32 2, %v2624
    %v2626 = vrot.slane %v2580, %v2625
    %v2627 = vlaneseq
    %v2628 = vshrl.u32 %v2627, 7
    %v2629 = vsub.s32 3, %v2628
    %v2630 = vrot.slane %v2580, %v2629
    %v2631 = vlaneseq
    %v2632 = vshrl.u32 %v2631, 7
    %v2633 = vsub.s32 4, %v2632
    %v2634 = vrot.slane %v2580, %v2633
    %v2635 = vlaneseq
    %v2636 = vshrl.u32 %v2635, 7
    %v2637 = vsub.s32 5, %v2636
    %v2638 = vrot.slane %v2580, %v2637
    %v2639 = vlaneseq
    %v2640 = vshrl.u32 %v2639, 7
    %v2641 = vsub.s32 6, %v2640
    %v2642 = vrot.slane %v2580, %v2641
    %v2643 = vlaneseq
    %v2644 = vshrl.u32 %v2643, 7
    %v2645 = vsub.s32 7, %v2644
    %v2646 = vrot.slane %v2580, %v2645
    %v2791 = vunpack.c.l.b16 %v2451
    %v2792 = vunpack.c.h.b16 %v2451
    %v2793 = vunpack.c.l.b16 %v2452
    %v2794 = vunpack.c.h.b16 %v2452
    %v2795 = vunpack.c.l.b16 %v2453
    %v2796 = vunpack.c.h.b16 %v2453
    %v2797 = vunpack.c.l.b16 %v2454
    %v2798 = vunpack.c.h.b16 %v2454
    %v2799 = vunpack.c.l.b16 %v2455
    %v2800 = vunpack.c.h.b16 %v2455
    %v2801 = vunpack.c.l.b16 %v2456
    %v2802 = vunpack.c.h.b16 %v2456
    %v2803 = vunpack.c.l.b16 %v2457
    %v2804 = vunpack.c.h.b16 %v2457
    %v2805 = vunpack.c.l.b16 %v2458
    %v2806 = vunpack.c.h.b16 %v2458
    %v2807 = vunpack.c.l.b16 %v2459
    %v2808 = vunpack.c.h.b16 %v2459
    %v2809 = vunpack.c.l.b16 %v2460
    %v2810 = vunpack.c.h.b16 %v2460
    %v2811 = vunpack.c.l.b16 %v2461
    %v2812 = vunpack.c.h.b16 %v2461
    %v2813 = vunpack.c.l.b16 %v2462
    %v2814 = vunpack.c.h.b16 %v2462
    %v2815 = vunpack.c.l.b16 %v2463
    %v2816 = vunpack.c.h.b16 %v2463
    %v2817 = vunpack.c.l.b16 %v2464
    %v2818 = vunpack.c.h.b16 %v2464
    %v2819 = vunpack.c.l.b16 %v2465
    %v2820 = vunpack.c.h.b16 %v2465
    %v2821 = vunpack.c.l.b16 %v2466
    %v2822 = vunpack.c.h.b16 %v2466
    %v2823 = vunpack.c.l.b16 %v2467
    %v2824 = vunpack.c.h.b16 %v2467
    %v2825 = vunpack.c.l.b16 %v2468
    %v2826 = vunpack.c.h.b16 %v2468
    %v2827 = vunpack.c.l.b16 %v2469
    %v2828 = vunpack.c.h.b16 %v2469
    %v2829 = vunpack.c.l.b16 %v2470
    %v2830 = vunpack.c.h.b16 %v2470
    %v2831 = vunpack.c.l.b16 %v2471
    %v2832 = vunpack.c.h.b16 %v2471
    %v2833 = vunpack.c.l.b16 %v2472
    %v2834 = vunpack.c.h.b16 %v2472
    %v2835 = vunpack.c.l.b16 %v2473
    %v2836 = vunpack.c.h.b16 %v2473
    %v2837 = vunpack.c.l.b16 %v2474
    %v2838 = vunpack.c.h.b16 %v2474
    %v2839 = vunpack.c.l.b16 %v2475
    %v2840 = vunpack.c.h.b16 %v2475
    %v2841 = vunpack.c.l.b16 %v2476
    %v2842 = vunpack.c.h.b16 %v2476
    %v2843 = vunpack.c.l.b16 %v2477
    %v2844 = vunpack.c.h.b16 %v2477
    %v2845 = vunpack.c.l.b16 %v2478
    %v2846 = vunpack.c.h.b16 %v2478
    %v2847 = vunpack.c.l.b16 %v2479
    %v2848 = vunpack.c.h.b16 %v2479
    %v2849 = vunpack.c.l.b16 %v2480
    %v2850 = vunpack.c.h.b16 %v2480
    %v2851 = vunpack.c.l.b16 %v2481
    %v2852 = vunpack.c.h.b16 %v2481
    %v2853 = vunpack.c.l.b16 %v2482
    %v2854 = vunpack.c.h.b16 %v2482
    %v2855 = vunpack.c.l.b16 %v2483
    %v2856 = vunpack.c.h.b16 %v2483
    %v2857 = vunpack.c.l.b16 %v2484
    %v2858 = vunpack.c.h.b16 %v2484
    %v2859 = vunpack.c.l.b16 %v2485
    %v2860 = vunpack.c.h.b16 %v2485
    %v2861 = vunpack.c.l.b16 %v2486
    %v2862 = vunpack.c.h.b16 %v2486
    %v2863 = vunpack.c.l.b16 %v2487
    %v2864 = vunpack.c.h.b16 %v2487
    %v2865 = vunpack.c.l.b16 %v2488
    %v2866 = vunpack.c.h.b16 %v2488
    %v2867 = vunpack.c.l.b16 %v2489
    %v2868 = vunpack.c.h.b16 %v2489
    %v2869 = vunpack.c.l.b16 %v2490
    %v2870 = vunpack.c.h.b16 %v2490
    %v2871 = vunpack.c.l.b16 %v2491
    %v2872 = vunpack.c.h.b16 %v2491
    %v2873 = vunpack.c.l.b16 %v2492
    %v2874 = vunpack.c.h.b16 %v2492
    %v2875 = vunpack.c.l.b16 %v2493
    %v2876 = vunpack.c.h.b16 %v2493
    %v2877 = vunpack.c.l.b16 %v2494
    %v2878 = vunpack.c.h.b16 %v2494
    %v2879 = vunpack.c.l.b16 %v2495
    %v2880 = vunpack.c.h.b16 %v2495
    %v2881 = vunpack.c.l.b16 %v2496
    %v2882 = vunpack.c.h.b16 %v2496
    %v2883 = vunpack.c.l.b16 %v2497
    %v2884 = vunpack.c.h.b16 %v2497
    %v2885 = vunpack.c.l.b16 %v2498
    %v2886 = vunpack.c.h.b16 %v2498
    %v2887 = vunpack.c.l.b16 %v2499
    %v2888 = vunpack.c.h.b16 %v2499
    %v2889 = vunpack.c.l.b16 %v2500
    %v2890 = vunpack.c.h.b16 %v2500
    %v2891 = vunpack.c.l.b16 %v2501
    %v2892 = vunpack.c.h.b16 %v2501
    %v2893 = vunpack.c.l.b16 %v2502
    %v2894 = vunpack.c.h.b16 %v2502
    %v2895 = vunpack.c.l.b16 %v2503
    %v2896 = vunpack.c.h.b16 %v2503
    %v2897 = vunpack.c.l.b16 %v2504
    %v2898 = vunpack.c.h.b16 %v2504
    %v2899 = vunpack.c.l.b16 %v2505
    %v2900 = vunpack.c.h.b16 %v2505
    %v2901 = vunpack.c.l.b16 %v2506
    %v2902 = vunpack.c.h.b16 %v2506
    %v2903 = vunpack.c.l.b16 %v2507
    %v2904 = vunpack.c.h.b16 %v2507
    %v2905 = vunpack.c.l.b16 %v2508
    %v2906 = vunpack.c.h.b16 %v2508
    %v2907 = vunpack.c.l.b16 %v2509
    %v2908 = vunpack.c.h.b16 %v2509
    %v2909 = vunpack.c.l.b16 %v2510
    %v2910 = vunpack.c.h.b16 %v2510
    %v2911 = vunpack.c.l.b16 %v2511
    %v2912 = vunpack.c.h.b16 %v2511
    %v2913 = vunpack.c.l.b16 %v2512
    %v2914 = vunpack.c.h.b16 %v2512
    %v2915 = vunpack.c.l.b16 %v2513
    %v2916 = vunpack.c.h.b16 %v2513
    %v2917 = vunpack.c.l.b16 %v2514
    %v2918 = vunpack.c.h.b16 %v2514
    %v2919 = vunpack.c.l.b16 %v2515
    %v2920 = vunpack.c.h.b16 %v2515
    %v2921 = vunpack.c.l.b16 %v2516
    %v2922 = vunpack.c.h.b16 %v2516
    %v2923 = vunpack.c.l.b16 %v2517
    %v2924 = vunpack.c.h.b16 %v2517
    %v2925 = vunpack.c.l.b16 %v2518
    %v2926 = vunpack.c.h.b16 %v2518
    %v2927 = vunpack.c.l.b16 %v2519
    %v2928 = vunpack.c.h.b16 %v2519
    %v2929 = vunpack.c.l.b16 %v2520
    %v2930 = vunpack.c.h.b16 %v2520
    %v2931 = vunpack.c.l.b16 %v2521
    %v2932 = vunpack.c.h.b16 %v2521
    %v2933 = vunpack.c.l.b16 %v2522
    %v2934 = vunpack.c.h.b16 %v2522
    %v2935 = vunpack.c.l.b16 %v2523
    %v2936 = vunpack.c.h.b16 %v2523
    %v2937 = vunpack.c.l.b16 %v2524
    %v2938 = vunpack.c.h.b16 %v2524
    %v2939 = vunpack.c.l.b16 %v2525
    %v2940 = vunpack.c.h.b16 %v2525
    %v2941 = vunpack.c.l.b16 %v2526
    %v2942 = vunpack.c.h.b16 %v2526
    %v2943 = vunpack.c.l.b16 %v2527
    %v2944 = vunpack.c.h.b16 %v2527
    %v2945 = vunpack.c.l.b16 %v2528
    %v2946 = vunpack.c.h.b16 %v2528
    %v2947 = vunpack.c.l.b16 %v2529
    %v2948 = vunpack.c.h.b16 %v2529
    %v2949 = vunpack.c.l.b16 %v2530
    %v2950 = vunpack.c.h.b16 %v2530
    %v2951 = vunpack.c.l.b16 %v2531
    %v2952 = vunpack.c.h.b16 %v2531
    %v2953 = vunpack.c.l.b16 %v2532
    %v2954 = vunpack.c.h.b16 %v2532
    %v2955 = vunpack.c.l.b16 %v2533
    %v2956 = vunpack.c.h.b16 %v2533
    %v2957 = vunpack.c.l.b16 %v2534
    %v2958 = vunpack.c.h.b16 %v2534
    %v2959 = vunpack.c.l.b16 %v2535
    %v2960 = vunpack.c.h.b16 %v2535
    %v2961 = vunpack.c.l.b16 %v2536
    %v2962 = vunpack.c.h.b16 %v2536
    %v2963 = vunpack.c.l.b16 %v2537
    %v2964 = vunpack.c.h.b16 %v2537
    %v2965 = vunpack.c.l.b16 %v2538
    %v2966 = vunpack.c.h.b16 %v2538
    %v2967 = vunpack.c.l.b16 %v2539
    %v2968 = vunpack.c.h.b16 %v2539
    %v2969 = vunpack.c.l.b16 %v2540
    %v2970 = vunpack.c.h.b16 %v2540
    %v2971 = vunpack.c.l.b16 %v2541
    %v2972 = vunpack.c.h.b16 %v2541
    %v2973 = vunpack.c.l.b16 %v2542
    %v2974 = vunpack.c.h.b16 %v2542
    %v2975 = vunpack.c.l.b16 %v2543
    %v2976 = vunpack.c.h.b16 %v2543
    %v2977 = vunpack.c.l.b16 %v2544
    %v2978 = vunpack.c.h.b16 %v2544
    %v2979 = vunpack.c.l.b16 %v2545
    %v2980 = vunpack.c.h.b16 %v2545
    %v2981 = vunpack.c.l.b16 %v2546
    %v2982 = vunpack.c.h.b16 %v2546
    %v2983 = vunpack.c.l.b16 %v2547
    %v2984 = vunpack.c.h.b16 %v2547
    %v2985 = vunpack.c.l.b16 %v2548
    %v2986 = vunpack.c.h.b16 %v2548
    %v2987 = vunpack.c.l.b16 %v2549
    %v2988 = vunpack.c.h.b16 %v2549
    %v2989 = vunpack.c.l.b16 %v2550
    %v2990 = vunpack.c.h.b16 %v2550
    %v2991 = vunpack.c.l.b16 %v2551
    %v2992 = vunpack.c.h.b16 %v2551
    %v2993 = vunpack.c.l.b16 %v2552
    %v2994 = vunpack.c.h.b16 %v2552
    %v2995 = vunpack.c.l.b16 %v2553
    %v2996 = vunpack.c.h.b16 %v2553
    %v2997 = vunpack.c.l.b16 %v2554
    %v2998 = vunpack.c.h.b16 %v2554
    %v2999 = vunpack.c.l.b16 %v2555
    %v3000 = vunpack.c.h.b16 %v2555
    %v3001 = vunpack.c.l.b16 %v2556
    %v3002 = vunpack.c.h.b16 %v2556
    %v3003 = vunpack.c.l.b16 %v2557
    %v3004 = vunpack.c.h.b16 %v2557
    %v3005 = vunpack.c.l.b16 %v2558
    %v3006 = vunpack.c.h.b16 %v2558
    %v3007 = vunpack.c.l.b16 %v2559
    %v3008 = vunpack.c.h.b16 %v2559
    %v3009 = vunpack.c.l.b16 %v2560
    %v3010 = vunpack.c.h.b16 %v2560
    %v3011 = vunpack.c.l.b16 %v2561
    %v3012 = vunpack.c.h.b16 %v2561
    %v3013 = vunpack.c.l.b16 %v2562
    %v3014 = vunpack.c.h.b16 %v2562
    %v3015 = vunpack.c.l.b16 %v2563
    %v3016 = vunpack.c.h.b16 %v2563
    %v3017 = vunpack.c.l.b16 %v2564
    %v3018 = vunpack.c.h.b16 %v2564
    %v3019 = vunpack.c.l.b16 %v2565
    %v3020 = vunpack.c.h.b16 %v2565
    %v3021 = vunpack.c.l.b16 %v2566
    %v3022 = vunpack.c.h.b16 %v2566
    %v3023 = vunpack.c.l.b16 %v2567
    %v3024 = vunpack.c.h.b16 %v2567
    %v3025 = vunpack.c.l.b16 %v2568
    %v3026 = vunpack.c.h.b16 %v2568
    %v3027 = vunpack.c.l.b16 %v2569
    %v3028 = vunpack.c.h.b16 %v2569
    %v3029 = vunpack.c.l.b16 %v2570
    %v3030 = vunpack.c.h.b16 %v2570
    %v3031 = vunpack.c.l.b16 %v2571
    %v3032 = vunpack.c.h.b16 %v2571
    %v3033 = vunpack.c.l.b16 %v2572
    %v3034 = vunpack.c.h.b16 %v2572
    %v3035 = vunpack.c.l.b16 %v2573
    %v3036 = vunpack.c.h.b16 %v2573
    %v3037 = vunpack.c.l.b16 %v2574
    %v3038 = vunpack.c.h.b16 %v2574
    %v3039 = vunpack.c.l.b16 %v2575
    %v3040 = vunpack.c.h.b16 %v2575
    %v3041 = vunpack.c.l.b16 %v2576
    %v3042 = vunpack.c.h.b16 %v2576
    %v3043 = vunpack.c.l.b16 %v2577
    %v3044 = vunpack.c.h.b16 %v2577
    %v3045 = vunpack.c.l.b16 %v2578
    %v3046 = vunpack.c.h.b16 %v2578
    %v3047 = vpack.c.b16 %v2807, %v2791
    %v3048 = vpack.c.b16 %v2808, %v2792
    %v3049 = vpack.c.b16 %v2809, %v2793
    %v3050 = vpack.c.b16 %v2810, %v2794
    %v3051 = vpack.c.b16 %v2811, %v2795
    %v3052 = vpack.c.b16 %v2812, %v2796
    %v3053 = vpack.c.b16 %v2813, %v2797
    %v3054 = vpack.c.b16 %v2814, %v2798
    %v3055 = vpack.c.b16 %v2815, %v2799
    %v3056 = vpack.c.b16 %v2816, %v2800
    %v3057 = vpack.c.b16 %v2817, %v2801
    %v3058 = vpack.c.b16 %v2818, %v2802
    %v3059 = vpack.c.b16 %v2819, %v2803
    %v3060 = vpack.c.b16 %v2820, %v2804
    %v3061 = vpack.c.b16 %v2821, %v2805
    %v3062 = vpack.c.b16 %v2822, %v2806
    %v3063 = vpack.c.b16 %v2839, %v2823
    %v3064 = vpack.c.b16 %v2840, %v2824
    %v3065 = vpack.c.b16 %v2841, %v2825
    %v3066 = vpack.c.b16 %v2842, %v2826
    %v3067 = vpack.c.b16 %v2843, %v2827
    %v3068 = vpack.c.b16 %v2844, %v2828
    %v3069 = vpack.c.b16 %v2845, %v2829
    %v3070 = vpack.c.b16 %v2846, %v2830
    %v3071 = vpack.c.b16 %v2847, %v2831
    %v3072 = vpack.c.b16 %v2848, %v2832
    %v3073 = vpack.c.b16 %v2849, %v2833
    %v3074 = vpack.c.b16 %v2850, %v2834
    %v3075 = vpack.c.b16 %v2851, %v2835
    %v3076 = vpack.c.b16 %v2852, %v2836
    %v3077 = vpack.c.b16 %v2853, %v2837
    %v3078 = vpack.c.b16 %v2854, %v2838
    %v3079 = vpack.c.b16 %v2871, %v2855
    %v3080 = vpack.c.b16 %v2872, %v2856
    %v3081 = vpack.c.b16 %v2873, %v2857
    %v3082 = vpack.c.b16 %v2874, %v2858
    %v3083 = vpack.c.b16 %v2875, %v2859
    %v3084 = vpack.c.b16 %v2876, %v2860
    %v3085 = vpack.c.b16 %v2877, %v2861
    %v3086 = vpack.c.b16 %v2878, %v2862
    %v3087 = vpack.c.b16 %v2879, %v2863
    %v3088 = vpack.c.b16 %v2880, %v2864
    %v3089 = vpack.c.b16 %v2881, %v2865
    %v3090 = vpack.c.b16 %v2882, %v2866
    %v3091 = vpack.c.b16 %v2883, %v2867
    %v3092 = vpack.c.b16 %v2884, %v2868
    %v3093 = vpack.c.b16 %v2885, %v2869
    %v3094 = vpack.c.b16 %v2886, %v2870
    %v3095 = vpack.c.b16 %v2903, %v2887
    %v3096 = vpack.c.b16 %v2904, %v2888
    %v3097 = vpack.c.b16 %v2905, %v2889
    %v3098 = vpack.c.b16 %v2906, %v2890
    %v3099 = vpack.c.b16 %v2907, %v2891
    %v3100 = vpack.c.b16 %v2908, %v2892
    %v3101 = vpack.c.b16 %v2909, %v2893
    %v3102 = vpack.c.b16 %v2910, %v2894
    %v3103 = vpack.c.b16 %v2911, %v2895
    %v3104 = vpack.c.b16 %v2912, %v2896
    %v3105 = vpack.c.b16 %v2913, %v2897
    %v3106 = vpack.c.b16 %v2914, %v2898
    %v3107 = vpack.c.b16 %v2915, %v2899
    %v3108 = vpack.c.b16 %v2916, %v2900
    %v3109 = vpack.c.b16 %v2917, %v2901
    %v3110 = vpack.c.b16 %v2918, %v2902
    %v3111 = vpack.c.b16 %v2935, %v2919
    %v3112 = vpack.c.b16 %v2936, %v2920
    %v3113 = vpack.c.b16 %v2937, %v2921
    %v3114 = vpack.c.b16 %v2938, %v2922
    %v3115 = vpack.c.b16 %v2939, %v2923
    %v3116 = vpack.c.b16 %v2940, %v2924
    %v3117 = vpack.c.b16 %v2941, %v2925
    %v3118 = vpack.c.b16 %v2942, %v2926
    %v3119 = vpack.c.b16 %v2943, %v2927
    %v3120 = vpack.c.b16 %v2944, %v2928
    %v3121 = vpack.c.b16 %v2945, %v2929
    %v3122 = vpack.c.b16 %v2946, %v2930
    %v3123 = vpack.c.b16 %v2947, %v2931
    %v3124 = vpack.c.b16 %v2948, %v2932
    %v3125 = vpack.c.b16 %v2949, %v2933
    %v3126 = vpack.c.b16 %v2950, %v2934
    %v3127 = vpack.c.b16 %v2967, %v2951
    %v3128 = vpack.c.b16 %v2968, %v2952
    %v3129 = vpack.c.b16 %v2969, %v2953
    %v3130 = vpack.c.b16 %v2970, %v2954
    %v3131 = vpack.c.b16 %v2971, %v2955
    %v3132 = vpack.c.b16 %v2972, %v2956
    %v3133 = vpack.c.b16 %v2973, %v2957
    %v3134 = vpack.c.b16 %v2974, %v2958
    %v3135 = vpack.c.b16 %v2975, %v2959
    %v3136 = vpack.c.b16 %v2976, %v2960
    %v3137 = vpack.c.b16 %v2977, %v2961
    %v3138 = vpack.c.b16 %v2978, %v2962
    %v3139 = vpack.c.b16 %v2979, %v2963
    %v3140 = vpack.c.b16 %v2980, %v2964
    %v3141 = vpack.c.b16 %v2981, %v2965
    %v3142 = vpack.c.b16 %v2982, %v2966
    %v3143 = vpack.c.b16 %v2999, %v2983
    %v3144 = vpack.c.b16 %v3000, %v2984
    %v3145 = vpack.c.b16 %v3001, %v2985
    %v3146 = vpack.c.b16 %v3002, %v2986
    %v3147 = vpack.c.b16 %v3003, %v2987
    %v3148 = vpack.c.b16 %v3004, %v2988
    %v3149 = vpack.c.b16 %v3005, %v2989
    %v3150 = vpack.c.b16 %v3006, %v2990
    %v3151 = vpack.c.b16 %v3007, %v2991
    %v3152 = vpack.c.b16 %v3008, %v2992
    %v3153 = vpack.c.b16 %v3009, %v2993
    %v3154 = vpack.c.b16 %v3010, %v2994
    %v3155 = vpack.c.b16 %v3011, %v2995
    %v3156 = vpack.c.b16 %v3012, %v2996
    %v3157 = vpack.c.b16 %v3013, %v2997
    %v3158 = vpack.c.b16 %v3014, %v2998
    %v3159 = vpack.c.b16 %v3031, %v3015
    %v3160 = vpack.c.b16 %v3032, %v3016
    %v3161 = vpack.c.b16 %v3033, %v3017
    %v3162 = vpack.c.b16 %v3034, %v3018
    %v3163 = vpack.c.b16 %v3035, %v3019
    %v3164 = vpack.c.b16 %v3036, %v3020
    %v3165 = vpack.c.b16 %v3037, %v3021
    %v3166 = vpack.c.b16 %v3038, %v3022
    %v3167 = vpack.c.b16 %v3039, %v3023
    %v3168 = vpack.c.b16 %v3040, %v3024
    %v3169 = vpack.c.b16 %v3041, %v3025
    %v3170 = vpack.c.b16 %v3042, %v3026
    %v3171 = vpack.c.b16 %v3043, %v3027
    %v3172 = vpack.c.b16 %v3044, %v3028
    %v3173 = vpack.c.b16 %v3045, %v3029
    %v3174 = vpack.c.b16 %v3046, %v3030
    %3303 = vmatprep.subr.bf16.mxu0 %v3048
    %3304 = vmatpush1.bf16.msra.mxu0 %v3047
    %3305 = vmatprep.subr.bf16.mxu0 %v3064
    %3306 = vmatpush1.bf16.msra.mxu0 %v3063
    %3307 = vmatprep.subr.bf16.mxu0 %v3080
    %3308 = vmatpush1.bf16.msra.mxu0 %v3079
    %3309 = vmatprep.subr.bf16.mxu0 %v3096
    %3310 = vmatpush1.bf16.msra.mxu0 %v3095
    %3311 = vmatprep.subr.bf16.mxu0 %v3112
    %3312 = vmatpush1.bf16.msra.mxu0 %v3111
    %3313 = vmatprep.subr.bf16.mxu0 %v3128
    %3314 = vmatpush1.bf16.msra.mxu0 %v3127
    %3315 = vmatprep.subr.bf16.mxu0 %v3144
    %3316 = vmatpush1.bf16.msra.mxu0 %v3143
    %3317 = vmatprep.subr.bf16.mxu0 %v3160
    %3318 = vmatpush1.bf16.msra.mxu0 %v3159
    %3319 = vmatprep.subr.bf16.mxu0 0
    %3320 = vmatpush1.bf16.msra.mxu0 0
    %3321 = vmatprep.subr.bf16.mxu0 0
    %3322 = vmatpush1.bf16.msra.mxu0 0
    %3323 = vmatprep.subr.bf16.mxu0 0
    %3324 = vmatpush1.bf16.msra.mxu0 0
    %3325 = vmatprep.subr.bf16.mxu0 0
    %3326 = vmatpush1.bf16.msra.mxu0 0
    %3327 = vmatprep.subr.bf16.mxu0 0
    %3328 = vmatpush1.bf16.msra.mxu0 0
    %3329 = vmatprep.subr.bf16.mxu0 0
    %3330 = vmatpush1.bf16.msra.mxu0 0
    %3331 = vmatprep.subr.bf16.mxu0 0
    %3332 = vmatpush1.bf16.msra.mxu0 0
    %3333 = vmatprep.subr.bf16.mxu0 0
    %3334 = vmatpush1.bf16.msra.mxu0 0
    %3335 = vmatprep.mubr.bf16.mxu0 0
    %3336 = vmatmul.mubr.bf16.gmra.mrb[0].mxu0 %v2450
    %v3337 = vpop.f32.mrb[0].mxu0
    %v3338 = vadd.f32 %v2586, %v3337
    %v3339 = vpop.f32.mrb[0].mxu0
    %v3340 = vadd.f32 %v2590, %v3339
    %v3341 = vpop.f32.mrb[0].mxu0
    %v3342 = vadd.f32 %v2586, %v3341
    %v3343 = vpop.f32.mrb[0].mxu0
    %v3344 = vadd.f32 %v2590, %v3343
    %3345 = vdwg.mxu0
    %3346 = vmatprep.subr.bf16.mxu0 %v3050
    %3347 = vmatpush1.bf16.msra.mxu0 %v3049
    %3348 = vmatprep.subr.bf16.mxu0 %v3066
    %3349 = vmatpush1.bf16.msra.mxu0 %v3065
    %3350 = vmatprep.subr.bf16.mxu0 %v3082
    %3351 = vmatpush1.bf16.msra.mxu0 %v3081
    %3352 = vmatprep.subr.bf16.mxu0 %v3098
    %3353 = vmatpush1.bf16.msra.mxu0 %v3097
    %3354 = vmatprep.subr.bf16.mxu0 %v3114
    %3355 = vmatpush1.bf16.msra.mxu0 %v3113
    %3356 = vmatprep.subr.bf16.mxu0 %v3130
    %3357 = vmatpush1.bf16.msra.mxu0 %v3129
    %3358 = vmatprep.subr.bf16.mxu0 %v3146
    %3359 = vmatpush1.bf16.msra.mxu0 %v3145
    %3360 = vmatprep.subr.bf16.mxu0 %v3162
    %3361 = vmatpush1.bf16.msra.mxu0 %v3161
    %3362 = vmatprep.subr.bf16.mxu0 0
    %3363 = vmatpush1.bf16.msra.mxu0 0
    %3364 = vmatprep.subr.bf16.mxu0 0
    %3365 = vmatpush1.bf16.msra.mxu0 0
    %3366 = vmatprep.subr.bf16.mxu0 0
    %3367 = vmatpush1.bf16.msra.mxu0 0
    %3368 = vmatprep.subr.bf16.mxu0 0
    %3369 = vmatpush1.bf16.msra.mxu0 0
    %3370 = vmatprep.subr.bf16.mxu0 0
    %3371 = vmatpush1.bf16.msra.mxu0 0
    %3372 = vmatprep.subr.bf16.mxu0 0
    %3373 = vmatpush1.bf16.msra.mxu0 0
    %3374 = vmatprep.subr.bf16.mxu0 0
    %3375 = vmatpush1.bf16.msra.mxu0 0
    %3376 = vmatprep.subr.bf16.mxu0 0
    %3377 = vmatpush1.bf16.msra.mxu0 0
    %3378 = vmatprep.mubr.bf16.mxu0 0
    %3379 = vmatmul.mubr.bf16.gmra.mrb[0].mxu0 %v2450
    %v3380 = vpop.f32.mrb[0].mxu0
    %v3381 = vadd.f32 %v2594, %v3380
    %v3382 = vpop.f32.mrb[0].mxu0
    %v3383 = vadd.f32 %v2598, %v3382
    %v3384 = vpop.f32.mrb[0].mxu0
    %v3385 = vadd.f32 %v2594, %v3384
    %v3386 = vpop.f32.mrb[0].mxu0
    %v3387 = vadd.f32 %v2598, %v3386
    %3388 = vdwg.mxu0
    %3389 = vmatprep.subr.bf16.mxu0 %v3052
    %3390 = vmatpush1.bf16.msra.mxu0 %v3051
    %3391 = vmatprep.subr.bf16.mxu0 %v3068
    %3392 = vmatpush1.bf16.msra.mxu0 %v3067
    %3393 = vmatprep.subr.bf16.mxu0 %v3084
    %3394 = vmatpush1.bf16.msra.mxu0 %v3083
    %3395 = vmatprep.subr.bf16.mxu0 %v3100
    %3396 = vmatpush1.bf16.msra.mxu0 %v3099
    %3397 = vmatprep.subr.bf16.mxu0 %v3116
    %3398 = vmatpush1.bf16.msra.mxu0 %v3115
    %3399 = vmatprep.subr.bf16.mxu0 %v3132
    %3400 = vmatpush1.bf16.msra.mxu0 %v3131
    %3401 = vmatprep.subr.bf16.mxu0 %v3148
    %3402 = vmatpush1.bf16.msra.mxu0 %v3147
    %3403 = vmatprep.subr.bf16.mxu0 %v3164
    %3404 = vmatpush1.bf16.msra.mxu0 %v3163
    %3405 = vmatprep.subr.bf16.mxu0 0
    %3406 = vmatpush1.bf16.msra.mxu0 0
    %3407 = vmatprep.subr.bf16.mxu0 0
    %3408 = vmatpush1.bf16.msra.mxu0 0
    %3409 = vmatprep.subr.bf16.mxu0 0
    %3410 = vmatpush1.bf16.msra.mxu0 0
    %3411 = vmatprep.subr.bf16.mxu0 0
    %3412 = vmatpush1.bf16.msra.mxu0 0
    %3413 = vmatprep.subr.bf16.mxu0 0
    %3414 = vmatpush1.bf16.msra.mxu0 0
    %3415 = vmatprep.subr.bf16.mxu0 0
    %3416 = vmatpush1.bf16.msra.mxu0 0
    %3417 = vmatprep.subr.bf16.mxu0 0
    %3418 = vmatpush1.bf16.msra.mxu0 0
    %3419 = vmatprep.subr.bf16.mxu0 0
    %3420 = vmatpush1.bf16.msra.mxu0 0
    %3421 = vmatprep.mubr.bf16.mxu0 0
    %3422 = vmatmul.mubr.bf16.gmra.mrb[0].mxu0 %v2450
    %v3423 = vpop.f32.mrb[0].mxu0
    %v3424 = vadd.f32 %v2602, %v3423
    %v3425 = vpop.f32.mrb[0].mxu0
    %v3426 = vadd.f32 %v2606, %v3425
    %v3427 = vpop.f32.mrb[0].mxu0
    %v3428 = vadd.f32 %v2602, %v3427
    %v3429 = vpop.f32.mrb[0].mxu0
    %v3430 = vadd.f32 %v2606, %v3429
    %3431 = vdwg.mxu0
    %3432 = vmatprep.subr.bf16.mxu0 %v3054
    %3433 = vmatpush1.bf16.msra.mxu0 %v3053
    %3434 = vmatprep.subr.bf16.mxu0 %v3070
    %3435 = vmatpush1.bf16.msra.mxu0 %v3069
    %3436 = vmatprep.subr.bf16.mxu0 %v3086
    %3437 = vmatpush1.bf16.msra.mxu0 %v3085
    %3438 = vmatprep.subr.bf16.mxu0 %v3102
    %3439 = vmatpush1.bf16.msra.mxu0 %v3101
    %3440 = vmatprep.subr.bf16.mxu0 %v3118
    %3441 = vmatpush1.bf16.msra.mxu0 %v3117
    %3442 = vmatprep.subr.bf16.mxu0 %v3134
    %3443 = vmatpush1.bf16.msra.mxu0 %v3133
    %3444 = vmatprep.subr.bf16.mxu0 %v3150
    %3445 = vmatpush1.bf16.msra.mxu0 %v3149
    %3446 = vmatprep.subr.bf16.mxu0 %v3166
    %3447 = vmatpush1.bf16.msra.mxu0 %v3165
    %3448 = vmatprep.subr.bf16.mxu0 0
    %3449 = vmatpush1.bf16.msra.mxu0 0
    %3450 = vmatprep.subr.bf16.mxu0 0
    %3451 = vmatpush1.bf16.msra.mxu0 0
    %3452 = vmatprep.subr.bf16.mxu0 0
    %3453 = vmatpush1.bf16.msra.mxu0 0
    %3454 = vmatprep.subr.bf16.mxu0 0
    %3455 = vmatpush1.bf16.msra.mxu0 0
    %3456 = vmatprep.subr.bf16.mxu0 0
    %3457 = vmatpush1.bf16.msra.mxu0 0
    %3458 = vmatprep.subr.bf16.mxu0 0
    %3459 = vmatpush1.bf16.msra.mxu0 0
    %3460 = vmatprep.subr.bf16.mxu0 0
    %3461 = vmatpush1.bf16.msra.mxu0 0
    %3462 = vmatprep.subr.bf16.mxu0 0
    %3463 = vmatpush1.bf16.msra.mxu0 0
    %3464 = vmatprep.mubr.bf16.mxu0 0
    %3465 = vmatmul.mubr.bf16.gmra.mrb[0].mxu0 %v2450
    %v3466 = vpop.f32.mrb[0].mxu0
    %v3467 = vadd.f32 %v2610, %v3466
    %v3468 = vpop.f32.mrb[0].mxu0
    %v3469 = vadd.f32 %v2614, %v3468
    %v3470 = vpop.f32.mrb[0].mxu0
    %v3471 = vadd.f32 %v2610, %v3470
    %v3472 = vpop.f32.mrb[0].mxu0
    %v3473 = vadd.f32 %v2614, %v3472
    %3474 = vdwg.mxu0
    %3475 = vmatprep.subr.bf16.mxu0 %v3056
    %3476 = vmatpush1.bf16.msra.mxu0 %v3055
    %3477 = vmatprep.subr.bf16.mxu0 %v3072
    %3478 = vmatpush1.bf16.msra.mxu0 %v3071
    %3479 = vmatprep.subr.bf16.mxu0 %v3088
    %3480 = vmatpush1.bf16.msra.mxu0 %v3087
    %3481 = vmatprep.subr.bf16.mxu0 %v3104
    %3482 = vmatpush1.bf16.msra.mxu0 %v3103
    %3483 = vmatprep.subr.bf16.mxu0 %v3120
    %3484 = vmatpush1.bf16.msra.mxu0 %v3119
    %3485 = vmatprep.subr.bf16.mxu0 %v3136
    %3486 = vmatpush1.bf16.msra.mxu0 %v3135
    %3487 = vmatprep.subr.bf16.mxu0 %v3152
    %3488 = vmatpush1.bf16.msra.mxu0 %v3151
    %3489 = vmatprep.subr.bf16.mxu0 %v3168
    %3490 = vmatpush1.bf16.msra.mxu0 %v3167
    %3491 = vmatprep.subr.bf16.mxu0 0
    %3492 = vmatpush1.bf16.msra.mxu0 0
    %3493 = vmatprep.subr.bf16.mxu0 0
    %3494 = vmatpush1.bf16.msra.mxu0 0
    %3495 = vmatprep.subr.bf16.mxu0 0
    %3496 = vmatpush1.bf16.msra.mxu0 0
    %3497 = vmatprep.subr.bf16.mxu0 0
    %3498 = vmatpush1.bf16.msra.mxu0 0
    %3499 = vmatprep.subr.bf16.mxu0 0
    %3500 = vmatpush1.bf16.msra.mxu0 0
    %3501 = vmatprep.subr.bf16.mxu0 0
    %3502 = vmatpush1.bf16.msra.mxu0 0
    %3503 = vmatprep.subr.bf16.mxu0 0
    %3504 = vmatpush1.bf16.msra.mxu0 0
    %3505 = vmatprep.subr.bf16.mxu0 0
    %3506 = vmatpush1.bf16.msra.mxu0 0
    %3507 = vmatprep.mubr.bf16.mxu0 0
    %3508 = vmatmul.mubr.bf16.gmra.mrb[0].mxu0 %v2450
    %v3509 = vpop.f32.mrb[0].mxu0
    %v3510 = vadd.f32 %v2618, %v3509
    %v3511 = vpop.f32.mrb[0].mxu0
    %v3512 = vadd.f32 %v2622, %v3511
    %v3513 = vpop.f32.mrb[0].mxu0
    %v3514 = vadd.f32 %v2618, %v3513
    %v3515 = vpop.f32.mrb[0].mxu0
    %v3516 = vadd.f32 %v2622, %v3515
    %3517 = vdwg.mxu0
    %3518 = vmatprep.subr.bf16.mxu0 %v3058
    %3519 = vmatpush1.bf16.msra.mxu0 %v3057
    %3520 = vmatprep.subr.bf16.mxu0 %v3074
    %3521 = vmatpush1.bf16.msra.mxu0 %v3073
    %3522 = vmatprep.subr.bf16.mxu0 %v3090
    %3523 = vmatpush1.bf16.msra.mxu0 %v3089
    %3524 = vmatprep.subr.bf16.mxu0 %v3106
    %3525 = vmatpush1.bf16.msra.mxu0 %v3105
    %3526 = vmatprep.subr.bf16.mxu0 %v3122
    %3527 = vmatpush1.bf16.msra.mxu0 %v3121
    %3528 = vmatprep.subr.bf16.mxu0 %v3138
    %3529 = vmatpush1.bf16.msra.mxu0 %v3137
    %3530 = vmatprep.subr.bf16.mxu0 %v3154
    %3531 = vmatpush1.bf16.msra.mxu0 %v3153
    %3532 = vmatprep.subr.bf16.mxu0 %v3170
    %3533 = vmatpush1.bf16.msra.mxu0 %v3169
    %3534 = vmatprep.subr.bf16.mxu0 0
    %3535 = vmatpush1.bf16.msra.mxu0 0
    %3536 = vmatprep.subr.bf16.mxu0 0
    %3537 = vmatpush1.bf16.msra.mxu0 0
    %3538 = vmatprep.subr.bf16.mxu0 0
    %3539 = vmatpush1.bf16.msra.mxu0 0
    %3540 = vmatprep.subr.bf16.mxu0 0
    %3541 = vmatpush1.bf16.msra.mxu0 0
    %3542 = vmatprep.subr.bf16.mxu0 0
    %3543 = vmatpush1.bf16.msra.mxu0 0
    %3544 = vmatprep.subr.bf16.mxu0 0
    %3545 = vmatpush1.bf16.msra.mxu0 0
    %3546 = vmatprep.subr.bf16.mxu0 0
    %3547 = vmatpush1.bf16.msra.mxu0 0
    %3548 = vmatprep.subr.bf16.mxu0 0
    %3549 = vmatpush1.bf16.msra.mxu0 0
    %3550 = vmatprep.mubr.bf16.mxu0 0
    %3551 = vmatmul.mubr.bf16.gmra.mrb[0].mxu0 %v2450
    %v3552 = vpop.f32.mrb[0].mxu0
    %v3553 = vadd.f32 %v2626, %v3552
    %v3554 = vpop.f32.mrb[0].mxu0
    %v3555 = vadd.f32 %v2630, %v3554
    %v3556 = vpop.f32.mrb[0].mxu0
    %v3557 = vadd.f32 %v2626, %v3556
    %v3558 = vpop.f32.mrb[0].mxu0
    %v3559 = vadd.f32 %v2630, %v3558
    %3560 = vdwg.mxu0
    %3561 = vmatprep.subr.bf16.mxu0 %v3060
    %3562 = vmatpush1.bf16.msra.mxu0 %v3059
    %3563 = vmatprep.subr.bf16.mxu0 %v3076
    %3564 = vmatpush1.bf16.msra.mxu0 %v3075
    %3565 = vmatprep.subr.bf16.mxu0 %v3092
    %3566 = vmatpush1.bf16.msra.mxu0 %v3091
    %3567 = vmatprep.subr.bf16.mxu0 %v3108
    %3568 = vmatpush1.bf16.msra.mxu0 %v3107
    %3569 = vmatprep.subr.bf16.mxu0 %v3124
    %3570 = vmatpush1.bf16.msra.mxu0 %v3123
    %3571 = vmatprep.subr.bf16.mxu0 %v3140
    %3572 = vmatpush1.bf16.msra.mxu0 %v3139
    %3573 = vmatprep.subr.bf16.mxu0 %v3156
    %3574 = vmatpush1.bf16.msra.mxu0 %v3155
    %3575 = vmatprep.subr.bf16.mxu0 %v3172
    %3576 = vmatpush1.bf16.msra.mxu0 %v3171
    %3577 = vmatprep.subr.bf16.mxu0 0
    %3578 = vmatpush1.bf16.msra.mxu0 0
    %3579 = vmatprep.subr.bf16.mxu0 0
    %3580 = vmatpush1.bf16.msra.mxu0 0
    %3581 = vmatprep.subr.bf16.mxu0 0
    %3582 = vmatpush1.bf16.msra.mxu0 0
    %3583 = vmatprep.subr.bf16.mxu0 0
    %3584 = vmatpush1.bf16.msra.mxu0 0
    %3585 = vmatprep.subr.bf16.mxu0 0
    %3586 = vmatpush1.bf16.msra.mxu0 0
    %3587 = vmatprep.subr.bf16.mxu0 0
    %3588 = vmatpush1.bf16.msra.mxu0 0
    %3589 = vmatprep.subr.bf16.mxu0 0
    %3590 = vmatpush1.bf16.msra.mxu0 0
    %3591 = vmatprep.subr.bf16.mxu0 0
    %3592 = vmatpush1.bf16.msra.mxu0 0
    %3593 = vmatprep.mubr.bf16.mxu0 0
    %3594 = vmatmul.mubr.bf16.gmra.mrb[0].mxu0 %v2450
    %v3595 = vpop.f32.mrb[0].mxu0
    %v3596 = vadd.f32 %v2634, %v3595
    %v3597 = vpop.f32.mrb[0].mxu0
    %v3598 = vadd.f32 %v2638, %v3597
    %v3599 = vpop.f32.mrb[0].mxu0
    %v3600 = vadd.f32 %v2634, %v3599
    %v3601 = vpop.f32.mrb[0].mxu0
    %v3602 = vadd.f32 %v2638, %v3601
    %3603 = vdwg.mxu0
    %3604 = vmatprep.subr.bf16.mxu0 %v3062
    %3605 = vmatpush1.bf16.msra.mxu0 %v3061
    %3606 = vmatprep.subr.bf16.mxu0 %v3078
    %3607 = vmatpush1.bf16.msra.mxu0 %v3077
    %3608 = vmatprep.subr.bf16.mxu0 %v3094
    %3609 = vmatpush1.bf16.msra.mxu0 %v3093
    %3610 = vmatprep.subr.bf16.mxu0 %v3110
    %3611 = vmatpush1.bf16.msra.mxu0 %v3109
    %3612 = vmatprep.subr.bf16.mxu0 %v3126
    %3613 = vmatpush1.bf16.msra.mxu0 %v3125
    %3614 = vmatprep.subr.bf16.mxu0 %v3142
    %3615 = vmatpush1.bf16.msra.mxu0 %v3141
    %3616 = vmatprep.subr.bf16.mxu0 %v3158
    %3617 = vmatpush1.bf16.msra.mxu0 %v3157
    %3618 = vmatprep.subr.bf16.mxu0 %v3174
    %3619 = vmatpush1.bf16.msra.mxu0 %v3173
    %3620 = vmatprep.subr.bf16.mxu0 0
    %3621 = vmatpush1.bf16.msra.mxu0 0
    %3622 = vmatprep.subr.bf16.mxu0 0
    %3623 = vmatpush1.bf16.msra.mxu0 0
    %3624 = vmatprep.subr.bf16.mxu0 0
    %3625 = vmatpush1.bf16.msra.mxu0 0
    %3626 = vmatprep.subr.bf16.mxu0 0
    %3627 = vmatpush1.bf16.msra.mxu0 0
    %3628 = vmatprep.subr.bf16.mxu0 0
    %3629 = vmatpush1.bf16.msra.mxu0 0
    %3630 = vmatprep.subr.bf16.mxu0 0
    %3631 = vmatpush1.bf16.msra.mxu0 0
    %3632 = vmatprep.subr.bf16.mxu0 0
    %3633 = vmatpush1.bf16.msra.mxu0 0
    %3634 = vmatprep.subr.bf16.mxu0 0
    %3635 = vmatpush1.bf16.msra.mxu0 0
    %3636 = vmatprep.mubr.bf16.mxu0 0
    %3637 = vmatmul.mubr.bf16.gmra.mrb[0].mxu0 %v2450
    %v3638 = vpop.f32.mrb[0].mxu0
    %v3639 = vadd.f32 %v2642, %v3638
    %v3640 = vpop.f32.mrb[0].mxu0
    %v3641 = vadd.f32 %v2646, %v3640
    %v3642 = vpop.f32.mrb[0].mxu0
    %v3643 = vadd.f32 %v2642, %v3642
    %v3644 = vpop.f32.mrb[0].mxu0
    %v3645 = vadd.f32 %v2646, %v3644
    %3646 = vdwg.mxu0
    %v3647 = vmax.f32 %v3338, 0.0
    %v3648 = vmax.f32 %v3340, 0.0
    %v3649 = vmax.f32 %v3381, 0.0
    %v3650 = vmax.f32 %v3383, 0.0
    %v3651 = vmax.f32 %v3424, 0.0
    %v3652 = vmax.f32 %v3426, 0.0
    %v3653 = vmax.f32 %v3467, 0.0
    %v3654 = vmax.f32 %v3469, 0.0
    %v3655 = vmax.f32 %v3510, 0.0
    %v3656 = vmax.f32 %v3512, 0.0
    %v3657 = vmax.f32 %v3553, 0.0
    %v3658 = vmax.f32 %v3555, 0.0
    %v3659 = vmax.f32 %v3596, 0.0
    %v3660 = vmax.f32 %v3598, 0.0
    %v3661 = vmax.f32 %v3639, 0.0
    %v3662 = vmax.f32 %v3641, 0.0
    %v3663 = vmax.f32 %v3342, 0.0
    %v3664 = vmax.f32 %v3344, 0.0
    %v3665 = vmax.f32 %v3385, 0.0
    %v3666 = vmax.f32 %v3387, 0.0
    %v3667 = vmax.f32 %v3428, 0.0
    %v3668 = vmax.f32 %v3430, 0.0
    %v3669 = vmax.f32 %v3471, 0.0
    %v3670 = vmax.f32 %v3473, 0.0
    %v3671 = vmax.f32 %v3514, 0.0
    %v3672 = vmax.f32 %v3516, 0.0
    %v3673 = vmax.f32 %v3557, 0.0
    %v3674 = vmax.f32 %v3559, 0.0
    %v3675 = vmax.f32 %v3600, 0.0
    %v3676 = vmax.f32 %v3602, 0.0
    %v3677 = vmax.f32 %v3643, 0.0
    %v3678 = vmax.f32 %v3645, 0.0
    %v3679 = vpack.c.bf16 %v3663, %v3647
    %v3680 = vpack.c.bf16 %v3664, %v3648
    %v3681 = vpack.c.bf16 %v3665, %v3649
    %v3682 = vpack.c.bf16 %v3666, %v3650
    %v3683 = vpack.c.bf16 %v3667, %v3651
    %v3684 = vpack.c.bf16 %v3668, %v3652
    %v3685 = vpack.c.bf16 %v3669, %v3653
    %v3686 = vpack.c.bf16 %v3670, %v3654
    %v3687 = vpack.c.bf16 %v3671, %v3655
    %v3688 = vpack.c.bf16 %v3672, %v3656
    %v3689 = vpack.c.bf16 %v3673, %v3657
    %v3690 = vpack.c.bf16 %v3674, %v3658
    %v3691 = vpack.c.bf16 %v3675, %v3659
    %v3692 = vpack.c.bf16 %v3676, %v3660
    %v3693 = vpack.c.bf16 %v3677, %v3661
    %v3694 = vpack.c.bf16 %v3678, %v3662
    %v3695 = vld [vmem:[#allocation10] sm:$0xf]
    %v3696 = vld [vmem:[#allocation10 + $0x4] sm:$0xf]
    %v3697 = vld [vmem:[#allocation10 + $0x8] sm:$0xf]
    %v3698 = vld [vmem:[#allocation10 + $0xc] sm:$0xf]
    %v3699 = vld [vmem:[#allocation10 + $0x10] sm:$0xf]
    %v3700 = vld [vmem:[#allocation10 + $0x14] sm:$0xf]
    %v3701 = vld [vmem:[#allocation10 + $0x18] sm:$0xf]
    %v3702 = vld [vmem:[#allocation10 + $0x1c] sm:$0xf]
    %v3703 = vld [vmem:[#allocation10 + $0x20] sm:$0xf]
    %v3704 = vld [vmem:[#allocation10 + $0x24] sm:$0xf]
    %v3705 = vld [vmem:[#allocation10 + $0x28] sm:$0xf]
    %v3706 = vld [vmem:[#allocation10 + $0x2c] sm:$0xf]
    %v3707 = vld [vmem:[#allocation10 + $0x30] sm:$0xf]
    %v3708 = vld [vmem:[#allocation10 + $0x34] sm:$0xf]
    %v3709 = vld [vmem:[#allocation10 + $0x38] sm:$0xf]
    %v3710 = vld [vmem:[#allocation10 + $0x3c] sm:$0xf]
    %v3711 = vld [vmem:[#allocation10 + $0x40] sm:$0xf]
    %v3712 = vld [vmem:[#allocation10 + $0x44] sm:$0xf]
    %v3713 = vld [vmem:[#allocation10 + $0x48] sm:$0xf]
    %v3714 = vld [vmem:[#allocation10 + $0x4c] sm:$0xf]
    %v3715 = vld [vmem:[#allocation10 + $0x50] sm:$0xf]
    %v3716 = vld [vmem:[#allocation10 + $0x54] sm:$0xf]
    %v3717 = vld [vmem:[#allocation10 + $0x58] sm:$0xf]
    %v3718 = vld [vmem:[#allocation10 + $0x5c] sm:$0xf]
    %v3719 = vld [vmem:[#allocation10 + $0x60] sm:$0xf]
    %v3720 = vld [vmem:[#allocation10 + $0x64] sm:$0xf]
    %v3721 = vld [vmem:[#allocation10 + $0x68] sm:$0xf]
    %v3722 = vld [vmem:[#allocation10 + $0x6c] sm:$0xf]
    %v3723 = vld [vmem:[#allocation10 + $0x70] sm:$0xf]
    %v3724 = vld [vmem:[#allocation10 + $0x74] sm:$0xf]
    %v3725 = vld [vmem:[#allocation10 + $0x78] sm:$0xf]
    %v3726 = vld [vmem:[#allocation10 + $0x7c] sm:$0xf]
    %v3727 = vld [vmem:[#allocation10 + $0x80] sm:$0xf]
    %v3728 = vld [vmem:[#allocation10 + $0x84] sm:$0xf]
    %v3729 = vld [vmem:[#allocation10 + $0x88] sm:$0xf]
    %v3730 = vld [vmem:[#allocation10 + $0x8c] sm:$0xf]
    %v3731 = vld [vmem:[#allocation10 + $0x90] sm:$0xf]
    %v3732 = vld [vmem:[#allocation10 + $0x94] sm:$0xf]
    %v3733 = vld [vmem:[#allocation10 + $0x98] sm:$0xf]
    %v3734 = vld [vmem:[#allocation10 + $0x9c] sm:$0xf]
    %v3735 = vld [vmem:[#allocation10 + $0xa0] sm:$0xf]
    %v3736 = vld [vmem:[#allocation10 + $0xa4] sm:$0xf]
    %v3737 = vld [vmem:[#allocation10 + $0xa8] sm:$0xf]
    %v3738 = vld [vmem:[#allocation10 + $0xac] sm:$0xf]
    %v3739 = vld [vmem:[#allocation10 + $0xb0] sm:$0xf]
    %v3740 = vld [vmem:[#allocation10 + $0xb4] sm:$0xf]
    %v3741 = vld [vmem:[#allocation10 + $0xb8] sm:$0xf]
    %v3742 = vld [vmem:[#allocation10 + $0xbc] sm:$0xf]
    %v3743 = vld [vmem:[#allocation10 + $0xc0] sm:$0xf]
    %v3744 = vld [vmem:[#allocation10 + $0xc4] sm:$0xf]
    %v3745 = vld [vmem:[#allocation10 + $0xc8] sm:$0xf]
    %v3746 = vld [vmem:[#allocation10 + $0xcc] sm:$0xf]
    %v3747 = vld [vmem:[#allocation10 + $0xd0] sm:$0xf]
    %v3748 = vld [vmem:[#allocation10 + $0xd4] sm:$0xf]
    %v3749 = vld [vmem:[#allocation10 + $0xd8] sm:$0xf]
    %v3750 = vld [vmem:[#allocation10 + $0xdc] sm:$0xf]
    %v3751 = vld [vmem:[#allocation10 + $0xe0] sm:$0xf]
    %v3752 = vld [vmem:[#allocation10 + $0xe4] sm:$0xf]
    %v3753 = vld [vmem:[#allocation10 + $0xe8] sm:$0xf]
    %v3754 = vld [vmem:[#allocation10 + $0xec] sm:$0xf]
    %v3755 = vld [vmem:[#allocation10 + $0xf0] sm:$0xf]
    %v3756 = vld [vmem:[#allocation10 + $0xf4] sm:$0xf]
    %v3757 = vld [vmem:[#allocation10 + $0xf8] sm:$0xf]
    %v3758 = vld [vmem:[#allocation10 + $0xfc] sm:$0xf]
    %v3759 = vld [vmem:[#allocation10 + $0x100] sm:$0xf]
    %v3760 = vld [vmem:[#allocation10 + $0x104] sm:$0xf]
    %v3761 = vld [vmem:[#allocation10 + $0x108] sm:$0xf]
    %v3762 = vld [vmem:[#allocation10 + $0x10c] sm:$0xf]
    %v3763 = vld [vmem:[#allocation10 + $0x110] sm:$0xf]
    %v3764 = vld [vmem:[#allocation10 + $0x114] sm:$0xf]
    %v3765 = vld [vmem:[#allocation10 + $0x118] sm:$0xf]
    %v3766 = vld [vmem:[#allocation10 + $0x11c] sm:$0xf]
    %v3767 = vld [vmem:[#allocation10 + $0x120] sm:$0xf]
    %v3768 = vld [vmem:[#allocation10 + $0x124] sm:$0xf]
    %v3769 = vld [vmem:[#allocation10 + $0x128] sm:$0xf]
    %v3770 = vld [vmem:[#allocation10 + $0x12c] sm:$0xf]
    %v3771 = vld [vmem:[#allocation10 + $0x130] sm:$0xf]
    %v3772 = vld [vmem:[#allocation10 + $0x134] sm:$0xf]
    %v3773 = vld [vmem:[#allocation10 + $0x138] sm:$0xf]
    %v3774 = vld [vmem:[#allocation10 + $0x13c] sm:$0xf]
    %v3775 = vld [vmem:[#allocation10 + $0x140] sm:$0xf]
    %v3776 = vld [vmem:[#allocation10 + $0x144] sm:$0xf]
    %v3777 = vld [vmem:[#allocation10 + $0x148] sm:$0xf]
    %v3778 = vld [vmem:[#allocation10 + $0x14c] sm:$0xf]
    %v3779 = vld [vmem:[#allocation10 + $0x150] sm:$0xf]
    %v3780 = vld [vmem:[#allocation10 + $0x154] sm:$0xf]
    %v3781 = vld [vmem:[#allocation10 + $0x158] sm:$0xf]
    %v3782 = vld [vmem:[#allocation10 + $0x15c] sm:$0xf]
    %v3783 = vld [vmem:[#allocation10 + $0x160] sm:$0xf]
    %v3784 = vld [vmem:[#allocation10 + $0x164] sm:$0xf]
    %v3785 = vld [vmem:[#allocation10 + $0x168] sm:$0xf]
    %v3786 = vld [vmem:[#allocation10 + $0x16c] sm:$0xf]
    %v3787 = vld [vmem:[#allocation10 + $0x170] sm:$0xf]
    %v3788 = vld [vmem:[#allocation10 + $0x174] sm:$0xf]
    %v3789 = vld [vmem:[#allocation10 + $0x178] sm:$0xf]
    %v3790 = vld [vmem:[#allocation10 + $0x17c] sm:$0xf]
    %v3791 = vld [vmem:[#allocation10 + $0x180] sm:$0xf]
    %v3792 = vld [vmem:[#allocation10 + $0x184] sm:$0xf]
    %v3793 = vld [vmem:[#allocation10 + $0x188] sm:$0xf]
    %v3794 = vld [vmem:[#allocation10 + $0x18c] sm:$0xf]
    %v3795 = vld [vmem:[#allocation10 + $0x190] sm:$0xf]
    %v3796 = vld [vmem:[#allocation10 + $0x194] sm:$0xf]
    %v3797 = vld [vmem:[#allocation10 + $0x198] sm:$0xf]
    %v3798 = vld [vmem:[#allocation10 + $0x19c] sm:$0xf]
    %v3799 = vld [vmem:[#allocation10 + $0x1a0] sm:$0xf]
    %v3800 = vld [vmem:[#allocation10 + $0x1a4] sm:$0xf]
    %v3801 = vld [vmem:[#allocation10 + $0x1a8] sm:$0xf]
    %v3802 = vld [vmem:[#allocation10 + $0x1ac] sm:$0xf]
    %v3803 = vld [vmem:[#allocation10 + $0x1b0] sm:$0xf]
    %v3804 = vld [vmem:[#allocation10 + $0x1b4] sm:$0xf]
    %v3805 = vld [vmem:[#allocation10 + $0x1b8] sm:$0xf]
    %v3806 = vld [vmem:[#allocation10 + $0x1bc] sm:$0xf]
    %v3807 = vld [vmem:[#allocation10 + $0x1c0] sm:$0xf]
    %v3808 = vld [vmem:[#allocation10 + $0x1c4] sm:$0xf]
    %v3809 = vld [vmem:[#allocation10 + $0x1c8] sm:$0xf]
    %v3810 = vld [vmem:[#allocation10 + $0x1cc] sm:$0xf]
    %v3811 = vld [vmem:[#allocation10 + $0x1d0] sm:$0xf]
    %v3812 = vld [vmem:[#allocation10 + $0x1d4] sm:$0xf]
    %v3813 = vld [vmem:[#allocation10 + $0x1d8] sm:$0xf]
    %v3814 = vld [vmem:[#allocation10 + $0x1dc] sm:$0xf]
    %v3815 = vld [vmem:[#allocation10 + $0x1e0] sm:$0xf]
    %v3816 = vld [vmem:[#allocation10 + $0x1e4] sm:$0xf]
    %v3817 = vld [vmem:[#allocation10 + $0x1e8] sm:$0xf]
    %v3818 = vld [vmem:[#allocation10 + $0x1ec] sm:$0xf]
    %v3819 = vld [vmem:[#allocation10 + $0x1f0] sm:$0xf]
    %v3820 = vld [vmem:[#allocation10 + $0x1f4] sm:$0xf]
    %v3821 = vld [vmem:[#allocation10 + $0x1f8] sm:$0xf]
    %v3822 = vld [vmem:[#allocation10 + $0x1fc] sm:$0xf]
    %v3823 = vld [vmem:[#allocation10 + $0x200] sm:$0xf]
    %v3824 = vld [vmem:[#allocation10 + $0x204] sm:$0xf]
    %v3825 = vld [vmem:[#allocation10 + $0x208] sm:$0xf]
    %v3826 = vld [vmem:[#allocation10 + $0x20c] sm:$0xf]
    %v3827 = vld [vmem:[#allocation10 + $0x210] sm:$0xf]
    %v3828 = vld [vmem:[#allocation10 + $0x214] sm:$0xf]
    %v3829 = vld [vmem:[#allocation10 + $0x218] sm:$0xf]
    %v3830 = vld [vmem:[#allocation10 + $0x21c] sm:$0xf]
    %v3831 = vld [vmem:[#allocation10 + $0x220] sm:$0xf]
    %v3832 = vld [vmem:[#allocation10 + $0x224] sm:$0xf]
    %v3833 = vld [vmem:[#allocation10 + $0x228] sm:$0xf]
    %v3834 = vld [vmem:[#allocation10 + $0x22c] sm:$0xf]
    %v3835 = vld [vmem:[#allocation10 + $0x230] sm:$0xf]
    %v3836 = vld [vmem:[#allocation10 + $0x234] sm:$0xf]
    %v3837 = vld [vmem:[#allocation10 + $0x238] sm:$0xf]
    %v3838 = vld [vmem:[#allocation10 + $0x23c] sm:$0xf]
    %v3839 = vld [vmem:[#allocation10 + $0x240] sm:$0xf]
    %v3840 = vld [vmem:[#allocation10 + $0x244] sm:$0xf]
    %v3841 = vld [vmem:[#allocation10 + $0x248] sm:$0xf]
    %v3842 = vld [vmem:[#allocation10 + $0x24c] sm:$0xf]
    %v3843 = vld [vmem:[#allocation10 + $0x250] sm:$0xf]
    %v3844 = vld [vmem:[#allocation10 + $0x254] sm:$0xf]
    %v3845 = vld [vmem:[#allocation10 + $0x258] sm:$0xf]
    %v3846 = vld [vmem:[#allocation10 + $0x25c] sm:$0xf]
    %v3847 = vld [vmem:[#allocation10 + $0x260] sm:$0xf]
    %v3848 = vld [vmem:[#allocation10 + $0x264] sm:$0xf]
    %v3849 = vld [vmem:[#allocation10 + $0x268] sm:$0xf]
    %v3850 = vld [vmem:[#allocation10 + $0x26c] sm:$0xf]
    %v3851 = vld [vmem:[#allocation10 + $0x270] sm:$0xf]
    %v3852 = vld [vmem:[#allocation10 + $0x274] sm:$0xf]
    %v3853 = vld [vmem:[#allocation10 + $0x278] sm:$0xf]
    %v3854 = vld [vmem:[#allocation10 + $0x27c] sm:$0xf]
    %v3855 = vld [vmem:[#allocation10 + $0x280] sm:$0xf]
    %v3856 = vld [vmem:[#allocation10 + $0x284] sm:$0xf]
    %v3857 = vld [vmem:[#allocation10 + $0x288] sm:$0xf]
    %v3858 = vld [vmem:[#allocation10 + $0x28c] sm:$0xf]
    %v3859 = vld [vmem:[#allocation10 + $0x290] sm:$0xf]
    %v3860 = vld [vmem:[#allocation10 + $0x294] sm:$0xf]
    %v3861 = vld [vmem:[#allocation10 + $0x298] sm:$0xf]
    %v3862 = vld [vmem:[#allocation10 + $0x29c] sm:$0xf]
    %v3863 = vld [vmem:[#allocation10 + $0x2a0] sm:$0xf]
    %v3864 = vld [vmem:[#allocation10 + $0x2a4] sm:$0xf]
    %v3865 = vld [vmem:[#allocation10 + $0x2a8] sm:$0xf]
    %v3866 = vld [vmem:[#allocation10 + $0x2ac] sm:$0xf]
    %v3867 = vld [vmem:[#allocation10 + $0x2b0] sm:$0xf]
    %v3868 = vld [vmem:[#allocation10 + $0x2b4] sm:$0xf]
    %v3869 = vld [vmem:[#allocation10 + $0x2b8] sm:$0xf]
    %v3870 = vld [vmem:[#allocation10 + $0x2bc] sm:$0xf]
    %v3871 = vld [vmem:[#allocation10 + $0x2c0] sm:$0xf]
    %v3872 = vld [vmem:[#allocation10 + $0x2c4] sm:$0xf]
    %v3873 = vld [vmem:[#allocation10 + $0x2c8] sm:$0xf]
    %v3874 = vld [vmem:[#allocation10 + $0x2cc] sm:$0xf]
    %v3875 = vld [vmem:[#allocation10 + $0x2d0] sm:$0xf]
    %v3876 = vld [vmem:[#allocation10 + $0x2d4] sm:$0xf]
    %v3877 = vld [vmem:[#allocation10 + $0x2d8] sm:$0xf]
    %v3878 = vld [vmem:[#allocation10 + $0x2dc] sm:$0xf]
    %v3879 = vld [vmem:[#allocation10 + $0x2e0] sm:$0xf]
    %v3880 = vld [vmem:[#allocation10 + $0x2e4] sm:$0xf]
    %v3881 = vld [vmem:[#allocation10 + $0x2e8] sm:$0xf]
    %v3882 = vld [vmem:[#allocation10 + $0x2ec] sm:$0xf]
    %v3883 = vld [vmem:[#allocation10 + $0x2f0] sm:$0xf]
    %v3884 = vld [vmem:[#allocation10 + $0x2f4] sm:$0xf]
    %v3885 = vld [vmem:[#allocation10 + $0x2f8] sm:$0xf]
    %v3886 = vld [vmem:[#allocation10 + $0x2fc] sm:$0xf]
    %v3887 = vld [vmem:[#allocation10 + $0x300] sm:$0xf]
    %v3888 = vld [vmem:[#allocation10 + $0x304] sm:$0xf]
    %v3889 = vld [vmem:[#allocation10 + $0x308] sm:$0xf]
    %v3890 = vld [vmem:[#allocation10 + $0x30c] sm:$0xf]
    %v3891 = vld [vmem:[#allocation10 + $0x310] sm:$0xf]
    %v3892 = vld [vmem:[#allocation10 + $0x314] sm:$0xf]
    %v3893 = vld [vmem:[#allocation10 + $0x318] sm:$0xf]
    %v3894 = vld [vmem:[#allocation10 + $0x31c] sm:$0xf]
    %v3895 = vld [vmem:[#allocation10 + $0x320] sm:$0xf]
    %v3896 = vld [vmem:[#allocation10 + $0x324] sm:$0xf]
    %v3897 = vld [vmem:[#allocation10 + $0x328] sm:$0xf]
    %v3898 = vld [vmem:[#allocation10 + $0x32c] sm:$0xf]
    %v3899 = vld [vmem:[#allocation10 + $0x330] sm:$0xf]
    %v3900 = vld [vmem:[#allocation10 + $0x334] sm:$0xf]
    %v3901 = vld [vmem:[#allocation10 + $0x338] sm:$0xf]
    %v3902 = vld [vmem:[#allocation10 + $0x33c] sm:$0xf]
    %v3903 = vld [vmem:[#allocation10 + $0x340] sm:$0xf]
    %v3904 = vld [vmem:[#allocation10 + $0x344] sm:$0xf]
    %v3905 = vld [vmem:[#allocation10 + $0x348] sm:$0xf]
    %v3906 = vld [vmem:[#allocation10 + $0x34c] sm:$0xf]
    %v3907 = vld [vmem:[#allocation10 + $0x350] sm:$0xf]
    %v3908 = vld [vmem:[#allocation10 + $0x354] sm:$0xf]
    %v3909 = vld [vmem:[#allocation10 + $0x358] sm:$0xf]
    %v3910 = vld [vmem:[#allocation10 + $0x35c] sm:$0xf]
    %v3911 = vld [vmem:[#allocation10 + $0x360] sm:$0xf]
    %v3912 = vld [vmem:[#allocation10 + $0x364] sm:$0xf]
    %v3913 = vld [vmem:[#allocation10 + $0x368] sm:$0xf]
    %v3914 = vld [vmem:[#allocation10 + $0x36c] sm:$0xf]
    %v3915 = vld [vmem:[#allocation10 + $0x370] sm:$0xf]
    %v3916 = vld [vmem:[#allocation10 + $0x374] sm:$0xf]
    %v3917 = vld [vmem:[#allocation10 + $0x378] sm:$0xf]
    %v3918 = vld [vmem:[#allocation10 + $0x37c] sm:$0xf]
    %v3919 = vld [vmem:[#allocation10 + $0x380] sm:$0xf]
    %v3920 = vld [vmem:[#allocation10 + $0x384] sm:$0xf]
    %v3921 = vld [vmem:[#allocation10 + $0x388] sm:$0xf]
    %v3922 = vld [vmem:[#allocation10 + $0x38c] sm:$0xf]
    %v3923 = vld [vmem:[#allocation10 + $0x390] sm:$0xf]
    %v3924 = vld [vmem:[#allocation10 + $0x394] sm:$0xf]
    %v3925 = vld [vmem:[#allocation10 + $0x398] sm:$0xf]
    %v3926 = vld [vmem:[#allocation10 + $0x39c] sm:$0xf]
    %v3927 = vld [vmem:[#allocation10 + $0x3a0] sm:$0xf]
    %v3928 = vld [vmem:[#allocation10 + $0x3a4] sm:$0xf]
    %v3929 = vld [vmem:[#allocation10 + $0x3a8] sm:$0xf]
    %v3930 = vld [vmem:[#allocation10 + $0x3ac] sm:$0xf]
    %v3931 = vld [vmem:[#allocation10 + $0x3b0] sm:$0xf]
    %v3932 = vld [vmem:[#allocation10 + $0x3b4] sm:$0xf]
    %v3933 = vld [vmem:[#allocation10 + $0x3b8] sm:$0xf]
    %v3934 = vld [vmem:[#allocation10 + $0x3bc] sm:$0xf]
    %v3935 = vld [vmem:[#allocation10 + $0x3c0] sm:$0xf]
    %v3936 = vld [vmem:[#allocation10 + $0x3c4] sm:$0xf]
    %v3937 = vld [vmem:[#allocation10 + $0x3c8] sm:$0xf]
    %v3938 = vld [vmem:[#allocation10 + $0x3cc] sm:$0xf]
    %v3939 = vld [vmem:[#allocation10 + $0x3d0] sm:$0xf]
    %v3940 = vld [vmem:[#allocation10 + $0x3d4] sm:$0xf]
    %v3941 = vld [vmem:[#allocation10 + $0x3d8] sm:$0xf]
    %v3942 = vld [vmem:[#allocation10 + $0x3dc] sm:$0xf]
    %v3943 = vld [vmem:[#allocation10 + $0x3e0] sm:$0xf]
    %v3944 = vld [vmem:[#allocation10 + $0x3e4] sm:$0xf]
    %v3945 = vld [vmem:[#allocation10 + $0x3e8] sm:$0xf]
    %v3946 = vld [vmem:[#allocation10 + $0x3ec] sm:$0xf]
    %v3947 = vld [vmem:[#allocation10 + $0x3f0] sm:$0xf]
    %v3948 = vld [vmem:[#allocation10 + $0x3f4] sm:$0xf]
    %v3949 = vld [vmem:[#allocation10 + $0x3f8] sm:$0xf]
    %v3950 = vld [vmem:[#allocation10 + $0x3fc] sm:$0xf]
    %v3951 = vld [vmem:[%s10] sm:$0x1]
    %v3953 = vlaneseq
    %v3954 = vshrl.u32 %v3953, 7
    %v3955 = vsub.s32 0, %v3954
    %v3956 = vrot.slane %v3951, %v3955
    %v4214 = vunpack.c.l.b16 %v3695
    %v4215 = vunpack.c.l.b16 %v3696
    %v4216 = vunpack.c.l.b16 %v3697
    %v4217 = vunpack.c.l.b16 %v3698
    %v4218 = vunpack.c.l.b16 %v3699
    %v4219 = vunpack.c.l.b16 %v3700
    %v4220 = vunpack.c.l.b16 %v3701
    %v4221 = vunpack.c.l.b16 %v3702
    %v4222 = vunpack.c.l.b16 %v3703
    %v4223 = vunpack.c.l.b16 %v3704
    %v4224 = vunpack.c.l.b16 %v3705
    %v4225 = vunpack.c.l.b16 %v3706
    %v4226 = vunpack.c.l.b16 %v3707
    %v4227 = vunpack.c.l.b16 %v3708
    %v4228 = vunpack.c.l.b16 %v3709
    %v4229 = vunpack.c.l.b16 %v3710
    %v4230 = vunpack.c.l.b16 %v3711
    %v4231 = vunpack.c.l.b16 %v3712
    %v4232 = vunpack.c.l.b16 %v3713
    %v4233 = vunpack.c.l.b16 %v3714
    %v4234 = vunpack.c.l.b16 %v3715
    %v4235 = vunpack.c.l.b16 %v3716
    %v4236 = vunpack.c.l.b16 %v3717
    %v4237 = vunpack.c.l.b16 %v3718
    %v4238 = vunpack.c.l.b16 %v3719
    %v4239 = vunpack.c.l.b16 %v3720
    %v4240 = vunpack.c.l.b16 %v3721
    %v4241 = vunpack.c.l.b16 %v3722
    %v4242 = vunpack.c.l.b16 %v3723
    %v4243 = vunpack.c.l.b16 %v3724
    %v4244 = vunpack.c.l.b16 %v3725
    %v4245 = vunpack.c.l.b16 %v3726
    %v4246 = vunpack.c.l.b16 %v3727
    %v4247 = vunpack.c.l.b16 %v3728
    %v4248 = vunpack.c.l.b16 %v3729
    %v4249 = vunpack.c.l.b16 %v3730
    %v4250 = vunpack.c.l.b16 %v3731
    %v4251 = vunpack.c.l.b16 %v3732
    %v4252 = vunpack.c.l.b16 %v3733
    %v4253 = vunpack.c.l.b16 %v3734
    %v4254 = vunpack.c.l.b16 %v3735
    %v4255 = vunpack.c.l.b16 %v3736
    %v4256 = vunpack.c.l.b16 %v3737
    %v4257 = vunpack.c.l.b16 %v3738
    %v4258 = vunpack.c.l.b16 %v3739
    %v4259 = vunpack.c.l.b16 %v3740
    %v4260 = vunpack.c.l.b16 %v3741
    %v4261 = vunpack.c.l.b16 %v3742
    %v4262 = vunpack.c.l.b16 %v3743
    %v4263 = vunpack.c.l.b16 %v3744
    %v4264 = vunpack.c.l.b16 %v3745
    %v4265 = vunpack.c.l.b16 %v3746
    %v4266 = vunpack.c.l.b16 %v3747
    %v4267 = vunpack.c.l.b16 %v3748
    %v4268 = vunpack.c.l.b16 %v3749
    %v4269 = vunpack.c.l.b16 %v3750
    %v4270 = vunpack.c.l.b16 %v3751
    %v4271 = vunpack.c.l.b16 %v3752
    %v4272 = vunpack.c.l.b16 %v3753
    %v4273 = vunpack.c.l.b16 %v3754
    %v4274 = vunpack.c.l.b16 %v3755
    %v4275 = vunpack.c.l.b16 %v3756
    %v4276 = vunpack.c.l.b16 %v3757
    %v4277 = vunpack.c.l.b16 %v3758
    %v4278 = vunpack.c.l.b16 %v3759
    %v4279 = vunpack.c.l.b16 %v3760
    %v4280 = vunpack.c.l.b16 %v3761
    %v4281 = vunpack.c.l.b16 %v3762
    %v4282 = vunpack.c.l.b16 %v3763
    %v4283 = vunpack.c.l.b16 %v3764
    %v4284 = vunpack.c.l.b16 %v3765
    %v4285 = vunpack.c.l.b16 %v3766
    %v4286 = vunpack.c.l.b16 %v3767
    %v4287 = vunpack.c.l.b16 %v3768
    %v4288 = vunpack.c.l.b16 %v3769
    %v4289 = vunpack.c.l.b16 %v3770
    %v4290 = vunpack.c.l.b16 %v3771
    %v4291 = vunpack.c.l.b16 %v3772
    %v4292 = vunpack.c.l.b16 %v3773
    %v4293 = vunpack.c.l.b16 %v3774
    %v4294 = vunpack.c.l.b16 %v3775
    %v4295 = vunpack.c.l.b16 %v3776
    %v4296 = vunpack.c.l.b16 %v3777
    %v4297 = vunpack.c.l.b16 %v3778
    %v4298 = vunpack.c.l.b16 %v3779
    %v4299 = vunpack.c.l.b16 %v3780
    %v4300 = vunpack.c.l.b16 %v3781
    %v4301 = vunpack.c.l.b16 %v3782
    %v4302 = vunpack.c.l.b16 %v3783
    %v4303 = vunpack.c.l.b16 %v3784
    %v4304 = vunpack.c.l.b16 %v3785
    %v4305 = vunpack.c.l.b16 %v3786
    %v4306 = vunpack.c.l.b16 %v3787
    %v4307 = vunpack.c.l.b16 %v3788
    %v4308 = vunpack.c.l.b16 %v3789
    %v4309 = vunpack.c.l.b16 %v3790
    %v4310 = vunpack.c.l.b16 %v3791
    %v4311 = vunpack.c.l.b16 %v3792
    %v4312 = vunpack.c.l.b16 %v3793
    %v4313 = vunpack.c.l.b16 %v3794
    %v4314 = vunpack.c.l.b16 %v3795
    %v4315 = vunpack.c.l.b16 %v3796
    %v4316 = vunpack.c.l.b16 %v3797
    %v4317 = vunpack.c.l.b16 %v3798
    %v4318 = vunpack.c.l.b16 %v3799
    %v4319 = vunpack.c.l.b16 %v3800
    %v4320 = vunpack.c.l.b16 %v3801
    %v4321 = vunpack.c.l.b16 %v3802
    %v4322 = vunpack.c.l.b16 %v3803
    %v4323 = vunpack.c.l.b16 %v3804
    %v4324 = vunpack.c.l.b16 %v3805
    %v4325 = vunpack.c.l.b16 %v3806
    %v4326 = vunpack.c.l.b16 %v3807
    %v4327 = vunpack.c.l.b16 %v3808
    %v4328 = vunpack.c.l.b16 %v3809
    %v4329 = vunpack.c.l.b16 %v3810
    %v4330 = vunpack.c.l.b16 %v3811
    %v4331 = vunpack.c.l.b16 %v3812
    %v4332 = vunpack.c.l.b16 %v3813
    %v4333 = vunpack.c.l.b16 %v3814
    %v4334 = vunpack.c.l.b16 %v3815
    %v4335 = vunpack.c.l.b16 %v3816
    %v4336 = vunpack.c.l.b16 %v3817
    %v4337 = vunpack.c.l.b16 %v3818
    %v4338 = vunpack.c.l.b16 %v3819
    %v4339 = vunpack.c.l.b16 %v3820
    %v4340 = vunpack.c.l.b16 %v3821
    %v4341 = vunpack.c.l.b16 %v3822
    %v4342 = vunpack.c.l.b16 %v3823
    %v4343 = vunpack.c.l.b16 %v3824
    %v4344 = vunpack.c.l.b16 %v3825
    %v4345 = vunpack.c.l.b16 %v3826
    %v4346 = vunpack.c.l.b16 %v3827
    %v4347 = vunpack.c.l.b16 %v3828
    %v4348 = vunpack.c.l.b16 %v3829
    %v4349 = vunpack.c.l.b16 %v3830
    %v4350 = vunpack.c.l.b16 %v3831
    %v4351 = vunpack.c.l.b16 %v3832
    %v4352 = vunpack.c.l.b16 %v3833
    %v4353 = vunpack.c.l.b16 %v3834
    %v4354 = vunpack.c.l.b16 %v3835
    %v4355 = vunpack.c.l.b16 %v3836
    %v4356 = vunpack.c.l.b16 %v3837
    %v4357 = vunpack.c.l.b16 %v3838
    %v4358 = vunpack.c.l.b16 %v3839
    %v4359 = vunpack.c.l.b16 %v3840
    %v4360 = vunpack.c.l.b16 %v3841
    %v4361 = vunpack.c.l.b16 %v3842
    %v4362 = vunpack.c.l.b16 %v3843
    %v4363 = vunpack.c.l.b16 %v3844
    %v4364 = vunpack.c.l.b16 %v3845
    %v4365 = vunpack.c.l.b16 %v3846
    %v4366 = vunpack.c.l.b16 %v3847
    %v4367 = vunpack.c.l.b16 %v3848
    %v4368 = vunpack.c.l.b16 %v3849
    %v4369 = vunpack.c.l.b16 %v3850
    %v4370 = vunpack.c.l.b16 %v3851
    %v4371 = vunpack.c.l.b16 %v3852
    %v4372 = vunpack.c.l.b16 %v3853
    %v4373 = vunpack.c.l.b16 %v3854
    %v4374 = vunpack.c.l.b16 %v3855
    %v4375 = vunpack.c.l.b16 %v3856
    %v4376 = vunpack.c.l.b16 %v3857
    %v4377 = vunpack.c.l.b16 %v3858
    %v4378 = vunpack.c.l.b16 %v3859
    %v4379 = vunpack.c.l.b16 %v3860
    %v4380 = vunpack.c.l.b16 %v3861
    %v4381 = vunpack.c.l.b16 %v3862
    %v4382 = vunpack.c.l.b16 %v3863
    %v4383 = vunpack.c.l.b16 %v3864
    %v4384 = vunpack.c.l.b16 %v3865
    %v4385 = vunpack.c.l.b16 %v3866
    %v4386 = vunpack.c.l.b16 %v3867
    %v4387 = vunpack.c.l.b16 %v3868
    %v4388 = vunpack.c.l.b16 %v3869
    %v4389 = vunpack.c.l.b16 %v3870
    %v4390 = vunpack.c.l.b16 %v3871
    %v4391 = vunpack.c.l.b16 %v3872
    %v4392 = vunpack.c.l.b16 %v3873
    %v4393 = vunpack.c.l.b16 %v3874
    %v4394 = vunpack.c.l.b16 %v3875
    %v4395 = vunpack.c.l.b16 %v3876
    %v4396 = vunpack.c.l.b16 %v3877
    %v4397 = vunpack.c.l.b16 %v3878
    %v4398 = vunpack.c.l.b16 %v3879
    %v4399 = vunpack.c.l.b16 %v3880
    %v4400 = vunpack.c.l.b16 %v3881
    %v4401 = vunpack.c.l.b16 %v3882
    %v4402 = vunpack.c.l.b16 %v3883
    %v4403 = vunpack.c.l.b16 %v3884
    %v4404 = vunpack.c.l.b16 %v3885
    %v4405 = vunpack.c.l.b16 %v3886
    %v4406 = vunpack.c.l.b16 %v3887
    %v4407 = vunpack.c.l.b16 %v3888
    %v4408 = vunpack.c.l.b16 %v3889
    %v4409 = vunpack.c.l.b16 %v3890
    %v4410 = vunpack.c.l.b16 %v3891
    %v4411 = vunpack.c.l.b16 %v3892
    %v4412 = vunpack.c.l.b16 %v3893
    %v4413 = vunpack.c.l.b16 %v3894
    %v4414 = vunpack.c.l.b16 %v3895
    %v4415 = vunpack.c.l.b16 %v3896
    %v4416 = vunpack.c.l.b16 %v3897
    %v4417 = vunpack.c.l.b16 %v3898
    %v4418 = vunpack.c.l.b16 %v3899
    %v4419 = vunpack.c.l.b16 %v3900
    %v4420 = vunpack.c.l.b16 %v3901
    %v4421 = vunpack.c.l.b16 %v3902
    %v4422 = vunpack.c.l.b16 %v3903
    %v4423 = vunpack.c.l.b16 %v3904
    %v4424 = vunpack.c.l.b16 %v3905
    %v4425 = vunpack.c.l.b16 %v3906
    %v4426 = vunpack.c.l.b16 %v3907
    %v4427 = vunpack.c.l.b16 %v3908
    %v4428 = vunpack.c.l.b16 %v3909
    %v4429 = vunpack.c.l.b16 %v3910
    %v4430 = vunpack.c.l.b16 %v3911
    %v4431 = vunpack.c.l.b16 %v3912
    %v4432 = vunpack.c.l.b16 %v3913
    %v4433 = vunpack.c.l.b16 %v3914
    %v4434 = vunpack.c.l.b16 %v3915
    %v4435 = vunpack.c.l.b16 %v3916
    %v4436 = vunpack.c.l.b16 %v3917
    %v4437 = vunpack.c.l.b16 %v3918
    %v4438 = vunpack.c.l.b16 %v3919
    %v4439 = vunpack.c.l.b16 %v3920
    %v4440 = vunpack.c.l.b16 %v3921
    %v4441 = vunpack.c.l.b16 %v3922
    %v4442 = vunpack.c.l.b16 %v3923
    %v4443 = vunpack.c.l.b16 %v3924
    %v4444 = vunpack.c.l.b16 %v3925
    %v4445 = vunpack.c.l.b16 %v3926
    %v4446 = vunpack.c.l.b16 %v3927
    %v4447 = vunpack.c.l.b16 %v3928
    %v4448 = vunpack.c.l.b16 %v3929
    %v4449 = vunpack.c.l.b16 %v3930
    %v4450 = vunpack.c.l.b16 %v3931
    %v4451 = vunpack.c.l.b16 %v3932
    %v4452 = vunpack.c.l.b16 %v3933
    %v4453 = vunpack.c.l.b16 %v3934
    %v4454 = vunpack.c.l.b16 %v3935
    %v4455 = vunpack.c.l.b16 %v3936
    %v4456 = vunpack.c.l.b16 %v3937
    %v4457 = vunpack.c.l.b16 %v3938
    %v4458 = vunpack.c.l.b16 %v3939
    %v4459 = vunpack.c.l.b16 %v3940
    %v4460 = vunpack.c.l.b16 %v3941
    %v4461 = vunpack.c.l.b16 %v3942
    %v4462 = vunpack.c.l.b16 %v3943
    %v4463 = vunpack.c.l.b16 %v3944
    %v4464 = vunpack.c.l.b16 %v3945
    %v4465 = vunpack.c.l.b16 %v3946
    %v4466 = vunpack.c.l.b16 %v3947
    %v4467 = vunpack.c.l.b16 %v3948
    %v4468 = vunpack.c.l.b16 %v3949
    %v4469 = vunpack.c.l.b16 %v3950
    %v4470 = vpack.c.b16 %v4215, %v4214
    %v4471 = vpack.c.b16 %v4217, %v4216
    %v4472 = vpack.c.b16 %v4219, %v4218
    %v4473 = vpack.c.b16 %v4221, %v4220
    %v4474 = vpack.c.b16 %v4223, %v4222
    %v4475 = vpack.c.b16 %v4225, %v4224
    %v4476 = vpack.c.b16 %v4227, %v4226
    %v4477 = vpack.c.b16 %v4229, %v4228
    %v4478 = vpack.c.b16 %v4231, %v4230
    %v4479 = vpack.c.b16 %v4233, %v4232
    %v4480 = vpack.c.b16 %v4235, %v4234
    %v4481 = vpack.c.b16 %v4237, %v4236
    %v4482 = vpack.c.b16 %v4239, %v4238
    %v4483 = vpack.c.b16 %v4241, %v4240
    %v4484 = vpack.c.b16 %v4243, %v4242
    %v4485 = vpack.c.b16 %v4245, %v4244
    %v4486 = vpack.c.b16 %v4247, %v4246
    %v4487 = vpack.c.b16 %v4249, %v4248
    %v4488 = vpack.c.b16 %v4251, %v4250
    %v4489 = vpack.c.b16 %v4253, %v4252
    %v4490 = vpack.c.b16 %v4255, %v4254
    %v4491 = vpack.c.b16 %v4257, %v4256
    %v4492 = vpack.c.b16 %v4259, %v4258
    %v4493 = vpack.c.b16 %v4261, %v4260
    %v4494 = vpack.c.b16 %v4263, %v4262
    %v4495 = vpack.c.b16 %v4265, %v4264
    %v4496 = vpack.c.b16 %v4267, %v4266
    %v4497 = vpack.c.b16 %v4269, %v4268
    %v4498 = vpack.c.b16 %v4271, %v4270
    %v4499 = vpack.c.b16 %v4273, %v4272
    %v4500 = vpack.c.b16 %v4275, %v4274
    %v4501 = vpack.c.b16 %v4277, %v4276
    %v4502 = vpack.c.b16 %v4279, %v4278
    %v4503 = vpack.c.b16 %v4281, %v4280
    %v4504 = vpack.c.b16 %v4283, %v4282
    %v4505 = vpack.c.b16 %v4285, %v4284
    %v4506 = vpack.c.b16 %v4287, %v4286
    %v4507 = vpack.c.b16 %v4289, %v4288
    %v4508 = vpack.c.b16 %v4291, %v4290
    %v4509 = vpack.c.b16 %v4293, %v4292
    %v4510 = vpack.c.b16 %v4295, %v4294
    %v4511 = vpack.c.b16 %v4297, %v4296
    %v4512 = vpack.c.b16 %v4299, %v4298
    %v4513 = vpack.c.b16 %v4301, %v4300
    %v4514 = vpack.c.b16 %v4303, %v4302
    %v4515 = vpack.c.b16 %v4305, %v4304
    %v4516 = vpack.c.b16 %v4307, %v4306
    %v4517 = vpack.c.b16 %v4309, %v4308
    %v4518 = vpack.c.b16 %v4311, %v4310
    %v4519 = vpack.c.b16 %v4313, %v4312
    %v4520 = vpack.c.b16 %v4315, %v4314
    %v4521 = vpack.c.b16 %v4317, %v4316
    %v4522 = vpack.c.b16 %v4319, %v4318
    %v4523 = vpack.c.b16 %v4321, %v4320
    %v4524 = vpack.c.b16 %v4323, %v4322
    %v4525 = vpack.c.b16 %v4325, %v4324
    %v4526 = vpack.c.b16 %v4327, %v4326
    %v4527 = vpack.c.b16 %v4329, %v4328
    %v4528 = vpack.c.b16 %v4331, %v4330
    %v4529 = vpack.c.b16 %v4333, %v4332
    %v4530 = vpack.c.b16 %v4335, %v4334
    %v4531 = vpack.c.b16 %v4337, %v4336
    %v4532 = vpack.c.b16 %v4339, %v4338
    %v4533 = vpack.c.b16 %v4341, %v4340
    %v4534 = vpack.c.b16 %v4343, %v4342
    %v4535 = vpack.c.b16 %v4345, %v4344
    %v4536 = vpack.c.b16 %v4347, %v4346
    %v4537 = vpack.c.b16 %v4349, %v4348
    %v4538 = vpack.c.b16 %v4351, %v4350
    %v4539 = vpack.c.b16 %v4353, %v4352
    %v4540 = vpack.c.b16 %v4355, %v4354
    %v4541 = vpack.c.b16 %v4357, %v4356
    %v4542 = vpack.c.b16 %v4359, %v4358
    %v4543 = vpack.c.b16 %v4361, %v4360
    %v4544 = vpack.c.b16 %v4363, %v4362
    %v4545 = vpack.c.b16 %v4365, %v4364
    %v4546 = vpack.c.b16 %v4367, %v4366
    %v4547 = vpack.c.b16 %v4369, %v4368
    %v4548 = vpack.c.b16 %v4371, %v4370
    %v4549 = vpack.c.b16 %v4373, %v4372
    %v4550 = vpack.c.b16 %v4375, %v4374
    %v4551 = vpack.c.b16 %v4377, %v4376
    %v4552 = vpack.c.b16 %v4379, %v4378
    %v4553 = vpack.c.b16 %v4381, %v4380
    %v4554 = vpack.c.b16 %v4383, %v4382
    %v4555 = vpack.c.b16 %v4385, %v4384
    %v4556 = vpack.c.b16 %v4387, %v4386
    %v4557 = vpack.c.b16 %v4389, %v4388
    %v4558 = vpack.c.b16 %v4391, %v4390
    %v4559 = vpack.c.b16 %v4393, %v4392
    %v4560 = vpack.c.b16 %v4395, %v4394
    %v4561 = vpack.c.b16 %v4397, %v4396
    %v4562 = vpack.c.b16 %v4399, %v4398
    %v4563 = vpack.c.b16 %v4401, %v4400
    %v4564 = vpack.c.b16 %v4403, %v4402
    %v4565 = vpack.c.b16 %v4405, %v4404
    %v4566 = vpack.c.b16 %v4407, %v4406
    %v4567 = vpack.c.b16 %v4409, %v4408
    %v4568 = vpack.c.b16 %v4411, %v4410
    %v4569 = vpack.c.b16 %v4413, %v4412
    %v4570 = vpack.c.b16 %v4415, %v4414
    %v4571 = vpack.c.b16 %v4417, %v4416
    %v4572 = vpack.c.b16 %v4419, %v4418
    %v4573 = vpack.c.b16 %v4421, %v4420
    %v4574 = vpack.c.b16 %v4423, %v4422
    %v4575 = vpack.c.b16 %v4425, %v4424
    %v4576 = vpack.c.b16 %v4427, %v4426
    %v4577 = vpack.c.b16 %v4429, %v4428
    %v4578 = vpack.c.b16 %v4431, %v4430
    %v4579 = vpack.c.b16 %v4433, %v4432
    %v4580 = vpack.c.b16 %v4435, %v4434
    %v4581 = vpack.c.b16 %v4437, %v4436
    %v4582 = vpack.c.b16 %v4439, %v4438
    %v4583 = vpack.c.b16 %v4441, %v4440
    %v4584 = vpack.c.b16 %v4443, %v4442
    %v4585 = vpack.c.b16 %v4445, %v4444
    %v4586 = vpack.c.b16 %v4447, %v4446
    %v4587 = vpack.c.b16 %v4449, %v4448
    %v4588 = vpack.c.b16 %v4451, %v4450
    %v4589 = vpack.c.b16 %v4453, %v4452
    %v4590 = vpack.c.b16 %v4455, %v4454
    %v4591 = vpack.c.b16 %v4457, %v4456
    %v4592 = vpack.c.b16 %v4459, %v4458
    %v4593 = vpack.c.b16 %v4461, %v4460
    %v4594 = vpack.c.b16 %v4463, %v4462
    %v4595 = vpack.c.b16 %v4465, %v4464
    %v4596 = vpack.c.b16 %v4467, %v4466
    %v4597 = vpack.c.b16 %v4469, %v4468
    %4726 = vmatprep.subr.bf16.mxu0 0
    %4727 = vmatpush1.bf16.msra.mxu0 %v4470
    %4728 = vmatprep.subr.bf16.mxu0 0
    %4729 = vmatpush1.bf16.msra.mxu0 %v4471
    %4730 = vmatprep.subr.bf16.mxu0 0
    %4731 = vmatpush1.bf16.msra.mxu0 %v4472
    %4732 = vmatprep.subr.bf16.mxu0 0
    %4733 = vmatpush1.bf16.msra.mxu0 %v4473
    %4734 = vmatprep.subr.bf16.mxu0 0
    %4735 = vmatpush1.bf16.msra.mxu0 %v4474
    %4736 = vmatprep.subr.bf16.mxu0 0
    %4737 = vmatpush1.bf16.msra.mxu0 %v4475
    %4738 = vmatprep.subr.bf16.mxu0 0
    %4739 = vmatpush1.bf16.msra.mxu0 %v4476
    %4740 = vmatprep.subr.bf16.mxu0 0
    %4741 = vmatpush1.bf16.msra.mxu0 %v4477
    %4742 = vmatprep.subr.bf16.mxu0 0
    %4743 = vmatpush1.bf16.msra.mxu0 %v4478
    %4744 = vmatprep.subr.bf16.mxu0 0
    %4745 = vmatpush1.bf16.msra.mxu0 %v4479
    %4746 = vmatprep.subr.bf16.mxu0 0
    %4747 = vmatpush1.bf16.msra.mxu0 %v4480
    %4748 = vmatprep.subr.bf16.mxu0 0
    %4749 = vmatpush1.bf16.msra.mxu0 %v4481
    %4750 = vmatprep.subr.bf16.mxu0 0
    %4751 = vmatpush1.bf16.msra.mxu0 %v4482
    %4752 = vmatprep.subr.bf16.mxu0 0
    %4753 = vmatpush1.bf16.msra.mxu0 %v4483
    %4754 = vmatprep.subr.bf16.mxu0 0
    %4755 = vmatpush1.bf16.msra.mxu0 %v4484
    %4756 = vmatprep.subr.bf16.mxu0 0
    %4757 = vmatpush1.bf16.msra.mxu0 %v4485
    %4758 = vmatprep.mubr.bf16.mxu0 %v3680
    %4759 = vmatmul.mubr.bf16.gmra.mrb[0].mxu0 %v3679
    %v4760 = vpop.f32.mrb[0].mxu0
    %v4761 = vadd.f32 %v3956, %v4760
    %v4762 = vpop.f32.mrb[0].mxu0
    %v4763 = vpop.f32.mrb[0].mxu0
    %v4764 = vadd.f32 %v3956, %v4763
    %v4765 = vpop.f32.mrb[0].mxu0
    %4766 = vdwg.mxu0
    %4767 = vmatprep.subr.bf16.mxu0 0
    %4768 = vmatpush1.bf16.msra.mxu0 %v4486
    %4769 = vmatprep.subr.bf16.mxu0 0
    %4770 = vmatpush1.bf16.msra.mxu0 %v4487
    %4771 = vmatprep.subr.bf16.mxu0 0
    %4772 = vmatpush1.bf16.msra.mxu0 %v4488
    %4773 = vmatprep.subr.bf16.mxu0 0
    %4774 = vmatpush1.bf16.msra.mxu0 %v4489
    %4775 = vmatprep.subr.bf16.mxu0 0
    %4776 = vmatpush1.bf16.msra.mxu0 %v4490
    %4777 = vmatprep.subr.bf16.mxu0 0
    %4778 = vmatpush1.bf16.msra.mxu0 %v4491
    %4779 = vmatprep.subr.bf16.mxu0 0
    %4780 = vmatpush1.bf16.msra.mxu0 %v4492
    %4781 = vmatprep.subr.bf16.mxu0 0
    %4782 = vmatpush1.bf16.msra.mxu0 %v4493
    %4783 = vmatprep.subr.bf16.mxu0 0
    %4784 = vmatpush1.bf16.msra.mxu0 %v4494
    %4785 = vmatprep.subr.bf16.mxu0 0
    %4786 = vmatpush1.bf16.msra.mxu0 %v4495
    %4787 = vmatprep.subr.bf16.mxu0 0
    %4788 = vmatpush1.bf16.msra.mxu0 %v4496
    %4789 = vmatprep.subr.bf16.mxu0 0
    %4790 = vmatpush1.bf16.msra.mxu0 %v4497
    %4791 = vmatprep.subr.bf16.mxu0 0
    %4792 = vmatpush1.bf16.msra.mxu0 %v4498
    %4793 = vmatprep.subr.bf16.mxu0 0
    %4794 = vmatpush1.bf16.msra.mxu0 %v4499
    %4795 = vmatprep.subr.bf16.mxu0 0
    %4796 = vmatpush1.bf16.msra.mxu0 %v4500
    %4797 = vmatprep.subr.bf16.mxu0 0
    %4798 = vmatpush1.bf16.msra.mxu0 %v4501
    %4799 = vmatprep.mubr.bf16.mxu0 %v3682
    %4800 = vmatmul.mubr.bf16.gmra.mrb[0].mxu0 %v3681
    %v4801 = vpop.f32.mrb[0].mxu0
    %v4802 = vadd.f32 %v4761, %v4801
    %v4803 = vpop.f32.mrb[0].mxu0
    %v4804 = vpop.f32.mrb[0].mxu0
    %v4805 = vadd.f32 %v4764, %v4804
    %v4806 = vpop.f32.mrb[0].mxu0
    %4807 = vdwg.mxu0
    %4808 = vmatprep.subr.bf16.mxu0 0
    %4809 = vmatpush1.bf16.msra.mxu0 %v4502
    %4810 = vmatprep.subr.bf16.mxu0 0
    %4811 = vmatpush1.bf16.msra.mxu0 %v4503
    %4812 = vmatprep.subr.bf16.mxu0 0
    %4813 = vmatpush1.bf16.msra.mxu0 %v4504
    %4814 = vmatprep.subr.bf16.mxu0 0
    %4815 = vmatpush1.bf16.msra.mxu0 %v4505
    %4816 = vmatprep.subr.bf16.mxu0 0
    %4817 = vmatpush1.bf16.msra.mxu0 %v4506
    %4818 = vmatprep.subr.bf16.mxu0 0
    %4819 = vmatpush1.bf16.msra.mxu0 %v4507
    %4820 = vmatprep.subr.bf16.mxu0 0
    %4821 = vmatpush1.bf16.msra.mxu0 %v4508
    %4822 = vmatprep.subr.bf16.mxu0 0
    %4823 = vmatpush1.bf16.msra.mxu0 %v4509
    %4824 = vmatprep.subr.bf16.mxu0 0
    %4825 = vmatpush1.bf16.msra.mxu0 %v4510
    %4826 = vmatprep.subr.bf16.mxu0 0
    %4827 = vmatpush1.bf16.msra.mxu0 %v4511
    %4828 = vmatprep.subr.bf16.mxu0 0
    %4829 = vmatpush1.bf16.msra.mxu0 %v4512
    %4830 = vmatprep.subr.bf16.mxu0 0
    %4831 = vmatpush1.bf16.msra.mxu0 %v4513
    %4832 = vmatprep.subr.bf16.mxu0 0
    %4833 = vmatpush1.bf16.msra.mxu0 %v4514
    %4834 = vmatprep.subr.bf16.mxu0 0
    %4835 = vmatpush1.bf16.msra.mxu0 %v4515
    %4836 = vmatprep.subr.bf16.mxu0 0
    %4837 = vmatpush1.bf16.msra.mxu0 %v4516
    %4838 = vmatprep.subr.bf16.mxu0 0
    %4839 = vmatpush1.bf16.msra.mxu0 %v4517
    %4840 = vmatprep.mubr.bf16.mxu0 %v3684
    %4841 = vmatmul.mubr.bf16.gmra.mrb[0].mxu0 %v3683
    %v4842 = vpop.f32.mrb[0].mxu0
    %v4843 = vadd.f32 %v4802, %v4842
    %v4844 = vpop.f32.mrb[0].mxu0
    %v4845 = vpop.f32.mrb[0].mxu0
    %v4846 = vadd.f32 %v4805, %v4845
    %v4847 = vpop.f32.mrb[0].mxu0
    %4848 = vdwg.mxu0
    %4849 = vmatprep.subr.bf16.mxu0 0
    %4850 = vmatpush1.bf16.msra.mxu0 %v4518
    %4851 = vmatprep.subr.bf16.mxu0 0
    %4852 = vmatpush1.bf16.msra.mxu0 %v4519
    %4853 = vmatprep.subr.bf16.mxu0 0
    %4854 = vmatpush1.bf16.msra.mxu0 %v4520
    %4855 = vmatprep.subr.bf16.mxu0 0
    %4856 = vmatpush1.bf16.msra.mxu0 %v4521
    %4857 = vmatprep.subr.bf16.mxu0 0
    %4858 = vmatpush1.bf16.msra.mxu0 %v4522
    %4859 = vmatprep.subr.bf16.mxu0 0
    %4860 = vmatpush1.bf16.msra.mxu0 %v4523
    %4861 = vmatprep.subr.bf16.mxu0 0
    %4862 = vmatpush1.bf16.msra.mxu0 %v4524
    %4863 = vmatprep.subr.bf16.mxu0 0
    %4864 = vmatpush1.bf16.msra.mxu0 %v4525
    %4865 = vmatprep.subr.bf16.mxu0 0
    %4866 = vmatpush1.bf16.msra.mxu0 %v4526
    %4867 = vmatprep.subr.bf16.mxu0 0
    %4868 = vmatpush1.bf16.msra.mxu0 %v4527
    %4869 = vmatprep.subr.bf16.mxu0 0
    %4870 = vmatpush1.bf16.msra.mxu0 %v4528
    %4871 = vmatprep.subr.bf16.mxu0 0
    %4872 = vmatpush1.bf16.msra.mxu0 %v4529
    %4873 = vmatprep.subr.bf16.mxu0 0
    %4874 = vmatpush1.bf16.msra.mxu0 %v4530
    %4875 = vmatprep.subr.bf16.mxu0 0
    %4876 = vmatpush1.bf16.msra.mxu0 %v4531
    %4877 = vmatprep.subr.bf16.mxu0 0
    %4878 = vmatpush1.bf16.msra.mxu0 %v4532
    %4879 = vmatprep.subr.bf16.mxu0 0
    %4880 = vmatpush1.bf16.msra.mxu0 %v4533
    %4881 = vmatprep.mubr.bf16.mxu0 %v3686
    %4882 = vmatmul.mubr.bf16.gmra.mrb[0].mxu0 %v3685
    %v4883 = vpop.f32.mrb[0].mxu0
    %v4884 = vadd.f32 %v4843, %v4883
    %v4885 = vpop.f32.mrb[0].mxu0
    %v4886 = vpop.f32.mrb[0].mxu0
    %v4887 = vadd.f32 %v4846, %v4886
    %v4888 = vpop.f32.mrb[0].mxu0
    %4889 = vdwg.mxu0
    %4890 = vmatprep.subr.bf16.mxu0 0
    %4891 = vmatpush1.bf16.msra.mxu0 %v4534
    %4892 = vmatprep.subr.bf16.mxu0 0
    %4893 = vmatpush1.bf16.msra.mxu0 %v4535
    %4894 = vmatprep.subr.bf16.mxu0 0
    %4895 = vmatpush1.bf16.msra.mxu0 %v4536
    %4896 = vmatprep.subr.bf16.mxu0 0
    %4897 = vmatpush1.bf16.msra.mxu0 %v4537
    %4898 = vmatprep.subr.bf16.mxu0 0
    %4899 = vmatpush1.bf16.msra.mxu0 %v4538
    %4900 = vmatprep.subr.bf16.mxu0 0
    %4901 = vmatpush1.bf16.msra.mxu0 %v4539
    %4902 = vmatprep.subr.bf16.mxu0 0
    %4903 = vmatpush1.bf16.msra.mxu0 %v4540
    %4904 = vmatprep.subr.bf16.mxu0 0
    %4905 = vmatpush1.bf16.msra.mxu0 %v4541
    %4906 = vmatprep.subr.bf16.mxu0 0
    %4907 = vmatpush1.bf16.msra.mxu0 %v4542
    %4908 = vmatprep.subr.bf16.mxu0 0
    %4909 = vmatpush1.bf16.msra.mxu0 %v4543
    %4910 = vmatprep.subr.bf16.mxu0 0
    %4911 = vmatpush1.bf16.msra.mxu0 %v4544
    %4912 = vmatprep.subr.bf16.mxu0 0
    %4913 = vmatpush1.bf16.msra.mxu0 %v4545
    %4914 = vmatprep.subr.bf16.mxu0 0
    %4915 = vmatpush1.bf16.msra.mxu0 %v4546
    %4916 = vmatprep.subr.bf16.mxu0 0
    %4917 = vmatpush1.bf16.msra.mxu0 %v4547
    %4918 = vmatprep.subr.bf16.mxu0 0
    %4919 = vmatpush1.bf16.msra.mxu0 %v4548
    %4920 = vmatprep.subr.bf16.mxu0 0
    %4921 = vmatpush1.bf16.msra.mxu0 %v4549
    %4922 = vmatprep.mubr.bf16.mxu0 %v3688
    %4923 = vmatmul.mubr.bf16.gmra.mrb[0].mxu0 %v3687
    %v4924 = vpop.f32.mrb[0].mxu0
    %v4925 = vadd.f32 %v4884, %v4924
    %v4926 = vpop.f32.mrb[0].mxu0
    %v4927 = vpop.f32.mrb[0].mxu0
    %v4928 = vadd.f32 %v4887, %v4927
    %v4929 = vpop.f32.mrb[0].mxu0
    %4930 = vdwg.mxu0
    %4931 = vmatprep.subr.bf16.mxu0 0
    %4932 = vmatpush1.bf16.msra.mxu0 %v4550
    %4933 = vmatprep.subr.bf16.mxu0 0
    %4934 = vmatpush1.bf16.msra.mxu0 %v4551
    %4935 = vmatprep.subr.bf16.mxu0 0
    %4936 = vmatpush1.bf16.msra.mxu0 %v4552
    %4937 = vmatprep.subr.bf16.mxu0 0
    %4938 = vmatpush1.bf16.msra.mxu0 %v4553
    %4939 = vmatprep.subr.bf16.mxu0 0
    %4940 = vmatpush1.bf16.msra.mxu0 %v4554
    %4941 = vmatprep.subr.bf16.mxu0 0
    %4942 = vmatpush1.bf16.msra.mxu0 %v4555
    %4943 = vmatprep.subr.bf16.mxu0 0
    %4944 = vmatpush1.bf16.msra.mxu0 %v4556
    %4945 = vmatprep.subr.bf16.mxu0 0
    %4946 = vmatpush1.bf16.msra.mxu0 %v4557
    %4947 = vmatprep.subr.bf16.mxu0 0
    %4948 = vmatpush1.bf16.msra.mxu0 %v4558
    %4949 = vmatprep.subr.bf16.mxu0 0
    %4950 = vmatpush1.bf16.msra.mxu0 %v4559
    %4951 = vmatprep.subr.bf16.mxu0 0
    %4952 = vmatpush1.bf16.msra.mxu0 %v4560
    %4953 = vmatprep.subr.bf16.mxu0 0
    %4954 = vmatpush1.bf16.msra.mxu0 %v4561
    %4955 = vmatprep.subr.bf16.mxu0 0
    %4956 = vmatpush1.bf16.msra.mxu0 %v4562
    %4957 = vmatprep.subr.bf16.mxu0 0
    %4958 = vmatpush1.bf16.msra.mxu0 %v4563
    %4959 = vmatprep.subr.bf16.mxu0 0
    %4960 = vmatpush1.bf16.msra.mxu0 %v4564
    %4961 = vmatprep.subr.bf16.mxu0 0
    %4962 = vmatpush1.bf16.msra.mxu0 %v4565
    %4963 = vmatprep.mubr.bf16.mxu0 %v3690
    %4964 = vmatmul.mubr.bf16.gmra.mrb[0].mxu0 %v3689
    %v4965 = vpop.f32.mrb[0].mxu0
    %v4966 = vadd.f32 %v4925, %v4965
    %v4967 = vpop.f32.mrb[0].mxu0
    %v4968 = vpop.f32.mrb[0].mxu0
    %v4969 = vadd.f32 %v4928, %v4968
    %v4970 = vpop.f32.mrb[0].mxu0
    %4971 = vdwg.mxu0
    %4972 = vmatprep.subr.bf16.mxu0 0
    %4973 = vmatpush1.bf16.msra.mxu0 %v4566
    %4974 = vmatprep.subr.bf16.mxu0 0
    %4975 = vmatpush1.bf16.msra.mxu0 %v4567
    %4976 = vmatprep.subr.bf16.mxu0 0
    %4977 = vmatpush1.bf16.msra.mxu0 %v4568
    %4978 = vmatprep.subr.bf16.mxu0 0
    %4979 = vmatpush1.bf16.msra.mxu0 %v4569
    %4980 = vmatprep.subr.bf16.mxu0 0
    %4981 = vmatpush1.bf16.msra.mxu0 %v4570
    %4982 = vmatprep.subr.bf16.mxu0 0
    %4983 = vmatpush1.bf16.msra.mxu0 %v4571
    %4984 = vmatprep.subr.bf16.mxu0 0
    %4985 = vmatpush1.bf16.msra.mxu0 %v4572
    %4986 = vmatprep.subr.bf16.mxu0 0
    %4987 = vmatpush1.bf16.msra.mxu0 %v4573
    %4988 = vmatprep.subr.bf16.mxu0 0
    %4989 = vmatpush1.bf16.msra.mxu0 %v4574
    %4990 = vmatprep.subr.bf16.mxu0 0
    %4991 = vmatpush1.bf16.msra.mxu0 %v4575
    %4992 = vmatprep.subr.bf16.mxu0 0
    %4993 = vmatpush1.bf16.msra.mxu0 %v4576
    %4994 = vmatprep.subr.bf16.mxu0 0
    %4995 = vmatpush1.bf16.msra.mxu0 %v4577
    %4996 = vmatprep.subr.bf16.mxu0 0
    %4997 = vmatpush1.bf16.msra.mxu0 %v4578
    %4998 = vmatprep.subr.bf16.mxu0 0
    %4999 = vmatpush1.bf16.msra.mxu0 %v4579
    %5000 = vmatprep.subr.bf16.mxu0 0
    %5001 = vmatpush1.bf16.msra.mxu0 %v4580
    %5002 = vmatprep.subr.bf16.mxu0 0
    %5003 = vmatpush1.bf16.msra.mxu0 %v4581
    %5004 = vmatprep.mubr.bf16.mxu0 %v3692
    %5005 = vmatmul.mubr.bf16.gmra.mrb[0].mxu0 %v3691
    %v5006 = vpop.f32.mrb[0].mxu0
    %v5007 = vadd.f32 %v4966, %v5006
    %v5008 = vpop.f32.mrb[0].mxu0
    %v5009 = vpop.f32.mrb[0].mxu0
    %v5010 = vadd.f32 %v4969, %v5009
    %v5011 = vpop.f32.mrb[0].mxu0
    %5012 = vdwg.mxu0
    %5013 = vmatprep.subr.bf16.mxu0 0
    %5014 = vmatpush1.bf16.msra.mxu0 %v4582
    %5015 = vmatprep.subr.bf16.mxu0 0
    %5016 = vmatpush1.bf16.msra.mxu0 %v4583
    %5017 = vmatprep.subr.bf16.mxu0 0
    %5018 = vmatpush1.bf16.msra.mxu0 %v4584
    %5019 = vmatprep.subr.bf16.mxu0 0
    %5020 = vmatpush1.bf16.msra.mxu0 %v4585
    %5021 = vmatprep.subr.bf16.mxu0 0
    %5022 = vmatpush1.bf16.msra.mxu0 %v4586
    %5023 = vmatprep.subr.bf16.mxu0 0
    %5024 = vmatpush1.bf16.msra.mxu0 %v4587
    %5025 = vmatprep.subr.bf16.mxu0 0
    %5026 = vmatpush1.bf16.msra.mxu0 %v4588
    %5027 = vmatprep.subr.bf16.mxu0 0
    %5028 = vmatpush1.bf16.msra.mxu0 %v4589
    %5029 = vmatprep.subr.bf16.mxu0 0
    %5030 = vmatpush1.bf16.msra.mxu0 %v4590
    %5031 = vmatprep.subr.bf16.mxu0 0
    %5032 = vmatpush1.bf16.msra.mxu0 %v4591
    %5033 = vmatprep.subr.bf16.mxu0 0
    %5034 = vmatpush1.bf16.msra.mxu0 %v4592
    %5035 = vmatprep.subr.bf16.mxu0 0
    %5036 = vmatpush1.bf16.msra.mxu0 %v4593
    %5037 = vmatprep.subr.bf16.mxu0 0
    %5038 = vmatpush1.bf16.msra.mxu0 %v4594
    %5039 = vmatprep.subr.bf16.mxu0 0
    %5040 = vmatpush1.bf16.msra.mxu0 %v4595
    %5041 = vmatprep.subr.bf16.mxu0 0
    %5042 = vmatpush1.bf16.msra.mxu0 %v4596
    %5043 = vmatprep.subr.bf16.mxu0 0
    %5044 = vmatpush1.bf16.msra.mxu0 %v4597
    %5045 = vmatprep.mubr.bf16.mxu0 %v3694
    %5046 = vmatmul.mubr.bf16.gmra.mrb[0].mxu0 %v3693
    %v5047 = vpop.f32.mrb[0].mxu0
    %v5048 = vadd.f32 %v5007, %v5047
    %v5049 = vpop.f32.mrb[0].mxu0
    %v5050 = vpop.f32.mrb[0].mxu0
    %v5051 = vadd.f32 %v5010, %v5050
    %v5052 = vpop.f32.mrb[0].mxu0
    %5053 = vdwg.mxu0
    %v5054 = vadd.f32 %v2448, %v5048
    %v5055 = vadd.f32 %v2449, %v5051
    %v5056 = vld [vmem:[%s13] sm:$0x1]
    %v5057 = vld [vmem:[%s14] sm:$0x1]
    %5058 = vadd.xlane.f32.xlu0 %v5054
    %v5059 = vpop.xlane.xlu0 %5058
    %5060 = vadd.xlane.f32.xlu0 %v5055
    %v5061 = vpop.xlane.xlu0 %5060
    %v5062 = vmul.f32 %v5059, 0.03125
    %v5063 = vmul.f32 %v5061, 0.03125
    %v5064 = vmul.f32 %v5054, %v5054
    %v5065 = vmul.f32 %v5055, %v5055
    %5066 = vadd.xlane.f32.xlu0 %v5064
    %v5067 = vpop.xlane.xlu0 %5066
    %5068 = vadd.xlane.f32.xlu0 %v5065
    %v5069 = vpop.xlane.xlu0 %5068
    %v5070 = vmul.f32 %v5067, 0.03125
    %v5071 = vmul.f32 %v5069, 0.03125
    %v5072 = vmul.f32 %v5062, %v5062
    %v5073 = vmul.f32 %v5063, %v5063
    %v5074 = vsub.f32 %v5070, %v5072
    %v5075 = vsub.f32 %v5071, %v5073
    %v5076 = vsub.f32 %v5054, %v5062
    %v5077 = vsub.f32 %v5055, %v5063
    %v5078 = vadd.f32 %v5074, 1e-05
    %v5079 = vadd.f32 %v5075, 1e-05
    %v5080 = vrsqrt.pop %v5078
    %v5081 = vrsqrt.pop %v5079
    %v5082 = vmul.f32 %v5076, %v5080
    %v5083 = vmul.f32 %v5077, %v5081
    %v5085 = vlaneseq
    %v5086 = vshrl.u32 %v5085, 7
    %v5087 = vsub.s32 0, %v5086
    %v5088 = vrot.slane %v5056, %v5087
    %v5090 = vmul.f32 %v5082, %v5088
    %v5091 = vmul.f32 %v5083, %v5088
    %v5093 = vlaneseq
    %v5094 = vshrl.u32 %v5093, 7
    %v5095 = vsub.s32 0, %v5094
    %v5096 = vrot.slane %v5057, %v5095
    %v5098 = vadd.f32 %v5090, %v5096
    %v5099 = vadd.f32 %v5091, %v5096
    %v5100 = vpack.c.bf16 %v5099, %v5098
    %s5101 = scalar_lea.vmem [#allocation6], 768
    %v5102 = vld [vmem:[%s5101] sm:$0xff]
    %v5103 = vld [vmem:[%s5101 + $0x8] sm:$0xff]
    %v5104 = vld [vmem:[%s5101 + $0x10] sm:$0xff]
    %v5105 = vld [vmem:[%s5101 + $0x18] sm:$0xff]
    %v5106 = vld [vmem:[%s5101 + $0x20] sm:$0xff]
    %v5107 = vld [vmem:[%s5101 + $0x28] sm:$0xff]
    %v5108 = vld [vmem:[%s5101 + $0x30] sm:$0xff]
    %v5109 = vld [vmem:[%s5101 + $0x38] sm:$0xff]
    %v5110 = vld [vmem:[%s5101 + $0x40] sm:$0xff]
    %v5111 = vld [vmem:[%s5101 + $0x48] sm:$0xff]
    %v5112 = vld [vmem:[%s5101 + $0x50] sm:$0xff]
    %v5113 = vld [vmem:[%s5101 + $0x58] sm:$0xff]
    %v5114 = vld [vmem:[%s5101 + $0x60] sm:$0xff]
    %v5115 = vld [vmem:[%s5101 + $0x68] sm:$0xff]
    %v5116 = vld [vmem:[%s5101 + $0x70] sm:$0xff]
    %v5117 = vld [vmem:[%s5101 + $0x78] sm:$0xff]
    %v5118 = vld [vmem:[%s5101 + $0x80] sm:$0xff]
    %v5119 = vld [vmem:[%s5101 + $0x88] sm:$0xff]
    %v5120 = vld [vmem:[%s5101 + $0x90] sm:$0xff]
    %v5121 = vld [vmem:[%s5101 + $0x98] sm:$0xff]
    %v5122 = vld [vmem:[%s5101 + $0xa0] sm:$0xff]
    %v5123 = vld [vmem:[%s5101 + $0xa8] sm:$0xff]
    %v5124 = vld [vmem:[%s5101 + $0xb0] sm:$0xff]
    %v5125 = vld [vmem:[%s5101 + $0xb8] sm:$0xff]
    %v5126 = vld [vmem:[%s5101 + $0xc0] sm:$0xff]
    %v5127 = vld [vmem:[%s5101 + $0xc8] sm:$0xff]
    %v5128 = vld [vmem:[%s5101 + $0xd0] sm:$0xff]
    %v5129 = vld [vmem:[%s5101 + $0xd8] sm:$0xff]
    %v5130 = vld [vmem:[%s5101 + $0xe0] sm:$0xff]
    %v5131 = vld [vmem:[%s5101 + $0xe8] sm:$0xff]
    %v5132 = vld [vmem:[%s5101 + $0xf0] sm:$0xff]
    %v5133 = vld [vmem:[%s5101 + $0xf8] sm:$0xff]
    %v5134 = vld [vmem:[%s5101 + $0x100] sm:$0xff]
    %v5135 = vld [vmem:[%s5101 + $0x108] sm:$0xff]
    %v5136 = vld [vmem:[%s5101 + $0x110] sm:$0xff]
    %v5137 = vld [vmem:[%s5101 + $0x118] sm:$0xff]
    %v5138 = vld [vmem:[%s5101 + $0x120] sm:$0xff]
    %v5139 = vld [vmem:[%s5101 + $0x128] sm:$0xff]
    %v5140 = vld [vmem:[%s5101 + $0x130] sm:$0xff]
    %v5141 = vld [vmem:[%s5101 + $0x138] sm:$0xff]
    %v5142 = vld [vmem:[%s5101 + $0x140] sm:$0xff]
    %v5143 = vld [vmem:[%s5101 + $0x148] sm:$0xff]
    %v5144 = vld [vmem:[%s5101 + $0x150] sm:$0xff]
    %v5145 = vld [vmem:[%s5101 + $0x158] sm:$0xff]
    %v5146 = vld [vmem:[%s5101 + $0x160] sm:$0xff]
    %v5147 = vld [vmem:[%s5101 + $0x168] sm:$0xff]
    %v5148 = vld [vmem:[%s5101 + $0x170] sm:$0xff]
    %v5149 = vld [vmem:[%s5101 + $0x178] sm:$0xff]
    %v5150 = vld [vmem:[%s5101 + $0x180] sm:$0xff]
    %v5151 = vld [vmem:[%s5101 + $0x188] sm:$0xff]
    %v5152 = vld [vmem:[%s5101 + $0x190] sm:$0xff]
    %v5153 = vld [vmem:[%s5101 + $0x198] sm:$0xff]
    %v5154 = vld [vmem:[%s5101 + $0x1a0] sm:$0xff]
    %v5155 = vld [vmem:[%s5101 + $0x1a8] sm:$0xff]
    %v5156 = vld [vmem:[%s5101 + $0x1b0] sm:$0xff]
    %v5157 = vld [vmem:[%s5101 + $0x1b8] sm:$0xff]
    %v5158 = vld [vmem:[%s5101 + $0x1c0] sm:$0xff]
    %v5159 = vld [vmem:[%s5101 + $0x1c8] sm:$0xff]
    %v5160 = vld [vmem:[%s5101 + $0x1d0] sm:$0xff]
    %v5161 = vld [vmem:[%s5101 + $0x1d8] sm:$0xff]
    %v5162 = vld [vmem:[%s5101 + $0x1e0] sm:$0xff]
    %v5163 = vld [vmem:[%s5101 + $0x1e8] sm:$0xff]
    %v5164 = vld [vmem:[%s5101 + $0x1f0] sm:$0xff]
    %v5165 = vld [vmem:[%s5101 + $0x1f8] sm:$0xff]
    %v5166 = vld [vmem:[%s5101 + $0x200] sm:$0xff]
    %v5167 = vld [vmem:[%s5101 + $0x208] sm:$0xff]
    %v5168 = vld [vmem:[%s5101 + $0x210] sm:$0xff]
    %v5169 = vld [vmem:[%s5101 + $0x218] sm:$0xff]
    %v5170 = vld [vmem:[%s5101 + $0x220] sm:$0xff]
    %v5171 = vld [vmem:[%s5101 + $0x228] sm:$0xff]
    %v5172 = vld [vmem:[%s5101 + $0x230] sm:$0xff]
    %v5173 = vld [vmem:[%s5101 + $0x238] sm:$0xff]
    %v5174 = vld [vmem:[%s5101 + $0x240] sm:$0xff]
    %v5175 = vld [vmem:[%s5101 + $0x248] sm:$0xff]
    %v5176 = vld [vmem:[%s5101 + $0x250] sm:$0xff]
    %v5177 = vld [vmem:[%s5101 + $0x258] sm:$0xff]
    %v5178 = vld [vmem:[%s5101 + $0x260] sm:$0xff]
    %v5179 = vld [vmem:[%s5101 + $0x268] sm:$0xff]
    %v5180 = vld [vmem:[%s5101 + $0x270] sm:$0xff]
    %v5181 = vld [vmem:[%s5101 + $0x278] sm:$0xff]
    %v5182 = vld [vmem:[%s5101 + $0x280] sm:$0xff]
    %v5183 = vld [vmem:[%s5101 + $0x288] sm:$0xff]
    %v5184 = vld [vmem:[%s5101 + $0x290] sm:$0xff]
    %v5185 = vld [vmem:[%s5101 + $0x298] sm:$0xff]
    %v5186 = vld [vmem:[%s5101 + $0x2a0] sm:$0xff]
    %v5187 = vld [vmem:[%s5101 + $0x2a8] sm:$0xff]
    %v5188 = vld [vmem:[%s5101 + $0x2b0] sm:$0xff]
    %v5189 = vld [vmem:[%s5101 + $0x2b8] sm:$0xff]
    %v5190 = vld [vmem:[%s5101 + $0x2c0] sm:$0xff]
    %v5191 = vld [vmem:[%s5101 + $0x2c8] sm:$0xff]
    %v5192 = vld [vmem:[%s5101 + $0x2d0] sm:$0xff]
    %v5193 = vld [vmem:[%s5101 + $0x2d8] sm:$0xff]
    %v5194 = vld [vmem:[%s5101 + $0x2e0] sm:$0xff]
    %v5195 = vld [vmem:[%s5101 + $0x2e8] sm:$0xff]
    %v5196 = vld [vmem:[%s5101 + $0x2f0] sm:$0xff]
    %v5197 = vld [vmem:[%s5101 + $0x2f8] sm:$0xff]
    %s5198 = scalar_lea.vmem %s4, 12
    %v5199 = vld [vmem:[%s5198] sm:$0xff]
    %v5200 = vld [vmem:[%s5198 + $0x8] sm:$0xf]
    %v5203 = vlaneseq
    %v5204 = vshrl.u32 %v5203, 7
    %v5205 = vsub.s32 0, %v5204
    %v5206 = vrot.slane %v5199, %v5205
    %v5207 = vlaneseq
    %v5208 = vshrl.u32 %v5207, 7
    %v5209 = vsub.s32 1, %v5208
    %v5210 = vrot.slane %v5199, %v5209
    %v5211 = vlaneseq
    %v5212 = vshrl.u32 %v5211, 7
    %v5213 = vsub.s32 2, %v5212
    %v5214 = vrot.slane %v5199, %v5213
    %v5215 = vlaneseq
    %v5216 = vshrl.u32 %v5215, 7
    %v5217 = vsub.s32 3, %v5216
    %v5218 = vrot.slane %v5199, %v5217
    %v5219 = vlaneseq
    %v5220 = vshrl.u32 %v5219, 7
    %v5221 = vsub.s32 4, %v5220
    %v5222 = vrot.slane %v5199, %v5221
    %v5223 = vlaneseq
    %v5224 = vshrl.u32 %v5223, 7
    %v5225 = vsub.s32 5, %v5224
    %v5226 = vrot.slane %v5199, %v5225
    %v5227 = vlaneseq
    %v5228 = vshrl.u32 %v5227, 7
    %v5229 = vsub.s32 6, %v5228
    %v5230 = vrot.slane %v5199, %v5229
    %v5231 = vlaneseq
    %v5232 = vshrl.u32 %v5231, 7
    %v5233 = vsub.s32 7, %v5232
    %v5234 = vrot.slane %v5199, %v5233
    %v5235 = vlaneseq
    %v5236 = vshrl.u32 %v5235, 7
    %v5237 = vsub.s32 0, %v5236
    %v5238 = vrot.slane %v5200, %v5237
    %v5239 = vlaneseq
    %v5240 = vshrl.u32 %v5239, 7
    %v5241 = vsub.s32 1, %v5240
    %v5242 = vrot.slane %v5200, %v5241
    %v5243 = vlaneseq
    %v5244 = vshrl.u32 %v5243, 7
    %v5245 = vsub.s32 2, %v5244
    %v5246 = vrot.slane %v5200, %v5245
    %v5247 = vlaneseq
    %v5248 = vshrl.u32 %v5247, 7
    %v5249 = vsub.s32 3, %v5248
    %v5250 = vrot.slane %v5200, %v5249
    %v5359 = vunpack.c.l.b16 %v5102
    %v5360 = vunpack.c.h.b16 %v5102
    %v5361 = vunpack.c.l.b16 %v5103
    %v5362 = vunpack.c.h.b16 %v5103
    %v5363 = vunpack.c.l.b16 %v5104
    %v5364 = vunpack.c.h.b16 %v5104
    %v5365 = vunpack.c.l.b16 %v5105
    %v5366 = vunpack.c.h.b16 %v5105
    %v5367 = vunpack.c.l.b16 %v5106
    %v5368 = vunpack.c.h.b16 %v5106
    %v5369 = vunpack.c.l.b16 %v5107
    %v5370 = vunpack.c.h.b16 %v5107
    %v5371 = vunpack.c.l.b16 %v5108
    %v5372 = vunpack.c.h.b16 %v5108
    %v5373 = vunpack.c.l.b16 %v5109
    %v5374 = vunpack.c.h.b16 %v5109
    %v5375 = vunpack.c.l.b16 %v5110
    %v5376 = vunpack.c.h.b16 %v5110
    %v5377 = vunpack.c.l.b16 %v5111
    %v5378 = vunpack.c.h.b16 %v5111
    %v5379 = vunpack.c.l.b16 %v5112
    %v5380 = vunpack.c.h.b16 %v5112
    %v5381 = vunpack.c.l.b16 %v5113
    %v5382 = vunpack.c.h.b16 %v5113
    %v5383 = vunpack.c.l.b16 %v5114
    %v5384 = vunpack.c.h.b16 %v5114
    %v5385 = vunpack.c.l.b16 %v5115
    %v5386 = vunpack.c.h.b16 %v5115
    %v5387 = vunpack.c.l.b16 %v5116
    %v5388 = vunpack.c.h.b16 %v5116
    %v5389 = vunpack.c.l.b16 %v5117
    %v5390 = vunpack.c.h.b16 %v5117
    %v5391 = vunpack.c.l.b16 %v5118
    %v5392 = vunpack.c.h.b16 %v5118
    %v5393 = vunpack.c.l.b16 %v5119
    %v5394 = vunpack.c.h.b16 %v5119
    %v5395 = vunpack.c.l.b16 %v5120
    %v5396 = vunpack.c.h.b16 %v5120
    %v5397 = vunpack.c.l.b16 %v5121
    %v5398 = vunpack.c.h.b16 %v5121
    %v5399 = vunpack.c.l.b16 %v5122
    %v5400 = vunpack.c.h.b16 %v5122
    %v5401 = vunpack.c.l.b16 %v5123
    %v5402 = vunpack.c.h.b16 %v5123
    %v5403 = vunpack.c.l.b16 %v5124
    %v5404 = vunpack.c.h.b16 %v5124
    %v5405 = vunpack.c.l.b16 %v5125
    %v5406 = vunpack.c.h.b16 %v5125
    %v5407 = vunpack.c.l.b16 %v5126
    %v5408 = vunpack.c.h.b16 %v5126
    %v5409 = vunpack.c.l.b16 %v5127
    %v5410 = vunpack.c.h.b16 %v5127
    %v5411 = vunpack.c.l.b16 %v5128
    %v5412 = vunpack.c.h.b16 %v5128
    %v5413 = vunpack.c.l.b16 %v5129
    %v5414 = vunpack.c.h.b16 %v5129
    %v5415 = vunpack.c.l.b16 %v5130
    %v5416 = vunpack.c.h.b16 %v5130
    %v5417 = vunpack.c.l.b16 %v5131
    %v5418 = vunpack.c.h.b16 %v5131
    %v5419 = vunpack.c.l.b16 %v5132
    %v5420 = vunpack.c.h.b16 %v5132
    %v5421 = vunpack.c.l.b16 %v5133
    %v5422 = vunpack.c.h.b16 %v5133
    %v5423 = vunpack.c.l.b16 %v5134
    %v5424 = vunpack.c.h.b16 %v5134
    %v5425 = vunpack.c.l.b16 %v5135
    %v5426 = vunpack.c.h.b16 %v5135
    %v5427 = vunpack.c.l.b16 %v5136
    %v5428 = vunpack.c.h.b16 %v5136
    %v5429 = vunpack.c.l.b16 %v5137
    %v5430 = vunpack.c.h.b16 %v5137
    %v5431 = vunpack.c.l.b16 %v5138
    %v5432 = vunpack.c.h.b16 %v5138
    %v5433 = vunpack.c.l.b16 %v5139
    %v5434 = vunpack.c.h.b16 %v5139
    %v5435 = vunpack.c.l.b16 %v5140
    %v5436 = vunpack.c.h.b16 %v5140
    %v5437 = vunpack.c.l.b16 %v5141
    %v5438 = vunpack.c.h.b16 %v5141
    %v5439 = vunpack.c.l.b16 %v5142
    %v5440 = vunpack.c.h.b16 %v5142
    %v5441 = vunpack.c.l.b16 %v5143
    %v5442 = vunpack.c.h.b16 %v5143
    %v5443 = vunpack.c.l.b16 %v5144
    %v5444 = vunpack.c.h.b16 %v5144
    %v5445 = vunpack.c.l.b16 %v5145
    %v5446 = vunpack.c.h.b16 %v5145
    %v5447 = vunpack.c.l.b16 %v5146
    %v5448 = vunpack.c.h.b16 %v5146
    %v5449 = vunpack.c.l.b16 %v5147
    %v5450 = vunpack.c.h.b16 %v5147
    %v5451 = vunpack.c.l.b16 %v5148
    %v5452 = vunpack.c.h.b16 %v5148
    %v5453 = vunpack.c.l.b16 %v5149
    %v5454 = vunpack.c.h.b16 %v5149
    %v5455 = vunpack.c.l.b16 %v5150
    %v5456 = vunpack.c.h.b16 %v5150
    %v5457 = vunpack.c.l.b16 %v5151
    %v5458 = vunpack.c.h.b16 %v5151
    %v5459 = vunpack.c.l.b16 %v5152
    %v5460 = vunpack.c.h.b16 %v5152
    %v5461 = vunpack.c.l.b16 %v5153
    %v5462 = vunpack.c.h.b16 %v5153
    %v5463 = vunpack.c.l.b16 %v5154
    %v5464 = vunpack.c.h.b16 %v5154
    %v5465 = vunpack.c.l.b16 %v5155
    %v5466 = vunpack.c.h.b16 %v5155
    %v5467 = vunpack.c.l.b16 %v5156
    %v5468 = vunpack.c.h.b16 %v5156
    %v5469 = vunpack.c.l.b16 %v5157
    %v5470 = vunpack.c.h.b16 %v5157
    %v5471 = vunpack.c.l.b16 %v5158
    %v5472 = vunpack.c.h.b16 %v5158
    %v5473 = vunpack.c.l.b16 %v5159
    %v5474 = vunpack.c.h.b16 %v5159
    %v5475 = vunpack.c.l.b16 %v5160
    %v5476 = vunpack.c.h.b16 %v5160
    %v5477 = vunpack.c.l.b16 %v5161
    %v5478 = vunpack.c.h.b16 %v5161
    %v5479 = vunpack.c.l.b16 %v5162
    %v5480 = vunpack.c.h.b16 %v5162
    %v5481 = vunpack.c.l.b16 %v5163
    %v5482 = vunpack.c.h.b16 %v5163
    %v5483 = vunpack.c.l.b16 %v5164
    %v5484 = vunpack.c.h.b16 %v5164
    %v5485 = vunpack.c.l.b16 %v5165
    %v5486 = vunpack.c.h.b16 %v5165
    %v5487 = vunpack.c.l.b16 %v5166
    %v5488 = vunpack.c.h.b16 %v5166
    %v5489 = vunpack.c.l.b16 %v5167
    %v5490 = vunpack.c.h.b16 %v5167
    %v5491 = vunpack.c.l.b16 %v5168
    %v5492 = vunpack.c.h.b16 %v5168
    %v5493 = vunpack.c.l.b16 %v5169
    %v5494 = vunpack.c.h.b16 %v5169
    %v5495 = vunpack.c.l.b16 %v5170
    %v5496 = vunpack.c.h.b16 %v5170
    %v5497 = vunpack.c.l.b16 %v5171
    %v5498 = vunpack.c.h.b16 %v5171
    %v5499 = vunpack.c.l.b16 %v5172
    %v5500 = vunpack.c.h.b16 %v5172
    %v5501 = vunpack.c.l.b16 %v5173
    %v5502 = vunpack.c.h.b16 %v5173
    %v5503 = vunpack.c.l.b16 %v5174
    %v5504 = vunpack.c.h.b16 %v5174
    %v5505 = vunpack.c.l.b16 %v5175
    %v5506 = vunpack.c.h.b16 %v5175
    %v5507 = vunpack.c.l.b16 %v5176
    %v5508 = vunpack.c.h.b16 %v5176
    %v5509 = vunpack.c.l.b16 %v5177
    %v5510 = vunpack.c.h.b16 %v5177
    %v5511 = vunpack.c.l.b16 %v5178
    %v5512 = vunpack.c.h.b16 %v5178
    %v5513 = vunpack.c.l.b16 %v5179
    %v5514 = vunpack.c.h.b16 %v5179
    %v5515 = vunpack.c.l.b16 %v5180
    %v5516 = vunpack.c.h.b16 %v5180
    %v5517 = vunpack.c.l.b16 %v5181
    %v5518 = vunpack.c.h.b16 %v5181
    %v5519 = vunpack.c.l.b16 %v5182
    %v5520 = vunpack.c.h.b16 %v5182
    %v5521 = vunpack.c.l.b16 %v5183
    %v5522 = vunpack.c.h.b16 %v5183
    %v5523 = vunpack.c.l.b16 %v5184
    %v5524 = vunpack.c.h.b16 %v5184
    %v5525 = vunpack.c.l.b16 %v5185
    %v5526 = vunpack.c.h.b16 %v5185
    %v5527 = vunpack.c.l.b16 %v5186
    %v5528 = vunpack.c.h.b16 %v5186
    %v5529 = vunpack.c.l.b16 %v5187
    %v5530 = vunpack.c.h.b16 %v5187
    %v5531 = vunpack.c.l.b16 %v5188
    %v5532 = vunpack.c.h.b16 %v5188
    %v5533 = vunpack.c.l.b16 %v5189
    %v5534 = vunpack.c.h.b16 %v5189
    %v5535 = vunpack.c.l.b16 %v5190
    %v5536 = vunpack.c.h.b16 %v5190
    %v5537 = vunpack.c.l.b16 %v5191
    %v5538 = vunpack.c.h.b16 %v5191
    %v5539 = vunpack.c.l.b16 %v5192
    %v5540 = vunpack.c.h.b16 %v5192
    %v5541 = vunpack.c.l.b16 %v5193
    %v5542 = vunpack.c.h.b16 %v5193
    %v5543 = vunpack.c.l.b16 %v5194
    %v5544 = vunpack.c.h.b16 %v5194
    %v5545 = vunpack.c.l.b16 %v5195
    %v5546 = vunpack.c.h.b16 %v5195
    %v5547 = vunpack.c.l.b16 %v5196
    %v5548 = vunpack.c.h.b16 %v5196
    %v5549 = vunpack.c.l.b16 %v5197
    %v5550 = vunpack.c.h.b16 %v5197
    %v5551 = vpack.c.b16 %v5371, %v5359
    %v5552 = vpack.c.b16 %v5372, %v5360
    %v5553 = vpack.c.b16 %v5373, %v5361
    %v5554 = vpack.c.b16 %v5374, %v5362
    %v5555 = vpack.c.b16 %v5375, %v5363
    %v5556 = vpack.c.b16 %v5376, %v5364
    %v5557 = vpack.c.b16 %v5377, %v5365
    %v5558 = vpack.c.b16 %v5378, %v5366
    %v5559 = vpack.c.b16 %v5379, %v5367
    %v5560 = vpack.c.b16 %v5380, %v5368
    %v5561 = vpack.c.b16 %v5381, %v5369
    %v5562 = vpack.c.b16 %v5382, %v5370
    %v5563 = vpack.c.b16 %v5395, %v5383
    %v5564 = vpack.c.b16 %v5396, %v5384
    %v5565 = vpack.c.b16 %v5397, %v5385
    %v5566 = vpack.c.b16 %v5398, %v5386
    %v5567 = vpack.c.b16 %v5399, %v5387
    %v5568 = vpack.c.b16 %v5400, %v5388
    %v5569 = vpack.c.b16 %v5401, %v5389
    %v5570 = vpack.c.b16 %v5402, %v5390
    %v5571 = vpack.c.b16 %v5403, %v5391
    %v5572 = vpack.c.b16 %v5404, %v5392
    %v5573 = vpack.c.b16 %v5405, %v5393
    %v5574 = vpack.c.b16 %v5406, %v5394
    %v5575 = vpack.c.b16 %v5419, %v5407
    %v5576 = vpack.c.b16 %v5420, %v5408
    %v5577 = vpack.c.b16 %v5421, %v5409
    %v5578 = vpack.c.b16 %v5422, %v5410
    %v5579 = vpack.c.b16 %v5423, %v5411
    %v5580 = vpack.c.b16 %v5424, %v5412
    %v5581 = vpack.c.b16 %v5425, %v5413
    %v5582 = vpack.c.b16 %v5426, %v5414
    %v5583 = vpack.c.b16 %v5427, %v5415
    %v5584 = vpack.c.b16 %v5428, %v5416
    %v5585 = vpack.c.b16 %v5429, %v5417
    %v5586 = vpack.c.b16 %v5430, %v5418
    %v5587 = vpack.c.b16 %v5443, %v5431
    %v5588 = vpack.c.b16 %v5444, %v5432
    %v5589 = vpack.c.b16 %v5445, %v5433
    %v5590 = vpack.c.b16 %v5446, %v5434
    %v5591 = vpack.c.b16 %v5447, %v5435
    %v5592 = vpack.c.b16 %v5448, %v5436
    %v5593 = vpack.c.b16 %v5449, %v5437
    %v5594 = vpack.c.b16 %v5450, %v5438
    %v5595 = vpack.c.b16 %v5451, %v5439
    %v5596 = vpack.c.b16 %v5452, %v5440
    %v5597 = vpack.c.b16 %v5453, %v5441
    %v5598 = vpack.c.b16 %v5454, %v5442
    %v5599 = vpack.c.b16 %v5467, %v5455
    %v5600 = vpack.c.b16 %v5468, %v5456
    %v5601 = vpack.c.b16 %v5469, %v5457
    %v5602 = vpack.c.b16 %v5470, %v5458
    %v5603 = vpack.c.b16 %v5471, %v5459
    %v5604 = vpack.c.b16 %v5472, %v5460
    %v5605 = vpack.c.b16 %v5473, %v5461
    %v5606 = vpack.c.b16 %v5474, %v5462
    %v5607 = vpack.c.b16 %v5475, %v5463
    %v5608 = vpack.c.b16 %v5476, %v5464
    %v5609 = vpack.c.b16 %v5477, %v5465
    %v5610 = vpack.c.b16 %v5478, %v5466
    %v5611 = vpack.c.b16 %v5491, %v5479
    %v5612 = vpack.c.b16 %v5492, %v5480
    %v5613 = vpack.c.b16 %v5493, %v5481
    %v5614 = vpack.c.b16 %v5494, %v5482
    %v5615 = vpack.c.b16 %v5495, %v5483
    %v5616 = vpack.c.b16 %v5496, %v5484
    %v5617 = vpack.c.b16 %v5497, %v5485
    %v5618 = vpack.c.b16 %v5498, %v5486
    %v5619 = vpack.c.b16 %v5499, %v5487
    %v5620 = vpack.c.b16 %v5500, %v5488
    %v5621 = vpack.c.b16 %v5501, %v5489
    %v5622 = vpack.c.b16 %v5502, %v5490
    %v5623 = vpack.c.b16 %v5515, %v5503
    %v5624 = vpack.c.b16 %v5516, %v5504
    %v5625 = vpack.c.b16 %v5517, %v5505
    %v5626 = vpack.c.b16 %v5518, %v5506
    %v5627 = vpack.c.b16 %v5519, %v5507
    %v5628 = vpack.c.b16 %v5520, %v5508
    %v5629 = vpack.c.b16 %v5521, %v5509
    %v5630 = vpack.c.b16 %v5522, %v5510
    %v5631 = vpack.c.b16 %v5523, %v5511
    %v5632 = vpack.c.b16 %v5524, %v5512
    %v5633 = vpack.c.b16 %v5525, %v5513
    %v5634 = vpack.c.b16 %v5526, %v5514
    %v5635 = vpack.c.b16 %v5539, %v5527
    %v5636 = vpack.c.b16 %v5540, %v5528
    %v5637 = vpack.c.b16 %v5541, %v5529
    %v5638 = vpack.c.b16 %v5542, %v5530
    %v5639 = vpack.c.b16 %v5543, %v5531
    %v5640 = vpack.c.b16 %v5544, %v5532
    %v5641 = vpack.c.b16 %v5545, %v5533
    %v5642 = vpack.c.b16 %v5546, %v5534
    %v5643 = vpack.c.b16 %v5547, %v5535
    %v5644 = vpack.c.b16 %v5548, %v5536
    %v5645 = vpack.c.b16 %v5549, %v5537
    %v5646 = vpack.c.b16 %v5550, %v5538
    %5743 = vmatprep.subr.bf16.mxu0 %v5552
    %5744 = vmatpush1.bf16.msra.mxu0 %v5551
    %5745 = vmatprep.subr.bf16.mxu0 %v5564
    %5746 = vmatpush1.bf16.msra.mxu0 %v5563
    %5747 = vmatprep.subr.bf16.mxu0 %v5576
    %5748 = vmatpush1.bf16.msra.mxu0 %v5575
    %5749 = vmatprep.subr.bf16.mxu0 %v5588
    %5750 = vmatpush1.bf16.msra.mxu0 %v5587
    %5751 = vmatprep.subr.bf16.mxu0 %v5600
    %5752 = vmatpush1.bf16.msra.mxu0 %v5599
    %5753 = vmatprep.subr.bf16.mxu0 %v5612
    %5754 = vmatpush1.bf16.msra.mxu0 %v5611
    %5755 = vmatprep.subr.bf16.mxu0 %v5624
    %5756 = vmatpush1.bf16.msra.mxu0 %v5623
    %5757 = vmatprep.subr.bf16.mxu0 %v5636
    %5758 = vmatpush1.bf16.msra.mxu0 %v5635
    %5759 = vmatprep.subr.bf16.mxu0 0
    %5760 = vmatpush1.bf16.msra.mxu0 0
    %5761 = vmatprep.subr.bf16.mxu0 0
    %5762 = vmatpush1.bf16.msra.mxu0 0
    %5763 = vmatprep.subr.bf16.mxu0 0
    %5764 = vmatpush1.bf16.msra.mxu0 0
    %5765 = vmatprep.subr.bf16.mxu0 0
    %5766 = vmatpush1.bf16.msra.mxu0 0
    %5767 = vmatprep.subr.bf16.mxu0 0
    %5768 = vmatpush1.bf16.msra.mxu0 0
    %5769 = vmatprep.subr.bf16.mxu0 0
    %5770 = vmatpush1.bf16.msra.mxu0 0
    %5771 = vmatprep.subr.bf16.mxu0 0
    %5772 = vmatpush1.bf16.msra.mxu0 0
    %5773 = vmatprep.subr.bf16.mxu0 0
    %5774 = vmatpush1.bf16.msra.mxu0 0
    %5775 = vmatprep.mubr.bf16.mxu0 0
    %5776 = vmatmul.mubr.bf16.gmra.mrb[0].mxu0 %v5100
    %v5777 = vpop.f32.mrb[0].mxu0
    %v5778 = vadd.f32 %v5206, %v5777
    %v5779 = vpop.f32.mrb[0].mxu0
    %v5780 = vadd.f32 %v5210, %v5779
    %v5781 = vpop.f32.mrb[0].mxu0
    %v5782 = vadd.f32 %v5206, %v5781
    %v5783 = vpop.f32.mrb[0].mxu0
    %v5784 = vadd.f32 %v5210, %v5783
    %5785 = vdwg.mxu0
    %5786 = vmatprep.subr.bf16.mxu0 %v5554
    %5787 = vmatpush1.bf16.msra.mxu0 %v5553
    %5788 = vmatprep.subr.bf16.mxu0 %v5566
    %5789 = vmatpush1.bf16.msra.mxu0 %v5565
    %5790 = vmatprep.subr.bf16.mxu0 %v5578
    %5791 = vmatpush1.bf16.msra.mxu0 %v5577
    %5792 = vmatprep.subr.bf16.mxu0 %v5590
    %5793 = vmatpush1.bf16.msra.mxu0 %v5589
    %5794 = vmatprep.subr.bf16.mxu0 %v5602
    %5795 = vmatpush1.bf16.msra.mxu0 %v5601
    %5796 = vmatprep.subr.bf16.mxu0 %v5614
    %5797 = vmatpush1.bf16.msra.mxu0 %v5613
    %5798 = vmatprep.subr.bf16.mxu0 %v5626
    %5799 = vmatpush1.bf16.msra.mxu0 %v5625
    %5800 = vmatprep.subr.bf16.mxu0 %v5638
    %5801 = vmatpush1.bf16.msra.mxu0 %v5637
    %5802 = vmatprep.subr.bf16.mxu0 0
    %5803 = vmatpush1.bf16.msra.mxu0 0
    %5804 = vmatprep.subr.bf16.mxu0 0
    %5805 = vmatpush1.bf16.msra.mxu0 0
    %5806 = vmatprep.subr.bf16.mxu0 0
    %5807 = vmatpush1.bf16.msra.mxu0 0
    %5808 = vmatprep.subr.bf16.mxu0 0
    %5809 = vmatpush1.bf16.msra.mxu0 0
    %5810 = vmatprep.subr.bf16.mxu0 0
    %5811 = vmatpush1.bf16.msra.mxu0 0
    %5812 = vmatprep.subr.bf16.mxu0 0
    %5813 = vmatpush1.bf16.msra.mxu0 0
    %5814 = vmatprep.subr.bf16.mxu0 0
    %5815 = vmatpush1.bf16.msra.mxu0 0
    %5816 = vmatprep.subr.bf16.mxu0 0
    %5817 = vmatpush1.bf16.msra.mxu0 0
    %5818 = vmatprep.mubr.bf16.mxu0 0
    %5819 = vmatmul.mubr.bf16.gmra.mrb[0].mxu0 %v5100
    %v5820 = vpop.f32.mrb[0].mxu0
    %v5821 = vadd.f32 %v5214, %v5820
    %v5822 = vpop.f32.mrb[0].mxu0
    %v5823 = vadd.f32 %v5218, %v5822
    %v5824 = vpop.f32.mrb[0].mxu0
    %v5825 = vadd.f32 %v5214, %v5824
    %v5826 = vpop.f32.mrb[0].mxu0
    %v5827 = vadd.f32 %v5218, %v5826
    %5828 = vdwg.mxu0
    %5829 = vmatprep.subr.bf16.mxu0 %v5556
    %5830 = vmatpush1.bf16.msra.mxu0 %v5555
    %5831 = vmatprep.subr.bf16.mxu0 %v5568
    %5832 = vmatpush1.bf16.msra.mxu0 %v5567
    %5833 = vmatprep.subr.bf16.mxu0 %v5580
    %5834 = vmatpush1.bf16.msra.mxu0 %v5579
    %5835 = vmatprep.subr.bf16.mxu0 %v5592
    %5836 = vmatpush1.bf16.msra.mxu0 %v5591
    %5837 = vmatprep.subr.bf16.mxu0 %v5604
    %5838 = vmatpush1.bf16.msra.mxu0 %v5603
    %5839 = vmatprep.subr.bf16.mxu0 %v5616
    %5840 = vmatpush1.bf16.msra.mxu0 %v5615
    %5841 = vmatprep.subr.bf16.mxu0 %v5628
    %5842 = vmatpush1.bf16.msra.mxu0 %v5627
    %5843 = vmatprep.subr.bf16.mxu0 %v5640
    %5844 = vmatpush1.bf16.msra.mxu0 %v5639
    %5845 = vmatprep.subr.bf16.mxu0 0
    %5846 = vmatpush1.bf16.msra.mxu0 0
    %5847 = vmatprep.subr.bf16.mxu0 0
    %5848 = vmatpush1.bf16.msra.mxu0 0
    %5849 = vmatprep.subr.bf16.mxu0 0
    %5850 = vmatpush1.bf16.msra.mxu0 0
    %5851 = vmatprep.subr.bf16.mxu0 0
    %5852 = vmatpush1.bf16.msra.mxu0 0
    %5853 = vmatprep.subr.bf16.mxu0 0
    %5854 = vmatpush1.bf16.msra.mxu0 0
    %5855 = vmatprep.subr.bf16.mxu0 0
    %5856 = vmatpush1.bf16.msra.mxu0 0
    %5857 = vmatprep.subr.bf16.mxu0 0
    %5858 = vmatpush1.bf16.msra.mxu0 0
    %5859 = vmatprep.subr.bf16.mxu0 0
    %5860 = vmatpush1.bf16.msra.mxu0 0
    %5861 = vmatprep.mubr.bf16.mxu0 0
    %5862 = vmatmul.mubr.bf16.gmra.mrb[0].mxu0 %v5100
    %v5863 = vpop.f32.mrb[0].mxu0
    %v5864 = vadd.f32 %v5222, %v5863
    %v5865 = vpop.f32.mrb[0].mxu0
    %v5866 = vadd.f32 %v5226, %v5865
    %v5867 = vpop.f32.mrb[0].mxu0
    %v5868 = vadd.f32 %v5222, %v5867
    %v5869 = vpop.f32.mrb[0].mxu0
    %v5870 = vadd.f32 %v5226, %v5869
    %5871 = vdwg.mxu0
    %5872 = vmatprep.subr.bf16.mxu0 %v5558
    %5873 = vmatpush1.bf16.msra.mxu0 %v5557
    %5874 = vmatprep.subr.bf16.mxu0 %v5570
    %5875 = vmatpush1.bf16.msra.mxu0 %v5569
    %5876 = vmatprep.subr.bf16.mxu0 %v5582
    %5877 = vmatpush1.bf16.msra.mxu0 %v5581
    %5878 = vmatprep.subr.bf16.mxu0 %v5594
    %5879 = vmatpush1.bf16.msra.mxu0 %v5593
    %5880 = vmatprep.subr.bf16.mxu0 %v5606
    %5881 = vmatpush1.bf16.msra.mxu0 %v5605
    %5882 = vmatprep.subr.bf16.mxu0 %v5618
    %5883 = vmatpush1.bf16.msra.mxu0 %v5617
    %5884 = vmatprep.subr.bf16.mxu0 %v5630
    %5885 = vmatpush1.bf16.msra.mxu0 %v5629
    %5886 = vmatprep.subr.bf16.mxu0 %v5642
    %5887 = vmatpush1.bf16.msra.mxu0 %v5641
    %5888 = vmatprep.subr.bf16.mxu0 0
    %5889 = vmatpush1.bf16.msra.mxu0 0
    %5890 = vmatprep.subr.bf16.mxu0 0
    %5891 = vmatpush1.bf16.msra.mxu0 0
    %5892 = vmatprep.subr.bf16.mxu0 0
    %5893 = vmatpush1.bf16.msra.mxu0 0
    %5894 = vmatprep.subr.bf16.mxu0 0
    %5895 = vmatpush1.bf16.msra.mxu0 0
    %5896 = vmatprep.subr.bf16.mxu0 0
    %5897 = vmatpush1.bf16.msra.mxu0 0
    %5898 = vmatprep.subr.bf16.mxu0 0
    %5899 = vmatpush1.bf16.msra.mxu0 0
    %5900 = vmatprep.subr.bf16.mxu0 0
    %5901 = vmatpush1.bf16.msra.mxu0 0
    %5902 = vmatprep.subr.bf16.mxu0 0
    %5903 = vmatpush1.bf16.msra.mxu0 0
    %5904 = vmatprep.mubr.bf16.mxu0 0
    %5905 = vmatmul.mubr.bf16.gmra.mrb[0].mxu0 %v5100
    %v5906 = vpop.f32.mrb[0].mxu0
    %v5907 = vadd.f32 %v5230, %v5906
    %v5908 = vpop.f32.mrb[0].mxu0
    %v5909 = vadd.f32 %v5234, %v5908
    %v5910 = vpop.f32.mrb[0].mxu0
    %v5911 = vadd.f32 %v5230, %v5910
    %v5912 = vpop.f32.mrb[0].mxu0
    %v5913 = vadd.f32 %v5234, %v5912
    %5914 = vdwg.mxu0
    %5915 = vmatprep.subr.bf16.mxu0 %v5560
    %5916 = vmatpush1.bf16.msra.mxu0 %v5559
    %5917 = vmatprep.subr.bf16.mxu0 %v5572
    %5918 = vmatpush1.bf16.msra.mxu0 %v5571
    %5919 = vmatprep.subr.bf16.mxu0 %v5584
    %5920 = vmatpush1.bf16.msra.mxu0 %v5583
    %5921 = vmatprep.subr.bf16.mxu0 %v5596
    %5922 = vmatpush1.bf16.msra.mxu0 %v5595
    %5923 = vmatprep.subr.bf16.mxu0 %v5608
    %5924 = vmatpush1.bf16.msra.mxu0 %v5607
    %5925 = vmatprep.subr.bf16.mxu0 %v5620
    %5926 = vmatpush1.bf16.msra.mxu0 %v5619
    %5927 = vmatprep.subr.bf16.mxu0 %v5632
    %5928 = vmatpush1.bf16.msra.mxu0 %v5631
    %5929 = vmatprep.subr.bf16.mxu0 %v5644
    %5930 = vmatpush1.bf16.msra.mxu0 %v5643
    %5931 = vmatprep.subr.bf16.mxu0 0
    %5932 = vmatpush1.bf16.msra.mxu0 0
    %5933 = vmatprep.subr.bf16.mxu0 0
    %5934 = vmatpush1.bf16.msra.mxu0 0
    %5935 = vmatprep.subr.bf16.mxu0 0
    %5936 = vmatpush1.bf16.msra.mxu0 0
    %5937 = vmatprep.subr.bf16.mxu0 0
    %5938 = vmatpush1.bf16.msra.mxu0 0
    %5939 = vmatprep.subr.bf16.mxu0 0
    %5940 = vmatpush1.bf16.msra.mxu0 0
    %5941 = vmatprep.subr.bf16.mxu0 0
    %5942 = vmatpush1.bf16.msra.mxu0 0
    %5943 = vmatprep.subr.bf16.mxu0 0
    %5944 = vmatpush1.bf16.msra.mxu0 0
    %5945 = vmatprep.subr.bf16.mxu0 0
    %5946 = vmatpush1.bf16.msra.mxu0 0
    %5947 = vmatprep.mubr.bf16.mxu0 0
    %5948 = vmatmul.mubr.bf16.gmra.mrb[0].mxu0 %v5100
    %v5949 = vpop.f32.mrb[0].mxu0
    %v5950 = vadd.f32 %v5238, %v5949
    %v5951 = vpop.f32.mrb[0].mxu0
    %v5952 = vadd.f32 %v5242, %v5951
    %v5953 = vpop.f32.mrb[0].mxu0
    %v5954 = vadd.f32 %v5238, %v5953
    %v5955 = vpop.f32.mrb[0].mxu0
    %v5956 = vadd.f32 %v5242, %v5955
    %5957 = vdwg.mxu0
    %5958 = vmatprep.subr.bf16.mxu0 %v5562
    %5959 = vmatpush1.bf16.msra.mxu0 %v5561
    %5960 = vmatprep.subr.bf16.mxu0 %v5574
    %5961 = vmatpush1.bf16.msra.mxu0 %v5573
    %5962 = vmatprep.subr.bf16.mxu0 %v5586
    %5963 = vmatpush1.bf16.msra.mxu0 %v5585
    %5964 = vmatprep.subr.bf16.mxu0 %v5598
    %5965 = vmatpush1.bf16.msra.mxu0 %v5597
    %5966 = vmatprep.subr.bf16.mxu0 %v5610
    %5967 = vmatpush1.bf16.msra.mxu0 %v5609
    %5968 = vmatprep.subr.bf16.mxu0 %v5622
    %5969 = vmatpush1.bf16.msra.mxu0 %v5621
    %5970 = vmatprep.subr.bf16.mxu0 %v5634
    %5971 = vmatpush1.bf16.msra.mxu0 %v5633
    %5972 = vmatprep.subr.bf16.mxu0 %v5646
    %5973 = vmatpush1.bf16.msra.mxu0 %v5645
    %5974 = vmatprep.subr.bf16.mxu0 0
    %5975 = vmatpush1.bf16.msra.mxu0 0
    %5976 = vmatprep.subr.bf16.mxu0 0
    %5977 = vmatpush1.bf16.msra.mxu0 0
    %5978 = vmatprep.subr.bf16.mxu0 0
    %5979 = vmatpush1.bf16.msra.mxu0 0
    %5980 = vmatprep.subr.bf16.mxu0 0
    %5981 = vmatpush1.bf16.msra.mxu0 0
    %5982 = vmatprep.subr.bf16.mxu0 0
    %5983 = vmatpush1.bf16.msra.mxu0 0
    %5984 = vmatprep.subr.bf16.mxu0 0
    %5985 = vmatpush1.bf16.msra.mxu0 0
    %5986 = vmatprep.subr.bf16.mxu0 0
    %5987 = vmatpush1.bf16.msra.mxu0 0
    %5988 = vmatprep.subr.bf16.mxu0 0
    %5989 = vmatpush1.bf16.msra.mxu0 0
    %5990 = vmatprep.mubr.bf16.mxu0 0
    %5991 = vmatmul.mubr.bf16.gmra.mrb[0].mxu0 %v5100
    %v5992 = vpop.f32.mrb[0].mxu0
    %v5993 = vadd.f32 %v5246, %v5992
    %v5994 = vpop.f32.mrb[0].mxu0
    %v5995 = vadd.f32 %v5250, %v5994
    %v5996 = vpop.f32.mrb[0].mxu0
    %v5997 = vadd.f32 %v5246, %v5996
    %v5998 = vpop.f32.mrb[0].mxu0
    %v5999 = vadd.f32 %v5250, %v5998
    %6000 = vdwg.mxu0
    %v6001 = vpack.c.bf16 %v5782, %v5778
    %v6002 = vpack.c.bf16 %v5784, %v5780
    %v6003 = vpack.c.bf16 %v5825, %v5821
    %v6004 = vpack.c.bf16 %v5827, %v5823
    %v6005 = vpack.c.bf16 %v5868, %v5864
    %v6006 = vpack.c.bf16 %v5870, %v5866
    %v6007 = vpack.c.bf16 %v5911, %v5907
    %v6008 = vpack.c.bf16 %v5913, %v5909
    %v6009 = vpack.c.bf16 %v5954, %v5950
    %v6010 = vpack.c.bf16 %v5956, %v5952
    %v6011 = vpack.c.bf16 %v5997, %v5993
    %v6012 = vpack.c.bf16 %v5999, %v5995
    %v6014 = vunpack.c.l.b16 %v6001
    %v6015 = vunpack.c.h.b16 %v6001
    %v6016 = vpack.c.b16 %v6014, %v6014
    %v6017 = vpack.c.b16 %v6015, %v6015
    %v6021 = vunpack.c.l.b16 %v6005
    %v6022 = vunpack.c.h.b16 %v6005
    %v6023 = vpack.c.b16 %v6021, %v6021
    %v6024 = vpack.c.b16 %v6022, %v6022
    %v6028 = vunpack.c.l.b16 %v6009
    %v6029 = vunpack.c.h.b16 %v6009
    %v6030 = vpack.c.b16 %v6028, %v6028
    %v6031 = vpack.c.b16 %v6029, %v6029
    %6032 = vmatprep.subr.bf16.mxu0 0
    %6033 = vmatpush1.bf16.xpose.msra.mxu0 %v6023
    %6034 = vmatprep.subr.bf16.mxu0 0
    %6035 = vmatpush1.bf16.xpose.msra.mxu0 0
    %6036 = vmatprep.subr.bf16.mxu0 0
    %6037 = vmatpush1.bf16.xpose.msra.mxu0 0
    %6038 = vmatprep.subr.bf16.mxu0 0
    %6039 = vmatpush1.bf16.xpose.msra.mxu0 0
    %6040 = vmatprep.subr.bf16.mxu0 0
    %6041 = vmatpush1.bf16.xpose.msra.mxu0 0
    %6042 = vmatprep.subr.bf16.mxu0 0
    %6043 = vmatpush1.bf16.xpose.msra.mxu0 0
    %6044 = vmatprep.subr.bf16.mxu0 0
    %6045 = vmatpush1.bf16.xpose.msra.mxu0 0
    %6046 = vmatprep.subr.bf16.mxu0 0
    %6047 = vmatpush1.bf16.xpose.msra.mxu0 0
    %6048 = vmatprep.subr.bf16.mxu0 0
    %6049 = vmatpush1.bf16.xpose.msra.mxu0 0
    %6050 = vmatprep.subr.bf16.mxu0 0
    %6051 = vmatpush1.bf16.xpose.msra.mxu0 0
    %6052 = vmatprep.subr.bf16.mxu0 0
    %6053 = vmatpush1.bf16.xpose.msra.mxu0 0
    %6054 = vmatprep.subr.bf16.mxu0 0
    %6055 = vmatpush1.bf16.xpose.msra.mxu0 0
    %6056 = vmatprep.subr.bf16.mxu0 0
    %6057 = vmatpush1.bf16.xpose.msra.mxu0 0
    %6058 = vmatprep.subr.bf16.mxu0 0
    %6059 = vmatpush1.bf16.xpose.msra.mxu0 0
    %6060 = vmatprep.subr.bf16.mxu0 0
    %6061 = vmatpush1.bf16.xpose.msra.mxu0 0
    %6062 = vmatprep.subr.bf16.mxu0 0
    %6063 = vmatpush1.bf16.xpose.msra.mxu0 0
    %6064 = vmatprep.mubr.bf16.mxu0 0
    %6065 = vmatmul.mubr.bf16.gmra.mrb[0].mxu0 %v6016
    %v6066 = vpop.f32.mrb[0].mxu0
    %v6067 = vadd.f32 0.0, %v6066
    %v6068 = vpop.f32.mrb[0].mxu0
    %v6069 = vpop.f32.mrb[0].mxu0
    %v6070 = vpop.f32.mrb[0].mxu0
    %6071 = vdwg.mxu0
    %6072 = vmatprep.subr.bf16.mxu0 0
    %6073 = vmatpush1.bf16.xpose.msra.mxu0 %v6024
    %6074 = vmatprep.subr.bf16.mxu0 0
    %6075 = vmatpush1.bf16.xpose.msra.mxu0 0
    %6076 = vmatprep.subr.bf16.mxu0 0
    %6077 = vmatpush1.bf16.xpose.msra.mxu0 0
    %6078 = vmatprep.subr.bf16.mxu0 0
    %6079 = vmatpush1.bf16.xpose.msra.mxu0 0
    %6080 = vmatprep.subr.bf16.mxu0 0
    %6081 = vmatpush1.bf16.xpose.msra.mxu0 0
    %6082 = vmatprep.subr.bf16.mxu0 0
    %6083 = vmatpush1.bf16.xpose.msra.mxu0 0
    %6084 = vmatprep.subr.bf16.mxu0 0
    %6085 = vmatpush1.bf16.xpose.msra.mxu0 0
    %6086 = vmatprep.subr.bf16.mxu0 0
    %6087 = vmatpush1.bf16.xpose.msra.mxu0 0
    %6088 = vmatprep.subr.bf16.mxu0 0
    %6089 = vmatpush1.bf16.xpose.msra.mxu0 0
    %6090 = vmatprep.subr.bf16.mxu0 0
    %6091 = vmatpush1.bf16.xpose.msra.mxu0 0
    %6092 = vmatprep.subr.bf16.mxu0 0
    %6093 = vmatpush1.bf16.xpose.msra.mxu0 0
    %6094 = vmatprep.subr.bf16.mxu0 0
    %6095 = vmatpush1.bf16.xpose.msra.mxu0 0
    %6096 = vmatprep.subr.bf16.mxu0 0
    %6097 = vmatpush1.bf16.xpose.msra.mxu0 0
    %6098 = vmatprep.subr.bf16.mxu0 0
    %6099 = vmatpush1.bf16.xpose.msra.mxu0 0
    %6100 = vmatprep.subr.bf16.mxu0 0
    %6101 = vmatpush1.bf16.xpose.msra.mxu0 0
    %6102 = vmatprep.subr.bf16.mxu0 0
    %6103 = vmatpush1.bf16.xpose.msra.mxu0 0
    %6104 = vmatprep.mubr.bf16.mxu0 0
    %6105 = vmatmul.mubr.bf16.gmra.mrb[0].mxu0 %v6017
    %v6106 = vpop.f32.mrb[0].mxu0
    %v6107 = vadd.f32 0.0, %v6106
    %v6108 = vpop.f32.mrb[0].mxu0
    %v6109 = vpop.f32.mrb[0].mxu0
    %v6110 = vpop.f32.mrb[0].mxu0
    %6111 = vdwg.mxu0
    %v6112 = vsel %vm1292, %v6067, -inf
    %6113 = vmax.xlane.f32.xlu0 %v6112
    %v6114 = vpop.xlane.xlu0 %6113
    %v6115 = vsel %vm1292, %v6107, -inf
    %6116 = vmax.xlane.f32.xlu0 %v6115
    %v6117 = vpop.xlane.xlu0 %6116
    %v6118 = vsub.f32 %v6067, %v6114
    %v6119 = vsub.f32 %v6107, %v6117
    %v6120 = vmul.f32 %v6118, 1.442695
    %v6121 = vpow.pop %v6120
    %v6122 = vmul.f32 %v6119, 1.442695
    %v6123 = vpow.pop %v6122
    %v6124 = vsel %vm1292, %v6121, 0.0
    %6125 = vadd.xlane.f32.xlu0 %v6124
    %v6126 = vpop.xlane.xlu0 %6125
    %v6127 = vsel %vm1292, %v6123, 0.0
    %6128 = vadd.xlane.f32.xlu0 %v6127
    %v6129 = vpop.xlane.xlu0 %6128
    %v6130 = vrcp.pop %v6126
    %v6131 = vrcp.pop %v6129
    %v6132 = vmul.f32 %v6121, %v6130
    %v6133 = vmul.f32 %v6123, %v6131
    %v6134 = vpack.c.bf16 %v6132, %v6132
    %v6135 = vpack.c.bf16 %v6133, %v6133
    %v6137 = vsel %vm1292, %v6134, 0
    %v6140 = vsel %vm1320, %v6030, 0
    %6142 = vmatprep.subr.bf16.mxu0 0
    %6143 = vmatpush1.bf16.msra.mxu0 %v6140
    %6144 = vmatprep.subr.bf16.mxu0 0
    %6145 = vmatpush1.bf16.msra.mxu0 0
    %6146 = vmatprep.subr.bf16.mxu0 0
    %6147 = vmatpush1.bf16.msra.mxu0 0
    %6148 = vmatprep.subr.bf16.mxu0 0
    %6149 = vmatpush1.bf16.msra.mxu0 0
    %6150 = vmatprep.subr.bf16.mxu0 0
    %6151 = vmatpush1.bf16.msra.mxu0 0
    %6152 = vmatprep.subr.bf16.mxu0 0
    %6153 = vmatpush1.bf16.msra.mxu0 0
    %6154 = vmatprep.subr.bf16.mxu0 0
    %6155 = vmatpush1.bf16.msra.mxu0 0
    %6156 = vmatprep.subr.bf16.mxu0 0
    %6157 = vmatpush1.bf16.msra.mxu0 0
    %6158 = vmatprep.subr.bf16.mxu0 0
    %6159 = vmatpush1.bf16.msra.mxu0 0
    %6160 = vmatprep.subr.bf16.mxu0 0
    %6161 = vmatpush1.bf16.msra.mxu0 0
    %6162 = vmatprep.subr.bf16.mxu0 0
    %6163 = vmatpush1.bf16.msra.mxu0 0
    %6164 = vmatprep.subr.bf16.mxu0 0
    %6165 = vmatpush1.bf16.msra.mxu0 0
    %6166 = vmatprep.subr.bf16.mxu0 0
    %6167 = vmatpush1.bf16.msra.mxu0 0
    %6168 = vmatprep.subr.bf16.mxu0 0
    %6169 = vmatpush1.bf16.msra.mxu0 0
    %6170 = vmatprep.subr.bf16.mxu0 0
    %6171 = vmatpush1.bf16.msra.mxu0 0
    %6172 = vmatprep.subr.bf16.mxu0 0
    %6173 = vmatpush1.bf16.msra.mxu0 0
    %6174 = vmatprep.mubr.bf16.mxu0 0
    %6175 = vmatmul.mubr.bf16.gmra.mrb[0].mxu0 %v6137
    %v6176 = vpop.f32.mrb[0].mxu0
    %v6177 = vadd.f32 0.0, %v6176
    %v6178 = vpop.f32.mrb[0].mxu0
    %v6179 = vpop.f32.mrb[0].mxu0
    %v6180 = vpop.f32.mrb[0].mxu0
    %6181 = vdwg.mxu0
    %v6183 = vsel %vm1292, %v6135, 0
    %v6186 = vsel %vm1320, %v6031, 0
    %6188 = vmatprep.subr.bf16.mxu0 0
    %6189 = vmatpush1.bf16.msra.mxu0 %v6186
    %6190 = vmatprep.subr.bf16.mxu0 0
    %6191 = vmatpush1.bf16.msra.mxu0 0
    %6192 = vmatprep.subr.bf16.mxu0 0
    %6193 = vmatpush1.bf16.msra.mxu0 0
    %6194 = vmatprep.subr.bf16.mxu0 0
    %6195 = vmatpush1.bf16.msra.mxu0 0
    %6196 = vmatprep.subr.bf16.mxu0 0
    %6197 = vmatpush1.bf16.msra.mxu0 0
    %6198 = vmatprep.subr.bf16.mxu0 0
    %6199 = vmatpush1.bf16.msra.mxu0 0
    %6200 = vmatprep.subr.bf16.mxu0 0
    %6201 = vmatpush1.bf16.msra.mxu0 0
    %6202 = vmatprep.subr.bf16.mxu0 0
    %6203 = vmatpush1.bf16.msra.mxu0 0
    %6204 = vmatprep.subr.bf16.mxu0 0
    %6205 = vmatpush1.bf16.msra.mxu0 0
    %6206 = vmatprep.subr.bf16.mxu0 0
    %6207 = vmatpush1.bf16.msra.mxu0 0
    %6208 = vmatprep.subr.bf16.mxu0 0
    %6209 = vmatpush1.bf16.msra.mxu0 0
    %6210 = vmatprep.subr.bf16.mxu0 0
    %6211 = vmatpush1.bf16.msra.mxu0 0
    %6212 = vmatprep.subr.bf16.mxu0 0
    %6213 = vmatpush1.bf16.msra.mxu0 0
    %6214 = vmatprep.subr.bf16.mxu0 0
    %6215 = vmatpush1.bf16.msra.mxu0 0
    %6216 = vmatprep.subr.bf16.mxu0 0
    %6217 = vmatpush1.bf16.msra.mxu0 0
    %6218 = vmatprep.subr.bf16.mxu0 0
    %6219 = vmatpush1.bf16.msra.mxu0 0
    %6220 = vmatprep.mubr.bf16.mxu0 0
    %6221 = vmatmul.mubr.bf16.gmra.mrb[0].mxu0 %v6183
    %v6222 = vpop.f32.mrb[0].mxu0
    %v6223 = vadd.f32 0.0, %v6222
    %v6224 = vpop.f32.mrb[0].mxu0
    %v6225 = vpop.f32.mrb[0].mxu0
    %v6226 = vpop.f32.mrb[0].mxu0
    %6227 = vdwg.mxu0
    %v6229 = vunpack.c.l.b16 %v6002
    %v6230 = vunpack.c.h.b16 %v6002
    %v6231 = vpack.c.b16 %v6229, %v6229
    %v6232 = vpack.c.b16 %v6230, %v6230
    %v6236 = vunpack.c.l.b16 %v6006
    %v6237 = vunpack.c.h.b16 %v6006
    %v6238 = vpack.c.b16 %v6236, %v6236
    %v6239 = vpack.c.b16 %v6237, %v6237
    %v6243 = vunpack.c.l.b16 %v6010
    %v6244 = vunpack.c.h.b16 %v6010
    %v6245 = vpack.c.b16 %v6243, %v6243
    %v6246 = vpack.c.b16 %v6244, %v6244
    %6247 = vmatprep.subr.bf16.mxu0 0
    %6248 = vmatpush1.bf16.xpose.msra.mxu0 %v6238
    %6249 = vmatprep.subr.bf16.mxu0 0
    %6250 = vmatpush1.bf16.xpose.msra.mxu0 0
    %6251 = vmatprep.subr.bf16.mxu0 0
    %6252 = vmatpush1.bf16.xpose.msra.mxu0 0
    %6253 = vmatprep.subr.bf16.mxu0 0
    %6254 = vmatpush1.bf16.xpose.msra.mxu0 0
    %6255 = vmatprep.subr.bf16.mxu0 0
    %6256 = vmatpush1.bf16.xpose.msra.mxu0 0
    %6257 = vmatprep.subr.bf16.mxu0 0
    %6258 = vmatpush1.bf16.xpose.msra.mxu0 0
    %6259 = vmatprep.subr.bf16.mxu0 0
    %6260 = vmatpush1.bf16.xpose.msra.mxu0 0
    %6261 = vmatprep.subr.bf16.mxu0 0
    %6262 = vmatpush1.bf16.xpose.msra.mxu0 0
    %6263 = vmatprep.subr.bf16.mxu0 0
    %6264 = vmatpush1.bf16.xpose.msra.mxu0 0
    %6265 = vmatprep.subr.bf16.mxu0 0
    %6266 = vmatpush1.bf16.xpose.msra.mxu0 0
    %6267 = vmatprep.subr.bf16.mxu0 0
    %6268 = vmatpush1.bf16.xpose.msra.mxu0 0
    %6269 = vmatprep.subr.bf16.mxu0 0
    %6270 = vmatpush1.bf16.xpose.msra.mxu0 0
    %6271 = vmatprep.subr.bf16.mxu0 0
    %6272 = vmatpush1.bf16.xpose.msra.mxu0 0
    %6273 = vmatprep.subr.bf16.mxu0 0
    %6274 = vmatpush1.bf16.xpose.msra.mxu0 0
    %6275 = vmatprep.subr.bf16.mxu0 0
    %6276 = vmatpush1.bf16.xpose.msra.mxu0 0
    %6277 = vmatprep.subr.bf16.mxu0 0
    %6278 = vmatpush1.bf16.xpose.msra.mxu0 0
    %6279 = vmatprep.mubr.bf16.mxu0 0
    %6280 = vmatmul.mubr.bf16.gmra.mrb[0].mxu0 %v6231
    %v6281 = vpop.f32.mrb[0].mxu0
    %v6282 = vadd.f32 0.0, %v6281
    %v6283 = vpop.f32.mrb[0].mxu0
    %v6284 = vpop.f32.mrb[0].mxu0
    %v6285 = vpop.f32.mrb[0].mxu0
    %6286 = vdwg.mxu0
    %6287 = vmatprep.subr.bf16.mxu0 0
    %6288 = vmatpush1.bf16.xpose.msra.mxu0 %v6239
    %6289 = vmatprep.subr.bf16.mxu0 0
    %6290 = vmatpush1.bf16.xpose.msra.mxu0 0
    %6291 = vmatprep.subr.bf16.mxu0 0
    %6292 = vmatpush1.bf16.xpose.msra.mxu0 0
    %6293 = vmatprep.subr.bf16.mxu0 0
    %6294 = vmatpush1.bf16.xpose.msra.mxu0 0
    %6295 = vmatprep.subr.bf16.mxu0 0
    %6296 = vmatpush1.bf16.xpose.msra.mxu0 0
    %6297 = vmatprep.subr.bf16.mxu0 0
    %6298 = vmatpush1.bf16.xpose.msra.mxu0 0
    %6299 = vmatprep.subr.bf16.mxu0 0
    %6300 = vmatpush1.bf16.xpose.msra.mxu0 0
    %6301 = vmatprep.subr.bf16.mxu0 0
    %6302 = vmatpush1.bf16.xpose.msra.mxu0 0
    %6303 = vmatprep.subr.bf16.mxu0 0
    %6304 = vmatpush1.bf16.xpose.msra.mxu0 0
    %6305 = vmatprep.subr.bf16.mxu0 0
    %6306 = vmatpush1.bf16.xpose.msra.mxu0 0
    %6307 = vmatprep.subr.bf16.mxu0 0
    %6308 = vmatpush1.bf16.xpose.msra.mxu0 0
    %6309 = vmatprep.subr.bf16.mxu0 0
    %6310 = vmatpush1.bf16.xpose.msra.mxu0 0
    %6311 = vmatprep.subr.bf16.mxu0 0
    %6312 = vmatpush1.bf16.xpose.msra.mxu0 0
    %6313 = vmatprep.subr.bf16.mxu0 0
    %6314 = vmatpush1.bf16.xpose.msra.mxu0 0
    %6315 = vmatprep.subr.bf16.mxu0 0
    %6316 = vmatpush1.bf16.xpose.msra.mxu0 0
    %6317 = vmatprep.subr.bf16.mxu0 0
    %6318 = vmatpush1.bf16.xpose.msra.mxu0 0
    %6319 = vmatprep.mubr.bf16.mxu0 0
    %6320 = vmatmul.mubr.bf16.gmra.mrb[0].mxu0 %v6232
    %v6321 = vpop.f32.mrb[0].mxu0
    %v6322 = vadd.f32 0.0, %v6321
    %v6323 = vpop.f32.mrb[0].mxu0
    %v6324 = vpop.f32.mrb[0].mxu0
    %v6325 = vpop.f32.mrb[0].mxu0
    %6326 = vdwg.mxu0
    %v6327 = vsel %vm1292, %v6282, -inf
    %6328 = vmax.xlane.f32.xlu0 %v6327
    %v6329 = vpop.xlane.xlu0 %6328
    %v6330 = vsel %vm1292, %v6322, -inf
    %6331 = vmax.xlane.f32.xlu0 %v6330
    %v6332 = vpop.xlane.xlu0 %6331
    %v6333 = vsub.f32 %v6282, %v6329
    %v6334 = vsub.f32 %v6322, %v6332
    %v6335 = vmul.f32 %v6333, 1.442695
    %v6336 = vpow.pop %v6335
    %v6337 = vmul.f32 %v6334, 1.442695
    %v6338 = vpow.pop %v6337
    %v6339 = vsel %vm1292, %v6336, 0.0
    %6340 = vadd.xlane.f32.xlu0 %v6339
    %v6341 = vpop.xlane.xlu0 %6340
    %v6342 = vsel %vm1292, %v6338, 0.0
    %6343 = vadd.xlane.f32.xlu0 %v6342
    %v6344 = vpop.xlane.xlu0 %6343
    %v6345 = vrcp.pop %v6341
    %v6346 = vrcp.pop %v6344
    %v6347 = vmul.f32 %v6336, %v6345
    %v6348 = vmul.f32 %v6338, %v6346
    %v6349 = vpack.c.bf16 %v6347, %v6347
    %v6350 = vpack.c.bf16 %v6348, %v6348
    %v6352 = vsel %vm1292, %v6349, 0
    %v6355 = vsel %vm1320, %v6245, 0
    %6357 = vmatprep.subr.bf16.mxu0 0
    %6358 = vmatpush1.bf16.msra.mxu0 %v6355
    %6359 = vmatprep.subr.bf16.mxu0 0
    %6360 = vmatpush1.bf16.msra.mxu0 0
    %6361 = vmatprep.subr.bf16.mxu0 0
    %6362 = vmatpush1.bf16.msra.mxu0 0
    %6363 = vmatprep.subr.bf16.mxu0 0
    %6364 = vmatpush1.bf16.msra.mxu0 0
    %6365 = vmatprep.subr.bf16.mxu0 0
    %6366 = vmatpush1.bf16.msra.mxu0 0
    %6367 = vmatprep.subr.bf16.mxu0 0
    %6368 = vmatpush1.bf16.msra.mxu0 0
    %6369 = vmatprep.subr.bf16.mxu0 0
    %6370 = vmatpush1.bf16.msra.mxu0 0
    %6371 = vmatprep.subr.bf16.mxu0 0
    %6372 = vmatpush1.bf16.msra.mxu0 0
    %6373 = vmatprep.subr.bf16.mxu0 0
    %6374 = vmatpush1.bf16.msra.mxu0 0
    %6375 = vmatprep.subr.bf16.mxu0 0
    %6376 = vmatpush1.bf16.msra.mxu0 0
    %6377 = vmatprep.subr.bf16.mxu0 0
    %6378 = vmatpush1.bf16.msra.mxu0 0
    %6379 = vmatprep.subr.bf16.mxu0 0
    %6380 = vmatpush1.bf16.msra.mxu0 0
    %6381 = vmatprep.subr.bf16.mxu0 0
    %6382 = vmatpush1.bf16.msra.mxu0 0
    %6383 = vmatprep.subr.bf16.mxu0 0
    %6384 = vmatpush1.bf16.msra.mxu0 0
    %6385 = vmatprep.subr.bf16.mxu0 0
    %6386 = vmatpush1.bf16.msra.mxu0 0
    %6387 = vmatprep.subr.bf16.mxu0 0
    %6388 = vmatpush1.bf16.msra.mxu0 0
    %6389 = vmatprep.mubr.bf16.mxu0 0
    %6390 = vmatmul.mubr.bf16.gmra.mrb[0].mxu0 %v6352
    %v6391 = vpop.f32.mrb[0].mxu0
    %v6392 = vadd.f32 0.0, %v6391
    %v6393 = vpop.f32.mrb[0].mxu0
    %v6394 = vpop.f32.mrb[0].mxu0
    %v6395 = vpop.f32.mrb[0].mxu0
    %6396 = vdwg.mxu0
    %v6398 = vsel %vm1292, %v6350, 0
    %v6401 = vsel %vm1320, %v6246, 0
    %6403 = vmatprep.subr.bf16.mxu0 0
    %6404 = vmatpush1.bf16.msra.mxu0 %v6401
    %6405 = vmatprep.subr.bf16.mxu0 0
    %6406 = vmatpush1.bf16.msra.mxu0 0
    %6407 = vmatprep.subr.bf16.mxu0 0
    %6408 = vmatpush1.bf16.msra.mxu0 0
    %6409 = vmatprep.subr.bf16.mxu0 0
    %6410 = vmatpush1.bf16.msra.mxu0 0
    %6411 = vmatprep.subr.bf16.mxu0 0
    %6412 = vmatpush1.bf16.msra.mxu0 0
    %6413 = vmatprep.subr.bf16.mxu0 0
    %6414 = vmatpush1.bf16.msra.mxu0 0
    %6415 = vmatprep.subr.bf16.mxu0 0
    %6416 = vmatpush1.bf16.msra.mxu0 0
    %6417 = vmatprep.subr.bf16.mxu0 0
    %6418 = vmatpush1.bf16.msra.mxu0 0
    %6419 = vmatprep.subr.bf16.mxu0 0
    %6420 = vmatpush1.bf16.msra.mxu0 0
    %6421 = vmatprep.subr.bf16.mxu0 0
    %6422 = vmatpush1.bf16.msra.mxu0 0
    %6423 = vmatprep.subr.bf16.mxu0 0
    %6424 = vmatpush1.bf16.msra.mxu0 0
    %6425 = vmatprep.subr.bf16.mxu0 0
    %6426 = vmatpush1.bf16.msra.mxu0 0
    %6427 = vmatprep.subr.bf16.mxu0 0
    %6428 = vmatpush1.bf16.msra.mxu0 0
    %6429 = vmatprep.subr.bf16.mxu0 0
    %6430 = vmatpush1.bf16.msra.mxu0 0
    %6431 = vmatprep.subr.bf16.mxu0 0
    %6432 = vmatpush1.bf16.msra.mxu0 0
    %6433 = vmatprep.subr.bf16.mxu0 0
    %6434 = vmatpush1.bf16.msra.mxu0 0
    %6435 = vmatprep.mubr.bf16.mxu0 0
    %6436 = vmatmul.mubr.bf16.gmra.mrb[0].mxu0 %v6398
    %v6437 = vpop.f32.mrb[0].mxu0
    %v6438 = vadd.f32 0.0, %v6437
    %v6439 = vpop.f32.mrb[0].mxu0
    %v6440 = vpop.f32.mrb[0].mxu0
    %v6441 = vpop.f32.mrb[0].mxu0
    %6442 = vdwg.mxu0
    %v6444 = vunpack.c.l.b16 %v6003
    %v6445 = vunpack.c.h.b16 %v6003
    %v6446 = vpack.c.b16 %v6444, %v6444
    %v6447 = vpack.c.b16 %v6445, %v6445
    %v6451 = vunpack.c.l.b16 %v6007
    %v6452 = vunpack.c.h.b16 %v6007
    %v6453 = vpack.c.b16 %v6451, %v6451
    %v6454 = vpack.c.b16 %v6452, %v6452
    %v6458 = vunpack.c.l.b16 %v6011
    %v6459 = vunpack.c.h.b16 %v6011
    %v6460 = vpack.c.b16 %v6458, %v6458
    %v6461 = vpack.c.b16 %v6459, %v6459
    %6462 = vmatprep.subr.bf16.mxu0 0
    %6463 = vmatpush1.bf16.xpose.msra.mxu0 %v6453
    %6464 = vmatprep.subr.bf16.mxu0 0
    %6465 = vmatpush1.bf16.xpose.msra.mxu0 0
    %6466 = vmatprep.subr.bf16.mxu0 0
    %6467 = vmatpush1.bf16.xpose.msra.mxu0 0
    %6468 = vmatprep.subr.bf16.mxu0 0
    %6469 = vmatpush1.bf16.xpose.msra.mxu0 0
    %6470 = vmatprep.subr.bf16.mxu0 0
    %6471 = vmatpush1.bf16.xpose.msra.mxu0 0
    %6472 = vmatprep.subr.bf16.mxu0 0
    %6473 = vmatpush1.bf16.xpose.msra.mxu0 0
    %6474 = vmatprep.subr.bf16.mxu0 0
    %6475 = vmatpush1.bf16.xpose.msra.mxu0 0
    %6476 = vmatprep.subr.bf16.mxu0 0
    %6477 = vmatpush1.bf16.xpose.msra.mxu0 0
    %6478 = vmatprep.subr.bf16.mxu0 0
    %6479 = vmatpush1.bf16.xpose.msra.mxu0 0
    %6480 = vmatprep.subr.bf16.mxu0 0
    %6481 = vmatpush1.bf16.xpose.msra.mxu0 0
    %6482 = vmatprep.subr.bf16.mxu0 0
    %6483 = vmatpush1.bf16.xpose.msra.mxu0 0
    %6484 = vmatprep.subr.bf16.mxu0 0
    %6485 = vmatpush1.bf16.xpose.msra.mxu0 0
    %6486 = vmatprep.subr.bf16.mxu0 0
    %6487 = vmatpush1.bf16.xpose.msra.mxu0 0
    %6488 = vmatprep.subr.bf16.mxu0 0
    %6489 = vmatpush1.bf16.xpose.msra.mxu0 0
    %6490 = vmatprep.subr.bf16.mxu0 0
    %6491 = vmatpush1.bf16.xpose.msra.mxu0 0
    %6492 = vmatprep.subr.bf16.mxu0 0
    %6493 = vmatpush1.bf16.xpose.msra.mxu0 0
    %6494 = vmatprep.mubr.bf16.mxu0 0
    %6495 = vmatmul.mubr.bf16.gmra.mrb[0].mxu0 %v6446
    %v6496 = vpop.f32.mrb[0].mxu0
    %v6497 = vadd.f32 0.0, %v6496
    %v6498 = vpop.f32.mrb[0].mxu0
    %v6499 = vpop.f32.mrb[0].mxu0
    %v6500 = vpop.f32.mrb[0].mxu0
    %6501 = vdwg.mxu0
    %6502 = vmatprep.subr.bf16.mxu0 0
    %6503 = vmatpush1.bf16.xpose.msra.mxu0 %v6454
    %6504 = vmatprep.subr.bf16.mxu0 0
    %6505 = vmatpush1.bf16.xpose.msra.mxu0 0
    %6506 = vmatprep.subr.bf16.mxu0 0
    %6507 = vmatpush1.bf16.xpose.msra.mxu0 0
    %6508 = vmatprep.subr.bf16.mxu0 0
    %6509 = vmatpush1.bf16.xpose.msra.mxu0 0
    %6510 = vmatprep.subr.bf16.mxu0 0
    %6511 = vmatpush1.bf16.xpose.msra.mxu0 0
    %6512 = vmatprep.subr.bf16.mxu0 0
    %6513 = vmatpush1.bf16.xpose.msra.mxu0 0
    %6514 = vmatprep.subr.bf16.mxu0 0
    %6515 = vmatpush1.bf16.xpose.msra.mxu0 0
    %6516 = vmatprep.subr.bf16.mxu0 0
    %6517 = vmatpush1.bf16.xpose.msra.mxu0 0
    %6518 = vmatprep.subr.bf16.mxu0 0
    %6519 = vmatpush1.bf16.xpose.msra.mxu0 0
    %6520 = vmatprep.subr.bf16.mxu0 0
    %6521 = vmatpush1.bf16.xpose.msra.mxu0 0
    %6522 = vmatprep.subr.bf16.mxu0 0
    %6523 = vmatpush1.bf16.xpose.msra.mxu0 0
    %6524 = vmatprep.subr.bf16.mxu0 0
    %6525 = vmatpush1.bf16.xpose.msra.mxu0 0
    %6526 = vmatprep.subr.bf16.mxu0 0
    %6527 = vmatpush1.bf16.xpose.msra.mxu0 0
    %6528 = vmatprep.subr.bf16.mxu0 0
    %6529 = vmatpush1.bf16.xpose.msra.mxu0 0
    %6530 = vmatprep.subr.bf16.mxu0 0
    %6531 = vmatpush1.bf16.xpose.msra.mxu0 0
    %6532 = vmatprep.subr.bf16.mxu0 0
    %6533 = vmatpush1.bf16.xpose.msra.mxu0 0
    %6534 = vmatprep.mubr.bf16.mxu0 0
    %6535 = vmatmul.mubr.bf16.gmra.mrb[0].mxu0 %v6447
    %v6536 = vpop.f32.mrb[0].mxu0
    %v6537 = vadd.f32 0.0, %v6536
    %v6538 = vpop.f32.mrb[0].mxu0
    %v6539 = vpop.f32.mrb[0].mxu0
    %v6540 = vpop.f32.mrb[0].mxu0
    %6541 = vdwg.mxu0
    %v6542 = vsel %vm1292, %v6497, -inf
    %6543 = vmax.xlane.f32.xlu0 %v6542
    %v6544 = vpop.xlane.xlu0 %6543
    %v6545 = vsel %vm1292, %v6537, -inf
    %6546 = vmax.xlane.f32.xlu0 %v6545
    %v6547 = vpop.xlane.xlu0 %6546
    %v6548 = vsub.f32 %v6497, %v6544
    %v6549 = vsub.f32 %v6537, %v6547
    %v6550 = vmul.f32 %v6548, 1.442695
    %v6551 = vpow.pop %v6550
    %v6552 = vmul.f32 %v6549, 1.442695
    %v6553 = vpow.pop %v6552
    %v6554 = vsel %vm1292, %v6551, 0.0
    %6555 = vadd.xlane.f32.xlu0 %v6554
    %v6556 = vpop.xlane.xlu0 %6555
    %v6557 = vsel %vm1292, %v6553, 0.0
    %6558 = vadd.xlane.f32.xlu0 %v6557
    %v6559 = vpop.xlane.xlu0 %6558
    %v6560 = vrcp.pop %v6556
    %v6561 = vrcp.pop %v6559
    %v6562 = vmul.f32 %v6551, %v6560
    %v6563 = vmul.f32 %v6553, %v6561
    %v6564 = vpack.c.bf16 %v6562, %v6562
    %v6565 = vpack.c.bf16 %v6563, %v6563
    %v6567 = vsel %vm1292, %v6564, 0
    %v6570 = vsel %vm1320, %v6460, 0
    %6572 = vmatprep.subr.bf16.mxu0 0
    %6573 = vmatpush1.bf16.msra.mxu0 %v6570
    %6574 = vmatprep.subr.bf16.mxu0 0
    %6575 = vmatpush1.bf16.msra.mxu0 0
    %6576 = vmatprep.subr.bf16.mxu0 0
    %6577 = vmatpush1.bf16.msra.mxu0 0
    %6578 = vmatprep.subr.bf16.mxu0 0
    %6579 = vmatpush1.bf16.msra.mxu0 0
    %6580 = vmatprep.subr.bf16.mxu0 0
    %6581 = vmatpush1.bf16.msra.mxu0 0
    %6582 = vmatprep.subr.bf16.mxu0 0
    %6583 = vmatpush1.bf16.msra.mxu0 0
    %6584 = vmatprep.subr.bf16.mxu0 0
    %6585 = vmatpush1.bf16.msra.mxu0 0
    %6586 = vmatprep.subr.bf16.mxu0 0
    %6587 = vmatpush1.bf16.msra.mxu0 0
    %6588 = vmatprep.subr.bf16.mxu0 0
    %6589 = vmatpush1.bf16.msra.mxu0 0
    %6590 = vmatprep.subr.bf16.mxu0 0
    %6591 = vmatpush1.bf16.msra.mxu0 0
    %6592 = vmatprep.subr.bf16.mxu0 0
    %6593 = vmatpush1.bf16.msra.mxu0 0
    %6594 = vmatprep.subr.bf16.mxu0 0
    %6595 = vmatpush1.bf16.msra.mxu0 0
    %6596 = vmatprep.subr.bf16.mxu0 0
    %6597 = vmatpush1.bf16.msra.mxu0 0
    %6598 = vmatprep.subr.bf16.mxu0 0
    %6599 = vmatpush1.bf16.msra.mxu0 0
    %6600 = vmatprep.subr.bf16.mxu0 0
    %6601 = vmatpush1.bf16.msra.mxu0 0
    %6602 = vmatprep.subr.bf16.mxu0 0
    %6603 = vmatpush1.bf16.msra.mxu0 0
    %6604 = vmatprep.mubr.bf16.mxu0 0
    %6605 = vmatmul.mubr.bf16.gmra.mrb[0].mxu0 %v6567
    %v6606 = vpop.f32.mrb[0].mxu0
    %v6607 = vadd.f32 0.0, %v6606
    %v6608 = vpop.f32.mrb[0].mxu0
    %v6609 = vpop.f32.mrb[0].mxu0
    %v6610 = vpop.f32.mrb[0].mxu0
    %6611 = vdwg.mxu0
    %v6613 = vsel %vm1292, %v6565, 0
    %v6616 = vsel %vm1320, %v6461, 0
    %6618 = vmatprep.subr.bf16.mxu0 0
    %6619 = vmatpush1.bf16.msra.mxu0 %v6616
    %6620 = vmatprep.subr.bf16.mxu0 0
    %6621 = vmatpush1.bf16.msra.mxu0 0
    %6622 = vmatprep.subr.bf16.mxu0 0
    %6623 = vmatpush1.bf16.msra.mxu0 0
    %6624 = vmatprep.subr.bf16.mxu0 0
    %6625 = vmatpush1.bf16.msra.mxu0 0
    %6626 = vmatprep.subr.bf16.mxu0 0
    %6627 = vmatpush1.bf16.msra.mxu0 0
    %6628 = vmatprep.subr.bf16.mxu0 0
    %6629 = vmatpush1.bf16.msra.mxu0 0
    %6630 = vmatprep.subr.bf16.mxu0 0
    %6631 = vmatpush1.bf16.msra.mxu0 0
    %6632 = vmatprep.subr.bf16.mxu0 0
    %6633 = vmatpush1.bf16.msra.mxu0 0
    %6634 = vmatprep.subr.bf16.mxu0 0
    %6635 = vmatpush1.bf16.msra.mxu0 0
    %6636 = vmatprep.subr.bf16.mxu0 0
    %6637 = vmatpush1.bf16.msra.mxu0 0
    %6638 = vmatprep.subr.bf16.mxu0 0
    %6639 = vmatpush1.bf16.msra.mxu0 0
    %6640 = vmatprep.subr.bf16.mxu0 0
    %6641 = vmatpush1.bf16.msra.mxu0 0
    %6642 = vmatprep.subr.bf16.mxu0 0
    %6643 = vmatpush1.bf16.msra.mxu0 0
    %6644 = vmatprep.subr.bf16.mxu0 0
    %6645 = vmatpush1.bf16.msra.mxu0 0
    %6646 = vmatprep.subr.bf16.mxu0 0
    %6647 = vmatpush1.bf16.msra.mxu0 0
    %6648 = vmatprep.subr.bf16.mxu0 0
    %6649 = vmatpush1.bf16.msra.mxu0 0
    %6650 = vmatprep.mubr.bf16.mxu0 0
    %6651 = vmatmul.mubr.bf16.gmra.mrb[0].mxu0 %v6613
    %v6652 = vpop.f32.mrb[0].mxu0
    %v6653 = vadd.f32 0.0, %v6652
    %v6654 = vpop.f32.mrb[0].mxu0
    %v6655 = vpop.f32.mrb[0].mxu0
    %v6656 = vpop.f32.mrb[0].mxu0
    %6657 = vdwg.mxu0
    %v6659 = vunpack.c.l.b16 %v6004
    %v6660 = vunpack.c.h.b16 %v6004
    %v6661 = vpack.c.b16 %v6659, %v6659
    %v6662 = vpack.c.b16 %v6660, %v6660
    %v6666 = vunpack.c.l.b16 %v6008
    %v6667 = vunpack.c.h.b16 %v6008
    %v6668 = vpack.c.b16 %v6666, %v6666
    %v6669 = vpack.c.b16 %v6667, %v6667
    %v6673 = vunpack.c.l.b16 %v6012
    %v6674 = vunpack.c.h.b16 %v6012
    %v6675 = vpack.c.b16 %v6673, %v6673
    %v6676 = vpack.c.b16 %v6674, %v6674
    %6677 = vmatprep.subr.bf16.mxu0 0
    %6678 = vmatpush1.bf16.xpose.msra.mxu0 %v6668
    %6679 = vmatprep.subr.bf16.mxu0 0
    %6680 = vmatpush1.bf16.xpose.msra.mxu0 0
    %6681 = vmatprep.subr.bf16.mxu0 0
    %6682 = vmatpush1.bf16.xpose.msra.mxu0 0
    %6683 = vmatprep.subr.bf16.mxu0 0
    %6684 = vmatpush1.bf16.xpose.msra.mxu0 0
    %6685 = vmatprep.subr.bf16.mxu0 0
    %6686 = vmatpush1.bf16.xpose.msra.mxu0 0
    %6687 = vmatprep.subr.bf16.mxu0 0
    %6688 = vmatpush1.bf16.xpose.msra.mxu0 0
    %6689 = vmatprep.subr.bf16.mxu0 0
    %6690 = vmatpush1.bf16.xpose.msra.mxu0 0
    %6691 = vmatprep.subr.bf16.mxu0 0
    %6692 = vmatpush1.bf16.xpose.msra.mxu0 0
    %6693 = vmatprep.subr.bf16.mxu0 0
    %6694 = vmatpush1.bf16.xpose.msra.mxu0 0
    %6695 = vmatprep.subr.bf16.mxu0 0
    %6696 = vmatpush1.bf16.xpose.msra.mxu0 0
    %6697 = vmatprep.subr.bf16.mxu0 0
    %6698 = vmatpush1.bf16.xpose.msra.mxu0 0
    %6699 = vmatprep.subr.bf16.mxu0 0
    %6700 = vmatpush1.bf16.xpose.msra.mxu0 0
    %6701 = vmatprep.subr.bf16.mxu0 0
    %6702 = vmatpush1.bf16.xpose.msra.mxu0 0
    %6703 = vmatprep.subr.bf16.mxu0 0
    %6704 = vmatpush1.bf16.xpose.msra.mxu0 0
    %6705 = vmatprep.subr.bf16.mxu0 0
    %6706 = vmatpush1.bf16.xpose.msra.mxu0 0
    %6707 = vmatprep.subr.bf16.mxu0 0
    %6708 = vmatpush1.bf16.xpose.msra.mxu0 0
    %6709 = vmatprep.mubr.bf16.mxu0 0
    %6710 = vmatmul.mubr.bf16.gmra.mrb[0].mxu0 %v6661
    %v6711 = vpop.f32.mrb[0].mxu0
    %v6712 = vadd.f32 0.0, %v6711
    %v6713 = vpop.f32.mrb[0].mxu0
    %v6714 = vpop.f32.mrb[0].mxu0
    %v6715 = vpop.f32.mrb[0].mxu0
    %6716 = vdwg.mxu0
    %6717 = vmatprep.subr.bf16.mxu0 0
    %6718 = vmatpush1.bf16.xpose.msra.mxu0 %v6669
    %6719 = vmatprep.subr.bf16.mxu0 0
    %6720 = vmatpush1.bf16.xpose.msra.mxu0 0
    %6721 = vmatprep.subr.bf16.mxu0 0
    %6722 = vmatpush1.bf16.xpose.msra.mxu0 0
    %6723 = vmatprep.subr.bf16.mxu0 0
    %6724 = vmatpush1.bf16.xpose.msra.mxu0 0
    %6725 = vmatprep.subr.bf16.mxu0 0
    %6726 = vmatpush1.bf16.xpose.msra.mxu0 0
    %6727 = vmatprep.subr.bf16.mxu0 0
    %6728 = vmatpush1.bf16.xpose.msra.mxu0 0
    %6729 = vmatprep.subr.bf16.mxu0 0
    %6730 = vmatpush1.bf16.xpose.msra.mxu0 0
    %6731 = vmatprep.subr.bf16.mxu0 0
    %6732 = vmatpush1.bf16.xpose.msra.mxu0 0
    %6733 = vmatprep.subr.bf16.mxu0 0
    %6734 = vmatpush1.bf16.xpose.msra.mxu0 0
    %6735 = vmatprep.subr.bf16.mxu0 0
    %6736 = vmatpush1.bf16.xpose.msra.mxu0 0
    %6737 = vmatprep.subr.bf16.mxu0 0
    %6738 = vmatpush1.bf16.xpose.msra.mxu0 0
    %6739 = vmatprep.subr.bf16.mxu0 0
    %6740 = vmatpush1.bf16.xpose.msra.mxu0 0
    %6741 = vmatprep.subr.bf16.mxu0 0
    %6742 = vmatpush1.bf16.xpose.msra.mxu0 0
    %6743 = vmatprep.subr.bf16.mxu0 0
    %6744 = vmatpush1.bf16.xpose.msra.mxu0 0
    %6745 = vmatprep.subr.bf16.mxu0 0
    %6746 = vmatpush1.bf16.xpose.msra.mxu0 0
    %6747 = vmatprep.subr.bf16.mxu0 0
    %6748 = vmatpush1.bf16.xpose.msra.mxu0 0
    %6749 = vmatprep.mubr.bf16.mxu0 0
    %6750 = vmatmul.mubr.bf16.gmra.mrb[0].mxu0 %v6662
    %v6751 = vpop.f32.mrb[0].mxu0
    %v6752 = vadd.f32 0.0, %v6751
    %v6753 = vpop.f32.mrb[0].mxu0
    %v6754 = vpop.f32.mrb[0].mxu0
    %v6755 = vpop.f32.mrb[0].mxu0
    %6756 = vdwg.mxu0
    %v6757 = vsel %vm1292, %v6712, -inf
    %6758 = vmax.xlane.f32.xlu0 %v6757
    %v6759 = vpop.xlane.xlu0 %6758
    %v6760 = vsel %vm1292, %v6752, -inf
    %6761 = vmax.xlane.f32.xlu0 %v6760
    %v6762 = vpop.xlane.xlu0 %6761
    %v6763 = vsub.f32 %v6712, %v6759
    %v6764 = vsub.f32 %v6752, %v6762
    %v6765 = vmul.f32 %v6763, 1.442695
    %v6766 = vpow.pop %v6765
    %v6767 = vmul.f32 %v6764, 1.442695
    %v6768 = vpow.pop %v6767
    %v6769 = vsel %vm1292, %v6766, 0.0
    %6770 = vadd.xlane.f32.xlu0 %v6769
    %v6771 = vpop.xlane.xlu0 %6770
    %v6772 = vsel %vm1292, %v6768, 0.0
    %6773 = vadd.xlane.f32.xlu0 %v6772
    %v6774 = vpop.xlane.xlu0 %6773
    %v6775 = vrcp.pop %v6771
    %v6776 = vrcp.pop %v6774
    %v6777 = vmul.f32 %v6766, %v6775
    %v6778 = vmul.f32 %v6768, %v6776
    %v6779 = vpack.c.bf16 %v6777, %v6777
    %v6780 = vpack.c.bf16 %v6778, %v6778
    %v6782 = vsel %vm1292, %v6779, 0
    %v6785 = vsel %vm1320, %v6675, 0
    %6787 = vmatprep.subr.bf16.mxu0 0
    %6788 = vmatpush1.bf16.msra.mxu0 %v6785
    %6789 = vmatprep.subr.bf16.mxu0 0
    %6790 = vmatpush1.bf16.msra.mxu0 0
    %6791 = vmatprep.subr.bf16.mxu0 0
    %6792 = vmatpush1.bf16.msra.mxu0 0
    %6793 = vmatprep.subr.bf16.mxu0 0
    %6794 = vmatpush1.bf16.msra.mxu0 0
    %6795 = vmatprep.subr.bf16.mxu0 0
    %6796 = vmatpush1.bf16.msra.mxu0 0
    %6797 = vmatprep.subr.bf16.mxu0 0
    %6798 = vmatpush1.bf16.msra.mxu0 0
    %6799 = vmatprep.subr.bf16.mxu0 0
    %6800 = vmatpush1.bf16.msra.mxu0 0
    %6801 = vmatprep.subr.bf16.mxu0 0
    %6802 = vmatpush1.bf16.msra.mxu0 0
    %6803 = vmatprep.subr.bf16.mxu0 0
    %6804 = vmatpush1.bf16.msra.mxu0 0
    %6805 = vmatprep.subr.bf16.mxu0 0
    %6806 = vmatpush1.bf16.msra.mxu0 0
    %6807 = vmatprep.subr.bf16.mxu0 0
    %6808 = vmatpush1.bf16.msra.mxu0 0
    %6809 = vmatprep.subr.bf16.mxu0 0
    %6810 = vmatpush1.bf16.msra.mxu0 0
    %6811 = vmatprep.subr.bf16.mxu0 0
    %6812 = vmatpush1.bf16.msra.mxu0 0
    %6813 = vmatprep.subr.bf16.mxu0 0
    %6814 = vmatpush1.bf16.msra.mxu0 0
    %6815 = vmatprep.subr.bf16.mxu0 0
    %6816 = vmatpush1.bf16.msra.mxu0 0
    %6817 = vmatprep.subr.bf16.mxu0 0
    %6818 = vmatpush1.bf16.msra.mxu0 0
    %6819 = vmatprep.mubr.bf16.mxu0 0
    %6820 = vmatmul.mubr.bf16.gmra.mrb[0].mxu0 %v6782
    %v6821 = vpop.f32.mrb[0].mxu0
    %v6822 = vadd.f32 0.0, %v6821
    %v6823 = vpop.f32.mrb[0].mxu0
    %v6824 = vpop.f32.mrb[0].mxu0
    %v6825 = vpop.f32.mrb[0].mxu0
    %6826 = vdwg.mxu0
    %v6828 = vsel %vm1292, %v6780, 0
    %v6831 = vsel %vm1320, %v6676, 0
    %6833 = vmatprep.subr.bf16.mxu0 0
    %6834 = vmatpush1.bf16.msra.mxu0 %v6831
    %6835 = vmatprep.subr.bf16.mxu0 0
    %6836 = vmatpush1.bf16.msra.mxu0 0
    %6837 = vmatprep.subr.bf16.mxu0 0
    %6838 = vmatpush1.bf16.msra.mxu0 0
    %6839 = vmatprep.subr.bf16.mxu0 0
    %6840 = vmatpush1.bf16.msra.mxu0 0
    %6841 = vmatprep.subr.bf16.mxu0 0
    %6842 = vmatpush1.bf16.msra.mxu0 0
    %6843 = vmatprep.subr.bf16.mxu0 0
    %6844 = vmatpush1.bf16.msra.mxu0 0
    %6845 = vmatprep.subr.bf16.mxu0 0
    %6846 = vmatpush1.bf16.msra.mxu0 0
    %6847 = vmatprep.subr.bf16.mxu0 0
    %6848 = vmatpush1.bf16.msra.mxu0 0
    %6849 = vmatprep.subr.bf16.mxu0 0
    %6850 = vmatpush1.bf16.msra.mxu0 0
    %6851 = vmatprep.subr.bf16.mxu0 0
    %6852 = vmatpush1.bf16.msra.mxu0 0
    %6853 = vmatprep.subr.bf16.mxu0 0
    %6854 = vmatpush1.bf16.msra.mxu0 0
    %6855 = vmatprep.subr.bf16.mxu0 0
    %6856 = vmatpush1.bf16.msra.mxu0 0
    %6857 = vmatprep.subr.bf16.mxu0 0
    %6858 = vmatpush1.bf16.msra.mxu0 0
    %6859 = vmatprep.subr.bf16.mxu0 0
    %6860 = vmatpush1.bf16.msra.mxu0 0
    %6861 = vmatprep.subr.bf16.mxu0 0
    %6862 = vmatpush1.bf16.msra.mxu0 0
    %6863 = vmatprep.subr.bf16.mxu0 0
    %6864 = vmatpush1.bf16.msra.mxu0 0
    %6865 = vmatprep.mubr.bf16.mxu0 0
    %6866 = vmatmul.mubr.bf16.gmra.mrb[0].mxu0 %v6828
    %v6867 = vpop.f32.mrb[0].mxu0
    %v6868 = vadd.f32 0.0, %v6867
    %v6869 = vpop.f32.mrb[0].mxu0
    %v6870 = vpop.f32.mrb[0].mxu0
    %v6871 = vpop.f32.mrb[0].mxu0
    %6872 = vdwg.mxu0
    %v6873 = vpack.c.bf16 %v6223, %v6177
    %v6874 = vpack.c.bf16 %v6438, %v6392
    %v6875 = vpack.c.bf16 %v6653, %v6607
    %v6876 = vpack.c.bf16 %v6868, %v6822
    %s6877 = scalar_lea.vmem [#allocation7], 256
    %v6878 = vld [vmem:[%s6877] sm:$0xf]
    %v6879 = vld [vmem:[%s6877 + $0x4] sm:$0xf]
    %v6880 = vld [vmem:[%s6877 + $0x8] sm:$0xf]
    %v6881 = vld [vmem:[%s6877 + $0xc] sm:$0xf]
    %v6882 = vld [vmem:[%s6877 + $0x10] sm:$0xf]
    %v6883 = vld [vmem:[%s6877 + $0x14] sm:$0xf]
    %v6884 = vld [vmem:[%s6877 + $0x18] sm:$0xf]
    %v6885 = vld [vmem:[%s6877 + $0x1c] sm:$0xf]
    %v6886 = vld [vmem:[%s6877 + $0x20] sm:$0xf]
    %v6887 = vld [vmem:[%s6877 + $0x24] sm:$0xf]
    %v6888 = vld [vmem:[%s6877 + $0x28] sm:$0xf]
    %v6889 = vld [vmem:[%s6877 + $0x2c] sm:$0xf]
    %v6890 = vld [vmem:[%s6877 + $0x30] sm:$0xf]
    %v6891 = vld [vmem:[%s6877 + $0x34] sm:$0xf]
    %v6892 = vld [vmem:[%s6877 + $0x38] sm:$0xf]
    %v6893 = vld [vmem:[%s6877 + $0x3c] sm:$0xf]
    %v6894 = vld [vmem:[%s6877 + $0x40] sm:$0xf]
    %v6895 = vld [vmem:[%s6877 + $0x44] sm:$0xf]
    %v6896 = vld [vmem:[%s6877 + $0x48] sm:$0xf]
    %v6897 = vld [vmem:[%s6877 + $0x4c] sm:$0xf]
    %v6898 = vld [vmem:[%s6877 + $0x50] sm:$0xf]
    %v6899 = vld [vmem:[%s6877 + $0x54] sm:$0xf]
    %v6900 = vld [vmem:[%s6877 + $0x58] sm:$0xf]
    %v6901 = vld [vmem:[%s6877 + $0x5c] sm:$0xf]
    %v6902 = vld [vmem:[%s6877 + $0x60] sm:$0xf]
    %v6903 = vld [vmem:[%s6877 + $0x64] sm:$0xf]
    %v6904 = vld [vmem:[%s6877 + $0x68] sm:$0xf]
    %v6905 = vld [vmem:[%s6877 + $0x6c] sm:$0xf]
    %v6906 = vld [vmem:[%s6877 + $0x70] sm:$0xf]
    %v6907 = vld [vmem:[%s6877 + $0x74] sm:$0xf]
    %v6908 = vld [vmem:[%s6877 + $0x78] sm:$0xf]
    %v6909 = vld [vmem:[%s6877 + $0x7c] sm:$0xf]
    %v6910 = vld [vmem:[%s6877 + $0x80] sm:$0xf]
    %v6911 = vld [vmem:[%s6877 + $0x84] sm:$0xf]
    %v6912 = vld [vmem:[%s6877 + $0x88] sm:$0xf]
    %v6913 = vld [vmem:[%s6877 + $0x8c] sm:$0xf]
    %v6914 = vld [vmem:[%s6877 + $0x90] sm:$0xf]
    %v6915 = vld [vmem:[%s6877 + $0x94] sm:$0xf]
    %v6916 = vld [vmem:[%s6877 + $0x98] sm:$0xf]
    %v6917 = vld [vmem:[%s6877 + $0x9c] sm:$0xf]
    %v6918 = vld [vmem:[%s6877 + $0xa0] sm:$0xf]
    %v6919 = vld [vmem:[%s6877 + $0xa4] sm:$0xf]
    %v6920 = vld [vmem:[%s6877 + $0xa8] sm:$0xf]
    %v6921 = vld [vmem:[%s6877 + $0xac] sm:$0xf]
    %v6922 = vld [vmem:[%s6877 + $0xb0] sm:$0xf]
    %v6923 = vld [vmem:[%s6877 + $0xb4] sm:$0xf]
    %v6924 = vld [vmem:[%s6877 + $0xb8] sm:$0xf]
    %v6925 = vld [vmem:[%s6877 + $0xbc] sm:$0xf]
    %v6926 = vld [vmem:[%s6877 + $0xc0] sm:$0xf]
    %v6927 = vld [vmem:[%s6877 + $0xc4] sm:$0xf]
    %v6928 = vld [vmem:[%s6877 + $0xc8] sm:$0xf]
    %v6929 = vld [vmem:[%s6877 + $0xcc] sm:$0xf]
    %v6930 = vld [vmem:[%s6877 + $0xd0] sm:$0xf]
    %v6931 = vld [vmem:[%s6877 + $0xd4] sm:$0xf]
    %v6932 = vld [vmem:[%s6877 + $0xd8] sm:$0xf]
    %v6933 = vld [vmem:[%s6877 + $0xdc] sm:$0xf]
    %v6934 = vld [vmem:[%s6877 + $0xe0] sm:$0xf]
    %v6935 = vld [vmem:[%s6877 + $0xe4] sm:$0xf]
    %v6936 = vld [vmem:[%s6877 + $0xe8] sm:$0xf]
    %v6937 = vld [vmem:[%s6877 + $0xec] sm:$0xf]
    %v6938 = vld [vmem:[%s6877 + $0xf0] sm:$0xf]
    %v6939 = vld [vmem:[%s6877 + $0xf4] sm:$0xf]
    %v6940 = vld [vmem:[%s6877 + $0xf8] sm:$0xf]
    %v6941 = vld [vmem:[%s6877 + $0xfc] sm:$0xf]
    %s6942 = scalar_lea.vmem %s6, 1
    %v6943 = vld [vmem:[%s6942] sm:$0x1]
    %v6945 = vlaneseq
    %v6946 = vshrl.u32 %v6945, 7
    %v6947 = vsub.s32 0, %v6946
    %v6948 = vrot.slane %v6943, %v6947
    %v7014 = vunpack.c.l.b16 %v6878
    %v7015 = vunpack.c.l.b16 %v6879
    %v7016 = vunpack.c.l.b16 %v6880
    %v7017 = vunpack.c.l.b16 %v6881
    %v7018 = vunpack.c.l.b16 %v6882
    %v7019 = vunpack.c.l.b16 %v6883
    %v7020 = vunpack.c.l.b16 %v6884
    %v7021 = vunpack.c.l.b16 %v6885
    %v7022 = vunpack.c.l.b16 %v6886
    %v7023 = vunpack.c.l.b16 %v6887
    %v7024 = vunpack.c.l.b16 %v6888
    %v7025 = vunpack.c.l.b16 %v6889
    %v7026 = vunpack.c.l.b16 %v6890
    %v7027 = vunpack.c.l.b16 %v6891
    %v7028 = vunpack.c.l.b16 %v6892
    %v7029 = vunpack.c.l.b16 %v6893
    %v7030 = vunpack.c.l.b16 %v6894
    %v7031 = vunpack.c.l.b16 %v6895
    %v7032 = vunpack.c.l.b16 %v6896
    %v7033 = vunpack.c.l.b16 %v6897
    %v7034 = vunpack.c.l.b16 %v6898
    %v7035 = vunpack.c.l.b16 %v6899
    %v7036 = vunpack.c.l.b16 %v6900
    %v7037 = vunpack.c.l.b16 %v6901
    %v7038 = vunpack.c.l.b16 %v6902
    %v7039 = vunpack.c.l.b16 %v6903
    %v7040 = vunpack.c.l.b16 %v6904
    %v7041 = vunpack.c.l.b16 %v6905
    %v7042 = vunpack.c.l.b16 %v6906
    %v7043 = vunpack.c.l.b16 %v6907
    %v7044 = vunpack.c.l.b16 %v6908
    %v7045 = vunpack.c.l.b16 %v6909
    %v7046 = vunpack.c.l.b16 %v6910
    %v7047 = vunpack.c.l.b16 %v6911
    %v7048 = vunpack.c.l.b16 %v6912
    %v7049 = vunpack.c.l.b16 %v6913
    %v7050 = vunpack.c.l.b16 %v6914
    %v7051 = vunpack.c.l.b16 %v6915
    %v7052 = vunpack.c.l.b16 %v6916
    %v7053 = vunpack.c.l.b16 %v6917
    %v7054 = vunpack.c.l.b16 %v6918
    %v7055 = vunpack.c.l.b16 %v6919
    %v7056 = vunpack.c.l.b16 %v6920
    %v7057 = vunpack.c.l.b16 %v6921
    %v7058 = vunpack.c.l.b16 %v6922
    %v7059 = vunpack.c.l.b16 %v6923
    %v7060 = vunpack.c.l.b16 %v6924
    %v7061 = vunpack.c.l.b16 %v6925
    %v7062 = vunpack.c.l.b16 %v6926
    %v7063 = vunpack.c.l.b16 %v6927
    %v7064 = vunpack.c.l.b16 %v6928
    %v7065 = vunpack.c.l.b16 %v6929
    %v7066 = vunpack.c.l.b16 %v6930
    %v7067 = vunpack.c.l.b16 %v6931
    %v7068 = vunpack.c.l.b16 %v6932
    %v7069 = vunpack.c.l.b16 %v6933
    %v7070 = vunpack.c.l.b16 %v6934
    %v7071 = vunpack.c.l.b16 %v6935
    %v7072 = vunpack.c.l.b16 %v6936
    %v7073 = vunpack.c.l.b16 %v6937
    %v7074 = vunpack.c.l.b16 %v6938
    %v7075 = vunpack.c.l.b16 %v6939
    %v7076 = vunpack.c.l.b16 %v6940
    %v7077 = vunpack.c.l.b16 %v6941
    %v7078 = vpack.c.b16 %v7015, %v7014
    %v7079 = vpack.c.b16 %v7017, %v7016
    %v7080 = vpack.c.b16 %v7019, %v7018
    %v7081 = vpack.c.b16 %v7021, %v7020
    %v7082 = vpack.c.b16 %v7023, %v7022
    %v7083 = vpack.c.b16 %v7025, %v7024
    %v7084 = vpack.c.b16 %v7027, %v7026
    %v7085 = vpack.c.b16 %v7029, %v7028
    %v7086 = vpack.c.b16 %v7031, %v7030
    %v7087 = vpack.c.b16 %v7033, %v7032
    %v7088 = vpack.c.b16 %v7035, %v7034
    %v7089 = vpack.c.b16 %v7037, %v7036
    %v7090 = vpack.c.b16 %v7039, %v7038
    %v7091 = vpack.c.b16 %v7041, %v7040
    %v7092 = vpack.c.b16 %v7043, %v7042
    %v7093 = vpack.c.b16 %v7045, %v7044
    %v7094 = vpack.c.b16 %v7047, %v7046
    %v7095 = vpack.c.b16 %v7049, %v7048
    %v7096 = vpack.c.b16 %v7051, %v7050
    %v7097 = vpack.c.b16 %v7053, %v7052
    %v7098 = vpack.c.b16 %v7055, %v7054
    %v7099 = vpack.c.b16 %v7057, %v7056
    %v7100 = vpack.c.b16 %v7059, %v7058
    %v7101 = vpack.c.b16 %v7061, %v7060
    %v7102 = vpack.c.b16 %v7063, %v7062
    %v7103 = vpack.c.b16 %v7065, %v7064
    %v7104 = vpack.c.b16 %v7067, %v7066
    %v7105 = vpack.c.b16 %v7069, %v7068
    %v7106 = vpack.c.b16 %v7071, %v7070
    %v7107 = vpack.c.b16 %v7073, %v7072
    %v7108 = vpack.c.b16 %v7075, %v7074
    %v7109 = vpack.c.b16 %v7077, %v7076
    %7142 = vmatprep.subr.bf16.mxu0 0
    %7143 = vmatpush1.bf16.msra.mxu0 %v7078
    %7144 = vmatprep.subr.bf16.mxu0 0
    %7145 = vmatpush1.bf16.msra.mxu0 %v7079
    %7146 = vmatprep.subr.bf16.mxu0 0
    %7147 = vmatpush1.bf16.msra.mxu0 %v7080
    %7148 = vmatprep.subr.bf16.mxu0 0
    %7149 = vmatpush1.bf16.msra.mxu0 %v7081
    %7150 = vmatprep.subr.bf16.mxu0 0
    %7151 = vmatpush1.bf16.msra.mxu0 %v7082
    %7152 = vmatprep.subr.bf16.mxu0 0
    %7153 = vmatpush1.bf16.msra.mxu0 %v7083
    %7154 = vmatprep.subr.bf16.mxu0 0
    %7155 = vmatpush1.bf16.msra.mxu0 %v7084
    %7156 = vmatprep.subr.bf16.mxu0 0
    %7157 = vmatpush1.bf16.msra.mxu0 %v7085
    %7158 = vmatprep.subr.bf16.mxu0 0
    %7159 = vmatpush1.bf16.msra.mxu0 %v7086
    %7160 = vmatprep.subr.bf16.mxu0 0
    %7161 = vmatpush1.bf16.msra.mxu0 %v7087
    %7162 = vmatprep.subr.bf16.mxu0 0
    %7163 = vmatpush1.bf16.msra.mxu0 %v7088
    %7164 = vmatprep.subr.bf16.mxu0 0
    %7165 = vmatpush1.bf16.msra.mxu0 %v7089
    %7166 = vmatprep.subr.bf16.mxu0 0
    %7167 = vmatpush1.bf16.msra.mxu0 %v7090
    %7168 = vmatprep.subr.bf16.mxu0 0
    %7169 = vmatpush1.bf16.msra.mxu0 %v7091
    %7170 = vmatprep.subr.bf16.mxu0 0
    %7171 = vmatpush1.bf16.msra.mxu0 %v7092
    %7172 = vmatprep.subr.bf16.mxu0 0
    %7173 = vmatpush1.bf16.msra.mxu0 %v7093
    %7174 = vmatprep.mubr.bf16.mxu0 %v6874
    %7175 = vmatmul.mubr.bf16.gmra.mrb[0].mxu0 %v6873
    %v7176 = vpop.f32.mrb[0].mxu0
    %v7177 = vadd.f32 %v6948, %v7176
    %v7178 = vpop.f32.mrb[0].mxu0
    %v7179 = vpop.f32.mrb[0].mxu0
    %v7180 = vadd.f32 %v6948, %v7179
    %v7181 = vpop.f32.mrb[0].mxu0
    %7182 = vdwg.mxu0
    %7183 = vmatprep.subr.bf16.mxu0 0
    %7184 = vmatpush1.bf16.msra.mxu0 %v7094
    %7185 = vmatprep.subr.bf16.mxu0 0
    %7186 = vmatpush1.bf16.msra.mxu0 %v7095
    %7187 = vmatprep.subr.bf16.mxu0 0
    %7188 = vmatpush1.bf16.msra.mxu0 %v7096
    %7189 = vmatprep.subr.bf16.mxu0 0
    %7190 = vmatpush1.bf16.msra.mxu0 %v7097
    %7191 = vmatprep.subr.bf16.mxu0 0
    %7192 = vmatpush1.bf16.msra.mxu0 %v7098
    %7193 = vmatprep.subr.bf16.mxu0 0
    %7194 = vmatpush1.bf16.msra.mxu0 %v7099
    %7195 = vmatprep.subr.bf16.mxu0 0
    %7196 = vmatpush1.bf16.msra.mxu0 %v7100
    %7197 = vmatprep.subr.bf16.mxu0 0
    %7198 = vmatpush1.bf16.msra.mxu0 %v7101
    %7199 = vmatprep.subr.bf16.mxu0 0
    %7200 = vmatpush1.bf16.msra.mxu0 %v7102
    %7201 = vmatprep.subr.bf16.mxu0 0
    %7202 = vmatpush1.bf16.msra.mxu0 %v7103
    %7203 = vmatprep.subr.bf16.mxu0 0
    %7204 = vmatpush1.bf16.msra.mxu0 %v7104
    %7205 = vmatprep.subr.bf16.mxu0 0
    %7206 = vmatpush1.bf16.msra.mxu0 %v7105
    %7207 = vmatprep.subr.bf16.mxu0 0
    %7208 = vmatpush1.bf16.msra.mxu0 %v7106
    %7209 = vmatprep.subr.bf16.mxu0 0
    %7210 = vmatpush1.bf16.msra.mxu0 %v7107
    %7211 = vmatprep.subr.bf16.mxu0 0
    %7212 = vmatpush1.bf16.msra.mxu0 %v7108
    %7213 = vmatprep.subr.bf16.mxu0 0
    %7214 = vmatpush1.bf16.msra.mxu0 %v7109
    %7215 = vmatprep.mubr.bf16.mxu0 %v6876
    %7216 = vmatmul.mubr.bf16.gmra.mrb[0].mxu0 %v6875
    %v7217 = vpop.f32.mrb[0].mxu0
    %v7218 = vadd.f32 %v7177, %v7217
    %v7219 = vpop.f32.mrb[0].mxu0
    %v7220 = vpop.f32.mrb[0].mxu0
    %v7221 = vadd.f32 %v7180, %v7220
    %v7222 = vpop.f32.mrb[0].mxu0
    %7223 = vdwg.mxu0
    %v7224 = vadd.f32 %v5098, %v7218
    %v7225 = vadd.f32 %v5099, %v7221
    %s7226 = scalar_lea.vmem %s11, 1
    %v7227 = vld [vmem:[%s7226] sm:$0x1]
    %s7228 = scalar_lea.vmem %s12, 1
    %v7229 = vld [vmem:[%s7228] sm:$0x1]
    %7230 = vadd.xlane.f32.xlu0 %v7224
    %v7231 = vpop.xlane.xlu0 %7230
    %7232 = vadd.xlane.f32.xlu0 %v7225
    %v7233 = vpop.xlane.xlu0 %7232
    %v7234 = vmul.f32 %v7231, 0.03125
    %v7235 = vmul.f32 %v7233, 0.03125
    %v7236 = vmul.f32 %v7224, %v7224
    %v7237 = vmul.f32 %v7225, %v7225
    %7238 = vadd.xlane.f32.xlu0 %v7236
    %v7239 = vpop.xlane.xlu0 %7238
    %7240 = vadd.xlane.f32.xlu0 %v7237
    %v7241 = vpop.xlane.xlu0 %7240
    %v7242 = vmul.f32 %v7239, 0.03125
    %v7243 = vmul.f32 %v7241, 0.03125
    %v7244 = vmul.f32 %v7234, %v7234
    %v7245 = vmul.f32 %v7235, %v7235
    %v7246 = vsub.f32 %v7242, %v7244
    %v7247 = vsub.f32 %v7243, %v7245
    %v7248 = vsub.f32 %v7224, %v7234
    %v7249 = vsub.f32 %v7225, %v7235
    %v7250 = vadd.f32 %v7246, 1e-05
    %v7251 = vadd.f32 %v7247, 1e-05
    %v7252 = vrsqrt.pop %v7250
    %v7253 = vrsqrt.pop %v7251
    %v7254 = vmul.f32 %v7248, %v7252
    %v7255 = vmul.f32 %v7249, %v7253
    %v7257 = vlaneseq
    %v7258 = vshrl.u32 %v7257, 7
    %v7259 = vsub.s32 0, %v7258
    %v7260 = vrot.slane %v7227, %v7259
    %v7262 = vmul.f32 %v7254, %v7260
    %v7263 = vmul.f32 %v7255, %v7260
    %v7265 = vlaneseq
    %v7266 = vshrl.u32 %v7265, 7
    %v7267 = vsub.s32 0, %v7266
    %v7268 = vrot.slane %v7229, %v7267
    %v7270 = vadd.f32 %v7262, %v7268
    %v7271 = vadd.f32 %v7263, %v7268
    %v7272 = vpack.c.bf16 %v7271, %v7270
    %s7273 = scalar_lea.vmem [#allocation9], 1024
    %v7274 = vld [vmem:[%s7273] sm:$0xff]
    %v7275 = vld [vmem:[%s7273 + $0x8] sm:$0xff]
    %v7276 = vld [vmem:[%s7273 + $0x10] sm:$0xff]
    %v7277 = vld [vmem:[%s7273 + $0x18] sm:$0xff]
    %v7278 = vld [vmem:[%s7273 + $0x20] sm:$0xff]
    %v7279 = vld [vmem:[%s7273 + $0x28] sm:$0xff]
    %v7280 = vld [vmem:[%s7273 + $0x30] sm:$0xff]
    %v7281 = vld [vmem:[%s7273 + $0x38] sm:$0xff]
    %v7282 = vld [vmem:[%s7273 + $0x40] sm:$0xff]
    %v7283 = vld [vmem:[%s7273 + $0x48] sm:$0xff]
    %v7284 = vld [vmem:[%s7273 + $0x50] sm:$0xff]
    %v7285 = vld [vmem:[%s7273 + $0x58] sm:$0xff]
    %v7286 = vld [vmem:[%s7273 + $0x60] sm:$0xff]
    %v7287 = vld [vmem:[%s7273 + $0x68] sm:$0xff]
    %v7288 = vld [vmem:[%s7273 + $0x70] sm:$0xff]
    %v7289 = vld [vmem:[%s7273 + $0x78] sm:$0xff]
    %v7290 = vld [vmem:[%s7273 + $0x80] sm:$0xff]
    %v7291 = vld [vmem:[%s7273 + $0x88] sm:$0xff]
    %v7292 = vld [vmem:[%s7273 + $0x90] sm:$0xff]
    %v7293 = vld [vmem:[%s7273 + $0x98] sm:$0xff]
    %v7294 = vld [vmem:[%s7273 + $0xa0] sm:$0xff]
    %v7295 = vld [vmem:[%s7273 + $0xa8] sm:$0xff]
    %v7296 = vld [vmem:[%s7273 + $0xb0] sm:$0xff]
    %v7297 = vld [vmem:[%s7273 + $0xb8] sm:$0xff]
    %v7298 = vld [vmem:[%s7273 + $0xc0] sm:$0xff]
    %v7299 = vld [vmem:[%s7273 + $0xc8] sm:$0xff]
    %v7300 = vld [vmem:[%s7273 + $0xd0] sm:$0xff]
    %v7301 = vld [vmem:[%s7273 + $0xd8] sm:$0xff]
    %v7302 = vld [vmem:[%s7273 + $0xe0] sm:$0xff]
    %v7303 = vld [vmem:[%s7273 + $0xe8] sm:$0xff]
    %v7304 = vld [vmem:[%s7273 + $0xf0] sm:$0xff]
    %v7305 = vld [vmem:[%s7273 + $0xf8] sm:$0xff]
    %v7306 = vld [vmem:[%s7273 + $0x100] sm:$0xff]
    %v7307 = vld [vmem:[%s7273 + $0x108] sm:$0xff]
    %v7308 = vld [vmem:[%s7273 + $0x110] sm:$0xff]
    %v7309 = vld [vmem:[%s7273 + $0x118] sm:$0xff]
    %v7310 = vld [vmem:[%s7273 + $0x120] sm:$0xff]
    %v7311 = vld [vmem:[%s7273 + $0x128] sm:$0xff]
    %v7312 = vld [vmem:[%s7273 + $0x130] sm:$0xff]
    %v7313 = vld [vmem:[%s7273 + $0x138] sm:$0xff]
    %v7314 = vld [vmem:[%s7273 + $0x140] sm:$0xff]
    %v7315 = vld [vmem:[%s7273 + $0x148] sm:$0xff]
    %v7316 = vld [vmem:[%s7273 + $0x150] sm:$0xff]
    %v7317 = vld [vmem:[%s7273 + $0x158] sm:$0xff]
    %v7318 = vld [vmem:[%s7273 + $0x160] sm:$0xff]
    %v7319 = vld [vmem:[%s7273 + $0x168] sm:$0xff]
    %v7320 = vld [vmem:[%s7273 + $0x170] sm:$0xff]
    %v7321 = vld [vmem:[%s7273 + $0x178] sm:$0xff]
    %v7322 = vld [vmem:[%s7273 + $0x180] sm:$0xff]
    %v7323 = vld [vmem:[%s7273 + $0x188] sm:$0xff]
    %v7324 = vld [vmem:[%s7273 + $0x190] sm:$0xff]
    %v7325 = vld [vmem:[%s7273 + $0x198] sm:$0xff]
    %v7326 = vld [vmem:[%s7273 + $0x1a0] sm:$0xff]
    %v7327 = vld [vmem:[%s7273 + $0x1a8] sm:$0xff]
    %v7328 = vld [vmem:[%s7273 + $0x1b0] sm:$0xff]
    %v7329 = vld [vmem:[%s7273 + $0x1b8] sm:$0xff]
    %v7330 = vld [vmem:[%s7273 + $0x1c0] sm:$0xff]
    %v7331 = vld [vmem:[%s7273 + $0x1c8] sm:$0xff]
    %v7332 = vld [vmem:[%s7273 + $0x1d0] sm:$0xff]
    %v7333 = vld [vmem:[%s7273 + $0x1d8] sm:$0xff]
    %v7334 = vld [vmem:[%s7273 + $0x1e0] sm:$0xff]
    %v7335 = vld [vmem:[%s7273 + $0x1e8] sm:$0xff]
    %v7336 = vld [vmem:[%s7273 + $0x1f0] sm:$0xff]
    %v7337 = vld [vmem:[%s7273 + $0x1f8] sm:$0xff]
    %v7338 = vld [vmem:[%s7273 + $0x200] sm:$0xff]
    %v7339 = vld [vmem:[%s7273 + $0x208] sm:$0xff]
    %v7340 = vld [vmem:[%s7273 + $0x210] sm:$0xff]
    %v7341 = vld [vmem:[%s7273 + $0x218] sm:$0xff]
    %v7342 = vld [vmem:[%s7273 + $0x220] sm:$0xff]
    %v7343 = vld [vmem:[%s7273 + $0x228] sm:$0xff]
    %v7344 = vld [vmem:[%s7273 + $0x230] sm:$0xff]
    %v7345 = vld [vmem:[%s7273 + $0x238] sm:$0xff]
    %v7346 = vld [vmem:[%s7273 + $0x240] sm:$0xff]
    %v7347 = vld [vmem:[%s7273 + $0x248] sm:$0xff]
    %v7348 = vld [vmem:[%s7273 + $0x250] sm:$0xff]
    %v7349 = vld [vmem:[%s7273 + $0x258] sm:$0xff]
    %v7350 = vld [vmem:[%s7273 + $0x260] sm:$0xff]
    %v7351 = vld [vmem:[%s7273 + $0x268] sm:$0xff]
    %v7352 = vld [vmem:[%s7273 + $0x270] sm:$0xff]
    %v7353 = vld [vmem:[%s7273 + $0x278] sm:$0xff]
    %v7354 = vld [vmem:[%s7273 + $0x280] sm:$0xff]
    %v7355 = vld [vmem:[%s7273 + $0x288] sm:$0xff]
    %v7356 = vld [vmem:[%s7273 + $0x290] sm:$0xff]
    %v7357 = vld [vmem:[%s7273 + $0x298] sm:$0xff]
    %v7358 = vld [vmem:[%s7273 + $0x2a0] sm:$0xff]
    %v7359 = vld [vmem:[%s7273 + $0x2a8] sm:$0xff]
    %v7360 = vld [vmem:[%s7273 + $0x2b0] sm:$0xff]
    %v7361 = vld [vmem:[%s7273 + $0x2b8] sm:$0xff]
    %v7362 = vld [vmem:[%s7273 + $0x2c0] sm:$0xff]
    %v7363 = vld [vmem:[%s7273 + $0x2c8] sm:$0xff]
    %v7364 = vld [vmem:[%s7273 + $0x2d0] sm:$0xff]
    %v7365 = vld [vmem:[%s7273 + $0x2d8] sm:$0xff]
    %v7366 = vld [vmem:[%s7273 + $0x2e0] sm:$0xff]
    %v7367 = vld [vmem:[%s7273 + $0x2e8] sm:$0xff]
    %v7368 = vld [vmem:[%s7273 + $0x2f0] sm:$0xff]
    %v7369 = vld [vmem:[%s7273 + $0x2f8] sm:$0xff]
    %v7370 = vld [vmem:[%s7273 + $0x300] sm:$0xff]
    %v7371 = vld [vmem:[%s7273 + $0x308] sm:$0xff]
    %v7372 = vld [vmem:[%s7273 + $0x310] sm:$0xff]
    %v7373 = vld [vmem:[%s7273 + $0x318] sm:$0xff]
    %v7374 = vld [vmem:[%s7273 + $0x320] sm:$0xff]
    %v7375 = vld [vmem:[%s7273 + $0x328] sm:$0xff]
    %v7376 = vld [vmem:[%s7273 + $0x330] sm:$0xff]
    %v7377 = vld [vmem:[%s7273 + $0x338] sm:$0xff]
    %v7378 = vld [vmem:[%s7273 + $0x340] sm:$0xff]
    %v7379 = vld [vmem:[%s7273 + $0x348] sm:$0xff]
    %v7380 = vld [vmem:[%s7273 + $0x350] sm:$0xff]
    %v7381 = vld [vmem:[%s7273 + $0x358] sm:$0xff]
    %v7382 = vld [vmem:[%s7273 + $0x360] sm:$0xff]
    %v7383 = vld [vmem:[%s7273 + $0x368] sm:$0xff]
    %v7384 = vld [vmem:[%s7273 + $0x370] sm:$0xff]
    %v7385 = vld [vmem:[%s7273 + $0x378] sm:$0xff]
    %v7386 = vld [vmem:[%s7273 + $0x380] sm:$0xff]
    %v7387 = vld [vmem:[%s7273 + $0x388] sm:$0xff]
    %v7388 = vld [vmem:[%s7273 + $0x390] sm:$0xff]
    %v7389 = vld [vmem:[%s7273 + $0x398] sm:$0xff]
    %v7390 = vld [vmem:[%s7273 + $0x3a0] sm:$0xff]
    %v7391 = vld [vmem:[%s7273 + $0x3a8] sm:$0xff]
    %v7392 = vld [vmem:[%s7273 + $0x3b0] sm:$0xff]
    %v7393 = vld [vmem:[%s7273 + $0x3b8] sm:$0xff]
    %v7394 = vld [vmem:[%s7273 + $0x3c0] sm:$0xff]
    %v7395 = vld [vmem:[%s7273 + $0x3c8] sm:$0xff]
    %v7396 = vld [vmem:[%s7273 + $0x3d0] sm:$0xff]
    %v7397 = vld [vmem:[%s7273 + $0x3d8] sm:$0xff]
    %v7398 = vld [vmem:[%s7273 + $0x3e0] sm:$0xff]
    %v7399 = vld [vmem:[%s7273 + $0x3e8] sm:$0xff]
    %v7400 = vld [vmem:[%s7273 + $0x3f0] sm:$0xff]
    %v7401 = vld [vmem:[%s7273 + $0x3f8] sm:$0xff]
    %s7402 = scalar_lea.vmem %s8, 16
    %v7403 = vld [vmem:[%s7402] sm:$0xff]
    %v7404 = vld [vmem:[%s7402 + $0x8] sm:$0xff]
    %v7407 = vlaneseq
    %v7408 = vshrl.u32 %v7407, 7
    %v7409 = vsub.s32 0, %v7408
    %v7410 = vrot.slane %v7403, %v7409
    %v7411 = vlaneseq
    %v7412 = vshrl.u32 %v7411, 7
    %v7413 = vsub.s32 1, %v7412
    %v7414 = vrot.slane %v7403, %v7413
    %v7415 = vlaneseq
    %v7416 = vshrl.u32 %v7415, 7
    %v7417 = vsub.s32 2, %v7416
    %v7418 = vrot.slane %v7403, %v7417
    %v7419 = vlaneseq
    %v7420 = vshrl.u32 %v7419, 7
    %v7421 = vsub.s32 3, %v7420
    %v7422 = vrot.slane %v7403, %v7421
    %v7423 = vlaneseq
    %v7424 = vshrl.u32 %v7423, 7
    %v7425 = vsub.s32 4, %v7424
    %v7426 = vrot.slane %v7403, %v7425
    %v7427 = vlaneseq
    %v7428 = vshrl.u32 %v7427, 7
    %v7429 = vsub.s32 5, %v7428
    %v7430 = vrot.slane %v7403, %v7429
    %v7431 = vlaneseq
    %v7432 = vshrl.u32 %v7431, 7
    %v7433 = vsub.s32 6, %v7432
    %v7434 = vrot.slane %v7403, %v7433
    %v7435 = vlaneseq
    %v7436 = vshrl.u32 %v7435, 7
    %v7437 = vsub.s32 7, %v7436
    %v7438 = vrot.slane %v7403, %v7437
    %v7439 = vlaneseq
    %v7440 = vshrl.u32 %v7439, 7
    %v7441 = vsub.s32 0, %v7440
    %v7442 = vrot.slane %v7404, %v7441
    %v7443 = vlaneseq
    %v7444 = vshrl.u32 %v7443, 7
    %v7445 = vsub.s32 1, %v7444
    %v7446 = vrot.slane %v7404, %v7445
    %v7447 = vlaneseq
    %v7448 = vshrl.u32 %v7447, 7
    %v7449 = vsub.s32 2, %v7448
    %v7450 = vrot.slane %v7404, %v7449
    %v7451 = vlaneseq
    %v7452 = vshrl.u32 %v7451, 7
    %v7453 = vsub.s32 3, %v7452
    %v7454 = vrot.slane %v7404, %v7453
    %v7455 = vlaneseq
    %v7456 = vshrl.u32 %v7455, 7
    %v7457 = vsub.s32 4, %v7456
    %v7458 = vrot.slane %v7404, %v7457
    %v7459 = vlaneseq
    %v7460 = vshrl.u32 %v7459, 7
    %v7461 = vsub.s32 5, %v7460
    %v7462 = vrot.slane %v7404, %v7461
    %v7463 = vlaneseq
    %v7464 = vshrl.u32 %v7463, 7
    %v7465 = vsub.s32 6, %v7464
    %v7466 = vrot.slane %v7404, %v7465
    %v7467 = vlaneseq
    %v7468 = vshrl.u32 %v7467, 7
    %v7469 = vsub.s32 7, %v7468
    %v7470 = vrot.slane %v7404, %v7469
    %v7615 = vunpack.c.l.b16 %v7274
    %v7616 = vunpack.c.h.b16 %v7274
    %v7617 = vunpack.c.l.b16 %v7275
    %v7618 = vunpack.c.h.b16 %v7275
    %v7619 = vunpack.c.l.b16 %v7276
    %v7620 = vunpack.c.h.b16 %v7276
    %v7621 = vunpack.c.l.b16 %v7277
    %v7622 = vunpack.c.h.b16 %v7277
    %v7623 = vunpack.c.l.b16 %v7278
    %v7624 = vunpack.c.h.b16 %v7278
    %v7625 = vunpack.c.l.b16 %v7279
    %v7626 = vunpack.c.h.b16 %v7279
    %v7627 = vunpack.c.l.b16 %v7280
    %v7628 = vunpack.c.h.b16 %v7280
    %v7629 = vunpack.c.l.b16 %v7281
    %v7630 = vunpack.c.h.b16 %v7281
    %v7631 = vunpack.c.l.b16 %v7282
    %v7632 = vunpack.c.h.b16 %v7282
    %v7633 = vunpack.c.l.b16 %v7283
    %v7634 = vunpack.c.h.b16 %v7283
    %v7635 = vunpack.c.l.b16 %v7284
    %v7636 = vunpack.c.h.b16 %v7284
    %v7637 = vunpack.c.l.b16 %v7285
    %v7638 = vunpack.c.h.b16 %v7285
    %v7639 = vunpack.c.l.b16 %v7286
    %v7640 = vunpack.c.h.b16 %v7286
    %v7641 = vunpack.c.l.b16 %v7287
    %v7642 = vunpack.c.h.b16 %v7287
    %v7643 = vunpack.c.l.b16 %v7288
    %v7644 = vunpack.c.h.b16 %v7288
    %v7645 = vunpack.c.l.b16 %v7289
    %v7646 = vunpack.c.h.b16 %v7289
    %v7647 = vunpack.c.l.b16 %v7290
    %v7648 = vunpack.c.h.b16 %v7290
    %v7649 = vunpack.c.l.b16 %v7291
    %v7650 = vunpack.c.h.b16 %v7291
    %v7651 = vunpack.c.l.b16 %v7292
    %v7652 = vunpack.c.h.b16 %v7292
    %v7653 = vunpack.c.l.b16 %v7293
    %v7654 = vunpack.c.h.b16 %v7293
    %v7655 = vunpack.c.l.b16 %v7294
    %v7656 = vunpack.c.h.b16 %v7294
    %v7657 = vunpack.c.l.b16 %v7295
    %v7658 = vunpack.c.h.b16 %v7295
    %v7659 = vunpack.c.l.b16 %v7296
    %v7660 = vunpack.c.h.b16 %v7296
    %v7661 = vunpack.c.l.b16 %v7297
    %v7662 = vunpack.c.h.b16 %v7297
    %v7663 = vunpack.c.l.b16 %v7298
    %v7664 = vunpack.c.h.b16 %v7298
    %v7665 = vunpack.c.l.b16 %v7299
    %v7666 = vunpack.c.h.b16 %v7299
    %v7667 = vunpack.c.l.b16 %v7300
    %v7668 = vunpack.c.h.b16 %v7300
    %v7669 = vunpack.c.l.b16 %v7301
    %v7670 = vunpack.c.h.b16 %v7301
    %v7671 = vunpack.c.l.b16 %v7302
    %v7672 = vunpack.c.h.b16 %v7302
    %v7673 = vunpack.c.l.b16 %v7303
    %v7674 = vunpack.c.h.b16 %v7303
    %v7675 = vunpack.c.l.b16 %v7304
    %v7676 = vunpack.c.h.b16 %v7304
    %v7677 = vunpack.c.l.b16 %v7305
    %v7678 = vunpack.c.h.b16 %v7305
    %v7679 = vunpack.c.l.b16 %v7306
    %v7680 = vunpack.c.h.b16 %v7306
    %v7681 = vunpack.c.l.b16 %v7307
    %v7682 = vunpack.c.h.b16 %v7307
    %v7683 = vunpack.c.l.b16 %v7308
    %v7684 = vunpack.c.h.b16 %v7308
    %v7685 = vunpack.c.l.b16 %v7309
    %v7686 = vunpack.c.h.b16 %v7309
    %v7687 = vunpack.c.l.b16 %v7310
    %v7688 = vunpack.c.h.b16 %v7310
    %v7689 = vunpack.c.l.b16 %v7311
    %v7690 = vunpack.c.h.b16 %v7311
    %v7691 = vunpack.c.l.b16 %v7312
    %v7692 = vunpack.c.h.b16 %v7312
    %v7693 = vunpack.c.l.b16 %v7313
    %v7694 = vunpack.c.h.b16 %v7313
    %v7695 = vunpack.c.l.b16 %v7314
    %v7696 = vunpack.c.h.b16 %v7314
    %v7697 = vunpack.c.l.b16 %v7315
    %v7698 = vunpack.c.h.b16 %v7315
    %v7699 = vunpack.c.l.b16 %v7316
    %v7700 = vunpack.c.h.b16 %v7316
    %v7701 = vunpack.c.l.b16 %v7317
    %v7702 = vunpack.c.h.b16 %v7317
    %v7703 = vunpack.c.l.b16 %v7318
    %v7704 = vunpack.c.h.b16 %v7318
    %v7705 = vunpack.c.l.b16 %v7319
    %v7706 = vunpack.c.h.b16 %v7319
    %v7707 = vunpack.c.l.b16 %v7320
    %v7708 = vunpack.c.h.b16 %v7320
    %v7709 = vunpack.c.l.b16 %v7321
    %v7710 = vunpack.c.h.b16 %v7321
    %v7711 = vunpack.c.l.b16 %v7322
    %v7712 = vunpack.c.h.b16 %v7322
    %v7713 = vunpack.c.l.b16 %v7323
    %v7714 = vunpack.c.h.b16 %v7323
    %v7715 = vunpack.c.l.b16 %v7324
    %v7716 = vunpack.c.h.b16 %v7324
    %v7717 = vunpack.c.l.b16 %v7325
    %v7718 = vunpack.c.h.b16 %v7325
    %v7719 = vunpack.c.l.b16 %v7326
    %v7720 = vunpack.c.h.b16 %v7326
    %v7721 = vunpack.c.l.b16 %v7327
    %v7722 = vunpack.c.h.b16 %v7327
    %v7723 = vunpack.c.l.b16 %v7328
    %v7724 = vunpack.c.h.b16 %v7328
    %v7725 = vunpack.c.l.b16 %v7329
    %v7726 = vunpack.c.h.b16 %v7329
    %v7727 = vunpack.c.l.b16 %v7330
    %v7728 = vunpack.c.h.b16 %v7330
    %v7729 = vunpack.c.l.b16 %v7331
    %v7730 = vunpack.c.h.b16 %v7331
    %v7731 = vunpack.c.l.b16 %v7332
    %v7732 = vunpack.c.h.b16 %v7332
    %v7733 = vunpack.c.l.b16 %v7333
    %v7734 = vunpack.c.h.b16 %v7333
    %v7735 = vunpack.c.l.b16 %v7334
    %v7736 = vunpack.c.h.b16 %v7334
    %v7737 = vunpack.c.l.b16 %v7335
    %v7738 = vunpack.c.h.b16 %v7335
    %v7739 = vunpack.c.l.b16 %v7336
    %v7740 = vunpack.c.h.b16 %v7336
    %v7741 = vunpack.c.l.b16 %v7337
    %v7742 = vunpack.c.h.b16 %v7337
    %v7743 = vunpack.c.l.b16 %v7338
    %v7744 = vunpack.c.h.b16 %v7338
    %v7745 = vunpack.c.l.b16 %v7339
    %v7746 = vunpack.c.h.b16 %v7339
    %v7747 = vunpack.c.l.b16 %v7340
    %v7748 = vunpack.c.h.b16 %v7340
    %v7749 = vunpack.c.l.b16 %v7341
    %v7750 = vunpack.c.h.b16 %v7341
    %v7751 = vunpack.c.l.b16 %v7342
    %v7752 = vunpack.c.h.b16 %v7342
    %v7753 = vunpack.c.l.b16 %v7343
    %v7754 = vunpack.c.h.b16 %v7343
    %v7755 = vunpack.c.l.b16 %v7344
    %v7756 = vunpack.c.h.b16 %v7344
    %v7757 = vunpack.c.l.b16 %v7345
    %v7758 = vunpack.c.h.b16 %v7345
    %v7759 = vunpack.c.l.b16 %v7346
    %v7760 = vunpack.c.h.b16 %v7346
    %v7761 = vunpack.c.l.b16 %v7347
    %v7762 = vunpack.c.h.b16 %v7347
    %v7763 = vunpack.c.l.b16 %v7348
    %v7764 = vunpack.c.h.b16 %v7348
    %v7765 = vunpack.c.l.b16 %v7349
    %v7766 = vunpack.c.h.b16 %v7349
    %v7767 = vunpack.c.l.b16 %v7350
    %v7768 = vunpack.c.h.b16 %v7350
    %v7769 = vunpack.c.l.b16 %v7351
    %v7770 = vunpack.c.h.b16 %v7351
    %v7771 = vunpack.c.l.b16 %v7352
    %v7772 = vunpack.c.h.b16 %v7352
    %v7773 = vunpack.c.l.b16 %v7353
    %v7774 = vunpack.c.h.b16 %v7353
    %v7775 = vunpack.c.l.b16 %v7354
    %v7776 = vunpack.c.h.b16 %v7354
    %v7777 = vunpack.c.l.b16 %v7355
    %v7778 = vunpack.c.h.b16 %v7355
    %v7779 = vunpack.c.l.b16 %v7356
    %v7780 = vunpack.c.h.b16 %v7356
    %v7781 = vunpack.c.l.b16 %v7357
    %v7782 = vunpack.c.h.b16 %v7357
    %v7783 = vunpack.c.l.b16 %v7358
    %v7784 = vunpack.c.h.b16 %v7358
    %v7785 = vunpack.c.l.b16 %v7359
    %v7786 = vunpack.c.h.b16 %v7359
    %v7787 = vunpack.c.l.b16 %v7360
    %v7788 = vunpack.c.h.b16 %v7360
    %v7789 = vunpack.c.l.b16 %v7361
    %v7790 = vunpack.c.h.b16 %v7361
    %v7791 = vunpack.c.l.b16 %v7362
    %v7792 = vunpack.c.h.b16 %v7362
    %v7793 = vunpack.c.l.b16 %v7363
    %v7794 = vunpack.c.h.b16 %v7363
    %v7795 = vunpack.c.l.b16 %v7364
    %v7796 = vunpack.c.h.b16 %v7364
    %v7797 = vunpack.c.l.b16 %v7365
    %v7798 = vunpack.c.h.b16 %v7365
    %v7799 = vunpack.c.l.b16 %v7366
    %v7800 = vunpack.c.h.b16 %v7366
    %v7801 = vunpack.c.l.b16 %v7367
    %v7802 = vunpack.c.h.b16 %v7367
    %v7803 = vunpack.c.l.b16 %v7368
    %v7804 = vunpack.c.h.b16 %v7368
    %v7805 = vunpack.c.l.b16 %v7369
    %v7806 = vunpack.c.h.b16 %v7369
    %v7807 = vunpack.c.l.b16 %v7370
    %v7808 = vunpack.c.h.b16 %v7370
    %v7809 = vunpack.c.l.b16 %v7371
    %v7810 = vunpack.c.h.b16 %v7371
    %v7811 = vunpack.c.l.b16 %v7372
    %v7812 = vunpack.c.h.b16 %v7372
    %v7813 = vunpack.c.l.b16 %v7373
    %v7814 = vunpack.c.h.b16 %v7373
    %v7815 = vunpack.c.l.b16 %v7374
    %v7816 = vunpack.c.h.b16 %v7374
    %v7817 = vunpack.c.l.b16 %v7375
    %v7818 = vunpack.c.h.b16 %v7375
    %v7819 = vunpack.c.l.b16 %v7376
    %v7820 = vunpack.c.h.b16 %v7376
    %v7821 = vunpack.c.l.b16 %v7377
    %v7822 = vunpack.c.h.b16 %v7377
    %v7823 = vunpack.c.l.b16 %v7378
    %v7824 = vunpack.c.h.b16 %v7378
    %v7825 = vunpack.c.l.b16 %v7379
    %v7826 = vunpack.c.h.b16 %v7379
    %v7827 = vunpack.c.l.b16 %v7380
    %v7828 = vunpack.c.h.b16 %v7380
    %v7829 = vunpack.c.l.b16 %v7381
    %v7830 = vunpack.c.h.b16 %v7381
    %v7831 = vunpack.c.l.b16 %v7382
    %v7832 = vunpack.c.h.b16 %v7382
    %v7833 = vunpack.c.l.b16 %v7383
    %v7834 = vunpack.c.h.b16 %v7383
    %v7835 = vunpack.c.l.b16 %v7384
    %v7836 = vunpack.c.h.b16 %v7384
    %v7837 = vunpack.c.l.b16 %v7385
    %v7838 = vunpack.c.h.b16 %v7385
    %v7839 = vunpack.c.l.b16 %v7386
    %v7840 = vunpack.c.h.b16 %v7386
    %v7841 = vunpack.c.l.b16 %v7387
    %v7842 = vunpack.c.h.b16 %v7387
    %v7843 = vunpack.c.l.b16 %v7388
    %v7844 = vunpack.c.h.b16 %v7388
    %v7845 = vunpack.c.l.b16 %v7389
    %v7846 = vunpack.c.h.b16 %v7389
    %v7847 = vunpack.c.l.b16 %v7390
    %v7848 = vunpack.c.h.b16 %v7390
    %v7849 = vunpack.c.l.b16 %v7391
    %v7850 = vunpack.c.h.b16 %v7391
    %v7851 = vunpack.c.l.b16 %v7392
    %v7852 = vunpack.c.h.b16 %v7392
    %v7853 = vunpack.c.l.b16 %v7393
    %v7854 = vunpack.c.h.b16 %v7393
    %v7855 = vunpack.c.l.b16 %v7394
    %v7856 = vunpack.c.h.b16 %v7394
    %v7857 = vunpack.c.l.b16 %v7395
    %v7858 = vunpack.c.h.b16 %v7395
    %v7859 = vunpack.c.l.b16 %v7396
    %v7860 = vunpack.c.h.b16 %v7396
    %v7861 = vunpack.c.l.b16 %v7397
    %v7862 = vunpack.c.h.b16 %v7397
    %v7863 = vunpack.c.l.b16 %v7398
    %v7864 = vunpack.c.h.b16 %v7398
    %v7865 = vunpack.c.l.b16 %v7399
    %v7866 = vunpack.c.h.b16 %v7399
    %v7867 = vunpack.c.l.b16 %v7400
    %v7868 = vunpack.c.h.b16 %v7400
    %v7869 = vunpack.c.l.b16 %v7401
    %v7870 = vunpack.c.h.b16 %v7401
    %v7871 = vpack.c.b16 %v7631, %v7615
    %v7872 = vpack.c.b16 %v7632, %v7616
    %v7873 = vpack.c.b16 %v7633, %v7617
    %v7874 = vpack.c.b16 %v7634, %v7618
    %v7875 = vpack.c.b16 %v7635, %v7619
    %v7876 = vpack.c.b16 %v7636, %v7620
    %v7877 = vpack.c.b16 %v7637, %v7621
    %v7878 = vpack.c.b16 %v7638, %v7622
    %v7879 = vpack.c.b16 %v7639, %v7623
    %v7880 = vpack.c.b16 %v7640, %v7624
    %v7881 = vpack.c.b16 %v7641, %v7625
    %v7882 = vpack.c.b16 %v7642, %v7626
    %v7883 = vpack.c.b16 %v7643, %v7627
    %v7884 = vpack.c.b16 %v7644, %v7628
    %v7885 = vpack.c.b16 %v7645, %v7629
    %v7886 = vpack.c.b16 %v7646, %v7630
    %v7887 = vpack.c.b16 %v7663, %v7647
    %v7888 = vpack.c.b16 %v7664, %v7648
    %v7889 = vpack.c.b16 %v7665, %v7649
    %v7890 = vpack.c.b16 %v7666, %v7650
    %v7891 = vpack.c.b16 %v7667, %v7651
    %v7892 = vpack.c.b16 %v7668, %v7652
    %v7893 = vpack.c.b16 %v7669, %v7653
    %v7894 = vpack.c.b16 %v7670, %v7654
    %v7895 = vpack.c.b16 %v7671, %v7655
    %v7896 = vpack.c.b16 %v7672, %v7656
    %v7897 = vpack.c.b16 %v7673, %v7657
    %v7898 = vpack.c.b16 %v7674, %v7658
    %v7899 = vpack.c.b16 %v7675, %v7659
    %v7900 = vpack.c.b16 %v7676, %v7660
    %v7901 = vpack.c.b16 %v7677, %v7661
    %v7902 = vpack.c.b16 %v7678, %v7662
    %v7903 = vpack.c.b16 %v7695, %v7679
    %v7904 = vpack.c.b16 %v7696, %v7680
    %v7905 = vpack.c.b16 %v7697, %v7681
    %v7906 = vpack.c.b16 %v7698, %v7682
    %v7907 = vpack.c.b16 %v7699, %v7683
    %v7908 = vpack.c.b16 %v7700, %v7684
    %v7909 = vpack.c.b16 %v7701, %v7685
    %v7910 = vpack.c.b16 %v7702, %v7686
    %v7911 = vpack.c.b16 %v7703, %v7687
    %v7912 = vpack.c.b16 %v7704, %v7688
    %v7913 = vpack.c.b16 %v7705, %v7689
    %v7914 = vpack.c.b16 %v7706, %v7690
    %v7915 = vpack.c.b16 %v7707, %v7691
    %v7916 = vpack.c.b16 %v7708, %v7692
    %v7917 = vpack.c.b16 %v7709, %v7693
    %v7918 = vpack.c.b16 %v7710, %v7694
    %v7919 = vpack.c.b16 %v7727, %v7711
    %v7920 = vpack.c.b16 %v7728, %v7712
    %v7921 = vpack.c.b16 %v7729, %v7713
    %v7922 = vpack.c.b16 %v7730, %v7714
    %v7923 = vpack.c.b16 %v7731, %v7715
    %v7924 = vpack.c.b16 %v7732, %v7716
    %v7925 = vpack.c.b16 %v7733, %v7717
    %v7926 = vpack.c.b16 %v7734, %v7718
    %v7927 = vpack.c.b16 %v7735, %v7719
    %v7928 = vpack.c.b16 %v7736, %v7720
    %v7929 = vpack.c.b16 %v7737, %v7721
    %v7930 = vpack.c.b16 %v7738, %v7722
    %v7931 = vpack.c.b16 %v7739, %v7723
    %v7932 = vpack.c.b16 %v7740, %v7724
    %v7933 = vpack.c.b16 %v7741, %v7725
    %v7934 = vpack.c.b16 %v7742, %v7726
    %v7935 = vpack.c.b16 %v7759, %v7743
    %v7936 = vpack.c.b16 %v7760, %v7744
    %v7937 = vpack.c.b16 %v7761, %v7745
    %v7938 = vpack.c.b16 %v7762, %v7746
    %v7939 = vpack.c.b16 %v7763, %v7747
    %v7940 = vpack.c.b16 %v7764, %v7748
    %v7941 = vpack.c.b16 %v7765, %v7749
    %v7942 = vpack.c.b16 %v7766, %v7750
    %v7943 = vpack.c.b16 %v7767, %v7751
    %v7944 = vpack.c.b16 %v7768, %v7752
    %v7945 = vpack.c.b16 %v7769, %v7753
    %v7946 = vpack.c.b16 %v7770, %v7754
    %v7947 = vpack.c.b16 %v7771, %v7755
    %v7948 = vpack.c.b16 %v7772, %v7756
    %v7949 = vpack.c.b16 %v7773, %v7757
    %v7950 = vpack.c.b16 %v7774, %v7758
    %v7951 = vpack.c.b16 %v7791, %v7775
    %v7952 = vpack.c.b16 %v7792, %v7776
    %v7953 = vpack.c.b16 %v7793, %v7777
    %v7954 = vpack.c.b16 %v7794, %v7778
    %v7955 = vpack.c.b16 %v7795, %v7779
    %v7956 = vpack.c.b16 %v7796, %v7780
    %v7957 = vpack.c.b16 %v7797, %v7781
    %v7958 = vpack.c.b16 %v7798, %v7782
    %v7959 = vpack.c.b16 %v7799, %v7783
    %v7960 = vpack.c.b16 %v7800, %v7784
    %v7961 = vpack.c.b16 %v7801, %v7785
    %v7962 = vpack.c.b16 %v7802, %v7786
    %v7963 = vpack.c.b16 %v7803, %v7787
    %v7964 = vpack.c.b16 %v7804, %v7788
    %v7965 = vpack.c.b16 %v7805, %v7789
    %v7966 = vpack.c.b16 %v7806, %v7790
    %v7967 = vpack.c.b16 %v7823, %v7807
    %v7968 = vpack.c.b16 %v7824, %v7808
    %v7969 = vpack.c.b16 %v7825, %v7809
    %v7970 = vpack.c.b16 %v7826, %v7810
    %v7971 = vpack.c.b16 %v7827, %v7811
    %v7972 = vpack.c.b16 %v7828, %v7812
    %v7973 = vpack.c.b16 %v7829, %v7813
    %v7974 = vpack.c.b16 %v7830, %v7814
    %v7975 = vpack.c.b16 %v7831, %v7815
    %v7976 = vpack.c.b16 %v7832, %v7816
    %v7977 = vpack.c.b16 %v7833, %v7817
    %v7978 = vpack.c.b16 %v7834, %v7818
    %v7979 = vpack.c.b16 %v7835, %v7819
    %v7980 = vpack.c.b16 %v7836, %v7820
    %v7981 = vpack.c.b16 %v7837, %v7821
    %v7982 = vpack.c.b16 %v7838, %v7822
    %v7983 = vpack.c.b16 %v7855, %v7839
    %v7984 = vpack.c.b16 %v7856, %v7840
    %v7985 = vpack.c.b16 %v7857, %v7841
    %v7986 = vpack.c.b16 %v7858, %v7842
    %v7987 = vpack.c.b16 %v7859, %v7843
    %v7988 = vpack.c.b16 %v7860, %v7844
    %v7989 = vpack.c.b16 %v7861, %v7845
    %v7990 = vpack.c.b16 %v7862, %v7846
    %v7991 = vpack.c.b16 %v7863, %v7847
    %v7992 = vpack.c.b16 %v7864, %v7848
    %v7993 = vpack.c.b16 %v7865, %v7849
    %v7994 = vpack.c.b16 %v7866, %v7850
    %v7995 = vpack.c.b16 %v7867, %v7851
    %v7996 = vpack.c.b16 %v7868, %v7852
    %v7997 = vpack.c.b16 %v7869, %v7853
    %v7998 = vpack.c.b16 %v7870, %v7854
    %8127 = vmatprep.subr.bf16.mxu0 %v7872
    %8128 = vmatpush1.bf16.msra.mxu0 %v7871
    %8129 = vmatprep.subr.bf16.mxu0 %v7888
    %8130 = vmatpush1.bf16.msra.mxu0 %v7887
    %8131 = vmatprep.subr.bf16.mxu0 %v7904
    %8132 = vmatpush1.bf16.msra.mxu0 %v7903
    %8133 = vmatprep.subr.bf16.mxu0 %v7920
    %8134 = vmatpush1.bf16.msra.mxu0 %v7919
    %8135 = vmatprep.subr.bf16.mxu0 %v7936
    %8136 = vmatpush1.bf16.msra.mxu0 %v7935
    %8137 = vmatprep.subr.bf16.mxu0 %v7952
    %8138 = vmatpush1.bf16.msra.mxu0 %v7951
    %8139 = vmatprep.subr.bf16.mxu0 %v7968
    %8140 = vmatpush1.bf16.msra.mxu0 %v7967
    %8141 = vmatprep.subr.bf16.mxu0 %v7984
    %8142 = vmatpush1.bf16.msra.mxu0 %v7983
    %8143 = vmatprep.subr.bf16.mxu0 0
    %8144 = vmatpush1.bf16.msra.mxu0 0
    %8145 = vmatprep.subr.bf16.mxu0 0
    %8146 = vmatpush1.bf16.msra.mxu0 0
    %8147 = vmatprep.subr.bf16.mxu0 0
    %8148 = vmatpush1.bf16.msra.mxu0 0
    %8149 = vmatprep.subr.bf16.mxu0 0
    %8150 = vmatpush1.bf16.msra.mxu0 0
    %8151 = vmatprep.subr.bf16.mxu0 0
    %8152 = vmatpush1.bf16.msra.mxu0 0
    %8153 = vmatprep.subr.bf16.mxu0 0
    %8154 = vmatpush1.bf16.msra.mxu0 0
    %8155 = vmatprep.subr.bf16.mxu0 0
    %8156 = vmatpush1.bf16.msra.mxu0 0
    %8157 = vmatprep.subr.bf16.mxu0 0
    %8158 = vmatpush1.bf16.msra.mxu0 0
    %8159 = vmatprep.mubr.bf16.mxu0 0
    %8160 = vmatmul.mubr.bf16.gmra.mrb[0].mxu0 %v7272
    %v8161 = vpop.f32.mrb[0].mxu0
    %v8162 = vadd.f32 %v7410, %v8161
    %v8163 = vpop.f32.mrb[0].mxu0
    %v8164 = vadd.f32 %v7414, %v8163
    %v8165 = vpop.f32.mrb[0].mxu0
    %v8166 = vadd.f32 %v7410, %v8165
    %v8167 = vpop.f32.mrb[0].mxu0
    %v8168 = vadd.f32 %v7414, %v8167
    %8169 = vdwg.mxu0
    %8170 = vmatprep.subr.bf16.mxu0 %v7874
    %8171 = vmatpush1.bf16.msra.mxu0 %v7873
    %8172 = vmatprep.subr.bf16.mxu0 %v7890
    %8173 = vmatpush1.bf16.msra.mxu0 %v7889
    %8174 = vmatprep.subr.bf16.mxu0 %v7906
    %8175 = vmatpush1.bf16.msra.mxu0 %v7905
    %8176 = vmatprep.subr.bf16.mxu0 %v7922
    %8177 = vmatpush1.bf16.msra.mxu0 %v7921
    %8178 = vmatprep.subr.bf16.mxu0 %v7938
    %8179 = vmatpush1.bf16.msra.mxu0 %v7937
    %8180 = vmatprep.subr.bf16.mxu0 %v7954
    %8181 = vmatpush1.bf16.msra.mxu0 %v7953
    %8182 = vmatprep.subr.bf16.mxu0 %v7970
    %8183 = vmatpush1.bf16.msra.mxu0 %v7969
    %8184 = vmatprep.subr.bf16.mxu0 %v7986
    %8185 = vmatpush1.bf16.msra.mxu0 %v7985
    %8186 = vmatprep.subr.bf16.mxu0 0
    %8187 = vmatpush1.bf16.msra.mxu0 0
    %8188 = vmatprep.subr.bf16.mxu0 0
    %8189 = vmatpush1.bf16.msra.mxu0 0
    %8190 = vmatprep.subr.bf16.mxu0 0
    %8191 = vmatpush1.bf16.msra.mxu0 0
    %8192 = vmatprep.subr.bf16.mxu0 0
    %8193 = vmatpush1.bf16.msra.mxu0 0
    %8194 = vmatprep.subr.bf16.mxu0 0
    %8195 = vmatpush1.bf16.msra.mxu0 0
    %8196 = vmatprep.subr.bf16.mxu0 0
    %8197 = vmatpush1.bf16.msra.mxu0 0
    %8198 = vmatprep.subr.bf16.mxu0 0
    %8199 = vmatpush1.bf16.msra.mxu0 0
    %8200 = vmatprep.subr.bf16.mxu0 0
    %8201 = vmatpush1.bf16.msra.mxu0 0
    %8202 = vmatprep.mubr.bf16.mxu0 0
    %8203 = vmatmul.mubr.bf16.gmra.mrb[0].mxu0 %v7272
    %v8204 = vpop.f32.mrb[0].mxu0
    %v8205 = vadd.f32 %v7418, %v8204
    %v8206 = vpop.f32.mrb[0].mxu0
    %v8207 = vadd.f32 %v7422, %v8206
    %v8208 = vpop.f32.mrb[0].mxu0
    %v8209 = vadd.f32 %v7418, %v8208
    %v8210 = vpop.f32.mrb[0].mxu0
    %v8211 = vadd.f32 %v7422, %v8210
    %8212 = vdwg.mxu0
    %8213 = vmatprep.subr.bf16.mxu0 %v7876
    %8214 = vmatpush1.bf16.msra.mxu0 %v7875
    %8215 = vmatprep.subr.bf16.mxu0 %v7892
    %8216 = vmatpush1.bf16.msra.mxu0 %v7891
    %8217 = vmatprep.subr.bf16.mxu0 %v7908
    %8218 = vmatpush1.bf16.msra.mxu0 %v7907
    %8219 = vmatprep.subr.bf16.mxu0 %v7924
    %8220 = vmatpush1.bf16.msra.mxu0 %v7923
    %8221 = vmatprep.subr.bf16.mxu0 %v7940
    %8222 = vmatpush1.bf16.msra.mxu0 %v7939
    %8223 = vmatprep.subr.bf16.mxu0 %v7956
    %8224 = vmatpush1.bf16.msra.mxu0 %v7955
    %8225 = vmatprep.subr.bf16.mxu0 %v7972
    %8226 = vmatpush1.bf16.msra.mxu0 %v7971
    %8227 = vmatprep.subr.bf16.mxu0 %v7988
    %8228 = vmatpush1.bf16.msra.mxu0 %v7987
    %8229 = vmatprep.subr.bf16.mxu0 0
    %8230 = vmatpush1.bf16.msra.mxu0 0
    %8231 = vmatprep.subr.bf16.mxu0 0
    %8232 = vmatpush1.bf16.msra.mxu0 0
    %8233 = vmatprep.subr.bf16.mxu0 0
    %8234 = vmatpush1.bf16.msra.mxu0 0
    %8235 = vmatprep.subr.bf16.mxu0 0
    %8236 = vmatpush1.bf16.msra.mxu0 0
    %8237 = vmatprep.subr.bf16.mxu0 0
    %8238 = vmatpush1.bf16.msra.mxu0 0
    %8239 = vmatprep.subr.bf16.mxu0 0
    %8240 = vmatpush1.bf16.msra.mxu0 0
    %8241 = vmatprep.subr.bf16.mxu0 0
    %8242 = vmatpush1.bf16.msra.mxu0 0
    %8243 = vmatprep.subr.bf16.mxu0 0
    %8244 = vmatpush1.bf16.msra.mxu0 0
    %8245 = vmatprep.mubr.bf16.mxu0 0
    %8246 = vmatmul.mubr.bf16.gmra.mrb[0].mxu0 %v7272
    %v8247 = vpop.f32.mrb[0].mxu0
    %v8248 = vadd.f32 %v7426, %v8247
    %v8249 = vpop.f32.mrb[0].mxu0
    %v8250 = vadd.f32 %v7430, %v8249
    %v8251 = vpop.f32.mrb[0].mxu0
    %v8252 = vadd.f32 %v7426, %v8251
    %v8253 = vpop.f32.mrb[0].mxu0
    %v8254 = vadd.f32 %v7430, %v8253
    %8255 = vdwg.mxu0
    %8256 = vmatprep.subr.bf16.mxu0 %v7878
    %8257 = vmatpush1.bf16.msra.mxu0 %v7877
    %8258 = vmatprep.subr.bf16.mxu0 %v7894
    %8259 = vmatpush1.bf16.msra.mxu0 %v7893
    %8260 = vmatprep.subr.bf16.mxu0 %v7910
    %8261 = vmatpush1.bf16.msra.mxu0 %v7909
    %8262 = vmatprep.subr.bf16.mxu0 %v7926
    %8263 = vmatpush1.bf16.msra.mxu0 %v7925
    %8264 = vmatprep.subr.bf16.mxu0 %v7942
    %8265 = vmatpush1.bf16.msra.mxu0 %v7941
    %8266 = vmatprep.subr.bf16.mxu0 %v7958
    %8267 = vmatpush1.bf16.msra.mxu0 %v7957
    %8268 = vmatprep.subr.bf16.mxu0 %v7974
    %8269 = vmatpush1.bf16.msra.mxu0 %v7973
    %8270 = vmatprep.subr.bf16.mxu0 %v7990
    %8271 = vmatpush1.bf16.msra.mxu0 %v7989
    %8272 = vmatprep.subr.bf16.mxu0 0
    %8273 = vmatpush1.bf16.msra.mxu0 0
    %8274 = vmatprep.subr.bf16.mxu0 0
    %8275 = vmatpush1.bf16.msra.mxu0 0
    %8276 = vmatprep.subr.bf16.mxu0 0
    %8277 = vmatpush1.bf16.msra.mxu0 0
    %8278 = vmatprep.subr.bf16.mxu0 0
    %8279 = vmatpush1.bf16.msra.mxu0 0
    %8280 = vmatprep.subr.bf16.mxu0 0
    %8281 = vmatpush1.bf16.msra.mxu0 0
    %8282 = vmatprep.subr.bf16.mxu0 0
    %8283 = vmatpush1.bf16.msra.mxu0 0
    %8284 = vmatprep.subr.bf16.mxu0 0
    %8285 = vmatpush1.bf16.msra.mxu0 0
    %8286 = vmatprep.subr.bf16.mxu0 0
    %8287 = vmatpush1.bf16.msra.mxu0 0
    %8288 = vmatprep.mubr.bf16.mxu0 0
    %8289 = vmatmul.mubr.bf16.gmra.mrb[0].mxu0 %v7272
    %v8290 = vpop.f32.mrb[0].mxu0
    %v8291 = vadd.f32 %v7434, %v8290
    %v8292 = vpop.f32.mrb[0].mxu0
    %v8293 = vadd.f32 %v7438, %v8292
    %v8294 = vpop.f32.mrb[0].mxu0
    %v8295 = vadd.f32 %v7434, %v8294
    %v8296 = vpop.f32.mrb[0].mxu0
    %v8297 = vadd.f32 %v7438, %v8296
    %8298 = vdwg.mxu0
    %8299 = vmatprep.subr.bf16.mxu0 %v7880
    %8300 = vmatpush1.bf16.msra.mxu0 %v7879
    %8301 = vmatprep.subr.bf16.mxu0 %v7896
    %8302 = vmatpush1.bf16.msra.mxu0 %v7895
    %8303 = vmatprep.subr.bf16.mxu0 %v7912
    %8304 = vmatpush1.bf16.msra.mxu0 %v7911
    %8305 = vmatprep.subr.bf16.mxu0 %v7928
    %8306 = vmatpush1.bf16.msra.mxu0 %v7927
    %8307 = vmatprep.subr.bf16.mxu0 %v7944
    %8308 = vmatpush1.bf16.msra.mxu0 %v7943
    %8309 = vmatprep.subr.bf16.mxu0 %v7960
    %8310 = vmatpush1.bf16.msra.mxu0 %v7959
    %8311 = vmatprep.subr.bf16.mxu0 %v7976
    %8312 = vmatpush1.bf16.msra.mxu0 %v7975
    %8313 = vmatprep.subr.bf16.mxu0 %v7992
    %8314 = vmatpush1.bf16.msra.mxu0 %v7991
    %8315 = vmatprep.subr.bf16.mxu0 0
    %8316 = vmatpush1.bf16.msra.mxu0 0
    %8317 = vmatprep.subr.bf16.mxu0 0
    %8318 = vmatpush1.bf16.msra.mxu0 0
    %8319 = vmatprep.subr.bf16.mxu0 0
    %8320 = vmatpush1.bf16.msra.mxu0 0
    %8321 = vmatprep.subr.bf16.mxu0 0
    %8322 = vmatpush1.bf16.msra.mxu0 0
    %8323 = vmatprep.subr.bf16.mxu0 0
    %8324 = vmatpush1.bf16.msra.mxu0 0
    %8325 = vmatprep.subr.bf16.mxu0 0
    %8326 = vmatpush1.bf16.msra.mxu0 0
    %8327 = vmatprep.subr.bf16.mxu0 0
    %8328 = vmatpush1.bf16.msra.mxu0 0
    %8329 = vmatprep.subr.bf16.mxu0 0
    %8330 = vmatpush1.bf16.msra.mxu0 0
    %8331 = vmatprep.mubr.bf16.mxu0 0
    %8332 = vmatmul.mubr.bf16.gmra.mrb[0].mxu0 %v7272
    %v8333 = vpop.f32.mrb[0].mxu0
    %v8334 = vadd.f32 %v7442, %v8333
    %v8335 = vpop.f32.mrb[0].mxu0
    %v8336 = vadd.f32 %v7446, %v8335
    %v8337 = vpop.f32.mrb[0].mxu0
    %v8338 = vadd.f32 %v7442, %v8337
    %v8339 = vpop.f32.mrb[0].mxu0
    %v8340 = vadd.f32 %v7446, %v8339
    %8341 = vdwg.mxu0
    %8342 = vmatprep.subr.bf16.mxu0 %v7882
    %8343 = vmatpush1.bf16.msra.mxu0 %v7881
    %8344 = vmatprep.subr.bf16.mxu0 %v7898
    %8345 = vmatpush1.bf16.msra.mxu0 %v7897
    %8346 = vmatprep.subr.bf16.mxu0 %v7914
    %8347 = vmatpush1.bf16.msra.mxu0 %v7913
    %8348 = vmatprep.subr.bf16.mxu0 %v7930
    %8349 = vmatpush1.bf16.msra.mxu0 %v7929
    %8350 = vmatprep.subr.bf16.mxu0 %v7946
    %8351 = vmatpush1.bf16.msra.mxu0 %v7945
    %8352 = vmatprep.subr.bf16.mxu0 %v7962
    %8353 = vmatpush1.bf16.msra.mxu0 %v7961
    %8354 = vmatprep.subr.bf16.mxu0 %v7978
    %8355 = vmatpush1.bf16.msra.mxu0 %v7977
    %8356 = vmatprep.subr.bf16.mxu0 %v7994
    %8357 = vmatpush1.bf16.msra.mxu0 %v7993
    %8358 = vmatprep.subr.bf16.mxu0 0
    %8359 = vmatpush1.bf16.msra.mxu0 0
    %8360 = vmatprep.subr.bf16.mxu0 0
    %8361 = vmatpush1.bf16.msra.mxu0 0
    %8362 = vmatprep.subr.bf16.mxu0 0
    %8363 = vmatpush1.bf16.msra.mxu0 0
    %8364 = vmatprep.subr.bf16.mxu0 0
    %8365 = vmatpush1.bf16.msra.mxu0 0
    %8366 = vmatprep.subr.bf16.mxu0 0
    %8367 = vmatpush1.bf16.msra.mxu0 0
    %8368 = vmatprep.subr.bf16.mxu0 0
    %8369 = vmatpush1.bf16.msra.mxu0 0
    %8370 = vmatprep.subr.bf16.mxu0 0
    %8371 = vmatpush1.bf16.msra.mxu0 0
    %8372 = vmatprep.subr.bf16.mxu0 0
    %8373 = vmatpush1.bf16.msra.mxu0 0
    %8374 = vmatprep.mubr.bf16.mxu0 0
    %8375 = vmatmul.mubr.bf16.gmra.mrb[0].mxu0 %v7272
    %v8376 = vpop.f32.mrb[0].mxu0
    %v8377 = vadd.f32 %v7450, %v8376
    %v8378 = vpop.f32.mrb[0].mxu0
    %v8379 = vadd.f32 %v7454, %v8378
    %v8380 = vpop.f32.mrb[0].mxu0
    %v8381 = vadd.f32 %v7450, %v8380
    %v8382 = vpop.f32.mrb[0].mxu0
    %v8383 = vadd.f32 %v7454, %v8382
    %8384 = vdwg.mxu0
    %8385 = vmatprep.subr.bf16.mxu0 %v7884
    %8386 = vmatpush1.bf16.msra.mxu0 %v7883
    %8387 = vmatprep.subr.bf16.mxu0 %v7900
    %8388 = vmatpush1.bf16.msra.mxu0 %v7899
    %8389 = vmatprep.subr.bf16.mxu0 %v7916
    %8390 = vmatpush1.bf16.msra.mxu0 %v7915
    %8391 = vmatprep.subr.bf16.mxu0 %v7932
    %8392 = vmatpush1.bf16.msra.mxu0 %v7931
    %8393 = vmatprep.subr.bf16.mxu0 %v7948
    %8394 = vmatpush1.bf16.msra.mxu0 %v7947
    %8395 = vmatprep.subr.bf16.mxu0 %v7964
    %8396 = vmatpush1.bf16.msra.mxu0 %v7963
    %8397 = vmatprep.subr.bf16.mxu0 %v7980
    %8398 = vmatpush1.bf16.msra.mxu0 %v7979
    %8399 = vmatprep.subr.bf16.mxu0 %v7996
    %8400 = vmatpush1.bf16.msra.mxu0 %v7995
    %8401 = vmatprep.subr.bf16.mxu0 0
    %8402 = vmatpush1.bf16.msra.mxu0 0
    %8403 = vmatprep.subr.bf16.mxu0 0
    %8404 = vmatpush1.bf16.msra.mxu0 0
    %8405 = vmatprep.subr.bf16.mxu0 0
    %8406 = vmatpush1.bf16.msra.mxu0 0
    %8407 = vmatprep.subr.bf16.mxu0 0
    %8408 = vmatpush1.bf16.msra.mxu0 0
    %8409 = vmatprep.subr.bf16.mxu0 0
    %8410 = vmatpush1.bf16.msra.mxu0 0
    %8411 = vmatprep.subr.bf16.mxu0 0
    %8412 = vmatpush1.bf16.msra.mxu0 0
    %8413 = vmatprep.subr.bf16.mxu0 0
    %8414 = vmatpush1.bf16.msra.mxu0 0
    %8415 = vmatprep.subr.bf16.mxu0 0
    %8416 = vmatpush1.bf16.msra.mxu0 0
    %8417 = vmatprep.mubr.bf16.mxu0 0
    %8418 = vmatmul.mubr.bf16.gmra.mrb[0].mxu0 %v7272
    %v8419 = vpop.f32.mrb[0].mxu0
    %v8420 = vadd.f32 %v7458, %v8419
    %v8421 = vpop.f32.mrb[0].mxu0
    %v8422 = vadd.f32 %v7462, %v8421
    %v8423 = vpop.f32.mrb[0].mxu0
    %v8424 = vadd.f32 %v7458, %v8423
    %v8425 = vpop.f32.mrb[0].mxu0
    %v8426 = vadd.f32 %v7462, %v8425
    %8427 = vdwg.mxu0
    %8428 = vmatprep.subr.bf16.mxu0 %v7886
    %8429 = vmatpush1.bf16.msra.mxu0 %v7885
    %8430 = vmatprep.subr.bf16.mxu0 %v7902
    %8431 = vmatpush1.bf16.msra.mxu0 %v7901
    %8432 = vmatprep.subr.bf16.mxu0 %v7918
    %8433 = vmatpush1.bf16.msra.mxu0 %v7917
    %8434 = vmatprep.subr.bf16.mxu0 %v7934
    %8435 = vmatpush1.bf16.msra.mxu0 %v7933
    %8436 = vmatprep.subr.bf16.mxu0 %v7950
    %8437 = vmatpush1.bf16.msra.mxu0 %v7949
    %8438 = vmatprep.subr.bf16.mxu0 %v7966
    %8439 = vmatpush1.bf16.msra.mxu0 %v7965
    %8440 = vmatprep.subr.bf16.mxu0 %v7982
    %8441 = vmatpush1.bf16.msra.mxu0 %v7981
    %8442 = vmatprep.subr.bf16.mxu0 %v7998
    %8443 = vmatpush1.bf16.msra.mxu0 %v7997
    %8444 = vmatprep.subr.bf16.mxu0 0
    %8445 = vmatpush1.bf16.msra.mxu0 0
    %8446 = vmatprep.subr.bf16.mxu0 0
    %8447 = vmatpush1.bf16.msra.mxu0 0
    %8448 = vmatprep.subr.bf16.mxu0 0
    %8449 = vmatpush1.bf16.msra.mxu0 0
    %8450 = vmatprep.subr.bf16.mxu0 0
    %8451 = vmatpush1.bf16.msra.mxu0 0
    %8452 = vmatprep.subr.bf16.mxu0 0
    %8453 = vmatpush1.bf16.msra.mxu0 0
    %8454 = vmatprep.subr.bf16.mxu0 0
    %8455 = vmatpush1.bf16.msra.mxu0 0
    %8456 = vmatprep.subr.bf16.mxu0 0
    %8457 = vmatpush1.bf16.msra.mxu0 0
    %8458 = vmatprep.subr.bf16.mxu0 0
    %8459 = vmatpush1.bf16.msra.mxu0 0
    %8460 = vmatprep.mubr.bf16.mxu0 0
    %8461 = vmatmul.mubr.bf16.gmra.mrb[0].mxu0 %v7272
    %v8462 = vpop.f32.mrb[0].mxu0
    %v8463 = vadd.f32 %v7466, %v8462
    %v8464 = vpop.f32.mrb[0].mxu0
    %v8465 = vadd.f32 %v7470, %v8464
    %v8466 = vpop.f32.mrb[0].mxu0
    %v8467 = vadd.f32 %v7466, %v8466
    %v8468 = vpop.f32.mrb[0].mxu0
    %v8469 = vadd.f32 %v7470, %v8468
    %8470 = vdwg.mxu0
    %v8471 = vmax.f32 %v8162, 0.0
    %v8472 = vmax.f32 %v8164, 0.0
    %v8473 = vmax.f32 %v8205, 0.0
    %v8474 = vmax.f32 %v8207, 0.0
    %v8475 = vmax.f32 %v8248, 0.0
    %v8476 = vmax.f32 %v8250, 0.0
    %v8477 = vmax.f32 %v8291, 0.0
    %v8478 = vmax.f32 %v8293, 0.0
    %v8479 = vmax.f32 %v8334, 0.0
    %v8480 = vmax.f32 %v8336, 0.0
    %v8481 = vmax.f32 %v8377, 0.0
    %v8482 = vmax.f32 %v8379, 0.0
    %v8483 = vmax.f32 %v8420, 0.0
    %v8484 = vmax.f32 %v8422, 0.0
    %v8485 = vmax.f32 %v8463, 0.0
    %v8486 = vmax.f32 %v8465, 0.0
    %v8487 = vmax.f32 %v8166, 0.0
    %v8488 = vmax.f32 %v8168, 0.0
    %v8489 = vmax.f32 %v8209, 0.0
    %v8490 = vmax.f32 %v8211, 0.0
    %v8491 = vmax.f32 %v8252, 0.0
    %v8492 = vmax.f32 %v8254, 0.0
    %v8493 = vmax.f32 %v8295, 0.0
    %v8494 = vmax.f32 %v8297, 0.0
    %v8495 = vmax.f32 %v8338, 0.0
    %v8496 = vmax.f32 %v8340, 0.0
    %v8497 = vmax.f32 %v8381, 0.0
    %v8498 = vmax.f32 %v8383, 0.0
    %v8499 = vmax.f32 %v8424, 0.0
    %v8500 = vmax.f32 %v8426, 0.0
    %v8501 = vmax.f32 %v8467, 0.0
    %v8502 = vmax.f32 %v8469, 0.0
    %v8503 = vpack.c.bf16 %v8487, %v8471
    %v8504 = vpack.c.bf16 %v8488, %v8472
    %v8505 = vpack.c.bf16 %v8489, %v8473
    %v8506 = vpack.c.bf16 %v8490, %v8474
    %v8507 = vpack.c.bf16 %v8491, %v8475
    %v8508 = vpack.c.bf16 %v8492, %v8476
    %v8509 = vpack.c.bf16 %v8493, %v8477
    %v8510 = vpack.c.bf16 %v8494, %v8478
    %v8511 = vpack.c.bf16 %v8495, %v8479
    %v8512 = vpack.c.bf16 %v8496, %v8480
    %v8513 = vpack.c.bf16 %v8497, %v8481
    %v8514 = vpack.c.bf16 %v8498, %v8482
    %v8515 = vpack.c.bf16 %v8499, %v8483
    %v8516 = vpack.c.bf16 %v8500, %v8484
    %v8517 = vpack.c.bf16 %v8501, %v8485
    %v8518 = vpack.c.bf16 %v8502, %v8486
    %s8519 = scalar_lea.vmem [#allocation10], 1024
    %v8520 = vld [vmem:[%s8519] sm:$0xf]
    %v8521 = vld [vmem:[%s8519 + $0x4] sm:$0xf]
    %v8522 = vld [vmem:[%s8519 + $0x8] sm:$0xf]
    %v8523 = vld [vmem:[%s8519 + $0xc] sm:$0xf]
    %v8524 = vld [vmem:[%s8519 + $0x10] sm:$0xf]
    %v8525 = vld [vmem:[%s8519 + $0x14] sm:$0xf]
    %v8526 = vld [vmem:[%s8519 + $0x18] sm:$0xf]
    %v8527 = vld [vmem:[%s8519 + $0x1c] sm:$0xf]
    %v8528 = vld [vmem:[%s8519 + $0x20] sm:$0xf]
    %v8529 = vld [vmem:[%s8519 + $0x24] sm:$0xf]
    %v8530 = vld [vmem:[%s8519 + $0x28] sm:$0xf]
    %v8531 = vld [vmem:[%s8519 + $0x2c] sm:$0xf]
    %v8532 = vld [vmem:[%s8519 + $0x30] sm:$0xf]
    %v8533 = vld [vmem:[%s8519 + $0x34] sm:$0xf]
    %v8534 = vld [vmem:[%s8519 + $0x38] sm:$0xf]
    %v8535 = vld [vmem:[%s8519 + $0x3c] sm:$0xf]
    %v8536 = vld [vmem:[%s8519 + $0x40] sm:$0xf]
    %v8537 = vld [vmem:[%s8519 + $0x44] sm:$0xf]
    %v8538 = vld [vmem:[%s8519 + $0x48] sm:$0xf]
    %v8539 = vld [vmem:[%s8519 + $0x4c] sm:$0xf]
    %v8540 = vld [vmem:[%s8519 + $0x50] sm:$0xf]
    %v8541 = vld [vmem:[%s8519 + $0x54] sm:$0xf]
    %v8542 = vld [vmem:[%s8519 + $0x58] sm:$0xf]
    %v8543 = vld [vmem:[%s8519 + $0x5c] sm:$0xf]
    %v8544 = vld [vmem:[%s8519 + $0x60] sm:$0xf]
    %v8545 = vld [vmem:[%s8519 + $0x64] sm:$0xf]
    %v8546 = vld [vmem:[%s8519 + $0x68] sm:$0xf]
    %v8547 = vld [vmem:[%s8519 + $0x6c] sm:$0xf]
    %v8548 = vld [vmem:[%s8519 + $0x70] sm:$0xf]
    %v8549 = vld [vmem:[%s8519 + $0x74] sm:$0xf]
    %v8550 = vld [vmem:[%s8519 + $0x78] sm:$0xf]
    %v8551 = vld [vmem:[%s8519 + $0x7c] sm:$0xf]
    %v8552 = vld [vmem:[%s8519 + $0x80] sm:$0xf]
    %v8553 = vld [vmem:[%s8519 + $0x84] sm:$0xf]
    %v8554 = vld [vmem:[%s8519 + $0x88] sm:$0xf]
    %v8555 = vld [vmem:[%s8519 + $0x8c] sm:$0xf]
    %v8556 = vld [vmem:[%s8519 + $0x90] sm:$0xf]
    %v8557 = vld [vmem:[%s8519 + $0x94] sm:$0xf]
    %v8558 = vld [vmem:[%s8519 + $0x98] sm:$0xf]
    %v8559 = vld [vmem:[%s8519 + $0x9c] sm:$0xf]
    %v8560 = vld [vmem:[%s8519 + $0xa0] sm:$0xf]
    %v8561 = vld [vmem:[%s8519 + $0xa4] sm:$0xf]
    %v8562 = vld [vmem:[%s8519 + $0xa8] sm:$0xf]
    %v8563 = vld [vmem:[%s8519 + $0xac] sm:$0xf]
    %v8564 = vld [vmem:[%s8519 + $0xb0] sm:$0xf]
    %v8565 = vld [vmem:[%s8519 + $0xb4] sm:$0xf]
    %v8566 = vld [vmem:[%s8519 + $0xb8] sm:$0xf]
    %v8567 = vld [vmem:[%s8519 + $0xbc] sm:$0xf]
    %v8568 = vld [vmem:[%s8519 + $0xc0] sm:$0xf]
    %v8569 = vld [vmem:[%s8519 + $0xc4] sm:$0xf]
    %v8570 = vld [vmem:[%s8519 + $0xc8] sm:$0xf]
    %v8571 = vld [vmem:[%s8519 + $0xcc] sm:$0xf]
    %v8572 = vld [vmem:[%s8519 + $0xd0] sm:$0xf]
    %v8573 = vld [vmem:[%s8519 + $0xd4] sm:$0xf]
    %v8574 = vld [vmem:[%s8519 + $0xd8] sm:$0xf]
    %v8575 = vld [vmem:[%s8519 + $0xdc] sm:$0xf]
    %v8576 = vld [vmem:[%s8519 + $0xe0] sm:$0xf]
    %v8577 = vld [vmem:[%s8519 + $0xe4] sm:$0xf]
    %v8578 = vld [vmem:[%s8519 + $0xe8] sm:$0xf]
    %v8579 = vld [vmem:[%s8519 + $0xec] sm:$0xf]
    %v8580 = vld [vmem:[%s8519 + $0xf0] sm:$0xf]
    %v8581 = vld [vmem:[%s8519 + $0xf4] sm:$0xf]
    %v8582 = vld [vmem:[%s8519 + $0xf8] sm:$0xf]
    %v8583 = vld [vmem:[%s8519 + $0xfc] sm:$0xf]
    %v8584 = vld [vmem:[%s8519 + $0x100] sm:$0xf]
    %v8585 = vld [vmem:[%s8519 + $0x104] sm:$0xf]
    %v8586 = vld [vmem:[%s8519 + $0x108] sm:$0xf]
    %v8587 = vld [vmem:[%s8519 + $0x10c] sm:$0xf]
    %v8588 = vld [vmem:[%s8519 + $0x110] sm:$0xf]
    %v8589 = vld [vmem:[%s8519 + $0x114] sm:$0xf]
    %v8590 = vld [vmem:[%s8519 + $0x118] sm:$0xf]
    %v8591 = vld [vmem:[%s8519 + $0x11c] sm:$0xf]
    %v8592 = vld [vmem:[%s8519 + $0x120] sm:$0xf]
    %v8593 = vld [vmem:[%s8519 + $0x124] sm:$0xf]
    %v8594 = vld [vmem:[%s8519 + $0x128] sm:$0xf]
    %v8595 = vld [vmem:[%s8519 + $0x12c] sm:$0xf]
    %v8596 = vld [vmem:[%s8519 + $0x130] sm:$0xf]
    %v8597 = vld [vmem:[%s8519 + $0x134] sm:$0xf]
    %v8598 = vld [vmem:[%s8519 + $0x138] sm:$0xf]
    %v8599 = vld [vmem:[%s8519 + $0x13c] sm:$0xf]
    %v8600 = vld [vmem:[%s8519 + $0x140] sm:$0xf]
    %v8601 = vld [vmem:[%s8519 + $0x144] sm:$0xf]
    %v8602 = vld [vmem:[%s8519 + $0x148] sm:$0xf]
    %v8603 = vld [vmem:[%s8519 + $0x14c] sm:$0xf]
    %v8604 = vld [vmem:[%s8519 + $0x150] sm:$0xf]
    %v8605 = vld [vmem:[%s8519 + $0x154] sm:$0xf]
    %v8606 = vld [vmem:[%s8519 + $0x158] sm:$0xf]
    %v8607 = vld [vmem:[%s8519 + $0x15c] sm:$0xf]
    %v8608 = vld [vmem:[%s8519 + $0x160] sm:$0xf]
    %v8609 = vld [vmem:[%s8519 + $0x164] sm:$0xf]
    %v8610 = vld [vmem:[%s8519 + $0x168] sm:$0xf]
    %v8611 = vld [vmem:[%s8519 + $0x16c] sm:$0xf]
    %v8612 = vld [vmem:[%s8519 + $0x170] sm:$0xf]
    %v8613 = vld [vmem:[%s8519 + $0x174] sm:$0xf]
    %v8614 = vld [vmem:[%s8519 + $0x178] sm:$0xf]
    %v8615 = vld [vmem:[%s8519 + $0x17c] sm:$0xf]
    %v8616 = vld [vmem:[%s8519 + $0x180] sm:$0xf]
    %v8617 = vld [vmem:[%s8519 + $0x184] sm:$0xf]
    %v8618 = vld [vmem:[%s8519 + $0x188] sm:$0xf]
    %v8619 = vld [vmem:[%s8519 + $0x18c] sm:$0xf]
    %v8620 = vld [vmem:[%s8519 + $0x190] sm:$0xf]
    %v8621 = vld [vmem:[%s8519 + $0x194] sm:$0xf]
    %v8622 = vld [vmem:[%s8519 + $0x198] sm:$0xf]
    %v8623 = vld [vmem:[%s8519 + $0x19c] sm:$0xf]
    %v8624 = vld [vmem:[%s8519 + $0x1a0] sm:$0xf]
    %v8625 = vld [vmem:[%s8519 + $0x1a4] sm:$0xf]
    %v8626 = vld [vmem:[%s8519 + $0x1a8] sm:$0xf]
    %v8627 = vld [vmem:[%s8519 + $0x1ac] sm:$0xf]
    %v8628 = vld [vmem:[%s8519 + $0x1b0] sm:$0xf]
    %v8629 = vld [vmem:[%s8519 + $0x1b4] sm:$0xf]
    %v8630 = vld [vmem:[%s8519 + $0x1b8] sm:$0xf]
    %v8631 = vld [vmem:[%s8519 + $0x1bc] sm:$0xf]
    %v8632 = vld [vmem:[%s8519 + $0x1c0] sm:$0xf]
    %v8633 = vld [vmem:[%s8519 + $0x1c4] sm:$0xf]
    %v8634 = vld [vmem:[%s8519 + $0x1c8] sm:$0xf]
    %v8635 = vld [vmem:[%s8519 + $0x1cc] sm:$0xf]
    %v8636 = vld [vmem:[%s8519 + $0x1d0] sm:$0xf]
    %v8637 = vld [vmem:[%s8519 + $0x1d4] sm:$0xf]
    %v8638 = vld [vmem:[%s8519 + $0x1d8] sm:$0xf]
    %v8639 = vld [vmem:[%s8519 + $0x1dc] sm:$0xf]
    %v8640 = vld [vmem:[%s8519 + $0x1e0] sm:$0xf]
    %v8641 = vld [vmem:[%s8519 + $0x1e4] sm:$0xf]
    %v8642 = vld [vmem:[%s8519 + $0x1e8] sm:$0xf]
    %v8643 = vld [vmem:[%s8519 + $0x1ec] sm:$0xf]
    %v8644 = vld [vmem:[%s8519 + $0x1f0] sm:$0xf]
    %v8645 = vld [vmem:[%s8519 + $0x1f4] sm:$0xf]
    %v8646 = vld [vmem:[%s8519 + $0x1f8] sm:$0xf]
    %v8647 = vld [vmem:[%s8519 + $0x1fc] sm:$0xf]
    %v8648 = vld [vmem:[%s8519 + $0x200] sm:$0xf]
    %v8649 = vld [vmem:[%s8519 + $0x204] sm:$0xf]
    %v8650 = vld [vmem:[%s8519 + $0x208] sm:$0xf]
    %v8651 = vld [vmem:[%s8519 + $0x20c] sm:$0xf]
    %v8652 = vld [vmem:[%s8519 + $0x210] sm:$0xf]
    %v8653 = vld [vmem:[%s8519 + $0x214] sm:$0xf]
    %v8654 = vld [vmem:[%s8519 + $0x218] sm:$0xf]
    %v8655 = vld [vmem:[%s8519 + $0x21c] sm:$0xf]
    %v8656 = vld [vmem:[%s8519 + $0x220] sm:$0xf]
    %v8657 = vld [vmem:[%s8519 + $0x224] sm:$0xf]
    %v8658 = vld [vmem:[%s8519 + $0x228] sm:$0xf]
    %v8659 = vld [vmem:[%s8519 + $0x22c] sm:$0xf]
    %v8660 = vld [vmem:[%s8519 + $0x230] sm:$0xf]
    %v8661 = vld [vmem:[%s8519 + $0x234] sm:$0xf]
    %v8662 = vld [vmem:[%s8519 + $0x238] sm:$0xf]
    %v8663 = vld [vmem:[%s8519 + $0x23c] sm:$0xf]
    %v8664 = vld [vmem:[%s8519 + $0x240] sm:$0xf]
    %v8665 = vld [vmem:[%s8519 + $0x244] sm:$0xf]
    %v8666 = vld [vmem:[%s8519 + $0x248] sm:$0xf]
    %v8667 = vld [vmem:[%s8519 + $0x24c] sm:$0xf]
    %v8668 = vld [vmem:[%s8519 + $0x250] sm:$0xf]
    %v8669 = vld [vmem:[%s8519 + $0x254] sm:$0xf]
    %v8670 = vld [vmem:[%s8519 + $0x258] sm:$0xf]
    %v8671 = vld [vmem:[%s8519 + $0x25c] sm:$0xf]
    %v8672 = vld [vmem:[%s8519 + $0x260] sm:$0xf]
    %v8673 = vld [vmem:[%s8519 + $0x264] sm:$0xf]
    %v8674 = vld [vmem:[%s8519 + $0x268] sm:$0xf]
    %v8675 = vld [vmem:[%s8519 + $0x26c] sm:$0xf]
    %v8676 = vld [vmem:[%s8519 + $0x270] sm:$0xf]
    %v8677 = vld [vmem:[%s8519 + $0x274] sm:$0xf]
    %v8678 = vld [vmem:[%s8519 + $0x278] sm:$0xf]
    %v8679 = vld [vmem:[%s8519 + $0x27c] sm:$0xf]
    %v8680 = vld [vmem:[%s8519 + $0x280] sm:$0xf]
    %v8681 = vld [vmem:[%s8519 + $0x284] sm:$0xf]
    %v8682 = vld [vmem:[%s8519 + $0x288] sm:$0xf]
    %v8683 = vld [vmem:[%s8519 + $0x28c] sm:$0xf]
    %v8684 = vld [vmem:[%s8519 + $0x290] sm:$0xf]
    %v8685 = vld [vmem:[%s8519 + $0x294] sm:$0xf]
    %v8686 = vld [vmem:[%s8519 + $0x298] sm:$0xf]
    %v8687 = vld [vmem:[%s8519 + $0x29c] sm:$0xf]
    %v8688 = vld [vmem:[%s8519 + $0x2a0] sm:$0xf]
    %v8689 = vld [vmem:[%s8519 + $0x2a4] sm:$0xf]
    %v8690 = vld [vmem:[%s8519 + $0x2a8] sm:$0xf]
    %v8691 = vld [vmem:[%s8519 + $0x2ac] sm:$0xf]
    %v8692 = vld [vmem:[%s8519 + $0x2b0] sm:$0xf]
    %v8693 = vld [vmem:[%s8519 + $0x2b4] sm:$0xf]
    %v8694 = vld [vmem:[%s8519 + $0x2b8] sm:$0xf]
    %v8695 = vld [vmem:[%s8519 + $0x2bc] sm:$0xf]
    %v8696 = vld [vmem:[%s8519 + $0x2c0] sm:$0xf]
    %v8697 = vld [vmem:[%s8519 + $0x2c4] sm:$0xf]
    %v8698 = vld [vmem:[%s8519 + $0x2c8] sm:$0xf]
    %v8699 = vld [vmem:[%s8519 + $0x2cc] sm:$0xf]
    %v8700 = vld [vmem:[%s8519 + $0x2d0] sm:$0xf]
    %v8701 = vld [vmem:[%s8519 + $0x2d4] sm:$0xf]
    %v8702 = vld [vmem:[%s8519 + $0x2d8] sm:$0xf]
    %v8703 = vld [vmem:[%s8519 + $0x2dc] sm:$0xf]
    %v8704 = vld [vmem:[%s8519 + $0x2e0] sm:$0xf]
    %v8705 = vld [vmem:[%s8519 + $0x2e4] sm:$0xf]
    %v8706 = vld [vmem:[%s8519 + $0x2e8] sm:$0xf]
    %v8707 = vld [vmem:[%s8519 + $0x2ec] sm:$0xf]
    %v8708 = vld [vmem:[%s8519 + $0x2f0] sm:$0xf]
    %v8709 = vld [vmem:[%s8519 + $0x2f4] sm:$0xf]
    %v8710 = vld [vmem:[%s8519 + $0x2f8] sm:$0xf]
    %v8711 = vld [vmem:[%s8519 + $0x2fc] sm:$0xf]
    %v8712 = vld [vmem:[%s8519 + $0x300] sm:$0xf]
    %v8713 = vld [vmem:[%s8519 + $0x304] sm:$0xf]
    %v8714 = vld [vmem:[%s8519 + $0x308] sm:$0xf]
    %v8715 = vld [vmem:[%s8519 + $0x30c] sm:$0xf]
    %v8716 = vld [vmem:[%s8519 + $0x310] sm:$0xf]
    %v8717 = vld [vmem:[%s8519 + $0x314] sm:$0xf]
    %v8718 = vld [vmem:[%s8519 + $0x318] sm:$0xf]
    %v8719 = vld [vmem:[%s8519 + $0x31c] sm:$0xf]
    %v8720 = vld [vmem:[%s8519 + $0x320] sm:$0xf]
    %v8721 = vld [vmem:[%s8519 + $0x324] sm:$0xf]
    %v8722 = vld [vmem:[%s8519 + $0x328] sm:$0xf]
    %v8723 = vld [vmem:[%s8519 + $0x32c] sm:$0xf]
    %v8724 = vld [vmem:[%s8519 + $0x330] sm:$0xf]
    %v8725 = vld [vmem:[%s8519 + $0x334] sm:$0xf]
    %v8726 = vld [vmem:[%s8519 + $0x338] sm:$0xf]
    %v8727 = vld [vmem:[%s8519 + $0x33c] sm:$0xf]
    %v8728 = vld [vmem:[%s8519 + $0x340] sm:$0xf]
    %v8729 = vld [vmem:[%s8519 + $0x344] sm:$0xf]
    %v8730 = vld [vmem:[%s8519 + $0x348] sm:$0xf]
    %v8731 = vld [vmem:[%s8519 + $0x34c] sm:$0xf]
    %v8732 = vld [vmem:[%s8519 + $0x350] sm:$0xf]
    %v8733 = vld [vmem:[%s8519 + $0x354] sm:$0xf]
    %v8734 = vld [vmem:[%s8519 + $0x358] sm:$0xf]
    %v8735 = vld [vmem:[%s8519 + $0x35c] sm:$0xf]
    %v8736 = vld [vmem:[%s8519 + $0x360] sm:$0xf]
    %v8737 = vld [vmem:[%s8519 + $0x364] sm:$0xf]
    %v8738 = vld [vmem:[%s8519 + $0x368] sm:$0xf]
    %v8739 = vld [vmem:[%s8519 + $0x36c] sm:$0xf]
    %v8740 = vld [vmem:[%s8519 + $0x370] sm:$0xf]
    %v8741 = vld [vmem:[%s8519 + $0x374] sm:$0xf]
    %v8742 = vld [vmem:[%s8519 + $0x378] sm:$0xf]
    %v8743 = vld [vmem:[%s8519 + $0x37c] sm:$0xf]
    %v8744 = vld [vmem:[%s8519 + $0x380] sm:$0xf]
    %v8745 = vld [vmem:[%s8519 + $0x384] sm:$0xf]
    %v8746 = vld [vmem:[%s8519 + $0x388] sm:$0xf]
    %v8747 = vld [vmem:[%s8519 + $0x38c] sm:$0xf]
    %v8748 = vld [vmem:[%s8519 + $0x390] sm:$0xf]
    %v8749 = vld [vmem:[%s8519 + $0x394] sm:$0xf]
    %v8750 = vld [vmem:[%s8519 + $0x398] sm:$0xf]
    %v8751 = vld [vmem:[%s8519 + $0x39c] sm:$0xf]
    %v8752 = vld [vmem:[%s8519 + $0x3a0] sm:$0xf]
    %v8753 = vld [vmem:[%s8519 + $0x3a4] sm:$0xf]
    %v8754 = vld [vmem:[%s8519 + $0x3a8] sm:$0xf]
    %v8755 = vld [vmem:[%s8519 + $0x3ac] sm:$0xf]
    %v8756 = vld [vmem:[%s8519 + $0x3b0] sm:$0xf]
    %v8757 = vld [vmem:[%s8519 + $0x3b4] sm:$0xf]
    %v8758 = vld [vmem:[%s8519 + $0x3b8] sm:$0xf]
    %v8759 = vld [vmem:[%s8519 + $0x3bc] sm:$0xf]
    %v8760 = vld [vmem:[%s8519 + $0x3c0] sm:$0xf]
    %v8761 = vld [vmem:[%s8519 + $0x3c4] sm:$0xf]
    %v8762 = vld [vmem:[%s8519 + $0x3c8] sm:$0xf]
    %v8763 = vld [vmem:[%s8519 + $0x3cc] sm:$0xf]
    %v8764 = vld [vmem:[%s8519 + $0x3d0] sm:$0xf]
    %v8765 = vld [vmem:[%s8519 + $0x3d4] sm:$0xf]
    %v8766 = vld [vmem:[%s8519 + $0x3d8] sm:$0xf]
    %v8767 = vld [vmem:[%s8519 + $0x3dc] sm:$0xf]
    %v8768 = vld [vmem:[%s8519 + $0x3e0] sm:$0xf]
    %v8769 = vld [vmem:[%s8519 + $0x3e4] sm:$0xf]
    %v8770 = vld [vmem:[%s8519 + $0x3e8] sm:$0xf]
    %v8771 = vld [vmem:[%s8519 + $0x3ec] sm:$0xf]
    %v8772 = vld [vmem:[%s8519 + $0x3f0] sm:$0xf]
    %v8773 = vld [vmem:[%s8519 + $0x3f4] sm:$0xf]
    %v8774 = vld [vmem:[%s8519 + $0x3f8] sm:$0xf]
    %v8775 = vld [vmem:[%s8519 + $0x3fc] sm:$0xf]
    %s8776 = scalar_lea.vmem %s10, 1
    %v8777 = vld [vmem:[%s8776] sm:$0x1]
    %v8779 = vlaneseq
    %v8780 = vshrl.u32 %v8779, 7
    %v8781 = vsub.s32 0, %v8780
    %v8782 = vrot.slane %v8777, %v8781
    %v9040 = vunpack.c.l.b16 %v8520
    %v9041 = vunpack.c.l.b16 %v8521
    %v9042 = vunpack.c.l.b16 %v8522
    %v9043 = vunpack.c.l.b16 %v8523
    %v9044 = vunpack.c.l.b16 %v8524
    %v9045 = vunpack.c.l.b16 %v8525
    %v9046 = vunpack.c.l.b16 %v8526
    %v9047 = vunpack.c.l.b16 %v8527
    %v9048 = vunpack.c.l.b16 %v8528
    %v9049 = vunpack.c.l.b16 %v8529
    %v9050 = vunpack.c.l.b16 %v8530
    %v9051 = vunpack.c.l.b16 %v8531
    %v9052 = vunpack.c.l.b16 %v8532
    %v9053 = vunpack.c.l.b16 %v8533
    %v9054 = vunpack.c.l.b16 %v8534
    %v9055 = vunpack.c.l.b16 %v8535
    %v9056 = vunpack.c.l.b16 %v8536
    %v9057 = vunpack.c.l.b16 %v8537
    %v9058 = vunpack.c.l.b16 %v8538
    %v9059 = vunpack.c.l.b16 %v8539
    %v9060 = vunpack.c.l.b16 %v8540
    %v9061 = vunpack.c.l.b16 %v8541
    %v9062 = vunpack.c.l.b16 %v8542
    %v9063 = vunpack.c.l.b16 %v8543
    %v9064 = vunpack.c.l.b16 %v8544
    %v9065 = vunpack.c.l.b16 %v8545
    %v9066 = vunpack.c.l.b16 %v8546
    %v9067 = vunpack.c.l.b16 %v8547
    %v9068 = vunpack.c.l.b16 %v8548
    %v9069 = vunpack.c.l.b16 %v8549
    %v9070 = vunpack.c.l.b16 %v8550
    %v9071 = vunpack.c.l.b16 %v8551
    %v9072 = vunpack.c.l.b16 %v8552
    %v9073 = vunpack.c.l.b16 %v8553
    %v9074 = vunpack.c.l.b16 %v8554
    %v9075 = vunpack.c.l.b16 %v8555
    %v9076 = vunpack.c.l.b16 %v8556
    %v9077 = vunpack.c.l.b16 %v8557
    %v9078 = vunpack.c.l.b16 %v8558
    %v9079 = vunpack.c.l.b16 %v8559
    %v9080 = vunpack.c.l.b16 %v8560
    %v9081 = vunpack.c.l.b16 %v8561
    %v9082 = vunpack.c.l.b16 %v8562
    %v9083 = vunpack.c.l.b16 %v8563
    %v9084 = vunpack.c.l.b16 %v8564
    %v9085 = vunpack.c.l.b16 %v8565
    %v9086 = vunpack.c.l.b16 %v8566
    %v9087 = vunpack.c.l.b16 %v8567
    %v9088 = vunpack.c.l.b16 %v8568
    %v9089 = vunpack.c.l.b16 %v8569
    %v9090 = vunpack.c.l.b16 %v8570
    %v9091 = vunpack.c.l.b16 %v8571
    %v9092 = vunpack.c.l.b16 %v8572
    %v9093 = vunpack.c.l.b16 %v8573
    %v9094 = vunpack.c.l.b16 %v8574
    %v9095 = vunpack.c.l.b16 %v8575
    %v9096 = vunpack.c.l.b16 %v8576
    %v9097 = vunpack.c.l.b16 %v8577
    %v9098 = vunpack.c.l.b16 %v8578
    %v9099 = vunpack.c.l.b16 %v8579
    %v9100 = vunpack.c.l.b16 %v8580
    %v9101 = vunpack.c.l.b16 %v8581
    %v9102 = vunpack.c.l.b16 %v8582
    %v9103 = vunpack.c.l.b16 %v8583
    %v9104 = vunpack.c.l.b16 %v8584
    %v9105 = vunpack.c.l.b16 %v8585
    %v9106 = vunpack.c.l.b16 %v8586
    %v9107 = vunpack.c.l.b16 %v8587
    %v9108 = vunpack.c.l.b16 %v8588
    %v9109 = vunpack.c.l.b16 %v8589
    %v9110 = vunpack.c.l.b16 %v8590
    %v9111 = vunpack.c.l.b16 %v8591
    %v9112 = vunpack.c.l.b16 %v8592
    %v9113 = vunpack.c.l.b16 %v8593
    %v9114 = vunpack.c.l.b16 %v8594
    %v9115 = vunpack.c.l.b16 %v8595
    %v9116 = vunpack.c.l.b16 %v8596
    %v9117 = vunpack.c.l.b16 %v8597
    %v9118 = vunpack.c.l.b16 %v8598
    %v9119 = vunpack.c.l.b16 %v8599
    %v9120 = vunpack.c.l.b16 %v8600
    %v9121 = vunpack.c.l.b16 %v8601
    %v9122 = vunpack.c.l.b16 %v8602
    %v9123 = vunpack.c.l.b16 %v8603
    %v9124 = vunpack.c.l.b16 %v8604
    %v9125 = vunpack.c.l.b16 %v8605
    %v9126 = vunpack.c.l.b16 %v8606
    %v9127 = vunpack.c.l.b16 %v8607
    %v9128 = vunpack.c.l.b16 %v8608
    %v9129 = vunpack.c.l.b16 %v8609
    %v9130 = vunpack.c.l.b16 %v8610
    %v9131 = vunpack.c.l.b16 %v8611
    %v9132 = vunpack.c.l.b16 %v8612
    %v9133 = vunpack.c.l.b16 %v8613
    %v9134 = vunpack.c.l.b16 %v8614
    %v9135 = vunpack.c.l.b16 %v8615
    %v9136 = vunpack.c.l.b16 %v8616
    %v9137 = vunpack.c.l.b16 %v8617
    %v9138 = vunpack.c.l.b16 %v8618
    %v9139 = vunpack.c.l.b16 %v8619
    %v9140 = vunpack.c.l.b16 %v8620
    %v9141 = vunpack.c.l.b16 %v8621
    %v9142 = vunpack.c.l.b16 %v8622
    %v9143 = vunpack.c.l.b16 %v8623
    %v9144 = vunpack.c.l.b16 %v8624
    %v9145 = vunpack.c.l.b16 %v8625
    %v9146 = vunpack.c.l.b16 %v8626
    %v9147 = vunpack.c.l.b16 %v8627
    %v9148 = vunpack.c.l.b16 %v8628
    %v9149 = vunpack.c.l.b16 %v8629
    %v9150 = vunpack.c.l.b16 %v8630
    %v9151 = vunpack.c.l.b16 %v8631
    %v9152 = vunpack.c.l.b16 %v8632
    %v9153 = vunpack.c.l.b16 %v8633
    %v9154 = vunpack.c.l.b16 %v8634
    %v9155 = vunpack.c.l.b16 %v8635
    %v9156 = vunpack.c.l.b16 %v8636
    %v9157 = vunpack.c.l.b16 %v8637
    %v9158 = vunpack.c.l.b16 %v8638
    %v9159 = vunpack.c.l.b16 %v8639
    %v9160 = vunpack.c.l.b16 %v8640
    %v9161 = vunpack.c.l.b16 %v8641
    %v9162 = vunpack.c.l.b16 %v8642
    %v9163 = vunpack.c.l.b16 %v8643
    %v9164 = vunpack.c.l.b16 %v8644
    %v9165 = vunpack.c.l.b16 %v8645
    %v9166 = vunpack.c.l.b16 %v8646
    %v9167 = vunpack.c.l.b16 %v8647
    %v9168 = vunpack.c.l.b16 %v8648
    %v9169 = vunpack.c.l.b16 %v8649
    %v9170 = vunpack.c.l.b16 %v8650
    %v9171 = vunpack.c.l.b16 %v8651
    %v9172 = vunpack.c.l.b16 %v8652
    %v9173 = vunpack.c.l.b16 %v8653
    %v9174 = vunpack.c.l.b16 %v8654
    %v9175 = vunpack.c.l.b16 %v8655
    %v9176 = vunpack.c.l.b16 %v8656
    %v9177 = vunpack.c.l.b16 %v8657
    %v9178 = vunpack.c.l.b16 %v8658
    %v9179 = vunpack.c.l.b16 %v8659
    %v9180 = vunpack.c.l.b16 %v8660
    %v9181 = vunpack.c.l.b16 %v8661
    %v9182 = vunpack.c.l.b16 %v8662
    %v9183 = vunpack.c.l.b16 %v8663
    %v9184 = vunpack.c.l.b16 %v8664
    %v9185 = vunpack.c.l.b16 %v8665
    %v9186 = vunpack.c.l.b16 %v8666
    %v9187 = vunpack.c.l.b16 %v8667
    %v9188 = vunpack.c.l.b16 %v8668
    %v9189 = vunpack.c.l.b16 %v8669
    %v9190 = vunpack.c.l.b16 %v8670
    %v9191 = vunpack.c.l.b16 %v8671
    %v9192 = vunpack.c.l.b16 %v8672
    %v9193 = vunpack.c.l.b16 %v8673
    %v9194 = vunpack.c.l.b16 %v8674
    %v9195 = vunpack.c.l.b16 %v8675
    %v9196 = vunpack.c.l.b16 %v8676
    %v9197 = vunpack.c.l.b16 %v8677
    %v9198 = vunpack.c.l.b16 %v8678
    %v9199 = vunpack.c.l.b16 %v8679
    %v9200 = vunpack.c.l.b16 %v8680
    %v9201 = vunpack.c.l.b16 %v8681
    %v9202 = vunpack.c.l.b16 %v8682
    %v9203 = vunpack.c.l.b16 %v8683
    %v9204 = vunpack.c.l.b16 %v8684
    %v9205 = vunpack.c.l.b16 %v8685
    %v9206 = vunpack.c.l.b16 %v8686
    %v9207 = vunpack.c.l.b16 %v8687
    %v9208 = vunpack.c.l.b16 %v8688
    %v9209 = vunpack.c.l.b16 %v8689
    %v9210 = vunpack.c.l.b16 %v8690
    %v9211 = vunpack.c.l.b16 %v8691
    %v9212 = vunpack.c.l.b16 %v8692
    %v9213 = vunpack.c.l.b16 %v8693
    %v9214 = vunpack.c.l.b16 %v8694
    %v9215 = vunpack.c.l.b16 %v8695
    %v9216 = vunpack.c.l.b16 %v8696
    %v9217 = vunpack.c.l.b16 %v8697
    %v9218 = vunpack.c.l.b16 %v8698
    %v9219 = vunpack.c.l.b16 %v8699
    %v9220 = vunpack.c.l.b16 %v8700
    %v9221 = vunpack.c.l.b16 %v8701
    %v9222 = vunpack.c.l.b16 %v8702
    %v9223 = vunpack.c.l.b16 %v8703
    %v9224 = vunpack.c.l.b16 %v8704
    %v9225 = vunpack.c.l.b16 %v8705
    %v9226 = vunpack.c.l.b16 %v8706
    %v9227 = vunpack.c.l.b16 %v8707
    %v9228 = vunpack.c.l.b16 %v8708
    %v9229 = vunpack.c.l.b16 %v8709
    %v9230 = vunpack.c.l.b16 %v8710
    %v9231 = vunpack.c.l.b16 %v8711
    %v9232 = vunpack.c.l.b16 %v8712
    %v9233 = vunpack.c.l.b16 %v8713
    %v9234 = vunpack.c.l.b16 %v8714
    %v9235 = vunpack.c.l.b16 %v8715
    %v9236 = vunpack.c.l.b16 %v8716
    %v9237 = vunpack.c.l.b16 %v8717
    %v9238 = vunpack.c.l.b16 %v8718
    %v9239 = vunpack.c.l.b16 %v8719
    %v9240 = vunpack.c.l.b16 %v8720
    %v9241 = vunpack.c.l.b16 %v8721
    %v9242 = vunpack.c.l.b16 %v8722
    %v9243 = vunpack.c.l.b16 %v8723
    %v9244 = vunpack.c.l.b16 %v8724
    %v9245 = vunpack.c.l.b16 %v8725
    %v9246 = vunpack.c.l.b16 %v8726
    %v9247 = vunpack.c.l.b16 %v8727
    %v9248 = vunpack.c.l.b16 %v8728
    %v9249 = vunpack.c.l.b16 %v8729
    %v9250 = vunpack.c.l.b16 %v8730
    %v9251 = vunpack.c.l.b16 %v8731
    %v9252 = vunpack.c.l.b16 %v8732
    %v9253 = vunpack.c.l.b16 %v8733
    %v9254 = vunpack.c.l.b16 %v8734
    %v9255 = vunpack.c.l.b16 %v8735
    %v9256 = vunpack.c.l.b16 %v8736
    %v9257 = vunpack.c.l.b16 %v8737
    %v9258 = vunpack.c.l.b16 %v8738
    %v9259 = vunpack.c.l.b16 %v8739
    %v9260 = vunpack.c.l.b16 %v8740
    %v9261 = vunpack.c.l.b16 %v8741
    %v9262 = vunpack.c.l.b16 %v8742
    %v9263 = vunpack.c.l.b16 %v8743
    %v9264 = vunpack.c.l.b16 %v8744
    %v9265 = vunpack.c.l.b16 %v8745
    %v9266 = vunpack.c.l.b16 %v8746
    %v9267 = vunpack.c.l.b16 %v8747
    %v9268 = vunpack.c.l.b16 %v8748
    %v9269 = vunpack.c.l.b16 %v8749
    %v9270 = vunpack.c.l.b16 %v8750
    %v9271 = vunpack.c.l.b16 %v8751
    %v9272 = vunpack.c.l.b16 %v8752
    %v9273 = vunpack.c.l.b16 %v8753
    %v9274 = vunpack.c.l.b16 %v8754
    %v9275 = vunpack.c.l.b16 %v8755
    %v9276 = vunpack.c.l.b16 %v8756
    %v9277 = vunpack.c.l.b16 %v8757
    %v9278 = vunpack.c.l.b16 %v8758
    %v9279 = vunpack.c.l.b16 %v8759
    %v9280 = vunpack.c.l.b16 %v8760
    %v9281 = vunpack.c.l.b16 %v8761
    %v9282 = vunpack.c.l.b16 %v8762
    %v9283 = vunpack.c.l.b16 %v8763
    %v9284 = vunpack.c.l.b16 %v8764
    %v9285 = vunpack.c.l.b16 %v8765
    %v9286 = vunpack.c.l.b16 %v8766
    %v9287 = vunpack.c.l.b16 %v8767
    %v9288 = vunpack.c.l.b16 %v8768
    %v9289 = vunpack.c.l.b16 %v8769
    %v9290 = vunpack.c.l.b16 %v8770
    %v9291 = vunpack.c.l.b16 %v8771
    %v9292 = vunpack.c.l.b16 %v8772
    %v9293 = vunpack.c.l.b16 %v8773
    %v9294 = vunpack.c.l.b16 %v8774
    %v9295 = vunpack.c.l.b16 %v8775
    %v9296 = vpack.c.b16 %v9041, %v9040
    %v9297 = vpack.c.b16 %v9043, %v9042
    %v9298 = vpack.c.b16 %v9045, %v9044
    %v9299 = vpack.c.b16 %v9047, %v9046
    %v9300 = vpack.c.b16 %v9049, %v9048
    %v9301 = vpack.c.b16 %v9051, %v9050
    %v9302 = vpack.c.b16 %v9053, %v9052
    %v9303 = vpack.c.b16 %v9055, %v9054
    %v9304 = vpack.c.b16 %v9057, %v9056
    %v9305 = vpack.c.b16 %v9059, %v9058
    %v9306 = vpack.c.b16 %v9061, %v9060
    %v9307 = vpack.c.b16 %v9063, %v9062
    %v9308 = vpack.c.b16 %v9065, %v9064
    %v9309 = vpack.c.b16 %v9067, %v9066
    %v9310 = vpack.c.b16 %v9069, %v9068
    %v9311 = vpack.c.b16 %v9071, %v9070
    %v9312 = vpack.c.b16 %v9073, %v9072
    %v9313 = vpack.c.b16 %v9075, %v9074
    %v9314 = vpack.c.b16 %v9077, %v9076
    %v9315 = vpack.c.b16 %v9079, %v9078
    %v9316 = vpack.c.b16 %v9081, %v9080
    %v9317 = vpack.c.b16 %v9083, %v9082
    %v9318 = vpack.c.b16 %v9085, %v9084
    %v9319 = vpack.c.b16 %v9087, %v9086
    %v9320 = vpack.c.b16 %v9089, %v9088
    %v9321 = vpack.c.b16 %v9091, %v9090
    %v9322 = vpack.c.b16 %v9093, %v9092
    %v9323 = vpack.c.b16 %v9095, %v9094
    %v9324 = vpack.c.b16 %v9097, %v9096
    %v9325 = vpack.c.b16 %v9099, %v9098
    %v9326 = vpack.c.b16 %v9101, %v9100
    %v9327 = vpack.c.b16 %v9103, %v9102
    %v9328 = vpack.c.b16 %v9105, %v9104
    %v9329 = vpack.c.b16 %v9107, %v9106
    %v9330 = vpack.c.b16 %v9109, %v9108
    %v9331 = vpack.c.b16 %v9111, %v9110
    %v9332 = vpack.c.b16 %v9113, %v9112
    %v9333 = vpack.c.b16 %v9115, %v9114
    %v9334 = vpack.c.b16 %v9117, %v9116
    %v9335 = vpack.c.b16 %v9119, %v9118
    %v9336 = vpack.c.b16 %v9121, %v9120
    %v9337 = vpack.c.b16 %v9123, %v9122
    %v9338 = vpack.c.b16 %v9125, %v9124
    %v9339 = vpack.c.b16 %v9127, %v9126
    %v9340 = vpack.c.b16 %v9129, %v9128
    %v9341 = vpack.c.b16 %v9131, %v9130
    %v9342 = vpack.c.b16 %v9133, %v9132
    %v9343 = vpack.c.b16 %v9135, %v9134
    %v9344 = vpack.c.b16 %v9137, %v9136
    %v9345 = vpack.c.b16 %v9139, %v9138
    %v9346 = vpack.c.b16 %v9141, %v9140
    %v9347 = vpack.c.b16 %v9143, %v9142
    %v9348 = vpack.c.b16 %v9145, %v9144
    %v9349 = vpack.c.b16 %v9147, %v9146
    %v9350 = vpack.c.b16 %v9149, %v9148
    %v9351 = vpack.c.b16 %v9151, %v9150
    %v9352 = vpack.c.b16 %v9153, %v9152
    %v9353 = vpack.c.b16 %v9155, %v9154
    %v9354 = vpack.c.b16 %v9157, %v9156
    %v9355 = vpack.c.b16 %v9159, %v9158
    %v9356 = vpack.c.b16 %v9161, %v9160
    %v9357 = vpack.c.b16 %v9163, %v9162
    %v9358 = vpack.c.b16 %v9165, %v9164
    %v9359 = vpack.c.b16 %v9167, %v9166
    %v9360 = vpack.c.b16 %v9169, %v9168
    %v9361 = vpack.c.b16 %v9171, %v9170
    %v9362 = vpack.c.b16 %v9173, %v9172
    %v9363 = vpack.c.b16 %v9175, %v9174
    %v9364 = vpack.c.b16 %v9177, %v9176
    %v9365 = vpack.c.b16 %v9179, %v9178
    %v9366 = vpack.c.b16 %v9181, %v9180
    %v9367 = vpack.c.b16 %v9183, %v9182
    %v9368 = vpack.c.b16 %v9185, %v9184
    %v9369 = vpack.c.b16 %v9187, %v9186
    %v9370 = vpack.c.b16 %v9189, %v9188
    %v9371 = vpack.c.b16 %v9191, %v9190
    %v9372 = vpack.c.b16 %v9193, %v9192
    %v9373 = vpack.c.b16 %v9195, %v9194
    %v9374 = vpack.c.b16 %v9197, %v9196
    %v9375 = vpack.c.b16 %v9199, %v9198
    %v9376 = vpack.c.b16 %v9201, %v9200
    %v9377 = vpack.c.b16 %v9203, %v9202
    %v9378 = vpack.c.b16 %v9205, %v9204
    %v9379 = vpack.c.b16 %v9207, %v9206
    %v9380 = vpack.c.b16 %v9209, %v9208
    %v9381 = vpack.c.b16 %v9211, %v9210
    %v9382 = vpack.c.b16 %v9213, %v9212
    %v9383 = vpack.c.b16 %v9215, %v9214
    %v9384 = vpack.c.b16 %v9217, %v9216
    %v9385 = vpack.c.b16 %v9219, %v9218
    %v9386 = vpack.c.b16 %v9221, %v9220
    %v9387 = vpack.c.b16 %v9223, %v9222
    %v9388 = vpack.c.b16 %v9225, %v9224
    %v9389 = vpack.c.b16 %v9227, %v9226
    %v9390 = vpack.c.b16 %v9229, %v9228
    %v9391 = vpack.c.b16 %v9231, %v9230
    %v9392 = vpack.c.b16 %v9233, %v9232
    %v9393 = vpack.c.b16 %v9235, %v9234
    %v9394 = vpack.c.b16 %v9237, %v9236
    %v9395 = vpack.c.b16 %v9239, %v9238
    %v9396 = vpack.c.b16 %v9241, %v9240
    %v9397 = vpack.c.b16 %v9243, %v9242
    %v9398 = vpack.c.b16 %v9245, %v9244
    %v9399 = vpack.c.b16 %v9247, %v9246
    %v9400 = vpack.c.b16 %v9249, %v9248
    %v9401 = vpack.c.b16 %v9251, %v9250
    %v9402 = vpack.c.b16 %v9253, %v9252
    %v9403 = vpack.c.b16 %v9255, %v9254
    %v9404 = vpack.c.b16 %v9257, %v9256
    %v9405 = vpack.c.b16 %v9259, %v9258
    %v9406 = vpack.c.b16 %v9261, %v9260
    %v9407 = vpack.c.b16 %v9263, %v9262
    %v9408 = vpack.c.b16 %v9265, %v9264
    %v9409 = vpack.c.b16 %v9267, %v9266
    %v9410 = vpack.c.b16 %v9269, %v9268
    %v9411 = vpack.c.b16 %v9271, %v9270
    %v9412 = vpack.c.b16 %v9273, %v9272
    %v9413 = vpack.c.b16 %v9275, %v9274
    %v9414 = vpack.c.b16 %v9277, %v9276
    %v9415 = vpack.c.b16 %v9279, %v9278
    %v9416 = vpack.c.b16 %v9281, %v9280
    %v9417 = vpack.c.b16 %v9283, %v9282
    %v9418 = vpack.c.b16 %v9285, %v9284
    %v9419 = vpack.c.b16 %v9287, %v9286
    %v9420 = vpack.c.b16 %v9289, %v9288
    %v9421 = vpack.c.b16 %v9291, %v9290
    %v9422 = vpack.c.b16 %v9293, %v9292
    %v9423 = vpack.c.b16 %v9295, %v9294
    %9552 = vmatprep.subr.bf16.mxu0 0
    %9553 = vmatpush1.bf16.msra.mxu0 %v9296
    %9554 = vmatprep.subr.bf16.mxu0 0
    %9555 = vmatpush1.bf16.msra.mxu0 %v9297
    %9556 = vmatprep.subr.bf16.mxu0 0
    %9557 = vmatpush1.bf16.msra.mxu0 %v9298
    %9558 = vmatprep.subr.bf16.mxu0 0
    %9559 = vmatpush1.bf16.msra.mxu0 %v9299
    %9560 = vmatprep.subr.bf16.mxu0 0
    %9561 = vmatpush1.bf16.msra.mxu0 %v9300
    %9562 = vmatprep.subr.bf16.mxu0 0
    %9563 = vmatpush1.bf16.msra.mxu0 %v9301
    %9564 = vmatprep.subr.bf16.mxu0 0
    %9565 = vmatpush1.bf16.msra.mxu0 %v9302
    %9566 = vmatprep.subr.bf16.mxu0 0
    %9567 = vmatpush1.bf16.msra.mxu0 %v9303
    %9568 = vmatprep.subr.bf16.mxu0 0
    %9569 = vmatpush1.bf16.msra.mxu0 %v9304
    %9570 = vmatprep.subr.bf16.mxu0 0
    %9571 = vmatpush1.bf16.msra.mxu0 %v9305
    %9572 = vmatprep.subr.bf16.mxu0 0
    %9573 = vmatpush1.bf16.msra.mxu0 %v9306
    %9574 = vmatprep.subr.bf16.mxu0 0
    %9575 = vmatpush1.bf16.msra.mxu0 %v9307
    %9576 = vmatprep.subr.bf16.mxu0 0
    %9577 = vmatpush1.bf16.msra.mxu0 %v9308
    %9578 = vmatprep.subr.bf16.mxu0 0
    %9579 = vmatpush1.bf16.msra.mxu0 %v9309
    %9580 = vmatprep.subr.bf16.mxu0 0
    %9581 = vmatpush1.bf16.msra.mxu0 %v9310
    %9582 = vmatprep.subr.bf16.mxu0 0
    %9583 = vmatpush1.bf16.msra.mxu0 %v9311
    %9584 = vmatprep.mubr.bf16.mxu0 %v8504
    %9585 = vmatmul.mubr.bf16.gmra.mrb[0].mxu0 %v8503
    %v9586 = vpop.f32.mrb[0].mxu0
    %v9587 = vadd.f32 %v8782, %v9586
    %v9588 = vpop.f32.mrb[0].mxu0
    %v9589 = vpop.f32.mrb[0].mxu0
    %v9590 = vadd.f32 %v8782, %v9589
    %v9591 = vpop.f32.mrb[0].mxu0
    %9592 = vdwg.mxu0
    %9593 = vmatprep.subr.bf16.mxu0 0
    %9594 = vmatpush1.bf16.msra.mxu0 %v9312
    %9595 = vmatprep.subr.bf16.mxu0 0
    %9596 = vmatpush1.bf16.msra.mxu0 %v9313
    %9597 = vmatprep.subr.bf16.mxu0 0
    %9598 = vmatpush1.bf16.msra.mxu0 %v9314
    %9599 = vmatprep.subr.bf16.mxu0 0
    %9600 = vmatpush1.bf16.msra.mxu0 %v9315
    %9601 = vmatprep.subr.bf16.mxu0 0
    %9602 = vmatpush1.bf16.msra.mxu0 %v9316
    %9603 = vmatprep.subr.bf16.mxu0 0
    %9604 = vmatpush1.bf16.msra.mxu0 %v9317
    %9605 = vmatprep.subr.bf16.mxu0 0
    %9606 = vmatpush1.bf16.msra.mxu0 %v9318
    %9607 = vmatprep.subr.bf16.mxu0 0
    %9608 = vmatpush1.bf16.msra.mxu0 %v9319
    %9609 = vmatprep.subr.bf16.mxu0 0
    %9610 = vmatpush1.bf16.msra.mxu0 %v9320
    %9611 = vmatprep.subr.bf16.mxu0 0
    %9612 = vmatpush1.bf16.msra.mxu0 %v9321
    %9613 = vmatprep.subr.bf16.mxu0 0
    %9614 = vmatpush1.bf16.msra.mxu0 %v9322
    %9615 = vmatprep.subr.bf16.mxu0 0
    %9616 = vmatpush1.bf16.msra.mxu0 %v9323
    %9617 = vmatprep.subr.bf16.mxu0 0
    %9618 = vmatpush1.bf16.msra.mxu0 %v9324
    %9619 = vmatprep.subr.bf16.mxu0 0
    %9620 = vmatpush1.bf16.msra.mxu0 %v9325
    %9621 = vmatprep.subr.bf16.mxu0 0
    %9622 = vmatpush1.bf16.msra.mxu0 %v9326
    %9623 = vmatprep.subr.bf16.mxu0 0
    %9624 = vmatpush1.bf16.msra.mxu0 %v9327
    %9625 = vmatprep.mubr.bf16.mxu0 %v8506
    %9626 = vmatmul.mubr.bf16.gmra.mrb[0].mxu0 %v8505
    %v9627 = vpop.f32.mrb[0].mxu0
    %v9628 = vadd.f32 %v9587, %v9627
    %v9629 = vpop.f32.mrb[0].mxu0
    %v9630 = vpop.f32.mrb[0].mxu0
    %v9631 = vadd.f32 %v9590, %v9630
    %v9632 = vpop.f32.mrb[0].mxu0
    %9633 = vdwg.mxu0
    %9634 = vmatprep.subr.bf16.mxu0 0
    %9635 = vmatpush1.bf16.msra.mxu0 %v9328
    %9636 = vmatprep.subr.bf16.mxu0 0
    %9637 = vmatpush1.bf16.msra.mxu0 %v9329
    %9638 = vmatprep.subr.bf16.mxu0 0
    %9639 = vmatpush1.bf16.msra.mxu0 %v9330
    %9640 = vmatprep.subr.bf16.mxu0 0
    %9641 = vmatpush1.bf16.msra.mxu0 %v9331
    %9642 = vmatprep.subr.bf16.mxu0 0
    %9643 = vmatpush1.bf16.msra.mxu0 %v9332
    %9644 = vmatprep.subr.bf16.mxu0 0
    %9645 = vmatpush1.bf16.msra.mxu0 %v9333
    %9646 = vmatprep.subr.bf16.mxu0 0
    %9647 = vmatpush1.bf16.msra.mxu0 %v9334
    %9648 = vmatprep.subr.bf16.mxu0 0
    %9649 = vmatpush1.bf16.msra.mxu0 %v9335
    %9650 = vmatprep.subr.bf16.mxu0 0
    %9651 = vmatpush1.bf16.msra.mxu0 %v9336
    %9652 = vmatprep.subr.bf16.mxu0 0
    %9653 = vmatpush1.bf16.msra.mxu0 %v9337
    %9654 = vmatprep.subr.bf16.mxu0 0
    %9655 = vmatpush1.bf16.msra.mxu0 %v9338
    %9656 = vmatprep.subr.bf16.mxu0 0
    %9657 = vmatpush1.bf16.msra.mxu0 %v9339
    %9658 = vmatprep.subr.bf16.mxu0 0
    %9659 = vmatpush1.bf16.msra.mxu0 %v9340
    %9660 = vmatprep.subr.bf16.mxu0 0
    %9661 = vmatpush1.bf16.msra.mxu0 %v9341
    %9662 = vmatprep.subr.bf16.mxu0 0
    %9663 = vmatpush1.bf16.msra.mxu0 %v9342
    %9664 = vmatprep.subr.bf16.mxu0 0
    %9665 = vmatpush1.bf16.msra.mxu0 %v9343
    %9666 = vmatprep.mubr.bf16.mxu0 %v8508
    %9667 = vmatmul.mubr.bf16.gmra.mrb[0].mxu0 %v8507
    %v9668 = vpop.f32.mrb[0].mxu0
    %v9669 = vadd.f32 %v9628, %v9668
    %v9670 = vpop.f32.mrb[0].mxu0
    %v9671 = vpop.f32.mrb[0].mxu0
    %v9672 = vadd.f32 %v9631, %v9671
    %v9673 = vpop.f32.mrb[0].mxu0
    %9674 = vdwg.mxu0
    %9675 = vmatprep.subr.bf16.mxu0 0
    %9676 = vmatpush1.bf16.msra.mxu0 %v9344
    %9677 = vmatprep.subr.bf16.mxu0 0
    %9678 = vmatpush1.bf16.msra.mxu0 %v9345
    %9679 = vmatprep.subr.bf16.mxu0 0
    %9680 = vmatpush1.bf16.msra.mxu0 %v9346
    %9681 = vmatprep.subr.bf16.mxu0 0
    %9682 = vmatpush1.bf16.msra.mxu0 %v9347
    %9683 = vmatprep.subr.bf16.mxu0 0
    %9684 = vmatpush1.bf16.msra.mxu0 %v9348
    %9685 = vmatprep.subr.bf16.mxu0 0
    %9686 = vmatpush1.bf16.msra.mxu0 %v9349
    %9687 = vmatprep.subr.bf16.mxu0 0
    %9688 = vmatpush1.bf16.msra.mxu0 %v9350
    %9689 = vmatprep.subr.bf16.mxu0 0
    %9690 = vmatpush1.bf16.msra.mxu0 %v9351
    %9691 = vmatprep.subr.bf16.mxu0 0
    %9692 = vmatpush1.bf16.msra.mxu0 %v9352
    %9693 = vmatprep.subr.bf16.mxu0 0
    %9694 = vmatpush1.bf16.msra.mxu0 %v9353
    %9695 = vmatprep.subr.bf16.mxu0 0
    %9696 = vmatpush1.bf16.msra.mxu0 %v9354
    %9697 = vmatprep.subr.bf16.mxu0 0
    %9698 = vmatpush1.bf16.msra.mxu0 %v9355
    %9699 = vmatprep.subr.bf16.mxu0 0
    %9700 = vmatpush1.bf16.msra.mxu0 %v9356
    %9701 = vmatprep.subr.bf16.mxu0 0
    %9702 = vmatpush1.bf16.msra.mxu0 %v9357
    %9703 = vmatprep.subr.bf16.mxu0 0
    %9704 = vmatpush1.bf16.msra.mxu0 %v9358
    %9705 = vmatprep.subr.bf16.mxu0 0
    %9706 = vmatpush1.bf16.msra.mxu0 %v9359
    %9707 = vmatprep.mubr.bf16.mxu0 %v8510
    %9708 = vmatmul.mubr.bf16.gmra.mrb[0].mxu0 %v8509
    %v9709 = vpop.f32.mrb[0].mxu0
    %v9710 = vadd.f32 %v9669, %v9709
    %v9711 = vpop.f32.mrb[0].mxu0
    %v9712 = vpop.f32.mrb[0].mxu0
    %v9713 = vadd.f32 %v9672, %v9712
    %v9714 = vpop.f32.mrb[0].mxu0
    %9715 = vdwg.mxu0
    %9716 = vmatprep.subr.bf16.mxu0 0
    %9717 = vmatpush1.bf16.msra.mxu0 %v9360
    %9718 = vmatprep.subr.bf16.mxu0 0
    %9719 = vmatpush1.bf16.msra.mxu0 %v9361
    %9720 = vmatprep.subr.bf16.mxu0 0
    %9721 = vmatpush1.bf16.msra.mxu0 %v9362
    %9722 = vmatprep.subr.bf16.mxu0 0
    %9723 = vmatpush1.bf16.msra.mxu0 %v9363
    %9724 = vmatprep.subr.bf16.mxu0 0
    %9725 = vmatpush1.bf16.msra.mxu0 %v9364
    %9726 = vmatprep.subr.bf16.mxu0 0
    %9727 = vmatpush1.bf16.msra.mxu0 %v9365
    %9728 = vmatprep.subr.bf16.mxu0 0
    %9729 = vmatpush1.bf16.msra.mxu0 %v9366
    %9730 = vmatprep.subr.bf16.mxu0 0
    %9731 = vmatpush1.bf16.msra.mxu0 %v9367
    %9732 = vmatprep.subr.bf16.mxu0 0
    %9733 = vmatpush1.bf16.msra.mxu0 %v9368
    %9734 = vmatprep.subr.bf16.mxu0 0
    %9735 = vmatpush1.bf16.msra.mxu0 %v9369
    %9736 = vmatprep.subr.bf16.mxu0 0
    %9737 = vmatpush1.bf16.msra.mxu0 %v9370
    %9738 = vmatprep.subr.bf16.mxu0 0
    %9739 = vmatpush1.bf16.msra.mxu0 %v9371
    %9740 = vmatprep.subr.bf16.mxu0 0
    %9741 = vmatpush1.bf16.msra.mxu0 %v9372
    %9742 = vmatprep.subr.bf16.mxu0 0
    %9743 = vmatpush1.bf16.msra.mxu0 %v9373
    %9744 = vmatprep.subr.bf16.mxu0 0
    %9745 = vmatpush1.bf16.msra.mxu0 %v9374
    %9746 = vmatprep.subr.bf16.mxu0 0
    %9747 = vmatpush1.bf16.msra.mxu0 %v9375
    %9748 = vmatprep.mubr.bf16.mxu0 %v8512
    %9749 = vmatmul.mubr.bf16.gmra.mrb[0].mxu0 %v8511
    %v9750 = vpop.f32.mrb[0].mxu0
    %v9751 = vadd.f32 %v9710, %v9750
    %v9752 = vpop.f32.mrb[0].mxu0
    %v9753 = vpop.f32.mrb[0].mxu0
    %v9754 = vadd.f32 %v9713, %v9753
    %v9755 = vpop.f32.mrb[0].mxu0
    %9756 = vdwg.mxu0
    %9757 = vmatprep.subr.bf16.mxu0 0
    %9758 = vmatpush1.bf16.msra.mxu0 %v9376
    %9759 = vmatprep.subr.bf16.mxu0 0
    %9760 = vmatpush1.bf16.msra.mxu0 %v9377
    %9761 = vmatprep.subr.bf16.mxu0 0
    %9762 = vmatpush1.bf16.msra.mxu0 %v9378
    %9763 = vmatprep.subr.bf16.mxu0 0
    %9764 = vmatpush1.bf16.msra.mxu0 %v9379
    %9765 = vmatprep.subr.bf16.mxu0 0
    %9766 = vmatpush1.bf16.msra.mxu0 %v9380
    %9767 = vmatprep.subr.bf16.mxu0 0
    %9768 = vmatpush1.bf16.msra.mxu0 %v9381
    %9769 = vmatprep.subr.bf16.mxu0 0
    %9770 = vmatpush1.bf16.msra.mxu0 %v9382
    %9771 = vmatprep.subr.bf16.mxu0 0
    %9772 = vmatpush1.bf16.msra.mxu0 %v9383
    %9773 = vmatprep.subr.bf16.mxu0 0
    %9774 = vmatpush1.bf16.msra.mxu0 %v9384
    %9775 = vmatprep.subr.bf16.mxu0 0
    %9776 = vmatpush1.bf16.msra.mxu0 %v9385
    %9777 = vmatprep.subr.bf16.mxu0 0
    %9778 = vmatpush1.bf16.msra.mxu0 %v9386
    %9779 = vmatprep.subr.bf16.mxu0 0
    %9780 = vmatpush1.bf16.msra.mxu0 %v9387
    %9781 = vmatprep.subr.bf16.mxu0 0
    %9782 = vmatpush1.bf16.msra.mxu0 %v9388
    %9783 = vmatprep.subr.bf16.mxu0 0
    %9784 = vmatpush1.bf16.msra.mxu0 %v9389
    %9785 = vmatprep.subr.bf16.mxu0 0
    %9786 = vmatpush1.bf16.msra.mxu0 %v9390
    %9787 = vmatprep.subr.bf16.mxu0 0
    %9788 = vmatpush1.bf16.msra.mxu0 %v9391
    %9789 = vmatprep.mubr.bf16.mxu0 %v8514
    %9790 = vmatmul.mubr.bf16.gmra.mrb[0].mxu0 %v8513
    %v9791 = vpop.f32.mrb[0].mxu0
    %v9792 = vadd.f32 %v9751, %v9791
    %v9793 = vpop.f32.mrb[0].mxu0
    %v9794 = vpop.f32.mrb[0].mxu0
    %v9795 = vadd.f32 %v9754, %v9794
    %v9796 = vpop.f32.mrb[0].mxu0
    %9797 = vdwg.mxu0
    %9798 = vmatprep.subr.bf16.mxu0 0
    %9799 = vmatpush1.bf16.msra.mxu0 %v9392
    %9800 = vmatprep.subr.bf16.mxu0 0
    %9801 = vmatpush1.bf16.msra.mxu0 %v9393
    %9802 = vmatprep.subr.bf16.mxu0 0
    %9803 = vmatpush1.bf16.msra.mxu0 %v9394
    %9804 = vmatprep.subr.bf16.mxu0 0
    %9805 = vmatpush1.bf16.msra.mxu0 %v9395
    %9806 = vmatprep.subr.bf16.mxu0 0
    %9807 = vmatpush1.bf16.msra.mxu0 %v9396
    %9808 = vmatprep.subr.bf16.mxu0 0
    %9809 = vmatpush1.bf16.msra.mxu0 %v9397
    %9810 = vmatprep.subr.bf16.mxu0 0
    %9811 = vmatpush1.bf16.msra.mxu0 %v9398
    %9812 = vmatprep.subr.bf16.mxu0 0
    %9813 = vmatpush1.bf16.msra.mxu0 %v9399
    %9814 = vmatprep.subr.bf16.mxu0 0
    %9815 = vmatpush1.bf16.msra.mxu0 %v9400
    %9816 = vmatprep.subr.bf16.mxu0 0
    %9817 = vmatpush1.bf16.msra.mxu0 %v9401
    %9818 = vmatprep.subr.bf16.mxu0 0
    %9819 = vmatpush1.bf16.msra.mxu0 %v9402
    %9820 = vmatprep.subr.bf16.mxu0 0
    %9821 = vmatpush1.bf16.msra.mxu0 %v9403
    %9822 = vmatprep.subr.bf16.mxu0 0
    %9823 = vmatpush1.bf16.msra.mxu0 %v9404
    %9824 = vmatprep.subr.bf16.mxu0 0
    %9825 = vmatpush1.bf16.msra.mxu0 %v9405
    %9826 = vmatprep.subr.bf16.mxu0 0
    %9827 = vmatpush1.bf16.msra.mxu0 %v9406
    %9828 = vmatprep.subr.bf16.mxu0 0
    %9829 = vmatpush1.bf16.msra.mxu0 %v9407
    %9830 = vmatprep.mubr.bf16.mxu0 %v8516
    %9831 = vmatmul.mubr.bf16.gmra.mrb[0].mxu0 %v8515
    %v9832 = vpop.f32.mrb[0].mxu0
    %v9833 = vadd.f32 %v9792, %v9832
    %v9834 = vpop.f32.mrb[0].mxu0
    %v9835 = vpop.f32.mrb[0].mxu0
    %v9836 = vadd.f32 %v9795, %v9835
    %v9837 = vpop.f32.mrb[0].mxu0
    %9838 = vdwg.mxu0
    %9839 = vmatprep.subr.bf16.mxu0 0
    %9840 = vmatpush1.bf16.msra.mxu0 %v9408
    %9841 = vmatprep.subr.bf16.mxu0 0
    %9842 = vmatpush1.bf16.msra.mxu0 %v9409
    %9843 = vmatprep.subr.bf16.mxu0 0
    %9844 = vmatpush1.bf16.msra.mxu0 %v9410
    %9845 = vmatprep.subr.bf16.mxu0 0
    %9846 = vmatpush1.bf16.msra.mxu0 %v9411
    %9847 = vmatprep.subr.bf16.mxu0 0
    %9848 = vmatpush1.bf16.msra.mxu0 %v9412
    %9849 = vmatprep.subr.bf16.mxu0 0
    %9850 = vmatpush1.bf16.msra.mxu0 %v9413
    %9851 = vmatprep.subr.bf16.mxu0 0
    %9852 = vmatpush1.bf16.msra.mxu0 %v9414
    %9853 = vmatprep.subr.bf16.mxu0 0
    %9854 = vmatpush1.bf16.msra.mxu0 %v9415
    %9855 = vmatprep.subr.bf16.mxu0 0
    %9856 = vmatpush1.bf16.msra.mxu0 %v9416
    %9857 = vmatprep.subr.bf16.mxu0 0
    %9858 = vmatpush1.bf16.msra.mxu0 %v9417
    %9859 = vmatprep.subr.bf16.mxu0 0
    %9860 = vmatpush1.bf16.msra.mxu0 %v9418
    %9861 = vmatprep.subr.bf16.mxu0 0
    %9862 = vmatpush1.bf16.msra.mxu0 %v9419
    %9863 = vmatprep.subr.bf16.mxu0 0
    %9864 = vmatpush1.bf16.msra.mxu0 %v9420
    %9865 = vmatprep.subr.bf16.mxu0 0
    %9866 = vmatpush1.bf16.msra.mxu0 %v9421
    %9867 = vmatprep.subr.bf16.mxu0 0
    %9868 = vmatpush1.bf16.msra.mxu0 %v9422
    %9869 = vmatprep.subr.bf16.mxu0 0
    %9870 = vmatpush1.bf16.msra.mxu0 %v9423
    %9871 = vmatprep.mubr.bf16.mxu0 %v8518
    %9872 = vmatmul.mubr.bf16.gmra.mrb[0].mxu0 %v8517
    %v9873 = vpop.f32.mrb[0].mxu0
    %v9874 = vadd.f32 %v9833, %v9873
    %v9875 = vpop.f32.mrb[0].mxu0
    %v9876 = vpop.f32.mrb[0].mxu0
    %v9877 = vadd.f32 %v9836, %v9876
    %v9878 = vpop.f32.mrb[0].mxu0
    %9879 = vdwg.mxu0
    %v9880 = vadd.f32 %v7270, %v9874
    %v9881 = vadd.f32 %v7271, %v9877
    %s9882 = scalar_lea.vmem %s13, 1
    %v9883 = vld [vmem:[%s9882] sm:$0x1]
    %s9884 = scalar_lea.vmem %s14, 1
    %v9885 = vld [vmem:[%s9884] sm:$0x1]
    %9886 = vadd.xlane.f32.xlu0 %v9880
    %v9887 = vpop.xlane.xlu0 %9886
    %9888 = vadd.xlane.f32.xlu0 %v9881
    %v9889 = vpop.xlane.xlu0 %9888
    %v9890 = vmul.f32 %v9887, 0.03125
    %v9891 = vmul.f32 %v9889, 0.03125
    %v9892 = vmul.f32 %v9880, %v9880
    %v9893 = vmul.f32 %v9881, %v9881
    %9894 = vadd.xlane.f32.xlu0 %v9892
    %v9895 = vpop.xlane.xlu0 %9894
    %9896 = vadd.xlane.f32.xlu0 %v9893
    %v9897 = vpop.xlane.xlu0 %9896
    %v9898 = vmul.f32 %v9895, 0.03125
    %v9899 = vmul.f32 %v9897, 0.03125
    %v9900 = vmul.f32 %v9890, %v9890
    %v9901 = vmul.f32 %v9891, %v9891
    %v9902 = vsub.f32 %v9898, %v9900
    %v9903 = vsub.f32 %v9899, %v9901
    %v9904 = vsub.f32 %v9880, %v9890
    %v9905 = vsub.f32 %v9881, %v9891
    %v9906 = vadd.f32 %v9902, 1e-05
    %v9907 = vadd.f32 %v9903, 1e-05
    %v9908 = vrsqrt.pop %v9906
    %v9909 = vrsqrt.pop %v9907
    %v9910 = vmul.f32 %v9904, %v9908
    %v9911 = vmul.f32 %v9905, %v9909
    %v9913 = vlaneseq
    %v9914 = vshrl.u32 %v9913, 7
    %v9915 = vsub.s32 0, %v9914
    %v9916 = vrot.slane %v9883, %v9915
    %v9918 = vmul.f32 %v9910, %v9916
    %v9919 = vmul.f32 %v9911, %v9916
    %v9921 = vlaneseq
    %v9922 = vshrl.u32 %v9921, 7
    %v9923 = vsub.s32 0, %v9922
    %v9924 = vrot.slane %v9885, %v9923
    %v9926 = vadd.f32 %v9918, %v9924
    %v9927 = vadd.f32 %v9919, %v9924
    %v9928 = vpack.c.bf16 %v9927, %v9926
    %v9929 = vld [vmem:[#allocation12] sm:$0xf]
    %v9930 = vld [vmem:[#allocation12 + $0x4] sm:$0xf]
    %v9931 = vld [vmem:[#allocation12 + $0x8] sm:$0xf]
    %v9932 = vld [vmem:[#allocation12 + $0xc] sm:$0xf]
    %v9933 = vld [vmem:[#allocation12 + $0x10] sm:$0xf]
    %v9934 = vld [vmem:[#allocation12 + $0x14] sm:$0xf]
    %v9935 = vld [vmem:[#allocation12 + $0x18] sm:$0xf]
    %v9936 = vld [vmem:[#allocation12 + $0x1c] sm:$0xf]
    %v9937 = vld [vmem:[#allocation12 + $0x20] sm:$0xf]
    %v9938 = vld [vmem:[#allocation12 + $0x24] sm:$0xf]
    %v9939 = vld [vmem:[#allocation12 + $0x28] sm:$0xf]
    %v9940 = vld [vmem:[#allocation12 + $0x2c] sm:$0xf]
    %v9941 = vld [vmem:[#allocation12 + $0x30] sm:$0xf]
    %v9942 = vld [vmem:[#allocation12 + $0x34] sm:$0xf]
    %v9943 = vld [vmem:[#allocation12 + $0x38] sm:$0xf]
    %v9944 = vld [vmem:[#allocation12 + $0x3c] sm:$0xf]
    %v9945 = vld [vmem:[#allocation13] sm:$0x1]
    %v9947 = vlaneseq
    %v9948 = vshrl.u32 %v9947, 7
    %v9949 = vsub.s32 0, %v9948
    %v9950 = vrot.slane %v9945, %v9949
    %v9968 = vunpack.c.l.b16 %v9929
    %v9969 = vunpack.c.l.b16 %v9930
    %v9970 = vunpack.c.l.b16 %v9931
    %v9971 = vunpack.c.l.b16 %v9932
    %v9972 = vunpack.c.l.b16 %v9933
    %v9973 = vunpack.c.l.b16 %v9934
    %v9974 = vunpack.c.l.b16 %v9935
    %v9975 = vunpack.c.l.b16 %v9936
    %v9976 = vunpack.c.l.b16 %v9937
    %v9977 = vunpack.c.l.b16 %v9938
    %v9978 = vunpack.c.l.b16 %v9939
    %v9979 = vunpack.c.l.b16 %v9940
    %v9980 = vunpack.c.l.b16 %v9941
    %v9981 = vunpack.c.l.b16 %v9942
    %v9982 = vunpack.c.l.b16 %v9943
    %v9983 = vunpack.c.l.b16 %v9944
    %v9984 = vpack.c.b16 %v9969, %v9968
    %v9985 = vpack.c.b16 %v9971, %v9970
    %v9986 = vpack.c.b16 %v9973, %v9972
    %v9987 = vpack.c.b16 %v9975, %v9974
    %v9988 = vpack.c.b16 %v9977, %v9976
    %v9989 = vpack.c.b16 %v9979, %v9978
    %v9990 = vpack.c.b16 %v9981, %v9980
    %v9991 = vpack.c.b16 %v9983, %v9982
    %10000 = vmatprep.subr.bf16.mxu0 0
    %10001 = vmatpush1.bf16.msra.mxu0 %v9984
    %10002 = vmatprep.subr.bf16.mxu0 0
    %10003 = vmatpush1.bf16.msra.mxu0 %v9985
    %10004 = vmatprep.subr.bf16.mxu0 0
    %10005 = vmatpush1.bf16.msra.mxu0 %v9986
    %10006 = vmatprep.subr.bf16.mxu0 0
    %10007 = vmatpush1.bf16.msra.mxu0 %v9987
    %10008 = vmatprep.subr.bf16.mxu0 0
    %10009 = vmatpush1.bf16.msra.mxu0 %v9988
    %10010 = vmatprep.subr.bf16.mxu0 0
    %10011 = vmatpush1.bf16.msra.mxu0 %v9989
    %10012 = vmatprep.subr.bf16.mxu0 0
    %10013 = vmatpush1.bf16.msra.mxu0 %v9990
    %10014 = vmatprep.subr.bf16.mxu0 0
    %10015 = vmatpush1.bf16.msra.mxu0 %v9991
    %10016 = vmatprep.subr.bf16.mxu0 0
    %10017 = vmatpush1.bf16.msra.mxu0 0
    %10018 = vmatprep.subr.bf16.mxu0 0
    %10019 = vmatpush1.bf16.msra.mxu0 0
    %10020 = vmatprep.subr.bf16.mxu0 0
    %10021 = vmatpush1.bf16.msra.mxu0 0
    %10022 = vmatprep.subr.bf16.mxu0 0
    %10023 = vmatpush1.bf16.msra.mxu0 0
    %10024 = vmatprep.subr.bf16.mxu0 0
    %10025 = vmatpush1.bf16.msra.mxu0 0
    %10026 = vmatprep.subr.bf16.mxu0 0
    %10027 = vmatpush1.bf16.msra.mxu0 0
    %10028 = vmatprep.subr.bf16.mxu0 0
    %10029 = vmatpush1.bf16.msra.mxu0 0
    %10030 = vmatprep.subr.bf16.mxu0 0
    %10031 = vmatpush1.bf16.msra.mxu0 0
    %10032 = vmatprep.mubr.bf16.mxu0 0
    %10033 = vmatmul.mubr.bf16.gmra.mrb[0].mxu0 %v9928
    %v10034 = vpop.f32.mrb[0].mxu0
    %v10035 = vadd.f32 %v9950, %v10034
    %v10036 = vpop.f32.mrb[0].mxu0
    %v10037 = vpop.f32.mrb[0].mxu0
    %v10038 = vadd.f32 %v9950, %v10037
    %v10039 = vpop.f32.mrb[0].mxu0
    %10040 = vdwg.mxu0
    %v10041 = vxor.u32 %v10035, 2147483648
    %v10042 = vxor.u32 %v10038, 2147483648
    %v10043 = vmul.f32 %v10041, 1.442695
    %v10044 = vpow.pop %v10043
    %v10045 = vmul.f32 %v10042, 1.442695
    %v10046 = vpow.pop %v10045
    %v10047 = vadd.f32 %v10044, 1.0
    %v10048 = vadd.f32 %v10046, 1.0
    %v10049 = vrcp.pop %v10047
    %v10050 = vmul.f32 1.0, %v10049
    %v10051 = vrcp.pop %v10048
    %v10052 = vmul.f32 1.0, %v10051
    %10053 = vst [vmem:[%s17] sm:$0xff] %v10050
    %10054 = vst [vmem:[%s17 + $0x8] sm:$0xff] %v10052
    // Predicated region
    $region102: #{transformer_forward.1} parent=1 // pred_check
      _
    $region103: #{transformer_forward.1} parent=1 // pred_check_branch
      %10056 = sbr.rel (0) target = $region105
    $region104: #{transformer_forward.1} parent=1 // pred_region
      _
    $region105: #{transformer_forward.1} parent=1 // pred_fallthru
      _
    // Predicated region
    $region106: #{transformer_forward.1} parent=1 // pred_check
      _
    $region107: #{transformer_forward.1} parent=1 // pred_check_branch
      %10058 = sbr.rel (0) target = $region109
    $region108: #{transformer_forward.1} parent=1 // pred_region
      _
    $region109: #{transformer_forward.1} parent=1 // pred_fallthru
      _
    %10059 = vsyncpa [#allocation3], 1
    %10060 = vsyncpa [#allocation5], 1
    %10061 = vsyncpa [#allocation8], 1
    %10062 = vsyncpa [#allocation11], 1
    %10063 = vsyncpa [#allocation14], 1

</llo_original>
